<compile_context>
chip_gen: v7x
topology: tpu7x:2x2x1
jax: 0.10.0
libtpu: 0.0.40
codegen_flags: <defaults>
</compile_context>

<pallas_src>
import functools
import math

import jax
import jax.numpy as jnp
from jax import lax
from jax.experimental import pallas as pl
from jax.experimental.pallas import tpu as pltpu  # noqa: F401  (TPU backend assumed)

VOCAB = 100
VOCAB_PAD = 128          # embedding table padded to a lane-friendly row count
SEQ = 8
HIDDEN = 128
HEADS = 4
HEAD_DIM = HIDDEN // HEADS
FFN = 256
LAYERS = 2
NUM_CLASSES = 4
CLS_PAD = 128            # classifier weight padded to 128 lanes (sliced before softmax)
LN_EPS = 1e-12
GELU_C = 0.7978845608028654  # sqrt(2/pi)


# ---------------------------------------------------------------------------
# Single fused Pallas kernel: embeddings -> 2 encoder layers -> pooler ->
# classifier -> softmax.  All refs are full-array VMEM blocks (no grid).
# ---------------------------------------------------------------------------
def _bert_forward_kernel(
    ids_ref, mask_ref, word_emb_ref, pos_ref, emb_g_ref, emb_b_ref,
    wqkv_ref, bqkv_ref, wo_ref, bo_ref, ln1g_ref, ln1b_ref,
    w1_ref, b1_ref, w2_ref, b2_ref, ln2g_ref, ln2b_ref,
    pool_w_ref, pool_b_ref, c1w_ref, c1b_ref, c2w_ref, c2b_ref,
    c3w_ref, c3b_ref, o_ref,
    *, batch, seq, heads, head_dim, layers, num_classes):
  bl = batch * seq
  hidden = heads * head_dim
  scale = 1.0 / math.sqrt(head_dim)

  def layer_norm(x, g, b):
    mu = jnp.mean(x, axis=-1, keepdims=True)
    var = jnp.mean((x - mu) * (x - mu), axis=-1, keepdims=True)
    return (x - mu) * lax.rsqrt(var + LN_EPS) * g + b

  def softmax_last(x):
    m = jnp.max(x, axis=-1, keepdims=True)
    e = jnp.exp(x - m)
    return e * pl.reciprocal(jnp.sum(e, axis=-1, keepdims=True), approx=True)

  def gelu(x):
    return 0.5 * x * (1.0 + jnp.tanh(GELU_C * (x + 0.044715 * x * x * x)))

  # --- embeddings: one-hot gather on the MXU + positional add + LayerNorm ---
  vocab_iota = lax.broadcasted_iota(jnp.int32, (bl, word_emb_ref.shape[0]), 1)
  onehot = (vocab_iota == ids_ref[...]).astype(jnp.float32)            # [BL, VOCAB_PAD]
  emb = jnp.dot(onehot, word_emb_ref[...], preferred_element_type=jnp.float32)
  emb = emb + jnp.concatenate([pos_ref[...]] * batch, axis=0)          # [BL, H]
  h = layer_norm(emb, emb_g_ref[...], emb_b_ref[...])

  # Additive attention bias over key positions: 0 keep / -1e9 masked.
  mbias = (1.0 - mask_ref[...].astype(jnp.float32)) * -1e9             # [B, L]

  for l in range(layers):
    x = h                                                              # [BL, H]
    # Fused QKV projection: one lane-dense [H, 3H] matmul.
    qkv = jnp.dot(x, wqkv_ref[l], preferred_element_type=jnp.float32) + bqkv_ref[l]
    q = qkv[:, :hidden]
    k = qkv[:, hidden:2 * hidden]
    v = qkv[:, 2 * hidden:3 * hidden]

    # Attention for all (batch, head) pairs in-kernel; heads are lane slices.
    # (Padded query positions still produce unused outputs — matches HF behavior.)
    ctx_rows = []
    for b in range(batch):
      r = b * seq
      qb, kb, vb = q[r:r + seq, :], k[r:r + seq, :], v[r:r + seq, :]
      bias_b = mbias[b:b + 1, :]                                       # [1, L]
      head_out = []
      for hd in range(heads):
        cs = hd * head_dim
        qh = qb[:, cs:cs + head_dim]
        kh = kb[:, cs:cs + head_dim]
        vh = vb[:, cs:cs + head_dim]
        s = jnp.dot(qh, kh.T, preferred_element_type=jnp.float32) * scale
        p = softmax_last(s + bias_b)
        head_out.append(jnp.dot(p, vh, preferred_element_type=jnp.float32))
      ctx_rows.append(jnp.concatenate(head_out, axis=-1))              # [L, H]
    ctx = jnp.concatenate(ctx_rows, axis=0)                            # [BL, H]

    # Output projection + residual + LayerNorm (fused epilogue).
    attn_out = jnp.dot(ctx, wo_ref[l], preferred_element_type=jnp.float32) + bo_ref[l]
    h1 = layer_norm(x + attn_out, ln1g_ref[l], ln1b_ref[l])

    # FFN + residual + LayerNorm (fused epilogue).
    ff = jnp.dot(h1, w1_ref[l], preferred_element_type=jnp.float32) + b1_ref[l]
    ff = gelu(ff)
    ff = jnp.dot(ff, w2_ref[l], preferred_element_type=jnp.float32) + b2_ref[l]
    h = layer_norm(h1 + ff, ln2g_ref[l], ln2b_ref[l])

  # --- pooler (first token per sequence) + classifier + softmax tail ---
  first = jnp.concatenate([h[b * seq:b * seq + 1, :] for b in range(batch)], axis=0)  # [B, H]
  pooled = jnp.tanh(
      jnp.dot(first, pool_w_ref[...], preferred_element_type=jnp.float32) + pool_b_ref[...])
  c1 = jnp.maximum(
      jnp.dot(pooled, c1w_ref[...], preferred_element_type=jnp.float32) + c1b_ref[...], 0.0)
  c2 = jnp.maximum(
      jnp.dot(c1, c2w_ref[...], preferred_element_type=jnp.float32) + c2b_ref[...], 0.0)
  logits = jnp.dot(c2, c3w_ref[...], preferred_element_type=jnp.float32) + c3b_ref[...]
  o_ref[...] = softmax_last(logits[:, :num_classes]).astype(o_ref.dtype)


# ---------------------------------------------------------------------------
# Wrapper
# ---------------------------------------------------------------------------
def _full_spec(shape):
  return pl.BlockSpec(shape, lambda: (0,) * len(shape))


@jax.jit
def bert_net_forward(params, ids, mask):
  """Equivalent of BERT_Net.forward((ids, mask)) for the csROBERTA/TAPTBERT branch."""
  B, L = ids.shape
  ids_col = ids.reshape(B * L, 1).astype(jnp.int32)
  mask_i = mask.astype(jnp.int32)

  inputs = (
      ids_col, mask_i,
      params["word_emb"], params["pos_emb"], params["emb_ln_g"], params["emb_ln_b"],
      params["wqkv"], params["bqkv"], params["wo"], params["bo"],
      params["ln1_g"], params["ln1_b"],
      params["w_ffn1"], params["b_ffn1"], params["w_ffn2"], params["b_ffn2"],
      params["ln2_g"], params["ln2_b"],
      params["pool_w"], params["pool_b"],
      params["cls_w1"], params["cls_b1"], params["cls_w2"], params["cls_b2"],
      params["cls_w3"], params["cls_b3"],
  )

  kernel = functools.partial(
      _bert_forward_kernel,
      batch=B, seq=L, heads=HEADS, head_dim=HEAD_DIM,
      layers=LAYERS, num_classes=NUM_CLASSES)

  return pl.pallas_call(
      kernel,
      out_shape=jax.ShapeDtypeStruct((B, NUM_CLASSES), jnp.float32),
      in_specs=[_full_spec(x.shape) for x in inputs],
      out_specs=_full_spec((B, NUM_CLASSES)),
  )(*inputs)


# ---------------------------------------------------------------------------
# Deterministic synthetic parameters (pre-packed: QKV concatenated, per-layer
# weights stacked on a leading LAYERS axis, vocab/class dims lane-padded).
# ---------------------------------------------------------------------------
def init_params(key):
  def nrm(k, shape):
    return jax.random.normal(k, shape, jnp.float32) * 0.02

  keys = iter(jax.random.split(key, 16))
  word = nrm(next(keys), (VOCAB, HIDDEN))
  cls_w3 = nrm(next(keys), (HIDDEN, NUM_CLASSES))
  return {
      "word_emb": jnp.pad(word, ((0, VOCAB_PAD - VOCAB), (0, 0))),
      "pos_emb": nrm(next(keys), (SEQ, HIDDEN)),
      "emb_ln_g": jnp.ones((1, HIDDEN), jnp.float32),
      "emb_ln_b": jnp.zeros((1, HIDDEN), jnp.float32),
      "wqkv": nrm(next(keys), (LAYERS, HIDDEN, 3 * HIDDEN)),
      "bqkv": jnp.zeros((LAYERS, 1, 3 * HIDDEN), jnp.float32),
      "wo": nrm(next(keys), (LAYERS, HIDDEN, HIDDEN)),
      "bo": jnp.zeros((LAYERS, 1, HIDDEN), jnp.float32),
      "ln1_g": jnp.ones((LAYERS, 1, HIDDEN), jnp.float32),
      "ln1_b": jnp.zeros((LAYERS, 1, HIDDEN), jnp.float32),
      "w_ffn1": nrm(next(keys), (LAYERS, HIDDEN, FFN)),
      "b_ffn1": jnp.zeros((LAYERS, 1, FFN), jnp.float32),
      "w_ffn2": nrm(next(keys), (LAYERS, FFN, HIDDEN)),
      "b_ffn2": jnp.zeros((LAYERS, 1, HIDDEN), jnp.float32),
      "ln2_g": jnp.ones((LAYERS, 1, HIDDEN), jnp.float32),
      "ln2_b": jnp.zeros((LAYERS, 1, HIDDEN), jnp.float32),
      "pool_w": nrm(next(keys), (HIDDEN, HIDDEN)),
      "pool_b": jnp.zeros((1, HIDDEN), jnp.float32),
      "cls_w1": nrm(next(keys), (HIDDEN, HIDDEN)),
      "cls_b1": jnp.zeros((1, HIDDEN), jnp.float32),
      "cls_w2": nrm(next(keys), (HIDDEN, HIDDEN)),
      "cls_b2": jnp.zeros((1, HIDDEN), jnp.float32),
      "cls_w3": jnp.pad(cls_w3, ((0, 0), (0, CLS_PAD - NUM_CLASSES))),
      "cls_b3": jnp.zeros((1, CLS_PAD), jnp.float32),
  }


# ---------------------------------------------------------------------------
# Pure-JAX reference (same packed params) for correctness checking.
# ---------------------------------------------------------------------------
def reference_forward(params, ids, mask):
  B, L = ids.shape
  H = HIDDEN
  hi = lax.Precision.HIGHEST

  def mm(a, b):
    return jnp.dot(a, b, precision=hi, preferred_element_type=jnp.float32)

  def ln(x, g, b):
    mu = jnp.mean(x, axis=-1, keepdims=True)
    var = jnp.mean((x - mu) ** 2, axis=-1, keepdims=True)
    return (x - mu) * lax.rsqrt(var + LN_EPS) * g + b

  emb = params["word_emb"][ids] + params["pos_emb"][None]
  h = ln(emb.reshape(B * L, H), params["emb_ln_g"], params["emb_ln_b"])
  mbias = (1.0 - mask.astype(jnp.float32)) * -1e9

  for l in range(LAYERS):
    x = h
    qkv = mm(x, params["wqkv"][l]) + params["bqkv"][l]
    q, k, v = qkv[:, :H], qkv[:, H:2 * H], qkv[:, 2 * H:]

    def split_heads(t):
      return t.reshape(B, L, HEADS, HEAD_DIM).transpose(0, 2, 1, 3)

    qh, kh, vh = split_heads(q), split_heads(k), split_heads(v)
    s = jnp.einsum("bhqd,bhkd->bhqk", qh, kh, precision=hi) / math.sqrt(HEAD_DIM)
    s = s + mbias[:, None, None, :]
    p = jax.nn.softmax(s, axis=-1)
    ctx = jnp.einsum("bhqk,bhkd->bhqd", p, vh, precision=hi)
    ctx = ctx.transpose(0, 2, 1, 3).reshape(B * L, H)
    attn_out = mm(ctx, params["wo"][l]) + params["bo"][l]
    h1 = ln(x + attn_out, params["ln1_g"][l], params["ln1_b"][l])
    ff = mm(h1, params["w_ffn1"][l]) + params["b_ffn1"][l]
    ff = 0.5 * ff * (1.0 + jnp.tanh(GELU_C * (ff + 0.044715 * ff ** 3)))
    ff = mm(ff, params["w_ffn2"][l]) + params["b_ffn2"][l]
    h = ln(h1 + ff, params["ln2_g"][l], params["ln2_b"][l])

  h = h.reshape(B, L, H)
  pooled = jnp.tanh(mm(h[:, 0, :], params["pool_w"]) + params["pool_b"])
  c = jnp.maximum(mm(pooled, params["cls_w1"]) + params["cls_b1"], 0.0)
  c = jnp.maximum(mm(c, params["cls_w2"]) + params["cls_b2"], 0.0)
  logits = (mm(c, params["cls_w3"]) + params["cls_b3"])[:, :NUM_CLASSES]
  return jax.nn.softmax(logits, axis=-1)


# ---------------------------------------------------------------------------
if __name__ == "__main__":
  key = jax.random.PRNGKey(0)
  pkey, ikey = jax.random.split(key)
  params = init_params(pkey)

  B = 2
  ids = jax.random.randint(ikey, (B, SEQ), 0, VOCAB, dtype=jnp.int32)
  # attention mask: second example has two padded (masked) positions.
  mask = jnp.array([[1, 1, 1, 1, 1, 1, 1, 1],
                    [1, 1, 1, 1, 1, 1, 0, 0]], dtype=jnp.int32)

  preds = jax.block_until_ready(bert_net_forward(params, ids, mask))
  ref = reference_forward(params, ids, mask)

  assert preds.shape == (B, NUM_CLASSES)
  assert bool(jnp.all(jnp.isfinite(preds)))
  assert bool(jnp.allclose(jnp.sum(preds, axis=1), 1.0, atol=2e-3))
  assert bool(jnp.allclose(preds, ref, atol=2e-3, rtol=0.0))
  print("KERNEL_OK")
</pallas_src>

<mosaic_0001>
module attributes {stable_mosaic.version = 11 : i64} {
  func.func @_bert_forward_kernel(%arg0: memref<16x1xi32, #tpu.memory_space<vmem>>, %arg1: memref<2x8xi32, #tpu.memory_space<vmem>>, %arg2: memref<128x128xf32, #tpu.memory_space<vmem>>, %arg3: memref<8x128xf32, #tpu.memory_space<vmem>>, %arg4: memref<1x128xf32, #tpu.memory_space<vmem>>, %arg5: memref<1x128xf32, #tpu.memory_space<vmem>>, %arg6: memref<2x128x384xf32, #tpu.memory_space<vmem>>, %arg7: memref<2x1x384xf32, #tpu.memory_space<vmem>>, %arg8: memref<2x128x128xf32, #tpu.memory_space<vmem>>, %arg9: memref<2x1x128xf32, #tpu.memory_space<vmem>>, %arg10: memref<2x1x128xf32, #tpu.memory_space<vmem>>, %arg11: memref<2x1x128xf32, #tpu.memory_space<vmem>>, %arg12: memref<2x128x256xf32, #tpu.memory_space<vmem>>, %arg13: memref<2x1x256xf32, #tpu.memory_space<vmem>>, %arg14: memref<2x256x128xf32, #tpu.memory_space<vmem>>, %arg15: memref<2x1x128xf32, #tpu.memory_space<vmem>>, %arg16: memref<2x1x128xf32, #tpu.memory_space<vmem>>, %arg17: memref<2x1x128xf32, #tpu.memory_space<vmem>>, %arg18: memref<128x128xf32, #tpu.memory_space<vmem>>, %arg19: memref<1x128xf32, #tpu.memory_space<vmem>>, %arg20: memref<128x128xf32, #tpu.memory_space<vmem>>, %arg21: memref<1x128xf32, #tpu.memory_space<vmem>>, %arg22: memref<128x128xf32, #tpu.memory_space<vmem>>, %arg23: memref<1x128xf32, #tpu.memory_space<vmem>>, %arg24: memref<128x128xf32, #tpu.memory_space<vmem>>, %arg25: memref<1x128xf32, #tpu.memory_space<vmem>>, %arg26: memref<2x4xf32, #tpu.memory_space<vmem>>) attributes {dimension_semantics = [], scalar_prefetch = 0 : i64, scratch_operands = 0 : i64, tpu.core_type = #tpu.core_type<tc>} {
    %0 = tpu.iota {dimensions = array<i32: 1>} : vector<16x128xi32>
    %c0 = arith.constant 0 : index
    %c0_0 = arith.constant 0 : index
    %1 = vector.load %arg0[%c0, %c0_0] : memref<16x1xi32, #tpu.memory_space<vmem>>, vector<16x1xi32>
    %2 = vector.broadcast %1 : vector<16x1xi32> to vector<16x128xi32>
    %3 = arith.cmpi eq, %0, %2 : vector<16x128xi32>
    %4 = arith.extui %3 : vector<16x128xi1> to vector<16x128xi32>
    %5 = arith.sitofp %4 : vector<16x128xi32> to vector<16x128xf32>
    %c0_1 = arith.constant 0 : index
    %c0_2 = arith.constant 0 : index
    %6 = vector.load %arg2[%c0_1, %c0_2] : memref<128x128xf32, #tpu.memory_space<vmem>>, vector<128x128xf32>
    %cst = arith.constant dense<0.000000e+00> : vector<16x128xf32>
    %7 = tpu.matmul %5, %6, %cst {dimension_numbers = #tpu.dot_dimension_numbers<[1], [0], [0], [1], [0, 0, 1, 1], [], []>} : vector<16x128xf32>, vector<128x128xf32>, vector<16x128xf32> -> vector<16x128xf32>
    %c0_3 = arith.constant 0 : index
    %c0_4 = arith.constant 0 : index
    %8 = vector.load %arg3[%c0_3, %c0_4] : memref<8x128xf32, #tpu.memory_space<vmem>>, vector<8x128xf32>
    %9 = tpu.concatenate %8, %8 in 0 : vector<8x128xf32>, vector<8x128xf32> -> vector<16x128xf32>
    %10 = arith.addf %7, %9 : vector<16x128xf32>
    %c0_5 = arith.constant 0 : index
    %c0_6 = arith.constant 0 : index
    %11 = vector.load %arg4[%c0_5, %c0_6] : memref<1x128xf32, #tpu.memory_space<vmem>>, vector<1x128xf32>
    %c0_7 = arith.constant 0 : index
    %c0_8 = arith.constant 0 : index
    %12 = vector.load %arg5[%c0_7, %c0_8] : memref<1x128xf32, #tpu.memory_space<vmem>>, vector<1x128xf32>
    %cst_9 = arith.constant dense<0.000000e+00> : vector<16xf32>
    %13 = vector.multi_reduction <add>, %10, %cst_9 [1] : vector<16x128xf32> to vector<16xf32>
    %14 = vector.shape_cast %13 : vector<16xf32> to vector<16x1xf32>
    %cst_10 = arith.constant 1.280000e+02 : f32
    %15 = vector.broadcast %cst_10 : f32 to vector<16x1xf32>
    %16 = arith.divf %14, %15 : vector<16x1xf32>
    %17 = vector.broadcast %16 : vector<16x1xf32> to vector<16x128xf32>
    %18 = arith.subf %10, %17 : vector<16x128xf32>
    %19 = vector.broadcast %16 : vector<16x1xf32> to vector<16x128xf32>
    %20 = arith.subf %10, %19 : vector<16x128xf32>
    %21 = arith.mulf %18, %20 : vector<16x128xf32>
    %cst_11 = arith.constant dense<0.000000e+00> : vector<16xf32>
    %22 = vector.multi_reduction <add>, %21, %cst_11 [1] : vector<16x128xf32> to vector<16xf32>
    %23 = vector.shape_cast %22 : vector<16xf32> to vector<16x1xf32>
    %cst_12 = arith.constant 1.280000e+02 : f32
    %24 = vector.broadcast %cst_12 : f32 to vector<16x1xf32>
    %25 = arith.divf %23, %24 : vector<16x1xf32>
    %26 = vector.broadcast %16 : vector<16x1xf32> to vector<16x128xf32>
    %27 = arith.subf %10, %26 : vector<16x128xf32>
    %cst_13 = arith.constant 9.99999996E-13 : f32
    %28 = vector.broadcast %cst_13 : f32 to vector<16x1xf32>
    %29 = arith.addf %25, %28 : vector<16x1xf32>
    %30 = math.rsqrt %29 : vector<16x1xf32>
    %31 = vector.broadcast %30 : vector<16x1xf32> to vector<16x128xf32>
    %32 = arith.mulf %27, %31 : vector<16x128xf32>
    %33 = vector.broadcast %11 : vector<1x128xf32> to vector<16x128xf32>
    %34 = arith.mulf %32, %33 : vector<16x128xf32>
    %35 = vector.broadcast %12 : vector<1x128xf32> to vector<16x128xf32>
    %36 = arith.addf %34, %35 : vector<16x128xf32>
    %c0_14 = arith.constant 0 : index
    %c0_15 = arith.constant 0 : index
    %37 = vector.load %arg1[%c0_14, %c0_15] : memref<2x8xi32, #tpu.memory_space<vmem>>, vector<2x8xi32>
    %38 = arith.sitofp %37 : vector<2x8xi32> to vector<2x8xf32>
    %cst_16 = arith.constant 1.000000e+00 : f32
    %39 = vector.broadcast %cst_16 : f32 to vector<2x8xf32>
    %40 = arith.subf %39, %38 : vector<2x8xf32>
    %cst_17 = arith.constant -1.000000e+09 : f32
    %41 = vector.broadcast %cst_17 : f32 to vector<2x8xf32>
    %42 = arith.mulf %40, %41 : vector<2x8xf32>
    %c0_18 = arith.constant 0 : index
    %c0_19 = arith.constant 0 : index
    %c0_20 = arith.constant 0 : index
    %43 = vector.load %arg6[%c0_18, %c0_19, %c0_20] : memref<2x128x384xf32, #tpu.memory_space<vmem>>, vector<1x128x384xf32>
    %44 = vector.shape_cast %43 : vector<1x128x384xf32> to vector<128x384xf32>
    %cst_21 = arith.constant dense<0.000000e+00> : vector<16x384xf32>
    %45 = tpu.matmul %36, %44, %cst_21 {dimension_numbers = #tpu.dot_dimension_numbers<[1], [0], [0], [1], [0, 0, 1, 1], [], []>} : vector<16x128xf32>, vector<128x384xf32>, vector<16x384xf32> -> vector<16x384xf32>
    %c0_22 = arith.constant 0 : index
    %c0_23 = arith.constant 0 : index
    %c0_24 = arith.constant 0 : index
    %46 = vector.load %arg7[%c0_22, %c0_23, %c0_24] : memref<2x1x384xf32, #tpu.memory_space<vmem>>, vector<1x1x384xf32>
    %47 = vector.shape_cast %46 : vector<1x1x384xf32> to vector<1x384xf32>
    %48 = vector.broadcast %47 : vector<1x384xf32> to vector<16x384xf32>
    %49 = arith.addf %45, %48 : vector<16x384xf32>
    %50 = vector.extract_strided_slice %49 {offsets = [0, 0], sizes = [16, 128], strides = [1, 1]} : vector<16x384xf32> to vector<16x128xf32>
    %51 = vector.extract_strided_slice %49 {offsets = [0, 128], sizes = [16, 128], strides = [1, 1]} : vector<16x384xf32> to vector<16x128xf32>
    %52 = vector.extract_strided_slice %49 {offsets = [0, 256], sizes = [16, 128], strides = [1, 1]} : vector<16x384xf32> to vector<16x128xf32>
    %53 = vector.extract_strided_slice %50 {offsets = [0, 0], sizes = [8, 128], strides = [1, 1]} : vector<16x128xf32> to vector<8x128xf32>
    %54 = vector.extract_strided_slice %51 {offsets = [0, 0], sizes = [8, 128], strides = [1, 1]} : vector<16x128xf32> to vector<8x128xf32>
    %55 = vector.extract_strided_slice %52 {offsets = [0, 0], sizes = [8, 128], strides = [1, 1]} : vector<16x128xf32> to vector<8x128xf32>
    %56 = vector.extract_strided_slice %42 {offsets = [0, 0], sizes = [1, 8], strides = [1, 1]} : vector<2x8xf32> to vector<1x8xf32>
    %57 = vector.extract_strided_slice %53 {offsets = [0, 0], sizes = [8, 32], strides = [1, 1]} : vector<8x128xf32> to vector<8x32xf32>
    %58 = vector.extract_strided_slice %54 {offsets = [0, 0], sizes = [8, 32], strides = [1, 1]} : vector<8x128xf32> to vector<8x32xf32>
    %59 = vector.extract_strided_slice %55 {offsets = [0, 0], sizes = [8, 32], strides = [1, 1]} : vector<8x128xf32> to vector<8x32xf32>
    %60 = tpu.transpose %58, [1, 0] : vector<8x32xf32> -> vector<32x8xf32>
    %cst_25 = arith.constant dense<0.000000e+00> : vector<8x8xf32>
    %61 = tpu.matmul %57, %60, %cst_25 {dimension_numbers = #tpu.dot_dimension_numbers<[1], [0], [0], [1], [0, 0, 1, 1], [], []>} : vector<8x32xf32>, vector<32x8xf32>, vector<8x8xf32> -> vector<8x8xf32>
    %cst_26 = arith.constant 0.176776692 : f32
    %62 = vector.broadcast %cst_26 : f32 to vector<8x8xf32>
    %63 = arith.mulf %61, %62 : vector<8x8xf32>
    %64 = vector.broadcast %56 : vector<1x8xf32> to vector<8x8xf32>
    %65 = arith.addf %63, %64 : vector<8x8xf32>
    %cst_27 = arith.constant dense<0xFF800000> : vector<8xf32>
    %66 = vector.multi_reduction <maximumf>, %65, %cst_27 [1] : vector<8x8xf32> to vector<8xf32>
    %67 = vector.shape_cast %66 : vector<8xf32> to vector<8x1xf32>
    %68 = vector.broadcast %67 : vector<8x1xf32> to vector<8x8xf32>
    %69 = arith.subf %65, %68 : vector<8x8xf32>
    %70 = math.exp %69 : vector<8x8xf32>
    %cst_28 = arith.constant dense<0.000000e+00> : vector<8xf32>
    %71 = vector.multi_reduction <add>, %70, %cst_28 [1] : vector<8x8xf32> to vector<8xf32>
    %72 = vector.shape_cast %71 : vector<8xf32> to vector<8x1xf32>
    %73 = tpu.reciprocal %72 {approx = true} : vector<8x1xf32> -> vector<8x1xf32>
    %74 = vector.broadcast %73 : vector<8x1xf32> to vector<8x8xf32>
    %75 = arith.mulf %70, %74 : vector<8x8xf32>
    %cst_29 = arith.constant dense<0.000000e+00> : vector<8x32xf32>
    %76 = tpu.matmul %75, %59, %cst_29 {dimension_numbers = #tpu.dot_dimension_numbers<[1], [0], [0], [1], [0, 0, 1, 1], [], []>} : vector<8x8xf32>, vector<8x32xf32>, vector<8x32xf32> -> vector<8x32xf32>
    %77 = vector.extract_strided_slice %53 {offsets = [0, 32], sizes = [8, 32], strides = [1, 1]} : vector<8x128xf32> to vector<8x32xf32>
    %78 = vector.extract_strided_slice %54 {offsets = [0, 32], sizes = [8, 32], strides = [1, 1]} : vector<8x128xf32> to vector<8x32xf32>
    %79 = vector.extract_strided_slice %55 {offsets = [0, 32], sizes = [8, 32], strides = [1, 1]} : vector<8x128xf32> to vector<8x32xf32>
    %80 = tpu.transpose %78, [1, 0] : vector<8x32xf32> -> vector<32x8xf32>
    %cst_30 = arith.constant dense<0.000000e+00> : vector<8x8xf32>
    %81 = tpu.matmul %77, %80, %cst_30 {dimension_numbers = #tpu.dot_dimension_numbers<[1], [0], [0], [1], [0, 0, 1, 1], [], []>} : vector<8x32xf32>, vector<32x8xf32>, vector<8x8xf32> -> vector<8x8xf32>
    %cst_31 = arith.constant 0.176776692 : f32
    %82 = vector.broadcast %cst_31 : f32 to vector<8x8xf32>
    %83 = arith.mulf %81, %82 : vector<8x8xf32>
    %84 = vector.broadcast %56 : vector<1x8xf32> to vector<8x8xf32>
    %85 = arith.addf %83, %84 : vector<8x8xf32>
    %cst_32 = arith.constant dense<0xFF800000> : vector<8xf32>
    %86 = vector.multi_reduction <maximumf>, %85, %cst_32 [1] : vector<8x8xf32> to vector<8xf32>
    %87 = vector.shape_cast %86 : vector<8xf32> to vector<8x1xf32>
    %88 = vector.broadcast %87 : vector<8x1xf32> to vector<8x8xf32>
    %89 = arith.subf %85, %88 : vector<8x8xf32>
    %90 = math.exp %89 : vector<8x8xf32>
    %cst_33 = arith.constant dense<0.000000e+00> : vector<8xf32>
    %91 = vector.multi_reduction <add>, %90, %cst_33 [1] : vector<8x8xf32> to vector<8xf32>
    %92 = vector.shape_cast %91 : vector<8xf32> to vector<8x1xf32>
    %93 = tpu.reciprocal %92 {approx = true} : vector<8x1xf32> -> vector<8x1xf32>
    %94 = vector.broadcast %93 : vector<8x1xf32> to vector<8x8xf32>
    %95 = arith.mulf %90, %94 : vector<8x8xf32>
    %cst_34 = arith.constant dense<0.000000e+00> : vector<8x32xf32>
    %96 = tpu.matmul %95, %79, %cst_34 {dimension_numbers = #tpu.dot_dimension_numbers<[1], [0], [0], [1], [0, 0, 1, 1], [], []>} : vector<8x8xf32>, vector<8x32xf32>, vector<8x32xf32> -> vector<8x32xf32>
    %97 = vector.extract_strided_slice %53 {offsets = [0, 64], sizes = [8, 32], strides = [1, 1]} : vector<8x128xf32> to vector<8x32xf32>
    %98 = vector.extract_strided_slice %54 {offsets = [0, 64], sizes = [8, 32], strides = [1, 1]} : vector<8x128xf32> to vector<8x32xf32>
    %99 = vector.extract_strided_slice %55 {offsets = [0, 64], sizes = [8, 32], strides = [1, 1]} : vector<8x128xf32> to vector<8x32xf32>
    %100 = tpu.transpose %98, [1, 0] : vector<8x32xf32> -> vector<32x8xf32>
    %cst_35 = arith.constant dense<0.000000e+00> : vector<8x8xf32>
    %101 = tpu.matmul %97, %100, %cst_35 {dimension_numbers = #tpu.dot_dimension_numbers<[1], [0], [0], [1], [0, 0, 1, 1], [], []>} : vector<8x32xf32>, vector<32x8xf32>, vector<8x8xf32> -> vector<8x8xf32>
    %cst_36 = arith.constant 0.176776692 : f32
    %102 = vector.broadcast %cst_36 : f32 to vector<8x8xf32>
    %103 = arith.mulf %101, %102 : vector<8x8xf32>
    %104 = vector.broadcast %56 : vector<1x8xf32> to vector<8x8xf32>
    %105 = arith.addf %103, %104 : vector<8x8xf32>
    %cst_37 = arith.constant dense<0xFF800000> : vector<8xf32>
    %106 = vector.multi_reduction <maximumf>, %105, %cst_37 [1] : vector<8x8xf32> to vector<8xf32>
    %107 = vector.shape_cast %106 : vector<8xf32> to vector<8x1xf32>
    %108 = vector.broadcast %107 : vector<8x1xf32> to vector<8x8xf32>
    %109 = arith.subf %105, %108 : vector<8x8xf32>
    %110 = math.exp %109 : vector<8x8xf32>
    %cst_38 = arith.constant dense<0.000000e+00> : vector<8xf32>
    %111 = vector.multi_reduction <add>, %110, %cst_38 [1] : vector<8x8xf32> to vector<8xf32>
    %112 = vector.shape_cast %111 : vector<8xf32> to vector<8x1xf32>
    %113 = tpu.reciprocal %112 {approx = true} : vector<8x1xf32> -> vector<8x1xf32>
    %114 = vector.broadcast %113 : vector<8x1xf32> to vector<8x8xf32>
    %115 = arith.mulf %110, %114 : vector<8x8xf32>
    %cst_39 = arith.constant dense<0.000000e+00> : vector<8x32xf32>
    %116 = tpu.matmul %115, %99, %cst_39 {dimension_numbers = #tpu.dot_dimension_numbers<[1], [0], [0], [1], [0, 0, 1, 1], [], []>} : vector<8x8xf32>, vector<8x32xf32>, vector<8x32xf32> -> vector<8x32xf32>
    %117 = vector.extract_strided_slice %53 {offsets = [0, 96], sizes = [8, 32], strides = [1, 1]} : vector<8x128xf32> to vector<8x32xf32>
    %118 = vector.extract_strided_slice %54 {offsets = [0, 96], sizes = [8, 32], strides = [1, 1]} : vector<8x128xf32> to vector<8x32xf32>
    %119 = vector.extract_strided_slice %55 {offsets = [0, 96], sizes = [8, 32], strides = [1, 1]} : vector<8x128xf32> to vector<8x32xf32>
    %120 = tpu.transpose %118, [1, 0] : vector<8x32xf32> -> vector<32x8xf32>
    %cst_40 = arith.constant dense<0.000000e+00> : vector<8x8xf32>
    %121 = tpu.matmul %117, %120, %cst_40 {dimension_numbers = #tpu.dot_dimension_numbers<[1], [0], [0], [1], [0, 0, 1, 1], [], []>} : vector<8x32xf32>, vector<32x8xf32>, vector<8x8xf32> -> vector<8x8xf32>
    %cst_41 = arith.constant 0.176776692 : f32
    %122 = vector.broadcast %cst_41 : f32 to vector<8x8xf32>
    %123 = arith.mulf %121, %122 : vector<8x8xf32>
    %124 = vector.broadcast %56 : vector<1x8xf32> to vector<8x8xf32>
    %125 = arith.addf %123, %124 : vector<8x8xf32>
    %cst_42 = arith.constant dense<0xFF800000> : vector<8xf32>
    %126 = vector.multi_reduction <maximumf>, %125, %cst_42 [1] : vector<8x8xf32> to vector<8xf32>
    %127 = vector.shape_cast %126 : vector<8xf32> to vector<8x1xf32>
    %128 = vector.broadcast %127 : vector<8x1xf32> to vector<8x8xf32>
    %129 = arith.subf %125, %128 : vector<8x8xf32>
    %130 = math.exp %129 : vector<8x8xf32>
    %cst_43 = arith.constant dense<0.000000e+00> : vector<8xf32>
    %131 = vector.multi_reduction <add>, %130, %cst_43 [1] : vector<8x8xf32> to vector<8xf32>
    %132 = vector.shape_cast %131 : vector<8xf32> to vector<8x1xf32>
    %133 = tpu.reciprocal %132 {approx = true} : vector<8x1xf32> -> vector<8x1xf32>
    %134 = vector.broadcast %133 : vector<8x1xf32> to vector<8x8xf32>
    %135 = arith.mulf %130, %134 : vector<8x8xf32>
    %cst_44 = arith.constant dense<0.000000e+00> : vector<8x32xf32>
    %136 = tpu.matmul %135, %119, %cst_44 {dimension_numbers = #tpu.dot_dimension_numbers<[1], [0], [0], [1], [0, 0, 1, 1], [], []>} : vector<8x8xf32>, vector<8x32xf32>, vector<8x32xf32> -> vector<8x32xf32>
    %137 = tpu.concatenate %76, %96, %116, %136 in 1 : vector<8x32xf32>, vector<8x32xf32>, vector<8x32xf32>, vector<8x32xf32> -> vector<8x128xf32>
    %138 = vector.extract_strided_slice %50 {offsets = [8, 0], sizes = [8, 128], strides = [1, 1]} : vector<16x128xf32> to vector<8x128xf32>
    %139 = vector.extract_strided_slice %51 {offsets = [8, 0], sizes = [8, 128], strides = [1, 1]} : vector<16x128xf32> to vector<8x128xf32>
    %140 = vector.extract_strided_slice %52 {offsets = [8, 0], sizes = [8, 128], strides = [1, 1]} : vector<16x128xf32> to vector<8x128xf32>
    %141 = vector.extract_strided_slice %42 {offsets = [1, 0], sizes = [1, 8], strides = [1, 1]} : vector<2x8xf32> to vector<1x8xf32>
    %142 = vector.extract_strided_slice %138 {offsets = [0, 0], sizes = [8, 32], strides = [1, 1]} : vector<8x128xf32> to vector<8x32xf32>
    %143 = vector.extract_strided_slice %139 {offsets = [0, 0], sizes = [8, 32], strides = [1, 1]} : vector<8x128xf32> to vector<8x32xf32>
    %144 = vector.extract_strided_slice %140 {offsets = [0, 0], sizes = [8, 32], strides = [1, 1]} : vector<8x128xf32> to vector<8x32xf32>
    %145 = tpu.transpose %143, [1, 0] : vector<8x32xf32> -> vector<32x8xf32>
    %cst_45 = arith.constant dense<0.000000e+00> : vector<8x8xf32>
    %146 = tpu.matmul %142, %145, %cst_45 {dimension_numbers = #tpu.dot_dimension_numbers<[1], [0], [0], [1], [0, 0, 1, 1], [], []>} : vector<8x32xf32>, vector<32x8xf32>, vector<8x8xf32> -> vector<8x8xf32>
    %cst_46 = arith.constant 0.176776692 : f32
    %147 = vector.broadcast %cst_46 : f32 to vector<8x8xf32>
    %148 = arith.mulf %146, %147 : vector<8x8xf32>
    %149 = vector.broadcast %141 : vector<1x8xf32> to vector<8x8xf32>
    %150 = arith.addf %148, %149 : vector<8x8xf32>
    %cst_47 = arith.constant dense<0xFF800000> : vector<8xf32>
    %151 = vector.multi_reduction <maximumf>, %150, %cst_47 [1] : vector<8x8xf32> to vector<8xf32>
    %152 = vector.shape_cast %151 : vector<8xf32> to vector<8x1xf32>
    %153 = vector.broadcast %152 : vector<8x1xf32> to vector<8x8xf32>
    %154 = arith.subf %150, %153 : vector<8x8xf32>
    %155 = math.exp %154 : vector<8x8xf32>
    %cst_48 = arith.constant dense<0.000000e+00> : vector<8xf32>
    %156 = vector.multi_reduction <add>, %155, %cst_48 [1] : vector<8x8xf32> to vector<8xf32>
    %157 = vector.shape_cast %156 : vector<8xf32> to vector<8x1xf32>
    %158 = tpu.reciprocal %157 {approx = true} : vector<8x1xf32> -> vector<8x1xf32>
    %159 = vector.broadcast %158 : vector<8x1xf32> to vector<8x8xf32>
    %160 = arith.mulf %155, %159 : vector<8x8xf32>
    %cst_49 = arith.constant dense<0.000000e+00> : vector<8x32xf32>
    %161 = tpu.matmul %160, %144, %cst_49 {dimension_numbers = #tpu.dot_dimension_numbers<[1], [0], [0], [1], [0, 0, 1, 1], [], []>} : vector<8x8xf32>, vector<8x32xf32>, vector<8x32xf32> -> vector<8x32xf32>
    %162 = vector.extract_strided_slice %138 {offsets = [0, 32], sizes = [8, 32], strides = [1, 1]} : vector<8x128xf32> to vector<8x32xf32>
    %163 = vector.extract_strided_slice %139 {offsets = [0, 32], sizes = [8, 32], strides = [1, 1]} : vector<8x128xf32> to vector<8x32xf32>
    %164 = vector.extract_strided_slice %140 {offsets = [0, 32], sizes = [8, 32], strides = [1, 1]} : vector<8x128xf32> to vector<8x32xf32>
    %165 = tpu.transpose %163, [1, 0] : vector<8x32xf32> -> vector<32x8xf32>
    %cst_50 = arith.constant dense<0.000000e+00> : vector<8x8xf32>
    %166 = tpu.matmul %162, %165, %cst_50 {dimension_numbers = #tpu.dot_dimension_numbers<[1], [0], [0], [1], [0, 0, 1, 1], [], []>} : vector<8x32xf32>, vector<32x8xf32>, vector<8x8xf32> -> vector<8x8xf32>
    %cst_51 = arith.constant 0.176776692 : f32
    %167 = vector.broadcast %cst_51 : f32 to vector<8x8xf32>
    %168 = arith.mulf %166, %167 : vector<8x8xf32>
    %169 = vector.broadcast %141 : vector<1x8xf32> to vector<8x8xf32>
    %170 = arith.addf %168, %169 : vector<8x8xf32>
    %cst_52 = arith.constant dense<0xFF800000> : vector<8xf32>
    %171 = vector.multi_reduction <maximumf>, %170, %cst_52 [1] : vector<8x8xf32> to vector<8xf32>
    %172 = vector.shape_cast %171 : vector<8xf32> to vector<8x1xf32>
    %173 = vector.broadcast %172 : vector<8x1xf32> to vector<8x8xf32>
    %174 = arith.subf %170, %173 : vector<8x8xf32>
    %175 = math.exp %174 : vector<8x8xf32>
    %cst_53 = arith.constant dense<0.000000e+00> : vector<8xf32>
    %176 = vector.multi_reduction <add>, %175, %cst_53 [1] : vector<8x8xf32> to vector<8xf32>
    %177 = vector.shape_cast %176 : vector<8xf32> to vector<8x1xf32>
    %178 = tpu.reciprocal %177 {approx = true} : vector<8x1xf32> -> vector<8x1xf32>
    %179 = vector.broadcast %178 : vector<8x1xf32> to vector<8x8xf32>
    %180 = arith.mulf %175, %179 : vector<8x8xf32>
    %cst_54 = arith.constant dense<0.000000e+00> : vector<8x32xf32>
    %181 = tpu.matmul %180, %164, %cst_54 {dimension_numbers = #tpu.dot_dimension_numbers<[1], [0], [0], [1], [0, 0, 1, 1], [], []>} : vector<8x8xf32>, vector<8x32xf32>, vector<8x32xf32> -> vector<8x32xf32>
    %182 = vector.extract_strided_slice %138 {offsets = [0, 64], sizes = [8, 32], strides = [1, 1]} : vector<8x128xf32> to vector<8x32xf32>
    %183 = vector.extract_strided_slice %139 {offsets = [0, 64], sizes = [8, 32], strides = [1, 1]} : vector<8x128xf32> to vector<8x32xf32>
    %184 = vector.extract_strided_slice %140 {offsets = [0, 64], sizes = [8, 32], strides = [1, 1]} : vector<8x128xf32> to vector<8x32xf32>
    %185 = tpu.transpose %183, [1, 0] : vector<8x32xf32> -> vector<32x8xf32>
    %cst_55 = arith.constant dense<0.000000e+00> : vector<8x8xf32>
    %186 = tpu.matmul %182, %185, %cst_55 {dimension_numbers = #tpu.dot_dimension_numbers<[1], [0], [0], [1], [0, 0, 1, 1], [], []>} : vector<8x32xf32>, vector<32x8xf32>, vector<8x8xf32> -> vector<8x8xf32>
    %cst_56 = arith.constant 0.176776692 : f32
    %187 = vector.broadcast %cst_56 : f32 to vector<8x8xf32>
    %188 = arith.mulf %186, %187 : vector<8x8xf32>
    %189 = vector.broadcast %141 : vector<1x8xf32> to vector<8x8xf32>
    %190 = arith.addf %188, %189 : vector<8x8xf32>
    %cst_57 = arith.constant dense<0xFF800000> : vector<8xf32>
    %191 = vector.multi_reduction <maximumf>, %190, %cst_57 [1] : vector<8x8xf32> to vector<8xf32>
    %192 = vector.shape_cast %191 : vector<8xf32> to vector<8x1xf32>
    %193 = vector.broadcast %192 : vector<8x1xf32> to vector<8x8xf32>
    %194 = arith.subf %190, %193 : vector<8x8xf32>
    %195 = math.exp %194 : vector<8x8xf32>
    %cst_58 = arith.constant dense<0.000000e+00> : vector<8xf32>
    %196 = vector.multi_reduction <add>, %195, %cst_58 [1] : vector<8x8xf32> to vector<8xf32>
    %197 = vector.shape_cast %196 : vector<8xf32> to vector<8x1xf32>
    %198 = tpu.reciprocal %197 {approx = true} : vector<8x1xf32> -> vector<8x1xf32>
    %199 = vector.broadcast %198 : vector<8x1xf32> to vector<8x8xf32>
    %200 = arith.mulf %195, %199 : vector<8x8xf32>
    %cst_59 = arith.constant dense<0.000000e+00> : vector<8x32xf32>
    %201 = tpu.matmul %200, %184, %cst_59 {dimension_numbers = #tpu.dot_dimension_numbers<[1], [0], [0], [1], [0, 0, 1, 1], [], []>} : vector<8x8xf32>, vector<8x32xf32>, vector<8x32xf32> -> vector<8x32xf32>
    %202 = vector.extract_strided_slice %138 {offsets = [0, 96], sizes = [8, 32], strides = [1, 1]} : vector<8x128xf32> to vector<8x32xf32>
    %203 = vector.extract_strided_slice %139 {offsets = [0, 96], sizes = [8, 32], strides = [1, 1]} : vector<8x128xf32> to vector<8x32xf32>
    %204 = vector.extract_strided_slice %140 {offsets = [0, 96], sizes = [8, 32], strides = [1, 1]} : vector<8x128xf32> to vector<8x32xf32>
    %205 = tpu.transpose %203, [1, 0] : vector<8x32xf32> -> vector<32x8xf32>
    %cst_60 = arith.constant dense<0.000000e+00> : vector<8x8xf32>
    %206 = tpu.matmul %202, %205, %cst_60 {dimension_numbers = #tpu.dot_dimension_numbers<[1], [0], [0], [1], [0, 0, 1, 1], [], []>} : vector<8x32xf32>, vector<32x8xf32>, vector<8x8xf32> -> vector<8x8xf32>
    %cst_61 = arith.constant 0.176776692 : f32
    %207 = vector.broadcast %cst_61 : f32 to vector<8x8xf32>
    %208 = arith.mulf %206, %207 : vector<8x8xf32>
    %209 = vector.broadcast %141 : vector<1x8xf32> to vector<8x8xf32>
    %210 = arith.addf %208, %209 : vector<8x8xf32>
    %cst_62 = arith.constant dense<0xFF800000> : vector<8xf32>
    %211 = vector.multi_reduction <maximumf>, %210, %cst_62 [1] : vector<8x8xf32> to vector<8xf32>
    %212 = vector.shape_cast %211 : vector<8xf32> to vector<8x1xf32>
    %213 = vector.broadcast %212 : vector<8x1xf32> to vector<8x8xf32>
    %214 = arith.subf %210, %213 : vector<8x8xf32>
    %215 = math.exp %214 : vector<8x8xf32>
    %cst_63 = arith.constant dense<0.000000e+00> : vector<8xf32>
    %216 = vector.multi_reduction <add>, %215, %cst_63 [1] : vector<8x8xf32> to vector<8xf32>
    %217 = vector.shape_cast %216 : vector<8xf32> to vector<8x1xf32>
    %218 = tpu.reciprocal %217 {approx = true} : vector<8x1xf32> -> vector<8x1xf32>
    %219 = vector.broadcast %218 : vector<8x1xf32> to vector<8x8xf32>
    %220 = arith.mulf %215, %219 : vector<8x8xf32>
    %cst_64 = arith.constant dense<0.000000e+00> : vector<8x32xf32>
    %221 = tpu.matmul %220, %204, %cst_64 {dimension_numbers = #tpu.dot_dimension_numbers<[1], [0], [0], [1], [0, 0, 1, 1], [], []>} : vector<8x8xf32>, vector<8x32xf32>, vector<8x32xf32> -> vector<8x32xf32>
    %222 = tpu.concatenate %161, %181, %201, %221 in 1 : vector<8x32xf32>, vector<8x32xf32>, vector<8x32xf32>, vector<8x32xf32> -> vector<8x128xf32>
    %223 = tpu.concatenate %137, %222 in 0 : vector<8x128xf32>, vector<8x128xf32> -> vector<16x128xf32>
    %c0_65 = arith.constant 0 : index
    %c0_66 = arith.constant 0 : index
    %c0_67 = arith.constant 0 : index
    %224 = vector.load %arg8[%c0_65, %c0_66, %c0_67] : memref<2x128x128xf32, #tpu.memory_space<vmem>>, vector<1x128x128xf32>
    %225 = vector.shape_cast %224 : vector<1x128x128xf32> to vector<128x128xf32>
    %cst_68 = arith.constant dense<0.000000e+00> : vector<16x128xf32>
    %226 = tpu.matmul %223, %225, %cst_68 {dimension_numbers = #tpu.dot_dimension_numbers<[1], [0], [0], [1], [0, 0, 1, 1], [], []>} : vector<16x128xf32>, vector<128x128xf32>, vector<16x128xf32> -> vector<16x128xf32>
    %c0_69 = arith.constant 0 : index
    %c0_70 = arith.constant 0 : index
    %c0_71 = arith.constant 0 : index
    %227 = vector.load %arg9[%c0_69, %c0_70, %c0_71] : memref<2x1x128xf32, #tpu.memory_space<vmem>>, vector<1x1x128xf32>
    %228 = vector.shape_cast %227 : vector<1x1x128xf32> to vector<1x128xf32>
    %229 = vector.broadcast %228 : vector<1x128xf32> to vector<16x128xf32>
    %230 = arith.addf %226, %229 : vector<16x128xf32>
    %231 = arith.addf %36, %230 : vector<16x128xf32>
    %c0_72 = arith.constant 0 : index
    %c0_73 = arith.constant 0 : index
    %c0_74 = arith.constant 0 : index
    %232 = vector.load %arg10[%c0_72, %c0_73, %c0_74] : memref<2x1x128xf32, #tpu.memory_space<vmem>>, vector<1x1x128xf32>
    %233 = vector.shape_cast %232 : vector<1x1x128xf32> to vector<1x128xf32>
    %c0_75 = arith.constant 0 : index
    %c0_76 = arith.constant 0 : index
    %c0_77 = arith.constant 0 : index
    %234 = vector.load %arg11[%c0_75, %c0_76, %c0_77] : memref<2x1x128xf32, #tpu.memory_space<vmem>>, vector<1x1x128xf32>
    %235 = vector.shape_cast %234 : vector<1x1x128xf32> to vector<1x128xf32>
    %cst_78 = arith.constant dense<0.000000e+00> : vector<16xf32>
    %236 = vector.multi_reduction <add>, %231, %cst_78 [1] : vector<16x128xf32> to vector<16xf32>
    %237 = vector.shape_cast %236 : vector<16xf32> to vector<16x1xf32>
    %cst_79 = arith.constant 1.280000e+02 : f32
    %238 = vector.broadcast %cst_79 : f32 to vector<16x1xf32>
    %239 = arith.divf %237, %238 : vector<16x1xf32>
    %240 = vector.broadcast %239 : vector<16x1xf32> to vector<16x128xf32>
    %241 = arith.subf %231, %240 : vector<16x128xf32>
    %242 = vector.broadcast %239 : vector<16x1xf32> to vector<16x128xf32>
    %243 = arith.subf %231, %242 : vector<16x128xf32>
    %244 = arith.mulf %241, %243 : vector<16x128xf32>
    %cst_80 = arith.constant dense<0.000000e+00> : vector<16xf32>
    %245 = vector.multi_reduction <add>, %244, %cst_80 [1] : vector<16x128xf32> to vector<16xf32>
    %246 = vector.shape_cast %245 : vector<16xf32> to vector<16x1xf32>
    %cst_81 = arith.constant 1.280000e+02 : f32
    %247 = vector.broadcast %cst_81 : f32 to vector<16x1xf32>
    %248 = arith.divf %246, %247 : vector<16x1xf32>
    %249 = vector.broadcast %239 : vector<16x1xf32> to vector<16x128xf32>
    %250 = arith.subf %231, %249 : vector<16x128xf32>
    %cst_82 = arith.constant 9.99999996E-13 : f32
    %251 = vector.broadcast %cst_82 : f32 to vector<16x1xf32>
    %252 = arith.addf %248, %251 : vector<16x1xf32>
    %253 = math.rsqrt %252 : vector<16x1xf32>
    %254 = vector.broadcast %253 : vector<16x1xf32> to vector<16x128xf32>
    %255 = arith.mulf %250, %254 : vector<16x128xf32>
    %256 = vector.broadcast %233 : vector<1x128xf32> to vector<16x128xf32>
    %257 = arith.mulf %255, %256 : vector<16x128xf32>
    %258 = vector.broadcast %235 : vector<1x128xf32> to vector<16x128xf32>
    %259 = arith.addf %257, %258 : vector<16x128xf32>
    %c0_83 = arith.constant 0 : index
    %c0_84 = arith.constant 0 : index
    %c0_85 = arith.constant 0 : index
    %260 = vector.load %arg12[%c0_83, %c0_84, %c0_85] : memref<2x128x256xf32, #tpu.memory_space<vmem>>, vector<1x128x256xf32>
    %261 = vector.shape_cast %260 : vector<1x128x256xf32> to vector<128x256xf32>
    %cst_86 = arith.constant dense<0.000000e+00> : vector<16x256xf32>
    %262 = tpu.matmul %259, %261, %cst_86 {dimension_numbers = #tpu.dot_dimension_numbers<[1], [0], [0], [1], [0, 0, 1, 1], [], []>} : vector<16x128xf32>, vector<128x256xf32>, vector<16x256xf32> -> vector<16x256xf32>
    %c0_87 = arith.constant 0 : index
    %c0_88 = arith.constant 0 : index
    %c0_89 = arith.constant 0 : index
    %263 = vector.load %arg13[%c0_87, %c0_88, %c0_89] : memref<2x1x256xf32, #tpu.memory_space<vmem>>, vector<1x1x256xf32>
    %264 = vector.shape_cast %263 : vector<1x1x256xf32> to vector<1x256xf32>
    %265 = vector.broadcast %264 : vector<1x256xf32> to vector<16x256xf32>
    %266 = arith.addf %262, %265 : vector<16x256xf32>
    %cst_90 = arith.constant 5.000000e-01 : f32
    %267 = vector.broadcast %cst_90 : f32 to vector<16x256xf32>
    %268 = arith.mulf %267, %266 : vector<16x256xf32>
    %cst_91 = arith.constant 4.471500e-02 : f32
    %269 = vector.broadcast %cst_91 : f32 to vector<16x256xf32>
    %270 = arith.mulf %269, %266 : vector<16x256xf32>
    %271 = arith.mulf %270, %266 : vector<16x256xf32>
    %272 = arith.mulf %271, %266 : vector<16x256xf32>
    %273 = arith.addf %266, %272 : vector<16x256xf32>
    %cst_92 = arith.constant 0.797884583 : f32
    %274 = vector.broadcast %cst_92 : f32 to vector<16x256xf32>
    %275 = arith.mulf %274, %273 : vector<16x256xf32>
    %276 = math.tanh %275 : vector<16x256xf32>
    %cst_93 = arith.constant 1.000000e+00 : f32
    %277 = vector.broadcast %cst_93 : f32 to vector<16x256xf32>
    %278 = arith.addf %277, %276 : vector<16x256xf32>
    %279 = arith.mulf %268, %278 : vector<16x256xf32>
    %c0_94 = arith.constant 0 : index
    %c0_95 = arith.constant 0 : index
    %c0_96 = arith.constant 0 : index
    %280 = vector.load %arg14[%c0_94, %c0_95, %c0_96] : memref<2x256x128xf32, #tpu.memory_space<vmem>>, vector<1x256x128xf32>
    %281 = vector.shape_cast %280 : vector<1x256x128xf32> to vector<256x128xf32>
    %cst_97 = arith.constant dense<0.000000e+00> : vector<16x128xf32>
    %282 = tpu.matmul %279, %281, %cst_97 {dimension_numbers = #tpu.dot_dimension_numbers<[1], [0], [0], [1], [0, 0, 1, 1], [], []>} : vector<16x256xf32>, vector<256x128xf32>, vector<16x128xf32> -> vector<16x128xf32>
    %c0_98 = arith.constant 0 : index
    %c0_99 = arith.constant 0 : index
    %c0_100 = arith.constant 0 : index
    %283 = vector.load %arg15[%c0_98, %c0_99, %c0_100] : memref<2x1x128xf32, #tpu.memory_space<vmem>>, vector<1x1x128xf32>
    %284 = vector.shape_cast %283 : vector<1x1x128xf32> to vector<1x128xf32>
    %285 = vector.broadcast %284 : vector<1x128xf32> to vector<16x128xf32>
    %286 = arith.addf %282, %285 : vector<16x128xf32>
    %287 = arith.addf %259, %286 : vector<16x128xf32>
    %c0_101 = arith.constant 0 : index
    %c0_102 = arith.constant 0 : index
    %c0_103 = arith.constant 0 : index
    %288 = vector.load %arg16[%c0_101, %c0_102, %c0_103] : memref<2x1x128xf32, #tpu.memory_space<vmem>>, vector<1x1x128xf32>
    %289 = vector.shape_cast %288 : vector<1x1x128xf32> to vector<1x128xf32>
    %c0_104 = arith.constant 0 : index
    %c0_105 = arith.constant 0 : index
    %c0_106 = arith.constant 0 : index
    %290 = vector.load %arg17[%c0_104, %c0_105, %c0_106] : memref<2x1x128xf32, #tpu.memory_space<vmem>>, vector<1x1x128xf32>
    %291 = vector.shape_cast %290 : vector<1x1x128xf32> to vector<1x128xf32>
    %cst_107 = arith.constant dense<0.000000e+00> : vector<16xf32>
    %292 = vector.multi_reduction <add>, %287, %cst_107 [1] : vector<16x128xf32> to vector<16xf32>
    %293 = vector.shape_cast %292 : vector<16xf32> to vector<16x1xf32>
    %cst_108 = arith.constant 1.280000e+02 : f32
    %294 = vector.broadcast %cst_108 : f32 to vector<16x1xf32>
    %295 = arith.divf %293, %294 : vector<16x1xf32>
    %296 = vector.broadcast %295 : vector<16x1xf32> to vector<16x128xf32>
    %297 = arith.subf %287, %296 : vector<16x128xf32>
    %298 = vector.broadcast %295 : vector<16x1xf32> to vector<16x128xf32>
    %299 = arith.subf %287, %298 : vector<16x128xf32>
    %300 = arith.mulf %297, %299 : vector<16x128xf32>
    %cst_109 = arith.constant dense<0.000000e+00> : vector<16xf32>
    %301 = vector.multi_reduction <add>, %300, %cst_109 [1] : vector<16x128xf32> to vector<16xf32>
    %302 = vector.shape_cast %301 : vector<16xf32> to vector<16x1xf32>
    %cst_110 = arith.constant 1.280000e+02 : f32
    %303 = vector.broadcast %cst_110 : f32 to vector<16x1xf32>
    %304 = arith.divf %302, %303 : vector<16x1xf32>
    %305 = vector.broadcast %295 : vector<16x1xf32> to vector<16x128xf32>
    %306 = arith.subf %287, %305 : vector<16x128xf32>
    %cst_111 = arith.constant 9.99999996E-13 : f32
    %307 = vector.broadcast %cst_111 : f32 to vector<16x1xf32>
    %308 = arith.addf %304, %307 : vector<16x1xf32>
    %309 = math.rsqrt %308 : vector<16x1xf32>
    %310 = vector.broadcast %309 : vector<16x1xf32> to vector<16x128xf32>
    %311 = arith.mulf %306, %310 : vector<16x128xf32>
    %312 = vector.broadcast %289 : vector<1x128xf32> to vector<16x128xf32>
    %313 = arith.mulf %311, %312 : vector<16x128xf32>
    %314 = vector.broadcast %291 : vector<1x128xf32> to vector<16x128xf32>
    %315 = arith.addf %313, %314 : vector<16x128xf32>
    %c1 = arith.constant 1 : index
    %c0_112 = arith.constant 0 : index
    %c0_113 = arith.constant 0 : index
    %316 = vector.load %arg6[%c1, %c0_112, %c0_113] : memref<2x128x384xf32, #tpu.memory_space<vmem>>, vector<1x128x384xf32>
    %317 = vector.shape_cast %316 : vector<1x128x384xf32> to vector<128x384xf32>
    %cst_114 = arith.constant dense<0.000000e+00> : vector<16x384xf32>
    %318 = tpu.matmul %315, %317, %cst_114 {dimension_numbers = #tpu.dot_dimension_numbers<[1], [0], [0], [1], [0, 0, 1, 1], [], []>} : vector<16x128xf32>, vector<128x384xf32>, vector<16x384xf32> -> vector<16x384xf32>
    %c1_115 = arith.constant 1 : index
    %c0_116 = arith.constant 0 : index
    %c0_117 = arith.constant 0 : index
    %319 = vector.load %arg7[%c1_115, %c0_116, %c0_117] : memref<2x1x384xf32, #tpu.memory_space<vmem>>, vector<1x1x384xf32>
    %320 = vector.shape_cast %319 : vector<1x1x384xf32> to vector<1x384xf32>
    %321 = vector.broadcast %320 : vector<1x384xf32> to vector<16x384xf32>
    %322 = arith.addf %318, %321 : vector<16x384xf32>
    %323 = vector.extract_strided_slice %322 {offsets = [0, 0], sizes = [16, 128], strides = [1, 1]} : vector<16x384xf32> to vector<16x128xf32>
    %324 = vector.extract_strided_slice %322 {offsets = [0, 128], sizes = [16, 128], strides = [1, 1]} : vector<16x384xf32> to vector<16x128xf32>
    %325 = vector.extract_strided_slice %322 {offsets = [0, 256], sizes = [16, 128], strides = [1, 1]} : vector<16x384xf32> to vector<16x128xf32>
    %326 = vector.extract_strided_slice %323 {offsets = [0, 0], sizes = [8, 128], strides = [1, 1]} : vector<16x128xf32> to vector<8x128xf32>
    %327 = vector.extract_strided_slice %324 {offsets = [0, 0], sizes = [8, 128], strides = [1, 1]} : vector<16x128xf32> to vector<8x128xf32>
    %328 = vector.extract_strided_slice %325 {offsets = [0, 0], sizes = [8, 128], strides = [1, 1]} : vector<16x128xf32> to vector<8x128xf32>
    %329 = vector.extract_strided_slice %42 {offsets = [0, 0], sizes = [1, 8], strides = [1, 1]} : vector<2x8xf32> to vector<1x8xf32>
    %330 = vector.extract_strided_slice %326 {offsets = [0, 0], sizes = [8, 32], strides = [1, 1]} : vector<8x128xf32> to vector<8x32xf32>
    %331 = vector.extract_strided_slice %327 {offsets = [0, 0], sizes = [8, 32], strides = [1, 1]} : vector<8x128xf32> to vector<8x32xf32>
    %332 = vector.extract_strided_slice %328 {offsets = [0, 0], sizes = [8, 32], strides = [1, 1]} : vector<8x128xf32> to vector<8x32xf32>
    %333 = tpu.transpose %331, [1, 0] : vector<8x32xf32> -> vector<32x8xf32>
    %cst_118 = arith.constant dense<0.000000e+00> : vector<8x8xf32>
    %334 = tpu.matmul %330, %333, %cst_118 {dimension_numbers = #tpu.dot_dimension_numbers<[1], [0], [0], [1], [0, 0, 1, 1], [], []>} : vector<8x32xf32>, vector<32x8xf32>, vector<8x8xf32> -> vector<8x8xf32>
    %cst_119 = arith.constant 0.176776692 : f32
    %335 = vector.broadcast %cst_119 : f32 to vector<8x8xf32>
    %336 = arith.mulf %334, %335 : vector<8x8xf32>
    %337 = vector.broadcast %329 : vector<1x8xf32> to vector<8x8xf32>
    %338 = arith.addf %336, %337 : vector<8x8xf32>
    %cst_120 = arith.constant dense<0xFF800000> : vector<8xf32>
    %339 = vector.multi_reduction <maximumf>, %338, %cst_120 [1] : vector<8x8xf32> to vector<8xf32>
    %340 = vector.shape_cast %339 : vector<8xf32> to vector<8x1xf32>
    %341 = vector.broadcast %340 : vector<8x1xf32> to vector<8x8xf32>
    %342 = arith.subf %338, %341 : vector<8x8xf32>
    %343 = math.exp %342 : vector<8x8xf32>
    %cst_121 = arith.constant dense<0.000000e+00> : vector<8xf32>
    %344 = vector.multi_reduction <add>, %343, %cst_121 [1] : vector<8x8xf32> to vector<8xf32>
    %345 = vector.shape_cast %344 : vector<8xf32> to vector<8x1xf32>
    %346 = tpu.reciprocal %345 {approx = true} : vector<8x1xf32> -> vector<8x1xf32>
    %347 = vector.broadcast %346 : vector<8x1xf32> to vector<8x8xf32>
    %348 = arith.mulf %343, %347 : vector<8x8xf32>
    %cst_122 = arith.constant dense<0.000000e+00> : vector<8x32xf32>
    %349 = tpu.matmul %348, %332, %cst_122 {dimension_numbers = #tpu.dot_dimension_numbers<[1], [0], [0], [1], [0, 0, 1, 1], [], []>} : vector<8x8xf32>, vector<8x32xf32>, vector<8x32xf32> -> vector<8x32xf32>
    %350 = vector.extract_strided_slice %326 {offsets = [0, 32], sizes = [8, 32], strides = [1, 1]} : vector<8x128xf32> to vector<8x32xf32>
    %351 = vector.extract_strided_slice %327 {offsets = [0, 32], sizes = [8, 32], strides = [1, 1]} : vector<8x128xf32> to vector<8x32xf32>
    %352 = vector.extract_strided_slice %328 {offsets = [0, 32], sizes = [8, 32], strides = [1, 1]} : vector<8x128xf32> to vector<8x32xf32>
    %353 = tpu.transpose %351, [1, 0] : vector<8x32xf32> -> vector<32x8xf32>
    %cst_123 = arith.constant dense<0.000000e+00> : vector<8x8xf32>
    %354 = tpu.matmul %350, %353, %cst_123 {dimension_numbers = #tpu.dot_dimension_numbers<[1], [0], [0], [1], [0, 0, 1, 1], [], []>} : vector<8x32xf32>, vector<32x8xf32>, vector<8x8xf32> -> vector<8x8xf32>
    %cst_124 = arith.constant 0.176776692 : f32
    %355 = vector.broadcast %cst_124 : f32 to vector<8x8xf32>
    %356 = arith.mulf %354, %355 : vector<8x8xf32>
    %357 = vector.broadcast %329 : vector<1x8xf32> to vector<8x8xf32>
    %358 = arith.addf %356, %357 : vector<8x8xf32>
    %cst_125 = arith.constant dense<0xFF800000> : vector<8xf32>
    %359 = vector.multi_reduction <maximumf>, %358, %cst_125 [1] : vector<8x8xf32> to vector<8xf32>
    %360 = vector.shape_cast %359 : vector<8xf32> to vector<8x1xf32>
    %361 = vector.broadcast %360 : vector<8x1xf32> to vector<8x8xf32>
    %362 = arith.subf %358, %361 : vector<8x8xf32>
    %363 = math.exp %362 : vector<8x8xf32>
    %cst_126 = arith.constant dense<0.000000e+00> : vector<8xf32>
    %364 = vector.multi_reduction <add>, %363, %cst_126 [1] : vector<8x8xf32> to vector<8xf32>
    %365 = vector.shape_cast %364 : vector<8xf32> to vector<8x1xf32>
    %366 = tpu.reciprocal %365 {approx = true} : vector<8x1xf32> -> vector<8x1xf32>
    %367 = vector.broadcast %366 : vector<8x1xf32> to vector<8x8xf32>
    %368 = arith.mulf %363, %367 : vector<8x8xf32>
    %cst_127 = arith.constant dense<0.000000e+00> : vector<8x32xf32>
    %369 = tpu.matmul %368, %352, %cst_127 {dimension_numbers = #tpu.dot_dimension_numbers<[1], [0], [0], [1], [0, 0, 1, 1], [], []>} : vector<8x8xf32>, vector<8x32xf32>, vector<8x32xf32> -> vector<8x32xf32>
    %370 = vector.extract_strided_slice %326 {offsets = [0, 64], sizes = [8, 32], strides = [1, 1]} : vector<8x128xf32> to vector<8x32xf32>
    %371 = vector.extract_strided_slice %327 {offsets = [0, 64], sizes = [8, 32], strides = [1, 1]} : vector<8x128xf32> to vector<8x32xf32>
    %372 = vector.extract_strided_slice %328 {offsets = [0, 64], sizes = [8, 32], strides = [1, 1]} : vector<8x128xf32> to vector<8x32xf32>
    %373 = tpu.transpose %371, [1, 0] : vector<8x32xf32> -> vector<32x8xf32>
    %cst_128 = arith.constant dense<0.000000e+00> : vector<8x8xf32>
    %374 = tpu.matmul %370, %373, %cst_128 {dimension_numbers = #tpu.dot_dimension_numbers<[1], [0], [0], [1], [0, 0, 1, 1], [], []>} : vector<8x32xf32>, vector<32x8xf32>, vector<8x8xf32> -> vector<8x8xf32>
    %cst_129 = arith.constant 0.176776692 : f32
    %375 = vector.broadcast %cst_129 : f32 to vector<8x8xf32>
    %376 = arith.mulf %374, %375 : vector<8x8xf32>
    %377 = vector.broadcast %329 : vector<1x8xf32> to vector<8x8xf32>
    %378 = arith.addf %376, %377 : vector<8x8xf32>
    %cst_130 = arith.constant dense<0xFF800000> : vector<8xf32>
    %379 = vector.multi_reduction <maximumf>, %378, %cst_130 [1] : vector<8x8xf32> to vector<8xf32>
    %380 = vector.shape_cast %379 : vector<8xf32> to vector<8x1xf32>
    %381 = vector.broadcast %380 : vector<8x1xf32> to vector<8x8xf32>
    %382 = arith.subf %378, %381 : vector<8x8xf32>
    %383 = math.exp %382 : vector<8x8xf32>
    %cst_131 = arith.constant dense<0.000000e+00> : vector<8xf32>
    %384 = vector.multi_reduction <add>, %383, %cst_131 [1] : vector<8x8xf32> to vector<8xf32>
    %385 = vector.shape_cast %384 : vector<8xf32> to vector<8x1xf32>
    %386 = tpu.reciprocal %385 {approx = true} : vector<8x1xf32> -> vector<8x1xf32>
    %387 = vector.broadcast %386 : vector<8x1xf32> to vector<8x8xf32>
    %388 = arith.mulf %383, %387 : vector<8x8xf32>
    %cst_132 = arith.constant dense<0.000000e+00> : vector<8x32xf32>
    %389 = tpu.matmul %388, %372, %cst_132 {dimension_numbers = #tpu.dot_dimension_numbers<[1], [0], [0], [1], [0, 0, 1, 1], [], []>} : vector<8x8xf32>, vector<8x32xf32>, vector<8x32xf32> -> vector<8x32xf32>
    %390 = vector.extract_strided_slice %326 {offsets = [0, 96], sizes = [8, 32], strides = [1, 1]} : vector<8x128xf32> to vector<8x32xf32>
    %391 = vector.extract_strided_slice %327 {offsets = [0, 96], sizes = [8, 32], strides = [1, 1]} : vector<8x128xf32> to vector<8x32xf32>
    %392 = vector.extract_strided_slice %328 {offsets = [0, 96], sizes = [8, 32], strides = [1, 1]} : vector<8x128xf32> to vector<8x32xf32>
    %393 = tpu.transpose %391, [1, 0] : vector<8x32xf32> -> vector<32x8xf32>
    %cst_133 = arith.constant dense<0.000000e+00> : vector<8x8xf32>
    %394 = tpu.matmul %390, %393, %cst_133 {dimension_numbers = #tpu.dot_dimension_numbers<[1], [0], [0], [1], [0, 0, 1, 1], [], []>} : vector<8x32xf32>, vector<32x8xf32>, vector<8x8xf32> -> vector<8x8xf32>
    %cst_134 = arith.constant 0.176776692 : f32
    %395 = vector.broadcast %cst_134 : f32 to vector<8x8xf32>
    %396 = arith.mulf %394, %395 : vector<8x8xf32>
    %397 = vector.broadcast %329 : vector<1x8xf32> to vector<8x8xf32>
    %398 = arith.addf %396, %397 : vector<8x8xf32>
    %cst_135 = arith.constant dense<0xFF800000> : vector<8xf32>
    %399 = vector.multi_reduction <maximumf>, %398, %cst_135 [1] : vector<8x8xf32> to vector<8xf32>
    %400 = vector.shape_cast %399 : vector<8xf32> to vector<8x1xf32>
    %401 = vector.broadcast %400 : vector<8x1xf32> to vector<8x8xf32>
    %402 = arith.subf %398, %401 : vector<8x8xf32>
    %403 = math.exp %402 : vector<8x8xf32>
    %cst_136 = arith.constant dense<0.000000e+00> : vector<8xf32>
    %404 = vector.multi_reduction <add>, %403, %cst_136 [1] : vector<8x8xf32> to vector<8xf32>
    %405 = vector.shape_cast %404 : vector<8xf32> to vector<8x1xf32>
    %406 = tpu.reciprocal %405 {approx = true} : vector<8x1xf32> -> vector<8x1xf32>
    %407 = vector.broadcast %406 : vector<8x1xf32> to vector<8x8xf32>
    %408 = arith.mulf %403, %407 : vector<8x8xf32>
    %cst_137 = arith.constant dense<0.000000e+00> : vector<8x32xf32>
    %409 = tpu.matmul %408, %392, %cst_137 {dimension_numbers = #tpu.dot_dimension_numbers<[1], [0], [0], [1], [0, 0, 1, 1], [], []>} : vector<8x8xf32>, vector<8x32xf32>, vector<8x32xf32> -> vector<8x32xf32>
    %410 = tpu.concatenate %349, %369, %389, %409 in 1 : vector<8x32xf32>, vector<8x32xf32>, vector<8x32xf32>, vector<8x32xf32> -> vector<8x128xf32>
    %411 = vector.extract_strided_slice %323 {offsets = [8, 0], sizes = [8, 128], strides = [1, 1]} : vector<16x128xf32> to vector<8x128xf32>
    %412 = vector.extract_strided_slice %324 {offsets = [8, 0], sizes = [8, 128], strides = [1, 1]} : vector<16x128xf32> to vector<8x128xf32>
    %413 = vector.extract_strided_slice %325 {offsets = [8, 0], sizes = [8, 128], strides = [1, 1]} : vector<16x128xf32> to vector<8x128xf32>
    %414 = vector.extract_strided_slice %42 {offsets = [1, 0], sizes = [1, 8], strides = [1, 1]} : vector<2x8xf32> to vector<1x8xf32>
    %415 = vector.extract_strided_slice %411 {offsets = [0, 0], sizes = [8, 32], strides = [1, 1]} : vector<8x128xf32> to vector<8x32xf32>
    %416 = vector.extract_strided_slice %412 {offsets = [0, 0], sizes = [8, 32], strides = [1, 1]} : vector<8x128xf32> to vector<8x32xf32>
    %417 = vector.extract_strided_slice %413 {offsets = [0, 0], sizes = [8, 32], strides = [1, 1]} : vector<8x128xf32> to vector<8x32xf32>
    %418 = tpu.transpose %416, [1, 0] : vector<8x32xf32> -> vector<32x8xf32>
    %cst_138 = arith.constant dense<0.000000e+00> : vector<8x8xf32>
    %419 = tpu.matmul %415, %418, %cst_138 {dimension_numbers = #tpu.dot_dimension_numbers<[1], [0], [0], [1], [0, 0, 1, 1], [], []>} : vector<8x32xf32>, vector<32x8xf32>, vector<8x8xf32> -> vector<8x8xf32>
    %cst_139 = arith.constant 0.176776692 : f32
    %420 = vector.broadcast %cst_139 : f32 to vector<8x8xf32>
    %421 = arith.mulf %419, %420 : vector<8x8xf32>
    %422 = vector.broadcast %414 : vector<1x8xf32> to vector<8x8xf32>
    %423 = arith.addf %421, %422 : vector<8x8xf32>
    %cst_140 = arith.constant dense<0xFF800000> : vector<8xf32>
    %424 = vector.multi_reduction <maximumf>, %423, %cst_140 [1] : vector<8x8xf32> to vector<8xf32>
    %425 = vector.shape_cast %424 : vector<8xf32> to vector<8x1xf32>
    %426 = vector.broadcast %425 : vector<8x1xf32> to vector<8x8xf32>
    %427 = arith.subf %423, %426 : vector<8x8xf32>
    %428 = math.exp %427 : vector<8x8xf32>
    %cst_141 = arith.constant dense<0.000000e+00> : vector<8xf32>
    %429 = vector.multi_reduction <add>, %428, %cst_141 [1] : vector<8x8xf32> to vector<8xf32>
    %430 = vector.shape_cast %429 : vector<8xf32> to vector<8x1xf32>
    %431 = tpu.reciprocal %430 {approx = true} : vector<8x1xf32> -> vector<8x1xf32>
    %432 = vector.broadcast %431 : vector<8x1xf32> to vector<8x8xf32>
    %433 = arith.mulf %428, %432 : vector<8x8xf32>
    %cst_142 = arith.constant dense<0.000000e+00> : vector<8x32xf32>
    %434 = tpu.matmul %433, %417, %cst_142 {dimension_numbers = #tpu.dot_dimension_numbers<[1], [0], [0], [1], [0, 0, 1, 1], [], []>} : vector<8x8xf32>, vector<8x32xf32>, vector<8x32xf32> -> vector<8x32xf32>
    %435 = vector.extract_strided_slice %411 {offsets = [0, 32], sizes = [8, 32], strides = [1, 1]} : vector<8x128xf32> to vector<8x32xf32>
    %436 = vector.extract_strided_slice %412 {offsets = [0, 32], sizes = [8, 32], strides = [1, 1]} : vector<8x128xf32> to vector<8x32xf32>
    %437 = vector.extract_strided_slice %413 {offsets = [0, 32], sizes = [8, 32], strides = [1, 1]} : vector<8x128xf32> to vector<8x32xf32>
    %438 = tpu.transpose %436, [1, 0] : vector<8x32xf32> -> vector<32x8xf32>
    %cst_143 = arith.constant dense<0.000000e+00> : vector<8x8xf32>
    %439 = tpu.matmul %435, %438, %cst_143 {dimension_numbers = #tpu.dot_dimension_numbers<[1], [0], [0], [1], [0, 0, 1, 1], [], []>} : vector<8x32xf32>, vector<32x8xf32>, vector<8x8xf32> -> vector<8x8xf32>
    %cst_144 = arith.constant 0.176776692 : f32
    %440 = vector.broadcast %cst_144 : f32 to vector<8x8xf32>
    %441 = arith.mulf %439, %440 : vector<8x8xf32>
    %442 = vector.broadcast %414 : vector<1x8xf32> to vector<8x8xf32>
    %443 = arith.addf %441, %442 : vector<8x8xf32>
    %cst_145 = arith.constant dense<0xFF800000> : vector<8xf32>
    %444 = vector.multi_reduction <maximumf>, %443, %cst_145 [1] : vector<8x8xf32> to vector<8xf32>
    %445 = vector.shape_cast %444 : vector<8xf32> to vector<8x1xf32>
    %446 = vector.broadcast %445 : vector<8x1xf32> to vector<8x8xf32>
    %447 = arith.subf %443, %446 : vector<8x8xf32>
    %448 = math.exp %447 : vector<8x8xf32>
    %cst_146 = arith.constant dense<0.000000e+00> : vector<8xf32>
    %449 = vector.multi_reduction <add>, %448, %cst_146 [1] : vector<8x8xf32> to vector<8xf32>
    %450 = vector.shape_cast %449 : vector<8xf32> to vector<8x1xf32>
    %451 = tpu.reciprocal %450 {approx = true} : vector<8x1xf32> -> vector<8x1xf32>
    %452 = vector.broadcast %451 : vector<8x1xf32> to vector<8x8xf32>
    %453 = arith.mulf %448, %452 : vector<8x8xf32>
    %cst_147 = arith.constant dense<0.000000e+00> : vector<8x32xf32>
    %454 = tpu.matmul %453, %437, %cst_147 {dimension_numbers = #tpu.dot_dimension_numbers<[1], [0], [0], [1], [0, 0, 1, 1], [], []>} : vector<8x8xf32>, vector<8x32xf32>, vector<8x32xf32> -> vector<8x32xf32>
    %455 = vector.extract_strided_slice %411 {offsets = [0, 64], sizes = [8, 32], strides = [1, 1]} : vector<8x128xf32> to vector<8x32xf32>
    %456 = vector.extract_strided_slice %412 {offsets = [0, 64], sizes = [8, 32], strides = [1, 1]} : vector<8x128xf32> to vector<8x32xf32>
    %457 = vector.extract_strided_slice %413 {offsets = [0, 64], sizes = [8, 32], strides = [1, 1]} : vector<8x128xf32> to vector<8x32xf32>
    %458 = tpu.transpose %456, [1, 0] : vector<8x32xf32> -> vector<32x8xf32>
    %cst_148 = arith.constant dense<0.000000e+00> : vector<8x8xf32>
    %459 = tpu.matmul %455, %458, %cst_148 {dimension_numbers = #tpu.dot_dimension_numbers<[1], [0], [0], [1], [0, 0, 1, 1], [], []>} : vector<8x32xf32>, vector<32x8xf32>, vector<8x8xf32> -> vector<8x8xf32>
    %cst_149 = arith.constant 0.176776692 : f32
    %460 = vector.broadcast %cst_149 : f32 to vector<8x8xf32>
    %461 = arith.mulf %459, %460 : vector<8x8xf32>
    %462 = vector.broadcast %414 : vector<1x8xf32> to vector<8x8xf32>
    %463 = arith.addf %461, %462 : vector<8x8xf32>
    %cst_150 = arith.constant dense<0xFF800000> : vector<8xf32>
    %464 = vector.multi_reduction <maximumf>, %463, %cst_150 [1] : vector<8x8xf32> to vector<8xf32>
    %465 = vector.shape_cast %464 : vector<8xf32> to vector<8x1xf32>
    %466 = vector.broadcast %465 : vector<8x1xf32> to vector<8x8xf32>
    %467 = arith.subf %463, %466 : vector<8x8xf32>
    %468 = math.exp %467 : vector<8x8xf32>
    %cst_151 = arith.constant dense<0.000000e+00> : vector<8xf32>
    %469 = vector.multi_reduction <add>, %468, %cst_151 [1] : vector<8x8xf32> to vector<8xf32>
    %470 = vector.shape_cast %469 : vector<8xf32> to vector<8x1xf32>
    %471 = tpu.reciprocal %470 {approx = true} : vector<8x1xf32> -> vector<8x1xf32>
    %472 = vector.broadcast %471 : vector<8x1xf32> to vector<8x8xf32>
    %473 = arith.mulf %468, %472 : vector<8x8xf32>
    %cst_152 = arith.constant dense<0.000000e+00> : vector<8x32xf32>
    %474 = tpu.matmul %473, %457, %cst_152 {dimension_numbers = #tpu.dot_dimension_numbers<[1], [0], [0], [1], [0, 0, 1, 1], [], []>} : vector<8x8xf32>, vector<8x32xf32>, vector<8x32xf32> -> vector<8x32xf32>
    %475 = vector.extract_strided_slice %411 {offsets = [0, 96], sizes = [8, 32], strides = [1, 1]} : vector<8x128xf32> to vector<8x32xf32>
    %476 = vector.extract_strided_slice %412 {offsets = [0, 96], sizes = [8, 32], strides = [1, 1]} : vector<8x128xf32> to vector<8x32xf32>
    %477 = vector.extract_strided_slice %413 {offsets = [0, 96], sizes = [8, 32], strides = [1, 1]} : vector<8x128xf32> to vector<8x32xf32>
    %478 = tpu.transpose %476, [1, 0] : vector<8x32xf32> -> vector<32x8xf32>
    %cst_153 = arith.constant dense<0.000000e+00> : vector<8x8xf32>
    %479 = tpu.matmul %475, %478, %cst_153 {dimension_numbers = #tpu.dot_dimension_numbers<[1], [0], [0], [1], [0, 0, 1, 1], [], []>} : vector<8x32xf32>, vector<32x8xf32>, vector<8x8xf32> -> vector<8x8xf32>
    %cst_154 = arith.constant 0.176776692 : f32
    %480 = vector.broadcast %cst_154 : f32 to vector<8x8xf32>
    %481 = arith.mulf %479, %480 : vector<8x8xf32>
    %482 = vector.broadcast %414 : vector<1x8xf32> to vector<8x8xf32>
    %483 = arith.addf %481, %482 : vector<8x8xf32>
    %cst_155 = arith.constant dense<0xFF800000> : vector<8xf32>
    %484 = vector.multi_reduction <maximumf>, %483, %cst_155 [1] : vector<8x8xf32> to vector<8xf32>
    %485 = vector.shape_cast %484 : vector<8xf32> to vector<8x1xf32>
    %486 = vector.broadcast %485 : vector<8x1xf32> to vector<8x8xf32>
    %487 = arith.subf %483, %486 : vector<8x8xf32>
    %488 = math.exp %487 : vector<8x8xf32>
    %cst_156 = arith.constant dense<0.000000e+00> : vector<8xf32>
    %489 = vector.multi_reduction <add>, %488, %cst_156 [1] : vector<8x8xf32> to vector<8xf32>
    %490 = vector.shape_cast %489 : vector<8xf32> to vector<8x1xf32>
    %491 = tpu.reciprocal %490 {approx = true} : vector<8x1xf32> -> vector<8x1xf32>
    %492 = vector.broadcast %491 : vector<8x1xf32> to vector<8x8xf32>
    %493 = arith.mulf %488, %492 : vector<8x8xf32>
    %cst_157 = arith.constant dense<0.000000e+00> : vector<8x32xf32>
    %494 = tpu.matmul %493, %477, %cst_157 {dimension_numbers = #tpu.dot_dimension_numbers<[1], [0], [0], [1], [0, 0, 1, 1], [], []>} : vector<8x8xf32>, vector<8x32xf32>, vector<8x32xf32> -> vector<8x32xf32>
    %495 = tpu.concatenate %434, %454, %474, %494 in 1 : vector<8x32xf32>, vector<8x32xf32>, vector<8x32xf32>, vector<8x32xf32> -> vector<8x128xf32>
    %496 = tpu.concatenate %410, %495 in 0 : vector<8x128xf32>, vector<8x128xf32> -> vector<16x128xf32>
    %c1_158 = arith.constant 1 : index
    %c0_159 = arith.constant 0 : index
    %c0_160 = arith.constant 0 : index
    %497 = vector.load %arg8[%c1_158, %c0_159, %c0_160] : memref<2x128x128xf32, #tpu.memory_space<vmem>>, vector<1x128x128xf32>
    %498 = vector.shape_cast %497 : vector<1x128x128xf32> to vector<128x128xf32>
    %cst_161 = arith.constant dense<0.000000e+00> : vector<16x128xf32>
    %499 = tpu.matmul %496, %498, %cst_161 {dimension_numbers = #tpu.dot_dimension_numbers<[1], [0], [0], [1], [0, 0, 1, 1], [], []>} : vector<16x128xf32>, vector<128x128xf32>, vector<16x128xf32> -> vector<16x128xf32>
    %c1_162 = arith.constant 1 : index
    %c0_163 = arith.constant 0 : index
    %c0_164 = arith.constant 0 : index
    %500 = vector.load %arg9[%c1_162, %c0_163, %c0_164] : memref<2x1x128xf32, #tpu.memory_space<vmem>>, vector<1x1x128xf32>
    %501 = vector.shape_cast %500 : vector<1x1x128xf32> to vector<1x128xf32>
    %502 = vector.broadcast %501 : vector<1x128xf32> to vector<16x128xf32>
    %503 = arith.addf %499, %502 : vector<16x128xf32>
    %504 = arith.addf %315, %503 : vector<16x128xf32>
    %c1_165 = arith.constant 1 : index
    %c0_166 = arith.constant 0 : index
    %c0_167 = arith.constant 0 : index
    %505 = vector.load %arg10[%c1_165, %c0_166, %c0_167] : memref<2x1x128xf32, #tpu.memory_space<vmem>>, vector<1x1x128xf32>
    %506 = vector.shape_cast %505 : vector<1x1x128xf32> to vector<1x128xf32>
    %c1_168 = arith.constant 1 : index
    %c0_169 = arith.constant 0 : index
    %c0_170 = arith.constant 0 : index
    %507 = vector.load %arg11[%c1_168, %c0_169, %c0_170] : memref<2x1x128xf32, #tpu.memory_space<vmem>>, vector<1x1x128xf32>
    %508 = vector.shape_cast %507 : vector<1x1x128xf32> to vector<1x128xf32>
    %cst_171 = arith.constant dense<0.000000e+00> : vector<16xf32>
    %509 = vector.multi_reduction <add>, %504, %cst_171 [1] : vector<16x128xf32> to vector<16xf32>
    %510 = vector.shape_cast %509 : vector<16xf32> to vector<16x1xf32>
    %cst_172 = arith.constant 1.280000e+02 : f32
    %511 = vector.broadcast %cst_172 : f32 to vector<16x1xf32>
    %512 = arith.divf %510, %511 : vector<16x1xf32>
    %513 = vector.broadcast %512 : vector<16x1xf32> to vector<16x128xf32>
    %514 = arith.subf %504, %513 : vector<16x128xf32>
    %515 = vector.broadcast %512 : vector<16x1xf32> to vector<16x128xf32>
    %516 = arith.subf %504, %515 : vector<16x128xf32>
    %517 = arith.mulf %514, %516 : vector<16x128xf32>
    %cst_173 = arith.constant dense<0.000000e+00> : vector<16xf32>
    %518 = vector.multi_reduction <add>, %517, %cst_173 [1] : vector<16x128xf32> to vector<16xf32>
    %519 = vector.shape_cast %518 : vector<16xf32> to vector<16x1xf32>
    %cst_174 = arith.constant 1.280000e+02 : f32
    %520 = vector.broadcast %cst_174 : f32 to vector<16x1xf32>
    %521 = arith.divf %519, %520 : vector<16x1xf32>
    %522 = vector.broadcast %512 : vector<16x1xf32> to vector<16x128xf32>
    %523 = arith.subf %504, %522 : vector<16x128xf32>
    %cst_175 = arith.constant 9.99999996E-13 : f32
    %524 = vector.broadcast %cst_175 : f32 to vector<16x1xf32>
    %525 = arith.addf %521, %524 : vector<16x1xf32>
    %526 = math.rsqrt %525 : vector<16x1xf32>
    %527 = vector.broadcast %526 : vector<16x1xf32> to vector<16x128xf32>
    %528 = arith.mulf %523, %527 : vector<16x128xf32>
    %529 = vector.broadcast %506 : vector<1x128xf32> to vector<16x128xf32>
    %530 = arith.mulf %528, %529 : vector<16x128xf32>
    %531 = vector.broadcast %508 : vector<1x128xf32> to vector<16x128xf32>
    %532 = arith.addf %530, %531 : vector<16x128xf32>
    %c1_176 = arith.constant 1 : index
    %c0_177 = arith.constant 0 : index
    %c0_178 = arith.constant 0 : index
    %533 = vector.load %arg12[%c1_176, %c0_177, %c0_178] : memref<2x128x256xf32, #tpu.memory_space<vmem>>, vector<1x128x256xf32>
    %534 = vector.shape_cast %533 : vector<1x128x256xf32> to vector<128x256xf32>
    %cst_179 = arith.constant dense<0.000000e+00> : vector<16x256xf32>
    %535 = tpu.matmul %532, %534, %cst_179 {dimension_numbers = #tpu.dot_dimension_numbers<[1], [0], [0], [1], [0, 0, 1, 1], [], []>} : vector<16x128xf32>, vector<128x256xf32>, vector<16x256xf32> -> vector<16x256xf32>
    %c1_180 = arith.constant 1 : index
    %c0_181 = arith.constant 0 : index
    %c0_182 = arith.constant 0 : index
    %536 = vector.load %arg13[%c1_180, %c0_181, %c0_182] : memref<2x1x256xf32, #tpu.memory_space<vmem>>, vector<1x1x256xf32>
    %537 = vector.shape_cast %536 : vector<1x1x256xf32> to vector<1x256xf32>
    %538 = vector.broadcast %537 : vector<1x256xf32> to vector<16x256xf32>
    %539 = arith.addf %535, %538 : vector<16x256xf32>
    %cst_183 = arith.constant 5.000000e-01 : f32
    %540 = vector.broadcast %cst_183 : f32 to vector<16x256xf32>
    %541 = arith.mulf %540, %539 : vector<16x256xf32>
    %cst_184 = arith.constant 4.471500e-02 : f32
    %542 = vector.broadcast %cst_184 : f32 to vector<16x256xf32>
    %543 = arith.mulf %542, %539 : vector<16x256xf32>
    %544 = arith.mulf %543, %539 : vector<16x256xf32>
    %545 = arith.mulf %544, %539 : vector<16x256xf32>
    %546 = arith.addf %539, %545 : vector<16x256xf32>
    %cst_185 = arith.constant 0.797884583 : f32
    %547 = vector.broadcast %cst_185 : f32 to vector<16x256xf32>
    %548 = arith.mulf %547, %546 : vector<16x256xf32>
    %549 = math.tanh %548 : vector<16x256xf32>
    %cst_186 = arith.constant 1.000000e+00 : f32
    %550 = vector.broadcast %cst_186 : f32 to vector<16x256xf32>
    %551 = arith.addf %550, %549 : vector<16x256xf32>
    %552 = arith.mulf %541, %551 : vector<16x256xf32>
    %c1_187 = arith.constant 1 : index
    %c0_188 = arith.constant 0 : index
    %c0_189 = arith.constant 0 : index
    %553 = vector.load %arg14[%c1_187, %c0_188, %c0_189] : memref<2x256x128xf32, #tpu.memory_space<vmem>>, vector<1x256x128xf32>
    %554 = vector.shape_cast %553 : vector<1x256x128xf32> to vector<256x128xf32>
    %cst_190 = arith.constant dense<0.000000e+00> : vector<16x128xf32>
    %555 = tpu.matmul %552, %554, %cst_190 {dimension_numbers = #tpu.dot_dimension_numbers<[1], [0], [0], [1], [0, 0, 1, 1], [], []>} : vector<16x256xf32>, vector<256x128xf32>, vector<16x128xf32> -> vector<16x128xf32>
    %c1_191 = arith.constant 1 : index
    %c0_192 = arith.constant 0 : index
    %c0_193 = arith.constant 0 : index
    %556 = vector.load %arg15[%c1_191, %c0_192, %c0_193] : memref<2x1x128xf32, #tpu.memory_space<vmem>>, vector<1x1x128xf32>
    %557 = vector.shape_cast %556 : vector<1x1x128xf32> to vector<1x128xf32>
    %558 = vector.broadcast %557 : vector<1x128xf32> to vector<16x128xf32>
    %559 = arith.addf %555, %558 : vector<16x128xf32>
    %560 = arith.addf %532, %559 : vector<16x128xf32>
    %c1_194 = arith.constant 1 : index
    %c0_195 = arith.constant 0 : index
    %c0_196 = arith.constant 0 : index
    %561 = vector.load %arg16[%c1_194, %c0_195, %c0_196] : memref<2x1x128xf32, #tpu.memory_space<vmem>>, vector<1x1x128xf32>
    %562 = vector.shape_cast %561 : vector<1x1x128xf32> to vector<1x128xf32>
    %c1_197 = arith.constant 1 : index
    %c0_198 = arith.constant 0 : index
    %c0_199 = arith.constant 0 : index
    %563 = vector.load %arg17[%c1_197, %c0_198, %c0_199] : memref<2x1x128xf32, #tpu.memory_space<vmem>>, vector<1x1x128xf32>
    %564 = vector.shape_cast %563 : vector<1x1x128xf32> to vector<1x128xf32>
    %cst_200 = arith.constant dense<0.000000e+00> : vector<16xf32>
    %565 = vector.multi_reduction <add>, %560, %cst_200 [1] : vector<16x128xf32> to vector<16xf32>
    %566 = vector.shape_cast %565 : vector<16xf32> to vector<16x1xf32>
    %cst_201 = arith.constant 1.280000e+02 : f32
    %567 = vector.broadcast %cst_201 : f32 to vector<16x1xf32>
    %568 = arith.divf %566, %567 : vector<16x1xf32>
    %569 = vector.broadcast %568 : vector<16x1xf32> to vector<16x128xf32>
    %570 = arith.subf %560, %569 : vector<16x128xf32>
    %571 = vector.broadcast %568 : vector<16x1xf32> to vector<16x128xf32>
    %572 = arith.subf %560, %571 : vector<16x128xf32>
    %573 = arith.mulf %570, %572 : vector<16x128xf32>
    %cst_202 = arith.constant dense<0.000000e+00> : vector<16xf32>
    %574 = vector.multi_reduction <add>, %573, %cst_202 [1] : vector<16x128xf32> to vector<16xf32>
    %575 = vector.shape_cast %574 : vector<16xf32> to vector<16x1xf32>
    %cst_203 = arith.constant 1.280000e+02 : f32
    %576 = vector.broadcast %cst_203 : f32 to vector<16x1xf32>
    %577 = arith.divf %575, %576 : vector<16x1xf32>
    %578 = vector.broadcast %568 : vector<16x1xf32> to vector<16x128xf32>
    %579 = arith.subf %560, %578 : vector<16x128xf32>
    %cst_204 = arith.constant 9.99999996E-13 : f32
    %580 = vector.broadcast %cst_204 : f32 to vector<16x1xf32>
    %581 = arith.addf %577, %580 : vector<16x1xf32>
    %582 = math.rsqrt %581 : vector<16x1xf32>
    %583 = vector.broadcast %582 : vector<16x1xf32> to vector<16x128xf32>
    %584 = arith.mulf %579, %583 : vector<16x128xf32>
    %585 = vector.broadcast %562 : vector<1x128xf32> to vector<16x128xf32>
    %586 = arith.mulf %584, %585 : vector<16x128xf32>
    %587 = vector.broadcast %564 : vector<1x128xf32> to vector<16x128xf32>
    %588 = arith.addf %586, %587 : vector<16x128xf32>
    %589 = vector.extract_strided_slice %588 {offsets = [0, 0], sizes = [1, 128], strides = [1, 1]} : vector<16x128xf32> to vector<1x128xf32>
    %590 = vector.extract_strided_slice %588 {offsets = [8, 0], sizes = [1, 128], strides = [1, 1]} : vector<16x128xf32> to vector<1x128xf32>
    %591 = tpu.concatenate %589, %590 in 0 : vector<1x128xf32>, vector<1x128xf32> -> vector<2x128xf32>
    %c0_205 = arith.constant 0 : index
    %c0_206 = arith.constant 0 : index
    %592 = vector.load %arg18[%c0_205, %c0_206] : memref<128x128xf32, #tpu.memory_space<vmem>>, vector<128x128xf32>
    %cst_207 = arith.constant dense<0.000000e+00> : vector<2x128xf32>
    %593 = tpu.matmul %591, %592, %cst_207 {dimension_numbers = #tpu.dot_dimension_numbers<[1], [0], [0], [1], [0, 0, 1, 1], [], []>} : vector<2x128xf32>, vector<128x128xf32>, vector<2x128xf32> -> vector<2x128xf32>
    %c0_208 = arith.constant 0 : index
    %c0_209 = arith.constant 0 : index
    %594 = vector.load %arg19[%c0_208, %c0_209] : memref<1x128xf32, #tpu.memory_space<vmem>>, vector<1x128xf32>
    %595 = vector.broadcast %594 : vector<1x128xf32> to vector<2x128xf32>
    %596 = arith.addf %593, %595 : vector<2x128xf32>
    %597 = math.tanh %596 : vector<2x128xf32>
    %c0_210 = arith.constant 0 : index
    %c0_211 = arith.constant 0 : index
    %598 = vector.load %arg20[%c0_210, %c0_211] : memref<128x128xf32, #tpu.memory_space<vmem>>, vector<128x128xf32>
    %cst_212 = arith.constant dense<0.000000e+00> : vector<2x128xf32>
    %599 = tpu.matmul %597, %598, %cst_212 {dimension_numbers = #tpu.dot_dimension_numbers<[1], [0], [0], [1], [0, 0, 1, 1], [], []>} : vector<2x128xf32>, vector<128x128xf32>, vector<2x128xf32> -> vector<2x128xf32>
    %c0_213 = arith.constant 0 : index
    %c0_214 = arith.constant 0 : index
    %600 = vector.load %arg21[%c0_213, %c0_214] : memref<1x128xf32, #tpu.memory_space<vmem>>, vector<1x128xf32>
    %601 = vector.broadcast %600 : vector<1x128xf32> to vector<2x128xf32>
    %602 = arith.addf %599, %601 : vector<2x128xf32>
    %cst_215 = arith.constant 0.000000e+00 : f32
    %603 = vector.broadcast %cst_215 : f32 to vector<2x128xf32>
    %604 = arith.maximumf %602, %603 : vector<2x128xf32>
    %c0_216 = arith.constant 0 : index
    %c0_217 = arith.constant 0 : index
    %605 = vector.load %arg22[%c0_216, %c0_217] : memref<128x128xf32, #tpu.memory_space<vmem>>, vector<128x128xf32>
    %cst_218 = arith.constant dense<0.000000e+00> : vector<2x128xf32>
    %606 = tpu.matmul %604, %605, %cst_218 {dimension_numbers = #tpu.dot_dimension_numbers<[1], [0], [0], [1], [0, 0, 1, 1], [], []>} : vector<2x128xf32>, vector<128x128xf32>, vector<2x128xf32> -> vector<2x128xf32>
    %c0_219 = arith.constant 0 : index
    %c0_220 = arith.constant 0 : index
    %607 = vector.load %arg23[%c0_219, %c0_220] : memref<1x128xf32, #tpu.memory_space<vmem>>, vector<1x128xf32>
    %608 = vector.broadcast %607 : vector<1x128xf32> to vector<2x128xf32>
    %609 = arith.addf %606, %608 : vector<2x128xf32>
    %cst_221 = arith.constant 0.000000e+00 : f32
    %610 = vector.broadcast %cst_221 : f32 to vector<2x128xf32>
    %611 = arith.maximumf %609, %610 : vector<2x128xf32>
    %c0_222 = arith.constant 0 : index
    %c0_223 = arith.constant 0 : index
    %612 = vector.load %arg24[%c0_222, %c0_223] : memref<128x128xf32, #tpu.memory_space<vmem>>, vector<128x128xf32>
    %cst_224 = arith.constant dense<0.000000e+00> : vector<2x128xf32>
    %613 = tpu.matmul %611, %612, %cst_224 {dimension_numbers = #tpu.dot_dimension_numbers<[1], [0], [0], [1], [0, 0, 1, 1], [], []>} : vector<2x128xf32>, vector<128x128xf32>, vector<2x128xf32> -> vector<2x128xf32>
    %c0_225 = arith.constant 0 : index
    %c0_226 = arith.constant 0 : index
    %614 = vector.load %arg25[%c0_225, %c0_226] : memref<1x128xf32, #tpu.memory_space<vmem>>, vector<1x128xf32>
    %615 = vector.broadcast %614 : vector<1x128xf32> to vector<2x128xf32>
    %616 = arith.addf %613, %615 : vector<2x128xf32>
    %617 = vector.extract_strided_slice %616 {offsets = [0, 0], sizes = [2, 4], strides = [1, 1]} : vector<2x128xf32> to vector<2x4xf32>
    %cst_227 = arith.constant dense<0xFF800000> : vector<2xf32>
    %618 = vector.multi_reduction <maximumf>, %617, %cst_227 [1] : vector<2x4xf32> to vector<2xf32>
    %619 = vector.shape_cast %618 : vector<2xf32> to vector<2x1xf32>
    %620 = vector.broadcast %619 : vector<2x1xf32> to vector<2x4xf32>
    %621 = arith.subf %617, %620 : vector<2x4xf32>
    %622 = math.exp %621 : vector<2x4xf32>
    %cst_228 = arith.constant dense<0.000000e+00> : vector<2xf32>
    %623 = vector.multi_reduction <add>, %622, %cst_228 [1] : vector<2x4xf32> to vector<2xf32>
    %624 = vector.shape_cast %623 : vector<2xf32> to vector<2x1xf32>
    %625 = tpu.reciprocal %624 {approx = true} : vector<2x1xf32> -> vector<2x1xf32>
    %626 = vector.broadcast %625 : vector<2x1xf32> to vector<2x4xf32>
    %627 = arith.mulf %622, %626 : vector<2x4xf32>
    %c0_229 = arith.constant 0 : index
    %c0_230 = arith.constant 0 : index
    %628 = vector.load %arg26[%c0_229, %c0_230] : memref<2x4xf32, #tpu.memory_space<vmem>>, vector<2x4xf32>
    tpu.vector_store %arg26[%c0_229, %c0_230], %627 {strides = array<i32>} : memref<2x4xf32, #tpu.memory_space<vmem>>, vector<2x4xf32>,
    return
  }
}

</mosaic_0001>

<llo_original>
// kernel: bert_net_forward.1
$region0: #{bert_net_forward.1}
  #allocation0 [shape = 'u32[]', space=smem, size = 0x4, offset = 0x4, fixed_abs, tag = 'smem constant byte address 0x4 - core index']
  #allocation1 [shape = 'u32[144,128]{1,0:T(1,128)}', space=vmem, size = 0x12000, scoped, tag = 'internal scratch']
  %s0 = inlined_call_operand.vmem [shape: s32[16,1], index: 0, kind: input, shape index: {}]
  %s1 = inlined_call_operand.vmem [shape: s32[2,8], index: 1, kind: input, shape index: {}]
  %s2 = inlined_call_operand.hbm [shape: f32[128,128], index: 2, kind: input, shape index: {}]
  %s3 = inlined_call_operand.vmem [shape: f32[8,128], index: 3, kind: input, shape index: {}]
  %s4 = inlined_call_operand.vmem [shape: f32[1,128], index: 4, kind: input, shape index: {}]
  %s5 = inlined_call_operand.vmem [shape: f32[1,128], index: 5, kind: input, shape index: {}]
  %s6 = inlined_call_operand.hbm [shape: f32[2,128,384], index: 6, kind: input, shape index: {}]
  %s7 = inlined_call_operand.vmem [shape: f32[2,1,384], index: 7, kind: input, shape index: {}]
  %s8 = inlined_call_operand.hbm [shape: f32[2,128,128], index: 8, kind: input, shape index: {}]
  %s9 = inlined_call_operand.vmem [shape: f32[2,1,128], index: 9, kind: input, shape index: {}]
  %s10 = inlined_call_operand.vmem [shape: f32[2,1,128], index: 10, kind: input, shape index: {}]
  %s11 = inlined_call_operand.vmem [shape: f32[2,1,128], index: 11, kind: input, shape index: {}]
  %s12 = inlined_call_operand.hbm [shape: f32[2,128,256], index: 12, kind: input, shape index: {}]
  %s13 = inlined_call_operand.vmem [shape: f32[2,1,256], index: 13, kind: input, shape index: {}]
  %s14 = inlined_call_operand.hbm [shape: f32[2,256,128], index: 14, kind: input, shape index: {}]
  %s15 = inlined_call_operand.hbm [shape: f32[2,1,128], index: 15, kind: input, shape index: {}]
  %s16 = inlined_call_operand.vmem [shape: f32[2,1,128], index: 16, kind: input, shape index: {}]
  %s17 = inlined_call_operand.vmem [shape: f32[2,1,128], index: 17, kind: input, shape index: {}]
  %s18 = inlined_call_operand.hbm [shape: f32[128,128], index: 18, kind: input, shape index: {}]
  %s19 = inlined_call_operand.vmem [shape: f32[1,128], index: 19, kind: input, shape index: {}]
  %s20 = inlined_call_operand.hbm [shape: f32[128,128], index: 20, kind: input, shape index: {}]
  %s21 = inlined_call_operand.hbm [shape: f32[1,128], index: 21, kind: input, shape index: {}]
  %s22 = inlined_call_operand.hbm [shape: f32[128,128], index: 22, kind: input, shape index: {}]
  %s23 = inlined_call_operand.vmem [shape: f32[1,128], index: 23, kind: input, shape index: {}]
  %s24 = inlined_call_operand.hbm [shape: f32[128,128], index: 24, kind: input, shape index: {}]
  %s25 = inlined_call_operand.vmem [shape: f32[1,128], index: 25, kind: input, shape index: {}]
  %s26 = inlined_call_operand.hbm [shape: f32[2,4], index: 26, kind: output, shape index: {}]
  %s27 = sld [smem:[#allocation0]]
  $region158: #{bert_net_forward.1} parent=0
    _
  %s29 = ssub.s32 1, %s27
  %s30 = scalar_select 0, %s29, %s27
  $region1: #{bert_net_forward.1} parent=0
    #allocation2 [shape = 'u8[65536]{0}', space=vmem, size = 0x10000, scoped, tag = 'input window, operand 2, single buffered']
    #allocation3 [shape = 's32[1]{0}', space=sflag, size = 0x4, scoped, tag = 'scoped memory for bert_net_forward.1']
    #allocation4 [shape = 's32[1]{0}', space=sflag, size = 0x4, scoped, tag = 'scoped memory for bert_net_forward.1']
    #allocation5 [shape = 'u8[393216]{0}', space=vmem, size = 0x60000, scoped, tag = 'input window, operand 6, single buffered']
    #allocation6 [shape = 's32[1]{0}', space=sflag, size = 0x4, scoped, tag = 'scoped memory for bert_net_forward.1']
    #allocation7 [shape = 'u8[131072]{0}', space=vmem, size = 0x20000, scoped, tag = 'input window, operand 8, single buffered']
    #allocation8 [shape = 'u8[262144]{0}', space=vmem, size = 0x40000, scoped, tag = 'input window, operand 12, single buffered']
    #allocation9 [shape = 's32[1]{0}', space=sflag, size = 0x4, scoped, tag = 'scoped memory for bert_net_forward.1']
    #allocation10 [shape = 'u8[262144]{0}', space=vmem, size = 0x40000, scoped, tag = 'input window, operand 14, single buffered']
    #allocation11 [shape = 'u8[1024]{0}', space=vmem, size = 0x400, scoped, tag = 'input window, operand 15, single buffered']
    #allocation12 [shape = 's32[1]{0}', space=sflag, size = 0x4, scoped, tag = 'scoped memory for bert_net_forward.1']
    #allocation13 [shape = 'u8[65536]{0}', space=vmem, size = 0x10000, scoped, tag = 'input window, operand 18, single buffered']
    #allocation14 [shape = 'u8[65536]{0}', space=vmem, size = 0x10000, scoped, tag = 'input window, operand 20, single buffered']
    #allocation15 [shape = 's32[1]{0}', space=sflag, size = 0x4, scoped, tag = 'scoped memory for bert_net_forward.1']
    #allocation16 [shape = 'u8[512]{0}', space=vmem, size = 0x400, scoped, tag = 'input window, operand 21, single buffered']
    #allocation17 [shape = 'u8[65536]{0}', space=vmem, size = 0x10000, scoped, tag = 'input window, operand 22, single buffered']
    #allocation18 [shape = 's32[1]{0}', space=sflag, size = 0x4, scoped, tag = 'scoped memory for bert_net_forward.1']
    #allocation19 [shape = 'u8[65536]{0}', space=vmem, size = 0x10000, scoped, tag = 'input window, operand 24, single buffered']
    #allocation20 [shape = 'u8[1024]{0}', space=vmem, size = 0x400, scoped, tag = 'output window, operand 0, single buffered']
    %31 = vsyncpa [#allocation3], 0
    %32 = vsyncpa [#allocation6], 0
    %33 = vsyncpa [#allocation9], 0
    %34 = vsyncpa [#allocation12], 0
    %35 = vsyncpa [#allocation15], 0
    %36 = vsyncpa [#allocation18], 0
    %37 = vsyncpa [#allocation4], 0
    // Predicated region
    $region2: #{bert_net_forward.1} parent=1 // pred_check
      _
    $region3: #{bert_net_forward.1} parent=1 // pred_check_branch
      %39 = sbr.rel (0) target = $region5
    $region4: #{bert_net_forward.1} parent=1 // pred_region
      _
    $region5: #{bert_net_forward.1} parent=1 // pred_fallthru
      _
    // Predicated region
    $region6: #{bert_net_forward.1} parent=1 // pred_check
      _
    $region7: #{bert_net_forward.1} parent=1 // pred_check_branch
      %41 = sbr.rel (0) target = $region9
    $region8: #{bert_net_forward.1} parent=1 // pred_region
      _
    $region9: #{bert_net_forward.1} parent=1 // pred_fallthru
      _
    // Predicated region
    $region10: #{bert_net_forward.1} parent=1 // pred_check
      _
    $region11: #{bert_net_forward.1} parent=1 // pred_check_branch
      %43 = sbr.rel (0) target = $region13
    $region12: #{bert_net_forward.1} parent=1 // pred_region
      %s45 = ssub.s32 2048, 2048
      %46 = vsyncadd [#allocation3], %s45
      %s47 = sshll.u32 [#allocation2], 4
      %s48 = int_to_ptr.vmem [resolvable:$true] %s47
      %53 = dma.hbm_to_vmem [thread:$0]  %s2, 2048, %s48, [#allocation3], 128, 128, 8
    $region13: #{bert_net_forward.1} parent=1 // pred_fallthru
      _
    // Predicated region
    $region14: #{bert_net_forward.1} parent=1 // pred_check
      _
    $region15: #{bert_net_forward.1} parent=1 // pred_check_branch
      %55 = sbr.rel (0) target = $region17
    $region16: #{bert_net_forward.1} parent=1 // pred_region
      _
    $region17: #{bert_net_forward.1} parent=1 // pred_fallthru
      _
    // Predicated region
    $region18: #{bert_net_forward.1} parent=1 // pred_check
      _
    $region19: #{bert_net_forward.1} parent=1 // pred_check_branch
      %57 = sbr.rel (0) target = $region21
    $region20: #{bert_net_forward.1} parent=1 // pred_region
      _
    $region21: #{bert_net_forward.1} parent=1 // pred_fallthru
      _
    // Predicated region
    $region22: #{bert_net_forward.1} parent=1 // pred_check
      _
    $region23: #{bert_net_forward.1} parent=1 // pred_check_branch
      %59 = sbr.rel (0) target = $region25
    $region24: #{bert_net_forward.1} parent=1 // pred_region
      _
    $region25: #{bert_net_forward.1} parent=1 // pred_fallthru
      _
    // Predicated region
    $region26: #{bert_net_forward.1} parent=1 // pred_check
      _
    $region27: #{bert_net_forward.1} parent=1 // pred_check_branch
      %61 = sbr.rel (0) target = $region29
    $region28: #{bert_net_forward.1} parent=1 // pred_region
      %s63 = ssub.s32 12288, 12288
      %64 = vsyncadd [#allocation6], %s63
      %s65 = sshll.u32 [#allocation5], 4
      %s66 = int_to_ptr.vmem [resolvable:$true] %s65
      %71 = dma.hbm_to_vmem [thread:$0]  %s6, 12288, %s66, [#allocation6], 384, 384, 24
    $region29: #{bert_net_forward.1} parent=1 // pred_fallthru
      _
    // Predicated region
    $region30: #{bert_net_forward.1} parent=1 // pred_check
      _
    $region31: #{bert_net_forward.1} parent=1 // pred_check_branch
      %73 = sbr.rel (0) target = $region33
    $region32: #{bert_net_forward.1} parent=1 // pred_region
      _
    $region33: #{bert_net_forward.1} parent=1 // pred_fallthru
      _
    // Predicated region
    $region34: #{bert_net_forward.1} parent=1 // pred_check
      _
    $region35: #{bert_net_forward.1} parent=1 // pred_check_branch
      %75 = sbr.rel (0) target = $region37
    $region36: #{bert_net_forward.1} parent=1 // pred_region
      %s77 = ssub.s32 4096, 4096
      %78 = vsyncadd [#allocation6], %s77
      %s79 = sshll.u32 [#allocation7], 4
      %s80 = int_to_ptr.vmem [resolvable:$true] %s79
      %85 = dma.hbm_to_vmem [thread:$0]  %s8, 4096, %s80, [#allocation6], 128, 128, 8
    $region37: #{bert_net_forward.1} parent=1 // pred_fallthru
      _
    // Predicated region
    $region38: #{bert_net_forward.1} parent=1 // pred_check
      _
    $region39: #{bert_net_forward.1} parent=1 // pred_check_branch
      %87 = sbr.rel (0) target = $region41
    $region40: #{bert_net_forward.1} parent=1 // pred_region
      _
    $region41: #{bert_net_forward.1} parent=1 // pred_fallthru
      _
    // Predicated region
    $region42: #{bert_net_forward.1} parent=1 // pred_check
      _
    $region43: #{bert_net_forward.1} parent=1 // pred_check_branch
      %89 = sbr.rel (0) target = $region45
    $region44: #{bert_net_forward.1} parent=1 // pred_region
      _
    $region45: #{bert_net_forward.1} parent=1 // pred_fallthru
      _
    // Predicated region
    $region46: #{bert_net_forward.1} parent=1 // pred_check
      _
    $region47: #{bert_net_forward.1} parent=1 // pred_check_branch
      %91 = sbr.rel (0) target = $region49
    $region48: #{bert_net_forward.1} parent=1 // pred_region
      _
    $region49: #{bert_net_forward.1} parent=1 // pred_fallthru
      _
    // Predicated region
    $region50: #{bert_net_forward.1} parent=1 // pred_check
      _
    $region51: #{bert_net_forward.1} parent=1 // pred_check_branch
      %93 = sbr.rel (0) target = $region53
    $region52: #{bert_net_forward.1} parent=1 // pred_region
      %s95 = ssub.s32 8192, 8192
      %96 = vsyncadd [#allocation9], %s95
      %s97 = sshll.u32 [#allocation8], 4
      %s98 = int_to_ptr.vmem [resolvable:$true] %s97
      %103 = dma.hbm_to_vmem [thread:$0]  %s12, 8192, %s98, [#allocation9], 256, 256, 16
    $region53: #{bert_net_forward.1} parent=1 // pred_fallthru
      _
    // Predicated region
    $region54: #{bert_net_forward.1} parent=1 // pred_check
      _
    $region55: #{bert_net_forward.1} parent=1 // pred_check_branch
      %105 = sbr.rel (0) target = $region57
    $region56: #{bert_net_forward.1} parent=1 // pred_region
      _
    $region57: #{bert_net_forward.1} parent=1 // pred_fallthru
      _
    // Predicated region
    $region58: #{bert_net_forward.1} parent=1 // pred_check
      _
    $region59: #{bert_net_forward.1} parent=1 // pred_check_branch
      %107 = sbr.rel (0) target = $region61
    $region60: #{bert_net_forward.1} parent=1 // pred_region
      %s109 = ssub.s32 8192, 8192
      %110 = vsyncadd [#allocation9], %s109
      %s111 = sshll.u32 [#allocation10], 4
      %s112 = int_to_ptr.vmem [resolvable:$true] %s111
      %117 = dma.hbm_to_vmem [thread:$0]  %s14, 8192, %s112, [#allocation9], 128, 128, 8
    $region61: #{bert_net_forward.1} parent=1 // pred_fallthru
      _
    // Predicated region
    $region62: #{bert_net_forward.1} parent=1 // pred_check
      _
    $region63: #{bert_net_forward.1} parent=1 // pred_check_branch
      %119 = sbr.rel (0) target = $region65
    $region64: #{bert_net_forward.1} parent=1 // pred_region
      %s121 = ssub.s32 32, 32
      %122 = vsyncadd [#allocation12], %s121
      %s123 = sshll.u32 [#allocation11], 4
      %s124 = int_to_ptr.vmem [resolvable:$true] %s123
      %129 = dma.hbm_to_vmem [thread:$0]  %s15, 32, %s124, [#allocation12], 16, 16, 1
    $region65: #{bert_net_forward.1} parent=1 // pred_fallthru
      _
    // Predicated region
    $region66: #{bert_net_forward.1} parent=1 // pred_check
      _
    $region67: #{bert_net_forward.1} parent=1 // pred_check_branch
      %131 = sbr.rel (0) target = $region69
    $region68: #{bert_net_forward.1} parent=1 // pred_region
      _
    $region69: #{bert_net_forward.1} parent=1 // pred_fallthru
      _
    // Predicated region
    $region70: #{bert_net_forward.1} parent=1 // pred_check
      _
    $region71: #{bert_net_forward.1} parent=1 // pred_check_branch
      %133 = sbr.rel (0) target = $region73
    $region72: #{bert_net_forward.1} parent=1 // pred_region
      _
    $region73: #{bert_net_forward.1} parent=1 // pred_fallthru
      _
    // Predicated region
    $region74: #{bert_net_forward.1} parent=1 // pred_check
      _
    $region75: #{bert_net_forward.1} parent=1 // pred_check_branch
      %135 = sbr.rel (0) target = $region77
    $region76: #{bert_net_forward.1} parent=1 // pred_region
      %s137 = ssub.s32 2048, 2048
      %138 = vsyncadd [#allocation12], %s137
      %s139 = sshll.u32 [#allocation13], 4
      %s140 = int_to_ptr.vmem [resolvable:$true] %s139
      %145 = dma.hbm_to_vmem [thread:$0]  %s18, 2048, %s140, [#allocation12], 128, 128, 8
    $region77: #{bert_net_forward.1} parent=1 // pred_fallthru
      _
    // Predicated region
    $region78: #{bert_net_forward.1} parent=1 // pred_check
      _
    $region79: #{bert_net_forward.1} parent=1 // pred_check_branch
      %147 = sbr.rel (0) target = $region81
    $region80: #{bert_net_forward.1} parent=1 // pred_region
      _
    $region81: #{bert_net_forward.1} parent=1 // pred_fallthru
      _
    // Predicated region
    $region82: #{bert_net_forward.1} parent=1 // pred_check
      _
    $region83: #{bert_net_forward.1} parent=1 // pred_check_branch
      %149 = sbr.rel (0) target = $region85
    $region84: #{bert_net_forward.1} parent=1 // pred_region
      %s151 = ssub.s32 2048, 2048
      %152 = vsyncadd [#allocation15], %s151
      %s153 = sshll.u32 [#allocation14], 4
      %s154 = int_to_ptr.vmem [resolvable:$true] %s153
      %159 = dma.hbm_to_vmem [thread:$0]  %s20, 2048, %s154, [#allocation15], 128, 128, 8
    $region85: #{bert_net_forward.1} parent=1 // pred_fallthru
      _
    // Predicated region
    $region86: #{bert_net_forward.1} parent=1 // pred_check
      _
    $region87: #{bert_net_forward.1} parent=1 // pred_check_branch
      %161 = sbr.rel (0) target = $region89
    $region88: #{bert_net_forward.1} parent=1 // pred_region
      %s163 = ssub.s32 16, 16
      %164 = vsyncadd [#allocation15], %s163
      %s166 = sshll.u32 [#allocation16], 4
      %s167 = int_to_ptr.vmem [resolvable:$true] %s166
      %169 = dma.hbm_to_vmem [thread:$0]  %s21, 16, %s167, [#allocation15]
    $region89: #{bert_net_forward.1} parent=1 // pred_fallthru
      _
    // Predicated region
    $region90: #{bert_net_forward.1} parent=1 // pred_check
      _
    $region91: #{bert_net_forward.1} parent=1 // pred_check_branch
      %171 = sbr.rel (0) target = $region93
    $region92: #{bert_net_forward.1} parent=1 // pred_region
      %s173 = ssub.s32 2048, 2048
      %174 = vsyncadd [#allocation18], %s173
      %s175 = sshll.u32 [#allocation17], 4
      %s176 = int_to_ptr.vmem [resolvable:$true] %s175
      %181 = dma.hbm_to_vmem [thread:$0]  %s22, 2048, %s176, [#allocation18], 128, 128, 8
    $region93: #{bert_net_forward.1} parent=1 // pred_fallthru
      _
    // Predicated region
    $region94: #{bert_net_forward.1} parent=1 // pred_check
      _
    $region95: #{bert_net_forward.1} parent=1 // pred_check_branch
      %183 = sbr.rel (0) target = $region97
    $region96: #{bert_net_forward.1} parent=1 // pred_region
      _
    $region97: #{bert_net_forward.1} parent=1 // pred_fallthru
      _
    // Predicated region
    $region98: #{bert_net_forward.1} parent=1 // pred_check
      _
    $region99: #{bert_net_forward.1} parent=1 // pred_check_branch
      %185 = sbr.rel (0) target = $region101
    $region100: #{bert_net_forward.1} parent=1 // pred_region
      %s187 = ssub.s32 2048, 2048
      %188 = vsyncadd [#allocation18], %s187
      %s189 = sshll.u32 [#allocation19], 4
      %s190 = int_to_ptr.vmem [resolvable:$true] %s189
      %195 = dma.hbm_to_vmem [thread:$0]  %s24, 2048, %s190, [#allocation18], 128, 128, 8
    $region101: #{bert_net_forward.1} parent=1 // pred_fallthru
      _
    // Predicated region
    $region102: #{bert_net_forward.1} parent=1 // pred_check
      _
    $region103: #{bert_net_forward.1} parent=1 // pred_check_branch
      %197 = sbr.rel (0) target = $region105
    $region104: #{bert_net_forward.1} parent=1 // pred_region
      _
    $region105: #{bert_net_forward.1} parent=1 // pred_fallthru
      _
    // Predicated region
    $region106: #{bert_net_forward.1} parent=1 // pred_check
      _
    $region107: #{bert_net_forward.1} parent=1 // pred_check_branch
      %199 = sbr.rel (0) target = $region109
    $region108: #{bert_net_forward.1} parent=1 // pred_region
      %200 = dma.done [#allocation3], 2048
    $region109: #{bert_net_forward.1} parent=1 // pred_fallthru
      _
    // Predicated region
    $region110: #{bert_net_forward.1} parent=1 // pred_check
      _
    $region111: #{bert_net_forward.1} parent=1 // pred_check_branch
      %202 = sbr.rel (0) target = $region113
    $region112: #{bert_net_forward.1} parent=1 // pred_region
      %203 = dma.done [#allocation6], 12288
    $region113: #{bert_net_forward.1} parent=1 // pred_fallthru
      _
    // Predicated region
    $region114: #{bert_net_forward.1} parent=1 // pred_check
      _
    $region115: #{bert_net_forward.1} parent=1 // pred_check_branch
      %205 = sbr.rel (0) target = $region117
    $region116: #{bert_net_forward.1} parent=1 // pred_region
      %206 = dma.done [#allocation6], 4096
    $region117: #{bert_net_forward.1} parent=1 // pred_fallthru
      _
    // Predicated region
    $region118: #{bert_net_forward.1} parent=1 // pred_check
      _
    $region119: #{bert_net_forward.1} parent=1 // pred_check_branch
      %208 = sbr.rel (0) target = $region121
    $region120: #{bert_net_forward.1} parent=1 // pred_region
      %209 = dma.done [#allocation9], 8192
    $region121: #{bert_net_forward.1} parent=1 // pred_fallthru
      _
    // Predicated region
    $region122: #{bert_net_forward.1} parent=1 // pred_check
      _
    $region123: #{bert_net_forward.1} parent=1 // pred_check_branch
      %211 = sbr.rel (0) target = $region125
    $region124: #{bert_net_forward.1} parent=1 // pred_region
      %212 = dma.done [#allocation9], 8192
    $region125: #{bert_net_forward.1} parent=1 // pred_fallthru
      _
    // Predicated region
    $region126: #{bert_net_forward.1} parent=1 // pred_check
      _
    $region127: #{bert_net_forward.1} parent=1 // pred_check_branch
      %214 = sbr.rel (0) target = $region129
    $region128: #{bert_net_forward.1} parent=1 // pred_region
      %215 = dma.done [#allocation12], 32
    $region129: #{bert_net_forward.1} parent=1 // pred_fallthru
      _
    // Predicated region
    $region130: #{bert_net_forward.1} parent=1 // pred_check
      _
    $region131: #{bert_net_forward.1} parent=1 // pred_check_branch
      %217 = sbr.rel (0) target = $region133
    $region132: #{bert_net_forward.1} parent=1 // pred_region
      %218 = dma.done [#allocation12], 2048
    $region133: #{bert_net_forward.1} parent=1 // pred_fallthru
      _
    // Predicated region
    $region134: #{bert_net_forward.1} parent=1 // pred_check
      _
    $region135: #{bert_net_forward.1} parent=1 // pred_check_branch
      %220 = sbr.rel (0) target = $region137
    $region136: #{bert_net_forward.1} parent=1 // pred_region
      %221 = dma.done [#allocation15], 2048
    $region137: #{bert_net_forward.1} parent=1 // pred_fallthru
      _
    // Predicated region
    $region138: #{bert_net_forward.1} parent=1 // pred_check
      _
    $region139: #{bert_net_forward.1} parent=1 // pred_check_branch
      %223 = sbr.rel (0) target = $region141
    $region140: #{bert_net_forward.1} parent=1 // pred_region
      %224 = dma.done [#allocation15], 16
    $region141: #{bert_net_forward.1} parent=1 // pred_fallthru
      _
    // Predicated region
    $region142: #{bert_net_forward.1} parent=1 // pred_check
      _
    $region143: #{bert_net_forward.1} parent=1 // pred_check_branch
      %226 = sbr.rel (0) target = $region145
    $region144: #{bert_net_forward.1} parent=1 // pred_region
      %227 = dma.done [#allocation18], 2048
    $region145: #{bert_net_forward.1} parent=1 // pred_fallthru
      _
    // Predicated region
    $region146: #{bert_net_forward.1} parent=1 // pred_check
      _
    $region147: #{bert_net_forward.1} parent=1 // pred_check_branch
      %229 = sbr.rel (0) target = $region149
    $region148: #{bert_net_forward.1} parent=1 // pred_region
      %230 = dma.done [#allocation18], 2048
    $region149: #{bert_net_forward.1} parent=1 // pred_fallthru
      _
    %v231 = vlaneseq
    %v232 = vand.u32 %v231, 127
    %v233 = vld [vmem:[%s0] sm:$0xff]
    %v234 = vld [vmem:[%s0 + $0x8] sm:$0xff]
    %235 = vset.pattern.permute.xlu0 0
    %236 = vperm.xlu0 %235, %v233
    %v237 = vpop.permute.xlu0 %236
    %238 = vset.pattern.permute.xlu0 0
    %239 = vperm.xlu0 %238, %v234
    %v240 = vpop.permute.xlu0 %239
    %vm241 = vcmp.eq.s32.totalorder %v232, %v237
    %vm242 = vcmp.eq.s32.totalorder %v232, %v240
    %v243 = vsel %vm241, 1, 0
    %v244 = vsel %vm242, 1, 0
    %v245 = vcvt.s32.f32 %v243
    %v246 = vcvt.s32.f32 %v244
    %v247 = vld [vmem:[#allocation2] sm:$0xff]
    %v248 = vld [vmem:[#allocation2 + $0x8] sm:$0xff]
    %v249 = vld [vmem:[#allocation2 + $0x10] sm:$0xff]
    %v250 = vld [vmem:[#allocation2 + $0x18] sm:$0xff]
    %v251 = vld [vmem:[#allocation2 + $0x20] sm:$0xff]
    %v252 = vld [vmem:[#allocation2 + $0x28] sm:$0xff]
    %v253 = vld [vmem:[#allocation2 + $0x30] sm:$0xff]
    %v254 = vld [vmem:[#allocation2 + $0x38] sm:$0xff]
    %v255 = vld [vmem:[#allocation2 + $0x40] sm:$0xff]
    %v256 = vld [vmem:[#allocation2 + $0x48] sm:$0xff]
    %v257 = vld [vmem:[#allocation2 + $0x50] sm:$0xff]
    %v258 = vld [vmem:[#allocation2 + $0x58] sm:$0xff]
    %v259 = vld [vmem:[#allocation2 + $0x60] sm:$0xff]
    %v260 = vld [vmem:[#allocation2 + $0x68] sm:$0xff]
    %v261 = vld [vmem:[#allocation2 + $0x70] sm:$0xff]
    %v262 = vld [vmem:[#allocation2 + $0x78] sm:$0xff]
    %v263 = vld [vmem:[%s3] sm:$0xff]
    %264 = vmatprep.subr.mxu0 0.0
    %265 = vmatpush1.msra.mxu0 %v247
    %266 = vmatprep.subr.mxu0 0.0
    %267 = vmatpush1.msra.mxu0 %v248
    %268 = vmatprep.subr.mxu0 0.0
    %269 = vmatpush1.msra.mxu0 %v249
    %270 = vmatprep.subr.mxu0 0.0
    %271 = vmatpush1.msra.mxu0 %v250
    %272 = vmatprep.subr.mxu0 0.0
    %273 = vmatpush1.msra.mxu0 %v251
    %274 = vmatprep.subr.mxu0 0.0
    %275 = vmatpush1.msra.mxu0 %v252
    %276 = vmatprep.subr.mxu0 0.0
    %277 = vmatpush1.msra.mxu0 %v253
    %278 = vmatprep.subr.mxu0 0.0
    %279 = vmatpush1.msra.mxu0 %v254
    %280 = vmatprep.subr.mxu0 0.0
    %281 = vmatpush1.msra.mxu0 %v255
    %282 = vmatprep.subr.mxu0 0.0
    %283 = vmatpush1.msra.mxu0 %v256
    %284 = vmatprep.subr.mxu0 0.0
    %285 = vmatpush1.msra.mxu0 %v257
    %286 = vmatprep.subr.mxu0 0.0
    %287 = vmatpush1.msra.mxu0 %v258
    %288 = vmatprep.subr.mxu0 0.0
    %289 = vmatpush1.msra.mxu0 %v259
    %290 = vmatprep.subr.mxu0 0.0
    %291 = vmatpush1.msra.mxu0 %v260
    %292 = vmatprep.subr.mxu0 0.0
    %293 = vmatpush1.msra.mxu0 %v261
    %294 = vmatprep.subr.mxu0 0.0
    %295 = vmatpush1.msra.mxu0 %v262
    %296 = vmatprep.subr.mxu0 0.0
    %297 = vmatpush1.msra.mxu0 0.0
    %298 = vmatprep.subr.mxu0 0.0
    %299 = vmatpush1.msra.mxu0 0.0
    %300 = vmatprep.subr.mxu0 0.0
    %301 = vmatpush1.msra.mxu0 0.0
    %302 = vmatprep.subr.mxu0 0.0
    %303 = vmatpush1.msra.mxu0 0.0
    %304 = vmatprep.subr.mxu0 0.0
    %305 = vmatpush1.msra.mxu0 0.0
    %306 = vmatprep.subr.mxu0 0.0
    %307 = vmatpush1.msra.mxu0 0.0
    %308 = vmatprep.subr.mxu0 0.0
    %309 = vmatpush1.msra.mxu0 0.0
    %310 = vmatprep.subr.mxu0 0.0
    %311 = vmatpush1.msra.mxu0 0.0
    %312 = vmatprep.subr.mxu0 0.0
    %313 = vmatpush1.msra.mxu0 0.0
    %314 = vmatprep.subr.mxu0 0.0
    %315 = vmatpush1.msra.mxu0 0.0
    %316 = vmatprep.subr.mxu0 0.0
    %317 = vmatpush1.msra.mxu0 0.0
    %318 = vmatprep.subr.mxu0 0.0
    %319 = vmatpush1.msra.mxu0 0.0
    %320 = vmatprep.subr.mxu0 0.0
    %321 = vmatpush1.msra.mxu0 0.0
    %322 = vmatprep.subr.mxu0 0.0
    %323 = vmatpush1.msra.mxu0 0.0
    %324 = vmatprep.subr.mxu0 0.0
    %325 = vmatpush1.msra.mxu0 0.0
    %326 = vmatprep.subr.mxu0 0.0
    %327 = vmatpush1.msra.mxu0 0.0
    %328 = vmatprep.mubr.f32.mxu0 0.0
    %329 = vmatmul.mubr.f32.gmra.mrb[0].mxu0 %v245
    %v330 = vpop.f32.mrb[0].mxu0
    %v331 = vadd.f32 %v263, %v330
    %v332 = vpop.f32.mrb[0].mxu0
    %333 = vmatprep.mubr.f32.mxu0 0.0
    %334 = vmatmul.mubr.f32.gmra.mrb[0].mxu0 %v246
    %v335 = vpop.f32.mrb[0].mxu0
    %v336 = vadd.f32 %v263, %v335
    %v337 = vpop.f32.mrb[0].mxu0
    %338 = vdwg.mxu0
    %v339 = vld [vmem:[%s4] sm:$0x1]
    %v340 = vld [vmem:[%s5] sm:$0x1]
    %341 = vadd.xlane.f32.xlu0 %v331
    %v342 = vpop.xlane.xlu0 %341
    %343 = vadd.xlane.f32.xlu0 %v336
    %v344 = vpop.xlane.xlu0 %343
    %v345 = vrcp.pop 128.0
    %v346 = vmul.f32 %v342, %v345
    %v347 = vmul.f32 %v344, %v345
    %v348 = vsub.f32 %v331, %v346
    %v349 = vsub.f32 %v336, %v347
    %v350 = vmul.f32 %v348, %v348
    %v351 = vmul.f32 %v349, %v349
    %352 = vadd.xlane.f32.xlu0 %v350
    %v353 = vpop.xlane.xlu0 %352
    %354 = vadd.xlane.f32.xlu0 %v351
    %v355 = vpop.xlane.xlu0 %354
    %v356 = vmul.f32 %v353, %v345
    %v357 = vmul.f32 %v355, %v345
    %v358 = vadd.f32 %v356, 1e-12
    %v359 = vadd.f32 %v357, 1e-12
    %v360 = vrsqrt.pop %v358
    %v361 = vrsqrt.pop %v359
    %v362 = vmul.f32 %v348, %v360
    %v363 = vmul.f32 %v349, %v361
    %v365 = vlaneseq
    %v366 = vshrl.u32 %v365, 7
    %v367 = vsub.s32 0, %v366
    %v368 = vrot.slane %v339, %v367
    %v370 = vmul.f32 %v362, %v368
    %v371 = vmul.f32 %v363, %v368
    %v373 = vlaneseq
    %v374 = vshrl.u32 %v373, 7
    %v375 = vsub.s32 0, %v374
    %v376 = vrot.slane %v340, %v375
    %v378 = vadd.f32 %v370, %v376
    %v379 = vadd.f32 %v371, %v376
    %v380 = vld [vmem:[%s1] sm:$0x3]
    %v381 = vcvt.s32.f32 %v380
    %v382 = vsub.f32 1.0, %v381
    %v383 = vmul.f32 %v382, -1e+09
    %v384 = vld [vmem:[#allocation5] sm:$0xff]
    %v385 = vld [vmem:[#allocation5 + $0x8] sm:$0xff]
    %v386 = vld [vmem:[#allocation5 + $0x10] sm:$0xff]
    %v387 = vld [vmem:[#allocation5 + $0x18] sm:$0xff]
    %v388 = vld [vmem:[#allocation5 + $0x20] sm:$0xff]
    %v389 = vld [vmem:[#allocation5 + $0x28] sm:$0xff]
    %v390 = vld [vmem:[#allocation5 + $0x30] sm:$0xff]
    %v391 = vld [vmem:[#allocation5 + $0x38] sm:$0xff]
    %v392 = vld [vmem:[#allocation5 + $0x40] sm:$0xff]
    %v393 = vld [vmem:[#allocation5 + $0x48] sm:$0xff]
    %v394 = vld [vmem:[#allocation5 + $0x50] sm:$0xff]
    %v395 = vld [vmem:[#allocation5 + $0x58] sm:$0xff]
    %v396 = vld [vmem:[#allocation5 + $0x60] sm:$0xff]
    %v397 = vld [vmem:[#allocation5 + $0x68] sm:$0xff]
    %v398 = vld [vmem:[#allocation5 + $0x70] sm:$0xff]
    %v399 = vld [vmem:[#allocation5 + $0x78] sm:$0xff]
    %v400 = vld [vmem:[#allocation5 + $0x80] sm:$0xff]
    %v401 = vld [vmem:[#allocation5 + $0x88] sm:$0xff]
    %v402 = vld [vmem:[#allocation5 + $0x90] sm:$0xff]
    %v403 = vld [vmem:[#allocation5 + $0x98] sm:$0xff]
    %v404 = vld [vmem:[#allocation5 + $0xa0] sm:$0xff]
    %v405 = vld [vmem:[#allocation5 + $0xa8] sm:$0xff]
    %v406 = vld [vmem:[#allocation5 + $0xb0] sm:$0xff]
    %v407 = vld [vmem:[#allocation5 + $0xb8] sm:$0xff]
    %v408 = vld [vmem:[#allocation5 + $0xc0] sm:$0xff]
    %v409 = vld [vmem:[#allocation5 + $0xc8] sm:$0xff]
    %v410 = vld [vmem:[#allocation5 + $0xd0] sm:$0xff]
    %v411 = vld [vmem:[#allocation5 + $0xd8] sm:$0xff]
    %v412 = vld [vmem:[#allocation5 + $0xe0] sm:$0xff]
    %v413 = vld [vmem:[#allocation5 + $0xe8] sm:$0xff]
    %v414 = vld [vmem:[#allocation5 + $0xf0] sm:$0xff]
    %v415 = vld [vmem:[#allocation5 + $0xf8] sm:$0xff]
    %v416 = vld [vmem:[#allocation5 + $0x100] sm:$0xff]
    %v417 = vld [vmem:[#allocation5 + $0x108] sm:$0xff]
    %v418 = vld [vmem:[#allocation5 + $0x110] sm:$0xff]
    %v419 = vld [vmem:[#allocation5 + $0x118] sm:$0xff]
    %v420 = vld [vmem:[#allocation5 + $0x120] sm:$0xff]
    %v421 = vld [vmem:[#allocation5 + $0x128] sm:$0xff]
    %v422 = vld [vmem:[#allocation5 + $0x130] sm:$0xff]
    %v423 = vld [vmem:[#allocation5 + $0x138] sm:$0xff]
    %v424 = vld [vmem:[#allocation5 + $0x140] sm:$0xff]
    %v425 = vld [vmem:[#allocation5 + $0x148] sm:$0xff]
    %v426 = vld [vmem:[#allocation5 + $0x150] sm:$0xff]
    %v427 = vld [vmem:[#allocation5 + $0x158] sm:$0xff]
    %v428 = vld [vmem:[#allocation5 + $0x160] sm:$0xff]
    %v429 = vld [vmem:[#allocation5 + $0x168] sm:$0xff]
    %v430 = vld [vmem:[#allocation5 + $0x170] sm:$0xff]
    %v431 = vld [vmem:[#allocation5 + $0x178] sm:$0xff]
    %v432 = vld [vmem:[%s7] sm:$0x7]
    %v434 = vlaneseq
    %v435 = vshrl.u32 %v434, 7
    %v436 = vsub.s32 0, %v435
    %v437 = vrot.slane %v432, %v436
    %v438 = vlaneseq
    %v439 = vshrl.u32 %v438, 7
    %v440 = vsub.s32 1, %v439
    %v441 = vrot.slane %v432, %v440
    %v442 = vlaneseq
    %v443 = vshrl.u32 %v442, 7
    %v444 = vsub.s32 2, %v443
    %v445 = vrot.slane %v432, %v444
    %449 = vmatprep.subr.mxu0 %v385
    %450 = vmatpush1.msra.mxu0 %v384
    %451 = vmatprep.subr.mxu0 %v388
    %452 = vmatpush1.msra.mxu0 %v387
    %453 = vmatprep.subr.mxu0 %v391
    %454 = vmatpush1.msra.mxu0 %v390
    %455 = vmatprep.subr.mxu0 %v394
    %456 = vmatpush1.msra.mxu0 %v393
    %457 = vmatprep.subr.mxu0 %v397
    %458 = vmatpush1.msra.mxu0 %v396
    %459 = vmatprep.subr.mxu0 %v400
    %460 = vmatpush1.msra.mxu0 %v399
    %461 = vmatprep.subr.mxu0 %v403
    %462 = vmatpush1.msra.mxu0 %v402
    %463 = vmatprep.subr.mxu0 %v406
    %464 = vmatpush1.msra.mxu0 %v405
    %465 = vmatprep.subr.mxu0 %v409
    %466 = vmatpush1.msra.mxu0 %v408
    %467 = vmatprep.subr.mxu0 %v412
    %468 = vmatpush1.msra.mxu0 %v411
    %469 = vmatprep.subr.mxu0 %v415
    %470 = vmatpush1.msra.mxu0 %v414
    %471 = vmatprep.subr.mxu0 %v418
    %472 = vmatpush1.msra.mxu0 %v417
    %473 = vmatprep.subr.mxu0 %v421
    %474 = vmatpush1.msra.mxu0 %v420
    %475 = vmatprep.subr.mxu0 %v424
    %476 = vmatpush1.msra.mxu0 %v423
    %477 = vmatprep.subr.mxu0 %v427
    %478 = vmatpush1.msra.mxu0 %v426
    %479 = vmatprep.subr.mxu0 %v430
    %480 = vmatpush1.msra.mxu0 %v429
    %481 = vmatprep.subr.mxu0 0.0
    %482 = vmatpush1.msra.mxu0 0.0
    %483 = vmatprep.subr.mxu0 0.0
    %484 = vmatpush1.msra.mxu0 0.0
    %485 = vmatprep.subr.mxu0 0.0
    %486 = vmatpush1.msra.mxu0 0.0
    %487 = vmatprep.subr.mxu0 0.0
    %488 = vmatpush1.msra.mxu0 0.0
    %489 = vmatprep.subr.mxu0 0.0
    %490 = vmatpush1.msra.mxu0 0.0
    %491 = vmatprep.subr.mxu0 0.0
    %492 = vmatpush1.msra.mxu0 0.0
    %493 = vmatprep.subr.mxu0 0.0
    %494 = vmatpush1.msra.mxu0 0.0
    %495 = vmatprep.subr.mxu0 0.0
    %496 = vmatpush1.msra.mxu0 0.0
    %497 = vmatprep.subr.mxu0 0.0
    %498 = vmatpush1.msra.mxu0 0.0
    %499 = vmatprep.subr.mxu0 0.0
    %500 = vmatpush1.msra.mxu0 0.0
    %501 = vmatprep.subr.mxu0 0.0
    %502 = vmatpush1.msra.mxu0 0.0
    %503 = vmatprep.subr.mxu0 0.0
    %504 = vmatpush1.msra.mxu0 0.0
    %505 = vmatprep.subr.mxu0 0.0
    %506 = vmatpush1.msra.mxu0 0.0
    %507 = vmatprep.subr.mxu0 0.0
    %508 = vmatpush1.msra.mxu0 0.0
    %509 = vmatprep.subr.mxu0 0.0
    %510 = vmatpush1.msra.mxu0 0.0
    %511 = vmatprep.subr.mxu0 0.0
    %512 = vmatpush1.msra.mxu0 0.0
    %513 = vmatprep.mubr.f32.mxu0 0.0
    %514 = vmatmul.mubr.f32.gmra.mrb[0].mxu0 %v378
    %v515 = vpop.f32.mrb[0].mxu0
    %v516 = vadd.f32 %v437, %v515
    %v517 = vpop.f32.mrb[0].mxu0
    %v518 = vadd.f32 %v441, %v517
    %519 = vmatprep.mubr.f32.mxu0 0.0
    %520 = vmatmul.mubr.f32.gmra.mrb[0].mxu0 %v379
    %v521 = vpop.f32.mrb[0].mxu0
    %v522 = vadd.f32 %v437, %v521
    %v523 = vpop.f32.mrb[0].mxu0
    %v524 = vadd.f32 %v441, %v523
    %525 = vdwg.mxu0
    %526 = vmatprep.subr.mxu0 0.0
    %527 = vmatpush1.msra.mxu0 %v386
    %528 = vmatprep.subr.mxu0 0.0
    %529 = vmatpush1.msra.mxu0 %v389
    %530 = vmatprep.subr.mxu0 0.0
    %531 = vmatpush1.msra.mxu0 %v392
    %532 = vmatprep.subr.mxu0 0.0
    %533 = vmatpush1.msra.mxu0 %v395
    %534 = vmatprep.subr.mxu0 0.0
    %535 = vmatpush1.msra.mxu0 %v398
    %536 = vmatprep.subr.mxu0 0.0
    %537 = vmatpush1.msra.mxu0 %v401
    %538 = vmatprep.subr.mxu0 0.0
    %539 = vmatpush1.msra.mxu0 %v404
    %540 = vmatprep.subr.mxu0 0.0
    %541 = vmatpush1.msra.mxu0 %v407
    %542 = vmatprep.subr.mxu0 0.0
    %543 = vmatpush1.msra.mxu0 %v410
    %544 = vmatprep.subr.mxu0 0.0
    %545 = vmatpush1.msra.mxu0 %v413
    %546 = vmatprep.subr.mxu0 0.0
    %547 = vmatpush1.msra.mxu0 %v416
    %548 = vmatprep.subr.mxu0 0.0
    %549 = vmatpush1.msra.mxu0 %v419
    %550 = vmatprep.subr.mxu0 0.0
    %551 = vmatpush1.msra.mxu0 %v422
    %552 = vmatprep.subr.mxu0 0.0
    %553 = vmatpush1.msra.mxu0 %v425
    %554 = vmatprep.subr.mxu0 0.0
    %555 = vmatpush1.msra.mxu0 %v428
    %556 = vmatprep.subr.mxu0 0.0
    %557 = vmatpush1.msra.mxu0 %v431
    %558 = vmatprep.subr.mxu0 0.0
    %559 = vmatpush1.msra.mxu0 0.0
    %560 = vmatprep.subr.mxu0 0.0
    %561 = vmatpush1.msra.mxu0 0.0
    %562 = vmatprep.subr.mxu0 0.0
    %563 = vmatpush1.msra.mxu0 0.0
    %564 = vmatprep.subr.mxu0 0.0
    %565 = vmatpush1.msra.mxu0 0.0
    %566 = vmatprep.subr.mxu0 0.0
    %567 = vmatpush1.msra.mxu0 0.0
    %568 = vmatprep.subr.mxu0 0.0
    %569 = vmatpush1.msra.mxu0 0.0
    %570 = vmatprep.subr.mxu0 0.0
    %571 = vmatpush1.msra.mxu0 0.0
    %572 = vmatprep.subr.mxu0 0.0
    %573 = vmatpush1.msra.mxu0 0.0
    %574 = vmatprep.subr.mxu0 0.0
    %575 = vmatpush1.msra.mxu0 0.0
    %576 = vmatprep.subr.mxu0 0.0
    %577 = vmatpush1.msra.mxu0 0.0
    %578 = vmatprep.subr.mxu0 0.0
    %579 = vmatpush1.msra.mxu0 0.0
    %580 = vmatprep.subr.mxu0 0.0
    %581 = vmatpush1.msra.mxu0 0.0
    %582 = vmatprep.subr.mxu0 0.0
    %583 = vmatpush1.msra.mxu0 0.0
    %584 = vmatprep.subr.mxu0 0.0
    %585 = vmatpush1.msra.mxu0 0.0
    %586 = vmatprep.subr.mxu0 0.0
    %587 = vmatpush1.msra.mxu0 0.0
    %588 = vmatprep.subr.mxu0 0.0
    %589 = vmatpush1.msra.mxu0 0.0
    %590 = vmatprep.mubr.f32.mxu0 0.0
    %591 = vmatmul.mubr.f32.gmra.mrb[0].mxu0 %v378
    %v592 = vpop.f32.mrb[0].mxu0
    %v593 = vadd.f32 %v445, %v592
    %v594 = vpop.f32.mrb[0].mxu0
    %595 = vmatprep.mubr.f32.mxu0 0.0
    %596 = vmatmul.mubr.f32.gmra.mrb[0].mxu0 %v379
    %v597 = vpop.f32.mrb[0].mxu0
    %v598 = vadd.f32 %v445, %v597
    %v599 = vpop.f32.mrb[0].mxu0
    %600 = vdwg.mxu0
    %vm601 = vcmask 261120
    %v603 = vsel %vm601, %v516, 0
    %v606 = vsel %vm601, %v518, 0
    %608 = vmatprep.subr.mxu0 0.0
    %609 = vmatpush1.xpose.msra.mxu0 %v606
    %610 = vmatprep.subr.mxu0 0.0
    %611 = vmatpush1.xpose.msra.mxu0 0.0
    %612 = vmatprep.subr.mxu0 0.0
    %613 = vmatpush1.xpose.msra.mxu0 0.0
    %614 = vmatprep.subr.mxu0 0.0
    %615 = vmatpush1.xpose.msra.mxu0 0.0
    %616 = vmatprep.subr.mxu0 0.0
    %617 = vmatpush1.xpose.msra.mxu0 0.0
    %618 = vmatprep.subr.mxu0 0.0
    %619 = vmatpush1.xpose.msra.mxu0 0.0
    %620 = vmatprep.subr.mxu0 0.0
    %621 = vmatpush1.xpose.msra.mxu0 0.0
    %622 = vmatprep.subr.mxu0 0.0
    %623 = vmatpush1.xpose.msra.mxu0 0.0
    %624 = vmatprep.subr.mxu0 0.0
    %625 = vmatpush1.xpose.msra.mxu0 0.0
    %626 = vmatprep.subr.mxu0 0.0
    %627 = vmatpush1.xpose.msra.mxu0 0.0
    %628 = vmatprep.subr.mxu0 0.0
    %629 = vmatpush1.xpose.msra.mxu0 0.0
    %630 = vmatprep.subr.mxu0 0.0
    %631 = vmatpush1.xpose.msra.mxu0 0.0
    %632 = vmatprep.subr.mxu0 0.0
    %633 = vmatpush1.xpose.msra.mxu0 0.0
    %634 = vmatprep.subr.mxu0 0.0
    %635 = vmatpush1.xpose.msra.mxu0 0.0
    %636 = vmatprep.subr.mxu0 0.0
    %637 = vmatpush1.xpose.msra.mxu0 0.0
    %638 = vmatprep.subr.mxu0 0.0
    %639 = vmatpush1.xpose.msra.mxu0 0.0
    %640 = vmatprep.subr.mxu0 0.0
    %641 = vmatpush1.xpose.msra.mxu0 0.0
    %642 = vmatprep.subr.mxu0 0.0
    %643 = vmatpush1.xpose.msra.mxu0 0.0
    %644 = vmatprep.subr.mxu0 0.0
    %645 = vmatpush1.xpose.msra.mxu0 0.0
    %646 = vmatprep.subr.mxu0 0.0
    %647 = vmatpush1.xpose.msra.mxu0 0.0
    %648 = vmatprep.subr.mxu0 0.0
    %649 = vmatpush1.xpose.msra.mxu0 0.0
    %650 = vmatprep.subr.mxu0 0.0
    %651 = vmatpush1.xpose.msra.mxu0 0.0
    %652 = vmatprep.subr.mxu0 0.0
    %653 = vmatpush1.xpose.msra.mxu0 0.0
    %654 = vmatprep.subr.mxu0 0.0
    %655 = vmatpush1.xpose.msra.mxu0 0.0
    %656 = vmatprep.subr.mxu0 0.0
    %657 = vmatpush1.xpose.msra.mxu0 0.0
    %658 = vmatprep.subr.mxu0 0.0
    %659 = vmatpush1.xpose.msra.mxu0 0.0
    %660 = vmatprep.subr.mxu0 0.0
    %661 = vmatpush1.xpose.msra.mxu0 0.0
    %662 = vmatprep.subr.mxu0 0.0
    %663 = vmatpush1.xpose.msra.mxu0 0.0
    %664 = vmatprep.subr.mxu0 0.0
    %665 = vmatpush1.xpose.msra.mxu0 0.0
    %666 = vmatprep.subr.mxu0 0.0
    %667 = vmatpush1.xpose.msra.mxu0 0.0
    %668 = vmatprep.subr.mxu0 0.0
    %669 = vmatpush1.xpose.msra.mxu0 0.0
    %670 = vmatprep.subr.mxu0 0.0
    %671 = vmatpush1.xpose.msra.mxu0 0.0
    %672 = vmatprep.mubr.f32.mxu0 0.0
    %673 = vmatmul.mubr.f32.gmra.mrb[0].mxu0 %v603
    %v674 = vpop.f32.mrb[0].mxu0
    %v675 = vadd.f32 0.0, %v674
    %v676 = vpop.f32.mrb[0].mxu0
    %677 = vdwg.mxu0
    %v678 = vmul.f32 %v675, 0.17677669
    %v679 = vlaneseq
    %v680 = vshrl.u32 %v679, 7
    %v681 = vsub.s32 0, %v680
    %v682 = vrot.slane %v383, %v681
    %v683 = vadd.f32 %v678, %v682
    %vm684 = vcmask 64512
    %v685 = vsel %vm684, %v683, -inf
    %686 = vmax.xlane.f32.xlu0 %v685
    %v687 = vpop.xlane.xlu0 %686
    %v688 = vsub.f32 %v683, %v687
    %v689 = vmul.f32 %v688, 1.442695
    %v690 = vpow.pop %v689
    %v691 = vsel %vm684, %v690, 0.0
    %692 = vadd.xlane.f32.xlu0 %v691
    %v693 = vpop.xlane.xlu0 %692
    %v694 = vrcp.pop %v693
    %v695 = vmul.f32 %v690, %v694
    %v697 = vsel %vm684, %v695, 0
    %699 = vmatprep.subr.mxu0 0.0
    %700 = vmatpush1.msra.mxu0 %v593
    %701 = vmatprep.subr.mxu0 0.0
    %702 = vmatpush1.msra.mxu0 0.0
    %703 = vmatprep.subr.mxu0 0.0
    %704 = vmatpush1.msra.mxu0 0.0
    %705 = vmatprep.subr.mxu0 0.0
    %706 = vmatpush1.msra.mxu0 0.0
    %707 = vmatprep.subr.mxu0 0.0
    %708 = vmatpush1.msra.mxu0 0.0
    %709 = vmatprep.subr.mxu0 0.0
    %710 = vmatpush1.msra.mxu0 0.0
    %711 = vmatprep.subr.mxu0 0.0
    %712 = vmatpush1.msra.mxu0 0.0
    %713 = vmatprep.subr.mxu0 0.0
    %714 = vmatpush1.msra.mxu0 0.0
    %715 = vmatprep.subr.mxu0 0.0
    %716 = vmatpush1.msra.mxu0 0.0
    %717 = vmatprep.subr.mxu0 0.0
    %718 = vmatpush1.msra.mxu0 0.0
    %719 = vmatprep.subr.mxu0 0.0
    %720 = vmatpush1.msra.mxu0 0.0
    %721 = vmatprep.subr.mxu0 0.0
    %722 = vmatpush1.msra.mxu0 0.0
    %723 = vmatprep.subr.mxu0 0.0
    %724 = vmatpush1.msra.mxu0 0.0
    %725 = vmatprep.subr.mxu0 0.0
    %726 = vmatpush1.msra.mxu0 0.0
    %727 = vmatprep.subr.mxu0 0.0
    %728 = vmatpush1.msra.mxu0 0.0
    %729 = vmatprep.subr.mxu0 0.0
    %730 = vmatpush1.msra.mxu0 0.0
    %731 = vmatprep.subr.mxu0 0.0
    %732 = vmatpush1.msra.mxu0 0.0
    %733 = vmatprep.subr.mxu0 0.0
    %734 = vmatpush1.msra.mxu0 0.0
    %735 = vmatprep.subr.mxu0 0.0
    %736 = vmatpush1.msra.mxu0 0.0
    %737 = vmatprep.subr.mxu0 0.0
    %738 = vmatpush1.msra.mxu0 0.0
    %739 = vmatprep.subr.mxu0 0.0
    %740 = vmatpush1.msra.mxu0 0.0
    %741 = vmatprep.subr.mxu0 0.0
    %742 = vmatpush1.msra.mxu0 0.0
    %743 = vmatprep.subr.mxu0 0.0
    %744 = vmatpush1.msra.mxu0 0.0
    %745 = vmatprep.subr.mxu0 0.0
    %746 = vmatpush1.msra.mxu0 0.0
    %747 = vmatprep.subr.mxu0 0.0
    %748 = vmatpush1.msra.mxu0 0.0
    %749 = vmatprep.subr.mxu0 0.0
    %750 = vmatpush1.msra.mxu0 0.0
    %751 = vmatprep.subr.mxu0 0.0
    %752 = vmatpush1.msra.mxu0 0.0
    %753 = vmatprep.subr.mxu0 0.0
    %754 = vmatpush1.msra.mxu0 0.0
    %755 = vmatprep.subr.mxu0 0.0
    %756 = vmatpush1.msra.mxu0 0.0
    %757 = vmatprep.subr.mxu0 0.0
    %758 = vmatpush1.msra.mxu0 0.0
    %759 = vmatprep.subr.mxu0 0.0
    %760 = vmatpush1.msra.mxu0 0.0
    %761 = vmatprep.subr.mxu0 0.0
    %762 = vmatpush1.msra.mxu0 0.0
    %763 = vmatprep.mubr.f32.mxu0 0.0
    %764 = vmatmul.mubr.f32.gmra.mrb[0].mxu0 %v697
    %v765 = vpop.f32.mrb[0].mxu0
    %v766 = vadd.f32 0.0, %v765
    %v767 = vpop.f32.mrb[0].mxu0
    %768 = vdwg.mxu0
    %769 = vrot.lane.b32.xlu0 %v516, 96
    %v770 = vpop.permute.xlu0 %769
    %771 = vrot.lane.b32.xlu0 %v518, 96
    %v772 = vpop.permute.xlu0 %771
    %v773 = vsel %vm601, %v770, 0
    %v775 = vsel %vm601, %v772, 0
    %777 = vmatprep.subr.mxu0 0.0
    %778 = vmatpush1.xpose.msra.mxu0 %v775
    %779 = vmatprep.subr.mxu0 0.0
    %780 = vmatpush1.xpose.msra.mxu0 0.0
    %781 = vmatprep.subr.mxu0 0.0
    %782 = vmatpush1.xpose.msra.mxu0 0.0
    %783 = vmatprep.subr.mxu0 0.0
    %784 = vmatpush1.xpose.msra.mxu0 0.0
    %785 = vmatprep.subr.mxu0 0.0
    %786 = vmatpush1.xpose.msra.mxu0 0.0
    %787 = vmatprep.subr.mxu0 0.0
    %788 = vmatpush1.xpose.msra.mxu0 0.0
    %789 = vmatprep.subr.mxu0 0.0
    %790 = vmatpush1.xpose.msra.mxu0 0.0
    %791 = vmatprep.subr.mxu0 0.0
    %792 = vmatpush1.xpose.msra.mxu0 0.0
    %793 = vmatprep.subr.mxu0 0.0
    %794 = vmatpush1.xpose.msra.mxu0 0.0
    %795 = vmatprep.subr.mxu0 0.0
    %796 = vmatpush1.xpose.msra.mxu0 0.0
    %797 = vmatprep.subr.mxu0 0.0
    %798 = vmatpush1.xpose.msra.mxu0 0.0
    %799 = vmatprep.subr.mxu0 0.0
    %800 = vmatpush1.xpose.msra.mxu0 0.0
    %801 = vmatprep.subr.mxu0 0.0
    %802 = vmatpush1.xpose.msra.mxu0 0.0
    %803 = vmatprep.subr.mxu0 0.0
    %804 = vmatpush1.xpose.msra.mxu0 0.0
    %805 = vmatprep.subr.mxu0 0.0
    %806 = vmatpush1.xpose.msra.mxu0 0.0
    %807 = vmatprep.subr.mxu0 0.0
    %808 = vmatpush1.xpose.msra.mxu0 0.0
    %809 = vmatprep.subr.mxu0 0.0
    %810 = vmatpush1.xpose.msra.mxu0 0.0
    %811 = vmatprep.subr.mxu0 0.0
    %812 = vmatpush1.xpose.msra.mxu0 0.0
    %813 = vmatprep.subr.mxu0 0.0
    %814 = vmatpush1.xpose.msra.mxu0 0.0
    %815 = vmatprep.subr.mxu0 0.0
    %816 = vmatpush1.xpose.msra.mxu0 0.0
    %817 = vmatprep.subr.mxu0 0.0
    %818 = vmatpush1.xpose.msra.mxu0 0.0
    %819 = vmatprep.subr.mxu0 0.0
    %820 = vmatpush1.xpose.msra.mxu0 0.0
    %821 = vmatprep.subr.mxu0 0.0
    %822 = vmatpush1.xpose.msra.mxu0 0.0
    %823 = vmatprep.subr.mxu0 0.0
    %824 = vmatpush1.xpose.msra.mxu0 0.0
    %825 = vmatprep.subr.mxu0 0.0
    %826 = vmatpush1.xpose.msra.mxu0 0.0
    %827 = vmatprep.subr.mxu0 0.0
    %828 = vmatpush1.xpose.msra.mxu0 0.0
    %829 = vmatprep.subr.mxu0 0.0
    %830 = vmatpush1.xpose.msra.mxu0 0.0
    %831 = vmatprep.subr.mxu0 0.0
    %832 = vmatpush1.xpose.msra.mxu0 0.0
    %833 = vmatprep.subr.mxu0 0.0
    %834 = vmatpush1.xpose.msra.mxu0 0.0
    %835 = vmatprep.subr.mxu0 0.0
    %836 = vmatpush1.xpose.msra.mxu0 0.0
    %837 = vmatprep.subr.mxu0 0.0
    %838 = vmatpush1.xpose.msra.mxu0 0.0
    %839 = vmatprep.subr.mxu0 0.0
    %840 = vmatpush1.xpose.msra.mxu0 0.0
    %841 = vmatprep.mubr.f32.mxu0 0.0
    %842 = vmatmul.mubr.f32.gmra.mrb[0].mxu0 %v773
    %v843 = vpop.f32.mrb[0].mxu0
    %v844 = vadd.f32 0.0, %v843
    %v845 = vpop.f32.mrb[0].mxu0
    %846 = vdwg.mxu0
    %v847 = vmul.f32 %v844, 0.17677669
    %v848 = vadd.f32 %v847, %v682
    %v849 = vsel %vm684, %v848, -inf
    %850 = vmax.xlane.f32.xlu0 %v849
    %v851 = vpop.xlane.xlu0 %850
    %v852 = vsub.f32 %v848, %v851
    %v853 = vmul.f32 %v852, 1.442695
    %v854 = vpow.pop %v853
    %v855 = vsel %vm684, %v854, 0.0
    %856 = vadd.xlane.f32.xlu0 %v855
    %v857 = vpop.xlane.xlu0 %856
    %v858 = vrcp.pop %v857
    %v859 = vmul.f32 %v854, %v858
    %861 = vrot.lane.b32.xlu0 %v593, 96
    %v862 = vpop.permute.xlu0 %861
    %v865 = vsel %vm684, %v859, 0
    %867 = vmatprep.subr.mxu0 0.0
    %868 = vmatpush1.msra.mxu0 %v862
    %869 = vmatprep.subr.mxu0 0.0
    %870 = vmatpush1.msra.mxu0 0.0
    %871 = vmatprep.subr.mxu0 0.0
    %872 = vmatpush1.msra.mxu0 0.0
    %873 = vmatprep.subr.mxu0 0.0
    %874 = vmatpush1.msra.mxu0 0.0
    %875 = vmatprep.subr.mxu0 0.0
    %876 = vmatpush1.msra.mxu0 0.0
    %877 = vmatprep.subr.mxu0 0.0
    %878 = vmatpush1.msra.mxu0 0.0
    %879 = vmatprep.subr.mxu0 0.0
    %880 = vmatpush1.msra.mxu0 0.0
    %881 = vmatprep.subr.mxu0 0.0
    %882 = vmatpush1.msra.mxu0 0.0
    %883 = vmatprep.subr.mxu0 0.0
    %884 = vmatpush1.msra.mxu0 0.0
    %885 = vmatprep.subr.mxu0 0.0
    %886 = vmatpush1.msra.mxu0 0.0
    %887 = vmatprep.subr.mxu0 0.0
    %888 = vmatpush1.msra.mxu0 0.0
    %889 = vmatprep.subr.mxu0 0.0
    %890 = vmatpush1.msra.mxu0 0.0
    %891 = vmatprep.subr.mxu0 0.0
    %892 = vmatpush1.msra.mxu0 0.0
    %893 = vmatprep.subr.mxu0 0.0
    %894 = vmatpush1.msra.mxu0 0.0
    %895 = vmatprep.subr.mxu0 0.0
    %896 = vmatpush1.msra.mxu0 0.0
    %897 = vmatprep.subr.mxu0 0.0
    %898 = vmatpush1.msra.mxu0 0.0
    %899 = vmatprep.subr.mxu0 0.0
    %900 = vmatpush1.msra.mxu0 0.0
    %901 = vmatprep.subr.mxu0 0.0
    %902 = vmatpush1.msra.mxu0 0.0
    %903 = vmatprep.subr.mxu0 0.0
    %904 = vmatpush1.msra.mxu0 0.0
    %905 = vmatprep.subr.mxu0 0.0
    %906 = vmatpush1.msra.mxu0 0.0
    %907 = vmatprep.subr.mxu0 0.0
    %908 = vmatpush1.msra.mxu0 0.0
    %909 = vmatprep.subr.mxu0 0.0
    %910 = vmatpush1.msra.mxu0 0.0
    %911 = vmatprep.subr.mxu0 0.0
    %912 = vmatpush1.msra.mxu0 0.0
    %913 = vmatprep.subr.mxu0 0.0
    %914 = vmatpush1.msra.mxu0 0.0
    %915 = vmatprep.subr.mxu0 0.0
    %916 = vmatpush1.msra.mxu0 0.0
    %917 = vmatprep.subr.mxu0 0.0
    %918 = vmatpush1.msra.mxu0 0.0
    %919 = vmatprep.subr.mxu0 0.0
    %920 = vmatpush1.msra.mxu0 0.0
    %921 = vmatprep.subr.mxu0 0.0
    %922 = vmatpush1.msra.mxu0 0.0
    %923 = vmatprep.subr.mxu0 0.0
    %924 = vmatpush1.msra.mxu0 0.0
    %925 = vmatprep.subr.mxu0 0.0
    %926 = vmatpush1.msra.mxu0 0.0
    %927 = vmatprep.subr.mxu0 0.0
    %928 = vmatpush1.msra.mxu0 0.0
    %929 = vmatprep.subr.mxu0 0.0
    %930 = vmatpush1.msra.mxu0 0.0
    %931 = vmatprep.mubr.f32.mxu0 0.0
    %932 = vmatmul.mubr.f32.gmra.mrb[0].mxu0 %v865
    %v933 = vpop.f32.mrb[0].mxu0
    %v934 = vadd.f32 0.0, %v933
    %v935 = vpop.f32.mrb[0].mxu0
    %936 = vdwg.mxu0
    %937 = vrot.lane.b32.xlu0 %v516, 64
    %v938 = vpop.permute.xlu0 %937
    %939 = vrot.lane.b32.xlu0 %v518, 64
    %v940 = vpop.permute.xlu0 %939
    %v941 = vsel %vm601, %v938, 0
    %v943 = vsel %vm601, %v940, 0
    %945 = vmatprep.subr.mxu0 0.0
    %946 = vmatpush1.xpose.msra.mxu0 %v943
    %947 = vmatprep.subr.mxu0 0.0
    %948 = vmatpush1.xpose.msra.mxu0 0.0
    %949 = vmatprep.subr.mxu0 0.0
    %950 = vmatpush1.xpose.msra.mxu0 0.0
    %951 = vmatprep.subr.mxu0 0.0
    %952 = vmatpush1.xpose.msra.mxu0 0.0
    %953 = vmatprep.subr.mxu0 0.0
    %954 = vmatpush1.xpose.msra.mxu0 0.0
    %955 = vmatprep.subr.mxu0 0.0
    %956 = vmatpush1.xpose.msra.mxu0 0.0
    %957 = vmatprep.subr.mxu0 0.0
    %958 = vmatpush1.xpose.msra.mxu0 0.0
    %959 = vmatprep.subr.mxu0 0.0
    %960 = vmatpush1.xpose.msra.mxu0 0.0
    %961 = vmatprep.subr.mxu0 0.0
    %962 = vmatpush1.xpose.msra.mxu0 0.0
    %963 = vmatprep.subr.mxu0 0.0
    %964 = vmatpush1.xpose.msra.mxu0 0.0
    %965 = vmatprep.subr.mxu0 0.0
    %966 = vmatpush1.xpose.msra.mxu0 0.0
    %967 = vmatprep.subr.mxu0 0.0
    %968 = vmatpush1.xpose.msra.mxu0 0.0
    %969 = vmatprep.subr.mxu0 0.0
    %970 = vmatpush1.xpose.msra.mxu0 0.0
    %971 = vmatprep.subr.mxu0 0.0
    %972 = vmatpush1.xpose.msra.mxu0 0.0
    %973 = vmatprep.subr.mxu0 0.0
    %974 = vmatpush1.xpose.msra.mxu0 0.0
    %975 = vmatprep.subr.mxu0 0.0
    %976 = vmatpush1.xpose.msra.mxu0 0.0
    %977 = vmatprep.subr.mxu0 0.0
    %978 = vmatpush1.xpose.msra.mxu0 0.0
    %979 = vmatprep.subr.mxu0 0.0
    %980 = vmatpush1.xpose.msra.mxu0 0.0
    %981 = vmatprep.subr.mxu0 0.0
    %982 = vmatpush1.xpose.msra.mxu0 0.0
    %983 = vmatprep.subr.mxu0 0.0
    %984 = vmatpush1.xpose.msra.mxu0 0.0
    %985 = vmatprep.subr.mxu0 0.0
    %986 = vmatpush1.xpose.msra.mxu0 0.0
    %987 = vmatprep.subr.mxu0 0.0
    %988 = vmatpush1.xpose.msra.mxu0 0.0
    %989 = vmatprep.subr.mxu0 0.0
    %990 = vmatpush1.xpose.msra.mxu0 0.0
    %991 = vmatprep.subr.mxu0 0.0
    %992 = vmatpush1.xpose.msra.mxu0 0.0
    %993 = vmatprep.subr.mxu0 0.0
    %994 = vmatpush1.xpose.msra.mxu0 0.0
    %995 = vmatprep.subr.mxu0 0.0
    %996 = vmatpush1.xpose.msra.mxu0 0.0
    %997 = vmatprep.subr.mxu0 0.0
    %998 = vmatpush1.xpose.msra.mxu0 0.0
    %999 = vmatprep.subr.mxu0 0.0
    %1000 = vmatpush1.xpose.msra.mxu0 0.0
    %1001 = vmatprep.subr.mxu0 0.0
    %1002 = vmatpush1.xpose.msra.mxu0 0.0
    %1003 = vmatprep.subr.mxu0 0.0
    %1004 = vmatpush1.xpose.msra.mxu0 0.0
    %1005 = vmatprep.subr.mxu0 0.0
    %1006 = vmatpush1.xpose.msra.mxu0 0.0
    %1007 = vmatprep.subr.mxu0 0.0
    %1008 = vmatpush1.xpose.msra.mxu0 0.0
    %1009 = vmatprep.mubr.f32.mxu0 0.0
    %1010 = vmatmul.mubr.f32.gmra.mrb[0].mxu0 %v941
    %v1011 = vpop.f32.mrb[0].mxu0
    %v1012 = vadd.f32 0.0, %v1011
    %v1013 = vpop.f32.mrb[0].mxu0
    %1014 = vdwg.mxu0
    %v1015 = vmul.f32 %v1012, 0.17677669
    %v1016 = vadd.f32 %v1015, %v682
    %v1017 = vsel %vm684, %v1016, -inf
    %1018 = vmax.xlane.f32.xlu0 %v1017
    %v1019 = vpop.xlane.xlu0 %1018
    %v1020 = vsub.f32 %v1016, %v1019
    %v1021 = vmul.f32 %v1020, 1.442695
    %v1022 = vpow.pop %v1021
    %v1023 = vsel %vm684, %v1022, 0.0
    %1024 = vadd.xlane.f32.xlu0 %v1023
    %v1025 = vpop.xlane.xlu0 %1024
    %v1026 = vrcp.pop %v1025
    %v1027 = vmul.f32 %v1022, %v1026
    %1028 = vrot.lane.b32.xlu0 %v593, 64
    %v1029 = vpop.permute.xlu0 %1028
    %v1032 = vsel %vm684, %v1027, 0
    %1034 = vmatprep.subr.mxu0 0.0
    %1035 = vmatpush1.msra.mxu0 %v1029
    %1036 = vmatprep.subr.mxu0 0.0
    %1037 = vmatpush1.msra.mxu0 0.0
    %1038 = vmatprep.subr.mxu0 0.0
    %1039 = vmatpush1.msra.mxu0 0.0
    %1040 = vmatprep.subr.mxu0 0.0
    %1041 = vmatpush1.msra.mxu0 0.0
    %1042 = vmatprep.subr.mxu0 0.0
    %1043 = vmatpush1.msra.mxu0 0.0
    %1044 = vmatprep.subr.mxu0 0.0
    %1045 = vmatpush1.msra.mxu0 0.0
    %1046 = vmatprep.subr.mxu0 0.0
    %1047 = vmatpush1.msra.mxu0 0.0
    %1048 = vmatprep.subr.mxu0 0.0
    %1049 = vmatpush1.msra.mxu0 0.0
    %1050 = vmatprep.subr.mxu0 0.0
    %1051 = vmatpush1.msra.mxu0 0.0
    %1052 = vmatprep.subr.mxu0 0.0
    %1053 = vmatpush1.msra.mxu0 0.0
    %1054 = vmatprep.subr.mxu0 0.0
    %1055 = vmatpush1.msra.mxu0 0.0
    %1056 = vmatprep.subr.mxu0 0.0
    %1057 = vmatpush1.msra.mxu0 0.0
    %1058 = vmatprep.subr.mxu0 0.0
    %1059 = vmatpush1.msra.mxu0 0.0
    %1060 = vmatprep.subr.mxu0 0.0
    %1061 = vmatpush1.msra.mxu0 0.0
    %1062 = vmatprep.subr.mxu0 0.0
    %1063 = vmatpush1.msra.mxu0 0.0
    %1064 = vmatprep.subr.mxu0 0.0
    %1065 = vmatpush1.msra.mxu0 0.0
    %1066 = vmatprep.subr.mxu0 0.0
    %1067 = vmatpush1.msra.mxu0 0.0
    %1068 = vmatprep.subr.mxu0 0.0
    %1069 = vmatpush1.msra.mxu0 0.0
    %1070 = vmatprep.subr.mxu0 0.0
    %1071 = vmatpush1.msra.mxu0 0.0
    %1072 = vmatprep.subr.mxu0 0.0
    %1073 = vmatpush1.msra.mxu0 0.0
    %1074 = vmatprep.subr.mxu0 0.0
    %1075 = vmatpush1.msra.mxu0 0.0
    %1076 = vmatprep.subr.mxu0 0.0
    %1077 = vmatpush1.msra.mxu0 0.0
    %1078 = vmatprep.subr.mxu0 0.0
    %1079 = vmatpush1.msra.mxu0 0.0
    %1080 = vmatprep.subr.mxu0 0.0
    %1081 = vmatpush1.msra.mxu0 0.0
    %1082 = vmatprep.subr.mxu0 0.0
    %1083 = vmatpush1.msra.mxu0 0.0
    %1084 = vmatprep.subr.mxu0 0.0
    %1085 = vmatpush1.msra.mxu0 0.0
    %1086 = vmatprep.subr.mxu0 0.0
    %1087 = vmatpush1.msra.mxu0 0.0
    %1088 = vmatprep.subr.mxu0 0.0
    %1089 = vmatpush1.msra.mxu0 0.0
    %1090 = vmatprep.subr.mxu0 0.0
    %1091 = vmatpush1.msra.mxu0 0.0
    %1092 = vmatprep.subr.mxu0 0.0
    %1093 = vmatpush1.msra.mxu0 0.0
    %1094 = vmatprep.subr.mxu0 0.0
    %1095 = vmatpush1.msra.mxu0 0.0
    %1096 = vmatprep.subr.mxu0 0.0
    %1097 = vmatpush1.msra.mxu0 0.0
    %1098 = vmatprep.mubr.f32.mxu0 0.0
    %1099 = vmatmul.mubr.f32.gmra.mrb[0].mxu0 %v1032
    %v1100 = vpop.f32.mrb[0].mxu0
    %v1101 = vadd.f32 0.0, %v1100
    %v1102 = vpop.f32.mrb[0].mxu0
    %1103 = vdwg.mxu0
    %1104 = vrot.lane.b32.xlu0 %v516, 32
    %v1105 = vpop.permute.xlu0 %1104
    %1106 = vrot.lane.b32.xlu0 %v518, 32
    %v1107 = vpop.permute.xlu0 %1106
    %v1108 = vsel %vm601, %v1105, 0
    %v1110 = vsel %vm601, %v1107, 0
    %1112 = vmatprep.subr.mxu0 0.0
    %1113 = vmatpush1.xpose.msra.mxu0 %v1110
    %1114 = vmatprep.subr.mxu0 0.0
    %1115 = vmatpush1.xpose.msra.mxu0 0.0
    %1116 = vmatprep.subr.mxu0 0.0
    %1117 = vmatpush1.xpose.msra.mxu0 0.0
    %1118 = vmatprep.subr.mxu0 0.0
    %1119 = vmatpush1.xpose.msra.mxu0 0.0
    %1120 = vmatprep.subr.mxu0 0.0
    %1121 = vmatpush1.xpose.msra.mxu0 0.0
    %1122 = vmatprep.subr.mxu0 0.0
    %1123 = vmatpush1.xpose.msra.mxu0 0.0
    %1124 = vmatprep.subr.mxu0 0.0
    %1125 = vmatpush1.xpose.msra.mxu0 0.0
    %1126 = vmatprep.subr.mxu0 0.0
    %1127 = vmatpush1.xpose.msra.mxu0 0.0
    %1128 = vmatprep.subr.mxu0 0.0
    %1129 = vmatpush1.xpose.msra.mxu0 0.0
    %1130 = vmatprep.subr.mxu0 0.0
    %1131 = vmatpush1.xpose.msra.mxu0 0.0
    %1132 = vmatprep.subr.mxu0 0.0
    %1133 = vmatpush1.xpose.msra.mxu0 0.0
    %1134 = vmatprep.subr.mxu0 0.0
    %1135 = vmatpush1.xpose.msra.mxu0 0.0
    %1136 = vmatprep.subr.mxu0 0.0
    %1137 = vmatpush1.xpose.msra.mxu0 0.0
    %1138 = vmatprep.subr.mxu0 0.0
    %1139 = vmatpush1.xpose.msra.mxu0 0.0
    %1140 = vmatprep.subr.mxu0 0.0
    %1141 = vmatpush1.xpose.msra.mxu0 0.0
    %1142 = vmatprep.subr.mxu0 0.0
    %1143 = vmatpush1.xpose.msra.mxu0 0.0
    %1144 = vmatprep.subr.mxu0 0.0
    %1145 = vmatpush1.xpose.msra.mxu0 0.0
    %1146 = vmatprep.subr.mxu0 0.0
    %1147 = vmatpush1.xpose.msra.mxu0 0.0
    %1148 = vmatprep.subr.mxu0 0.0
    %1149 = vmatpush1.xpose.msra.mxu0 0.0
    %1150 = vmatprep.subr.mxu0 0.0
    %1151 = vmatpush1.xpose.msra.mxu0 0.0
    %1152 = vmatprep.subr.mxu0 0.0
    %1153 = vmatpush1.xpose.msra.mxu0 0.0
    %1154 = vmatprep.subr.mxu0 0.0
    %1155 = vmatpush1.xpose.msra.mxu0 0.0
    %1156 = vmatprep.subr.mxu0 0.0
    %1157 = vmatpush1.xpose.msra.mxu0 0.0
    %1158 = vmatprep.subr.mxu0 0.0
    %1159 = vmatpush1.xpose.msra.mxu0 0.0
    %1160 = vmatprep.subr.mxu0 0.0
    %1161 = vmatpush1.xpose.msra.mxu0 0.0
    %1162 = vmatprep.subr.mxu0 0.0
    %1163 = vmatpush1.xpose.msra.mxu0 0.0
    %1164 = vmatprep.subr.mxu0 0.0
    %1165 = vmatpush1.xpose.msra.mxu0 0.0
    %1166 = vmatprep.subr.mxu0 0.0
    %1167 = vmatpush1.xpose.msra.mxu0 0.0
    %1168 = vmatprep.subr.mxu0 0.0
    %1169 = vmatpush1.xpose.msra.mxu0 0.0
    %1170 = vmatprep.subr.mxu0 0.0
    %1171 = vmatpush1.xpose.msra.mxu0 0.0
    %1172 = vmatprep.subr.mxu0 0.0
    %1173 = vmatpush1.xpose.msra.mxu0 0.0
    %1174 = vmatprep.subr.mxu0 0.0
    %1175 = vmatpush1.xpose.msra.mxu0 0.0
    %1176 = vmatprep.mubr.f32.mxu0 0.0
    %1177 = vmatmul.mubr.f32.gmra.mrb[0].mxu0 %v1108
    %v1178 = vpop.f32.mrb[0].mxu0
    %v1179 = vadd.f32 0.0, %v1178
    %v1180 = vpop.f32.mrb[0].mxu0
    %1181 = vdwg.mxu0
    %v1182 = vmul.f32 %v1179, 0.17677669
    %v1183 = vadd.f32 %v1182, %v682
    %v1184 = vsel %vm684, %v1183, -inf
    %1185 = vmax.xlane.f32.xlu0 %v1184
    %v1186 = vpop.xlane.xlu0 %1185
    %v1187 = vsub.f32 %v1183, %v1186
    %v1188 = vmul.f32 %v1187, 1.442695
    %v1189 = vpow.pop %v1188
    %v1190 = vsel %vm684, %v1189, 0.0
    %1191 = vadd.xlane.f32.xlu0 %v1190
    %v1192 = vpop.xlane.xlu0 %1191
    %v1193 = vrcp.pop %v1192
    %v1194 = vmul.f32 %v1189, %v1193
    %1195 = vrot.lane.b32.xlu0 %v593, 32
    %v1196 = vpop.permute.xlu0 %1195
    %v1199 = vsel %vm684, %v1194, 0
    %1201 = vmatprep.subr.mxu0 0.0
    %1202 = vmatpush1.msra.mxu0 %v1196
    %1203 = vmatprep.subr.mxu0 0.0
    %1204 = vmatpush1.msra.mxu0 0.0
    %1205 = vmatprep.subr.mxu0 0.0
    %1206 = vmatpush1.msra.mxu0 0.0
    %1207 = vmatprep.subr.mxu0 0.0
    %1208 = vmatpush1.msra.mxu0 0.0
    %1209 = vmatprep.subr.mxu0 0.0
    %1210 = vmatpush1.msra.mxu0 0.0
    %1211 = vmatprep.subr.mxu0 0.0
    %1212 = vmatpush1.msra.mxu0 0.0
    %1213 = vmatprep.subr.mxu0 0.0
    %1214 = vmatpush1.msra.mxu0 0.0
    %1215 = vmatprep.subr.mxu0 0.0
    %1216 = vmatpush1.msra.mxu0 0.0
    %1217 = vmatprep.subr.mxu0 0.0
    %1218 = vmatpush1.msra.mxu0 0.0
    %1219 = vmatprep.subr.mxu0 0.0
    %1220 = vmatpush1.msra.mxu0 0.0
    %1221 = vmatprep.subr.mxu0 0.0
    %1222 = vmatpush1.msra.mxu0 0.0
    %1223 = vmatprep.subr.mxu0 0.0
    %1224 = vmatpush1.msra.mxu0 0.0
    %1225 = vmatprep.subr.mxu0 0.0
    %1226 = vmatpush1.msra.mxu0 0.0
    %1227 = vmatprep.subr.mxu0 0.0
    %1228 = vmatpush1.msra.mxu0 0.0
    %1229 = vmatprep.subr.mxu0 0.0
    %1230 = vmatpush1.msra.mxu0 0.0
    %1231 = vmatprep.subr.mxu0 0.0
    %1232 = vmatpush1.msra.mxu0 0.0
    %1233 = vmatprep.subr.mxu0 0.0
    %1234 = vmatpush1.msra.mxu0 0.0
    %1235 = vmatprep.subr.mxu0 0.0
    %1236 = vmatpush1.msra.mxu0 0.0
    %1237 = vmatprep.subr.mxu0 0.0
    %1238 = vmatpush1.msra.mxu0 0.0
    %1239 = vmatprep.subr.mxu0 0.0
    %1240 = vmatpush1.msra.mxu0 0.0
    %1241 = vmatprep.subr.mxu0 0.0
    %1242 = vmatpush1.msra.mxu0 0.0
    %1243 = vmatprep.subr.mxu0 0.0
    %1244 = vmatpush1.msra.mxu0 0.0
    %1245 = vmatprep.subr.mxu0 0.0
    %1246 = vmatpush1.msra.mxu0 0.0
    %1247 = vmatprep.subr.mxu0 0.0
    %1248 = vmatpush1.msra.mxu0 0.0
    %1249 = vmatprep.subr.mxu0 0.0
    %1250 = vmatpush1.msra.mxu0 0.0
    %1251 = vmatprep.subr.mxu0 0.0
    %1252 = vmatpush1.msra.mxu0 0.0
    %1253 = vmatprep.subr.mxu0 0.0
    %1254 = vmatpush1.msra.mxu0 0.0
    %1255 = vmatprep.subr.mxu0 0.0
    %1256 = vmatpush1.msra.mxu0 0.0
    %1257 = vmatprep.subr.mxu0 0.0
    %1258 = vmatpush1.msra.mxu0 0.0
    %1259 = vmatprep.subr.mxu0 0.0
    %1260 = vmatpush1.msra.mxu0 0.0
    %1261 = vmatprep.subr.mxu0 0.0
    %1262 = vmatpush1.msra.mxu0 0.0
    %1263 = vmatprep.subr.mxu0 0.0
    %1264 = vmatpush1.msra.mxu0 0.0
    %1265 = vmatprep.mubr.f32.mxu0 0.0
    %1266 = vmatmul.mubr.f32.gmra.mrb[0].mxu0 %v1199
    %v1267 = vpop.f32.mrb[0].mxu0
    %v1268 = vadd.f32 0.0, %v1267
    %v1269 = vpop.f32.mrb[0].mxu0
    %1270 = vdwg.mxu0
    %1272 = vrot.lane.b32.xlu0 %v934, 32
    %v1273 = vpop.permute.xlu0 %1272
    %1276 = vrot.lane.b32.xlu0 %v1101, 64
    %v1277 = vpop.permute.xlu0 %1276
    %1280 = vrot.lane.b32.xlu0 %v1268, 96
    %v1281 = vpop.permute.xlu0 %1280
    %v1283 = vsel %vm601, %v766, %v1273
    %vm1284 = vcmask 523264
    %v1285 = vsel %vm1284, %v1283, %v1277
    %vm1286 = vcmask 785408
    %v1287 = vsel %vm1286, %v1285, %v1281
    %v1289 = vsel %vm601, %v522, 0
    %v1292 = vsel %vm601, %v524, 0
    %1294 = vmatprep.subr.mxu0 0.0
    %1295 = vmatpush1.xpose.msra.mxu0 %v1292
    %1296 = vmatprep.subr.mxu0 0.0
    %1297 = vmatpush1.xpose.msra.mxu0 0.0
    %1298 = vmatprep.subr.mxu0 0.0
    %1299 = vmatpush1.xpose.msra.mxu0 0.0
    %1300 = vmatprep.subr.mxu0 0.0
    %1301 = vmatpush1.xpose.msra.mxu0 0.0
    %1302 = vmatprep.subr.mxu0 0.0
    %1303 = vmatpush1.xpose.msra.mxu0 0.0
    %1304 = vmatprep.subr.mxu0 0.0
    %1305 = vmatpush1.xpose.msra.mxu0 0.0
    %1306 = vmatprep.subr.mxu0 0.0
    %1307 = vmatpush1.xpose.msra.mxu0 0.0
    %1308 = vmatprep.subr.mxu0 0.0
    %1309 = vmatpush1.xpose.msra.mxu0 0.0
    %1310 = vmatprep.subr.mxu0 0.0
    %1311 = vmatpush1.xpose.msra.mxu0 0.0
    %1312 = vmatprep.subr.mxu0 0.0
    %1313 = vmatpush1.xpose.msra.mxu0 0.0
    %1314 = vmatprep.subr.mxu0 0.0
    %1315 = vmatpush1.xpose.msra.mxu0 0.0
    %1316 = vmatprep.subr.mxu0 0.0
    %1317 = vmatpush1.xpose.msra.mxu0 0.0
    %1318 = vmatprep.subr.mxu0 0.0
    %1319 = vmatpush1.xpose.msra.mxu0 0.0
    %1320 = vmatprep.subr.mxu0 0.0
    %1321 = vmatpush1.xpose.msra.mxu0 0.0
    %1322 = vmatprep.subr.mxu0 0.0
    %1323 = vmatpush1.xpose.msra.mxu0 0.0
    %1324 = vmatprep.subr.mxu0 0.0
    %1325 = vmatpush1.xpose.msra.mxu0 0.0
    %1326 = vmatprep.subr.mxu0 0.0
    %1327 = vmatpush1.xpose.msra.mxu0 0.0
    %1328 = vmatprep.subr.mxu0 0.0
    %1329 = vmatpush1.xpose.msra.mxu0 0.0
    %1330 = vmatprep.subr.mxu0 0.0
    %1331 = vmatpush1.xpose.msra.mxu0 0.0
    %1332 = vmatprep.subr.mxu0 0.0
    %1333 = vmatpush1.xpose.msra.mxu0 0.0
    %1334 = vmatprep.subr.mxu0 0.0
    %1335 = vmatpush1.xpose.msra.mxu0 0.0
    %1336 = vmatprep.subr.mxu0 0.0
    %1337 = vmatpush1.xpose.msra.mxu0 0.0
    %1338 = vmatprep.subr.mxu0 0.0
    %1339 = vmatpush1.xpose.msra.mxu0 0.0
    %1340 = vmatprep.subr.mxu0 0.0
    %1341 = vmatpush1.xpose.msra.mxu0 0.0
    %1342 = vmatprep.subr.mxu0 0.0
    %1343 = vmatpush1.xpose.msra.mxu0 0.0
    %1344 = vmatprep.subr.mxu0 0.0
    %1345 = vmatpush1.xpose.msra.mxu0 0.0
    %1346 = vmatprep.subr.mxu0 0.0
    %1347 = vmatpush1.xpose.msra.mxu0 0.0
    %1348 = vmatprep.subr.mxu0 0.0
    %1349 = vmatpush1.xpose.msra.mxu0 0.0
    %1350 = vmatprep.subr.mxu0 0.0
    %1351 = vmatpush1.xpose.msra.mxu0 0.0
    %1352 = vmatprep.subr.mxu0 0.0
    %1353 = vmatpush1.xpose.msra.mxu0 0.0
    %1354 = vmatprep.subr.mxu0 0.0
    %1355 = vmatpush1.xpose.msra.mxu0 0.0
    %1356 = vmatprep.subr.mxu0 0.0
    %1357 = vmatpush1.xpose.msra.mxu0 0.0
    %1358 = vmatprep.mubr.f32.mxu0 0.0
    %1359 = vmatmul.mubr.f32.gmra.mrb[0].mxu0 %v1289
    %v1360 = vpop.f32.mrb[0].mxu0
    %v1361 = vadd.f32 0.0, %v1360
    %v1362 = vpop.f32.mrb[0].mxu0
    %1363 = vdwg.mxu0
    %v1364 = vmul.f32 %v1361, 0.17677669
    %v1365 = vlaneseq
    %v1366 = vshrl.u32 %v1365, 7
    %v1367 = vsub.s32 1, %v1366
    %v1368 = vrot.slane %v383, %v1367
    %v1369 = vadd.f32 %v1364, %v1368
    %v1370 = vsel %vm684, %v1369, -inf
    %1371 = vmax.xlane.f32.xlu0 %v1370
    %v1372 = vpop.xlane.xlu0 %1371
    %v1373 = vsub.f32 %v1369, %v1372
    %v1374 = vmul.f32 %v1373, 1.442695
    %v1375 = vpow.pop %v1374
    %v1376 = vsel %vm684, %v1375, 0.0
    %1377 = vadd.xlane.f32.xlu0 %v1376
    %v1378 = vpop.xlane.xlu0 %1377
    %v1379 = vrcp.pop %v1378
    %v1380 = vmul.f32 %v1375, %v1379
    %v1382 = vsel %vm684, %v1380, 0
    %1384 = vmatprep.subr.mxu0 0.0
    %1385 = vmatpush1.msra.mxu0 %v598
    %1386 = vmatprep.subr.mxu0 0.0
    %1387 = vmatpush1.msra.mxu0 0.0
    %1388 = vmatprep.subr.mxu0 0.0
    %1389 = vmatpush1.msra.mxu0 0.0
    %1390 = vmatprep.subr.mxu0 0.0
    %1391 = vmatpush1.msra.mxu0 0.0
    %1392 = vmatprep.subr.mxu0 0.0
    %1393 = vmatpush1.msra.mxu0 0.0
    %1394 = vmatprep.subr.mxu0 0.0
    %1395 = vmatpush1.msra.mxu0 0.0
    %1396 = vmatprep.subr.mxu0 0.0
    %1397 = vmatpush1.msra.mxu0 0.0
    %1398 = vmatprep.subr.mxu0 0.0
    %1399 = vmatpush1.msra.mxu0 0.0
    %1400 = vmatprep.subr.mxu0 0.0
    %1401 = vmatpush1.msra.mxu0 0.0
    %1402 = vmatprep.subr.mxu0 0.0
    %1403 = vmatpush1.msra.mxu0 0.0
    %1404 = vmatprep.subr.mxu0 0.0
    %1405 = vmatpush1.msra.mxu0 0.0
    %1406 = vmatprep.subr.mxu0 0.0
    %1407 = vmatpush1.msra.mxu0 0.0
    %1408 = vmatprep.subr.mxu0 0.0
    %1409 = vmatpush1.msra.mxu0 0.0
    %1410 = vmatprep.subr.mxu0 0.0
    %1411 = vmatpush1.msra.mxu0 0.0
    %1412 = vmatprep.subr.mxu0 0.0
    %1413 = vmatpush1.msra.mxu0 0.0
    %1414 = vmatprep.subr.mxu0 0.0
    %1415 = vmatpush1.msra.mxu0 0.0
    %1416 = vmatprep.subr.mxu0 0.0
    %1417 = vmatpush1.msra.mxu0 0.0
    %1418 = vmatprep.subr.mxu0 0.0
    %1419 = vmatpush1.msra.mxu0 0.0
    %1420 = vmatprep.subr.mxu0 0.0
    %1421 = vmatpush1.msra.mxu0 0.0
    %1422 = vmatprep.subr.mxu0 0.0
    %1423 = vmatpush1.msra.mxu0 0.0
    %1424 = vmatprep.subr.mxu0 0.0
    %1425 = vmatpush1.msra.mxu0 0.0
    %1426 = vmatprep.subr.mxu0 0.0
    %1427 = vmatpush1.msra.mxu0 0.0
    %1428 = vmatprep.subr.mxu0 0.0
    %1429 = vmatpush1.msra.mxu0 0.0
    %1430 = vmatprep.subr.mxu0 0.0
    %1431 = vmatpush1.msra.mxu0 0.0
    %1432 = vmatprep.subr.mxu0 0.0
    %1433 = vmatpush1.msra.mxu0 0.0
    %1434 = vmatprep.subr.mxu0 0.0
    %1435 = vmatpush1.msra.mxu0 0.0
    %1436 = vmatprep.subr.mxu0 0.0
    %1437 = vmatpush1.msra.mxu0 0.0
    %1438 = vmatprep.subr.mxu0 0.0
    %1439 = vmatpush1.msra.mxu0 0.0
    %1440 = vmatprep.subr.mxu0 0.0
    %1441 = vmatpush1.msra.mxu0 0.0
    %1442 = vmatprep.subr.mxu0 0.0
    %1443 = vmatpush1.msra.mxu0 0.0
    %1444 = vmatprep.subr.mxu0 0.0
    %1445 = vmatpush1.msra.mxu0 0.0
    %1446 = vmatprep.subr.mxu0 0.0
    %1447 = vmatpush1.msra.mxu0 0.0
    %1448 = vmatprep.mubr.f32.mxu0 0.0
    %1449 = vmatmul.mubr.f32.gmra.mrb[0].mxu0 %v1382
    %v1450 = vpop.f32.mrb[0].mxu0
    %v1451 = vadd.f32 0.0, %v1450
    %v1452 = vpop.f32.mrb[0].mxu0
    %1453 = vdwg.mxu0
    %1454 = vrot.lane.b32.xlu0 %v522, 96
    %v1455 = vpop.permute.xlu0 %1454
    %1456 = vrot.lane.b32.xlu0 %v524, 96
    %v1457 = vpop.permute.xlu0 %1456
    %v1458 = vsel %vm601, %v1455, 0
    %v1460 = vsel %vm601, %v1457, 0
    %1462 = vmatprep.subr.mxu0 0.0
    %1463 = vmatpush1.xpose.msra.mxu0 %v1460
    %1464 = vmatprep.subr.mxu0 0.0
    %1465 = vmatpush1.xpose.msra.mxu0 0.0
    %1466 = vmatprep.subr.mxu0 0.0
    %1467 = vmatpush1.xpose.msra.mxu0 0.0
    %1468 = vmatprep.subr.mxu0 0.0
    %1469 = vmatpush1.xpose.msra.mxu0 0.0
    %1470 = vmatprep.subr.mxu0 0.0
    %1471 = vmatpush1.xpose.msra.mxu0 0.0
    %1472 = vmatprep.subr.mxu0 0.0
    %1473 = vmatpush1.xpose.msra.mxu0 0.0
    %1474 = vmatprep.subr.mxu0 0.0
    %1475 = vmatpush1.xpose.msra.mxu0 0.0
    %1476 = vmatprep.subr.mxu0 0.0
    %1477 = vmatpush1.xpose.msra.mxu0 0.0
    %1478 = vmatprep.subr.mxu0 0.0
    %1479 = vmatpush1.xpose.msra.mxu0 0.0
    %1480 = vmatprep.subr.mxu0 0.0
    %1481 = vmatpush1.xpose.msra.mxu0 0.0
    %1482 = vmatprep.subr.mxu0 0.0
    %1483 = vmatpush1.xpose.msra.mxu0 0.0
    %1484 = vmatprep.subr.mxu0 0.0
    %1485 = vmatpush1.xpose.msra.mxu0 0.0
    %1486 = vmatprep.subr.mxu0 0.0
    %1487 = vmatpush1.xpose.msra.mxu0 0.0
    %1488 = vmatprep.subr.mxu0 0.0
    %1489 = vmatpush1.xpose.msra.mxu0 0.0
    %1490 = vmatprep.subr.mxu0 0.0
    %1491 = vmatpush1.xpose.msra.mxu0 0.0
    %1492 = vmatprep.subr.mxu0 0.0
    %1493 = vmatpush1.xpose.msra.mxu0 0.0
    %1494 = vmatprep.subr.mxu0 0.0
    %1495 = vmatpush1.xpose.msra.mxu0 0.0
    %1496 = vmatprep.subr.mxu0 0.0
    %1497 = vmatpush1.xpose.msra.mxu0 0.0
    %1498 = vmatprep.subr.mxu0 0.0
    %1499 = vmatpush1.xpose.msra.mxu0 0.0
    %1500 = vmatprep.subr.mxu0 0.0
    %1501 = vmatpush1.xpose.msra.mxu0 0.0
    %1502 = vmatprep.subr.mxu0 0.0
    %1503 = vmatpush1.xpose.msra.mxu0 0.0
    %1504 = vmatprep.subr.mxu0 0.0
    %1505 = vmatpush1.xpose.msra.mxu0 0.0
    %1506 = vmatprep.subr.mxu0 0.0
    %1507 = vmatpush1.xpose.msra.mxu0 0.0
    %1508 = vmatprep.subr.mxu0 0.0
    %1509 = vmatpush1.xpose.msra.mxu0 0.0
    %1510 = vmatprep.subr.mxu0 0.0
    %1511 = vmatpush1.xpose.msra.mxu0 0.0
    %1512 = vmatprep.subr.mxu0 0.0
    %1513 = vmatpush1.xpose.msra.mxu0 0.0
    %1514 = vmatprep.subr.mxu0 0.0
    %1515 = vmatpush1.xpose.msra.mxu0 0.0
    %1516 = vmatprep.subr.mxu0 0.0
    %1517 = vmatpush1.xpose.msra.mxu0 0.0
    %1518 = vmatprep.subr.mxu0 0.0
    %1519 = vmatpush1.xpose.msra.mxu0 0.0
    %1520 = vmatprep.subr.mxu0 0.0
    %1521 = vmatpush1.xpose.msra.mxu0 0.0
    %1522 = vmatprep.subr.mxu0 0.0
    %1523 = vmatpush1.xpose.msra.mxu0 0.0
    %1524 = vmatprep.subr.mxu0 0.0
    %1525 = vmatpush1.xpose.msra.mxu0 0.0
    %1526 = vmatprep.mubr.f32.mxu0 0.0
    %1527 = vmatmul.mubr.f32.gmra.mrb[0].mxu0 %v1458
    %v1528 = vpop.f32.mrb[0].mxu0
    %v1529 = vadd.f32 0.0, %v1528
    %v1530 = vpop.f32.mrb[0].mxu0
    %1531 = vdwg.mxu0
    %v1532 = vmul.f32 %v1529, 0.17677669
    %v1533 = vadd.f32 %v1532, %v1368
    %v1534 = vsel %vm684, %v1533, -inf
    %1535 = vmax.xlane.f32.xlu0 %v1534
    %v1536 = vpop.xlane.xlu0 %1535
    %v1537 = vsub.f32 %v1533, %v1536
    %v1538 = vmul.f32 %v1537, 1.442695
    %v1539 = vpow.pop %v1538
    %v1540 = vsel %vm684, %v1539, 0.0
    %1541 = vadd.xlane.f32.xlu0 %v1540
    %v1542 = vpop.xlane.xlu0 %1541
    %v1543 = vrcp.pop %v1542
    %v1544 = vmul.f32 %v1539, %v1543
    %1546 = vrot.lane.b32.xlu0 %v598, 96
    %v1547 = vpop.permute.xlu0 %1546
    %v1550 = vsel %vm684, %v1544, 0
    %1552 = vmatprep.subr.mxu0 0.0
    %1553 = vmatpush1.msra.mxu0 %v1547
    %1554 = vmatprep.subr.mxu0 0.0
    %1555 = vmatpush1.msra.mxu0 0.0
    %1556 = vmatprep.subr.mxu0 0.0
    %1557 = vmatpush1.msra.mxu0 0.0
    %1558 = vmatprep.subr.mxu0 0.0
    %1559 = vmatpush1.msra.mxu0 0.0
    %1560 = vmatprep.subr.mxu0 0.0
    %1561 = vmatpush1.msra.mxu0 0.0
    %1562 = vmatprep.subr.mxu0 0.0
    %1563 = vmatpush1.msra.mxu0 0.0
    %1564 = vmatprep.subr.mxu0 0.0
    %1565 = vmatpush1.msra.mxu0 0.0
    %1566 = vmatprep.subr.mxu0 0.0
    %1567 = vmatpush1.msra.mxu0 0.0
    %1568 = vmatprep.subr.mxu0 0.0
    %1569 = vmatpush1.msra.mxu0 0.0
    %1570 = vmatprep.subr.mxu0 0.0
    %1571 = vmatpush1.msra.mxu0 0.0
    %1572 = vmatprep.subr.mxu0 0.0
    %1573 = vmatpush1.msra.mxu0 0.0
    %1574 = vmatprep.subr.mxu0 0.0
    %1575 = vmatpush1.msra.mxu0 0.0
    %1576 = vmatprep.subr.mxu0 0.0
    %1577 = vmatpush1.msra.mxu0 0.0
    %1578 = vmatprep.subr.mxu0 0.0
    %1579 = vmatpush1.msra.mxu0 0.0
    %1580 = vmatprep.subr.mxu0 0.0
    %1581 = vmatpush1.msra.mxu0 0.0
    %1582 = vmatprep.subr.mxu0 0.0
    %1583 = vmatpush1.msra.mxu0 0.0
    %1584 = vmatprep.subr.mxu0 0.0
    %1585 = vmatpush1.msra.mxu0 0.0
    %1586 = vmatprep.subr.mxu0 0.0
    %1587 = vmatpush1.msra.mxu0 0.0
    %1588 = vmatprep.subr.mxu0 0.0
    %1589 = vmatpush1.msra.mxu0 0.0
    %1590 = vmatprep.subr.mxu0 0.0
    %1591 = vmatpush1.msra.mxu0 0.0
    %1592 = vmatprep.subr.mxu0 0.0
    %1593 = vmatpush1.msra.mxu0 0.0
    %1594 = vmatprep.subr.mxu0 0.0
    %1595 = vmatpush1.msra.mxu0 0.0
    %1596 = vmatprep.subr.mxu0 0.0
    %1597 = vmatpush1.msra.mxu0 0.0
    %1598 = vmatprep.subr.mxu0 0.0
    %1599 = vmatpush1.msra.mxu0 0.0
    %1600 = vmatprep.subr.mxu0 0.0
    %1601 = vmatpush1.msra.mxu0 0.0
    %1602 = vmatprep.subr.mxu0 0.0
    %1603 = vmatpush1.msra.mxu0 0.0
    %1604 = vmatprep.subr.mxu0 0.0
    %1605 = vmatpush1.msra.mxu0 0.0
    %1606 = vmatprep.subr.mxu0 0.0
    %1607 = vmatpush1.msra.mxu0 0.0
    %1608 = vmatprep.subr.mxu0 0.0
    %1609 = vmatpush1.msra.mxu0 0.0
    %1610 = vmatprep.subr.mxu0 0.0
    %1611 = vmatpush1.msra.mxu0 0.0
    %1612 = vmatprep.subr.mxu0 0.0
    %1613 = vmatpush1.msra.mxu0 0.0
    %1614 = vmatprep.subr.mxu0 0.0
    %1615 = vmatpush1.msra.mxu0 0.0
    %1616 = vmatprep.mubr.f32.mxu0 0.0
    %1617 = vmatmul.mubr.f32.gmra.mrb[0].mxu0 %v1550
    %v1618 = vpop.f32.mrb[0].mxu0
    %v1619 = vadd.f32 0.0, %v1618
    %v1620 = vpop.f32.mrb[0].mxu0
    %1621 = vdwg.mxu0
    %1622 = vrot.lane.b32.xlu0 %v522, 64
    %v1623 = vpop.permute.xlu0 %1622
    %1624 = vrot.lane.b32.xlu0 %v524, 64
    %v1625 = vpop.permute.xlu0 %1624
    %v1626 = vsel %vm601, %v1623, 0
    %v1628 = vsel %vm601, %v1625, 0
    %1630 = vmatprep.subr.mxu0 0.0
    %1631 = vmatpush1.xpose.msra.mxu0 %v1628
    %1632 = vmatprep.subr.mxu0 0.0
    %1633 = vmatpush1.xpose.msra.mxu0 0.0
    %1634 = vmatprep.subr.mxu0 0.0
    %1635 = vmatpush1.xpose.msra.mxu0 0.0
    %1636 = vmatprep.subr.mxu0 0.0
    %1637 = vmatpush1.xpose.msra.mxu0 0.0
    %1638 = vmatprep.subr.mxu0 0.0
    %1639 = vmatpush1.xpose.msra.mxu0 0.0
    %1640 = vmatprep.subr.mxu0 0.0
    %1641 = vmatpush1.xpose.msra.mxu0 0.0
    %1642 = vmatprep.subr.mxu0 0.0
    %1643 = vmatpush1.xpose.msra.mxu0 0.0
    %1644 = vmatprep.subr.mxu0 0.0
    %1645 = vmatpush1.xpose.msra.mxu0 0.0
    %1646 = vmatprep.subr.mxu0 0.0
    %1647 = vmatpush1.xpose.msra.mxu0 0.0
    %1648 = vmatprep.subr.mxu0 0.0
    %1649 = vmatpush1.xpose.msra.mxu0 0.0
    %1650 = vmatprep.subr.mxu0 0.0
    %1651 = vmatpush1.xpose.msra.mxu0 0.0
    %1652 = vmatprep.subr.mxu0 0.0
    %1653 = vmatpush1.xpose.msra.mxu0 0.0
    %1654 = vmatprep.subr.mxu0 0.0
    %1655 = vmatpush1.xpose.msra.mxu0 0.0
    %1656 = vmatprep.subr.mxu0 0.0
    %1657 = vmatpush1.xpose.msra.mxu0 0.0
    %1658 = vmatprep.subr.mxu0 0.0
    %1659 = vmatpush1.xpose.msra.mxu0 0.0
    %1660 = vmatprep.subr.mxu0 0.0
    %1661 = vmatpush1.xpose.msra.mxu0 0.0
    %1662 = vmatprep.subr.mxu0 0.0
    %1663 = vmatpush1.xpose.msra.mxu0 0.0
    %1664 = vmatprep.subr.mxu0 0.0
    %1665 = vmatpush1.xpose.msra.mxu0 0.0
    %1666 = vmatprep.subr.mxu0 0.0
    %1667 = vmatpush1.xpose.msra.mxu0 0.0
    %1668 = vmatprep.subr.mxu0 0.0
    %1669 = vmatpush1.xpose.msra.mxu0 0.0
    %1670 = vmatprep.subr.mxu0 0.0
    %1671 = vmatpush1.xpose.msra.mxu0 0.0
    %1672 = vmatprep.subr.mxu0 0.0
    %1673 = vmatpush1.xpose.msra.mxu0 0.0
    %1674 = vmatprep.subr.mxu0 0.0
    %1675 = vmatpush1.xpose.msra.mxu0 0.0
    %1676 = vmatprep.subr.mxu0 0.0
    %1677 = vmatpush1.xpose.msra.mxu0 0.0
    %1678 = vmatprep.subr.mxu0 0.0
    %1679 = vmatpush1.xpose.msra.mxu0 0.0
    %1680 = vmatprep.subr.mxu0 0.0
    %1681 = vmatpush1.xpose.msra.mxu0 0.0
    %1682 = vmatprep.subr.mxu0 0.0
    %1683 = vmatpush1.xpose.msra.mxu0 0.0
    %1684 = vmatprep.subr.mxu0 0.0
    %1685 = vmatpush1.xpose.msra.mxu0 0.0
    %1686 = vmatprep.subr.mxu0 0.0
    %1687 = vmatpush1.xpose.msra.mxu0 0.0
    %1688 = vmatprep.subr.mxu0 0.0
    %1689 = vmatpush1.xpose.msra.mxu0 0.0
    %1690 = vmatprep.subr.mxu0 0.0
    %1691 = vmatpush1.xpose.msra.mxu0 0.0
    %1692 = vmatprep.subr.mxu0 0.0
    %1693 = vmatpush1.xpose.msra.mxu0 0.0
    %1694 = vmatprep.mubr.f32.mxu0 0.0
    %1695 = vmatmul.mubr.f32.gmra.mrb[0].mxu0 %v1626
    %v1696 = vpop.f32.mrb[0].mxu0
    %v1697 = vadd.f32 0.0, %v1696
    %v1698 = vpop.f32.mrb[0].mxu0
    %1699 = vdwg.mxu0
    %v1700 = vmul.f32 %v1697, 0.17677669
    %v1701 = vadd.f32 %v1700, %v1368
    %v1702 = vsel %vm684, %v1701, -inf
    %1703 = vmax.xlane.f32.xlu0 %v1702
    %v1704 = vpop.xlane.xlu0 %1703
    %v1705 = vsub.f32 %v1701, %v1704
    %v1706 = vmul.f32 %v1705, 1.442695
    %v1707 = vpow.pop %v1706
    %v1708 = vsel %vm684, %v1707, 0.0
    %1709 = vadd.xlane.f32.xlu0 %v1708
    %v1710 = vpop.xlane.xlu0 %1709
    %v1711 = vrcp.pop %v1710
    %v1712 = vmul.f32 %v1707, %v1711
    %1713 = vrot.lane.b32.xlu0 %v598, 64
    %v1714 = vpop.permute.xlu0 %1713
    %v1717 = vsel %vm684, %v1712, 0
    %1719 = vmatprep.subr.mxu0 0.0
    %1720 = vmatpush1.msra.mxu0 %v1714
    %1721 = vmatprep.subr.mxu0 0.0
    %1722 = vmatpush1.msra.mxu0 0.0
    %1723 = vmatprep.subr.mxu0 0.0
    %1724 = vmatpush1.msra.mxu0 0.0
    %1725 = vmatprep.subr.mxu0 0.0
    %1726 = vmatpush1.msra.mxu0 0.0
    %1727 = vmatprep.subr.mxu0 0.0
    %1728 = vmatpush1.msra.mxu0 0.0
    %1729 = vmatprep.subr.mxu0 0.0
    %1730 = vmatpush1.msra.mxu0 0.0
    %1731 = vmatprep.subr.mxu0 0.0
    %1732 = vmatpush1.msra.mxu0 0.0
    %1733 = vmatprep.subr.mxu0 0.0
    %1734 = vmatpush1.msra.mxu0 0.0
    %1735 = vmatprep.subr.mxu0 0.0
    %1736 = vmatpush1.msra.mxu0 0.0
    %1737 = vmatprep.subr.mxu0 0.0
    %1738 = vmatpush1.msra.mxu0 0.0
    %1739 = vmatprep.subr.mxu0 0.0
    %1740 = vmatpush1.msra.mxu0 0.0
    %1741 = vmatprep.subr.mxu0 0.0
    %1742 = vmatpush1.msra.mxu0 0.0
    %1743 = vmatprep.subr.mxu0 0.0
    %1744 = vmatpush1.msra.mxu0 0.0
    %1745 = vmatprep.subr.mxu0 0.0
    %1746 = vmatpush1.msra.mxu0 0.0
    %1747 = vmatprep.subr.mxu0 0.0
    %1748 = vmatpush1.msra.mxu0 0.0
    %1749 = vmatprep.subr.mxu0 0.0
    %1750 = vmatpush1.msra.mxu0 0.0
    %1751 = vmatprep.subr.mxu0 0.0
    %1752 = vmatpush1.msra.mxu0 0.0
    %1753 = vmatprep.subr.mxu0 0.0
    %1754 = vmatpush1.msra.mxu0 0.0
    %1755 = vmatprep.subr.mxu0 0.0
    %1756 = vmatpush1.msra.mxu0 0.0
    %1757 = vmatprep.subr.mxu0 0.0
    %1758 = vmatpush1.msra.mxu0 0.0
    %1759 = vmatprep.subr.mxu0 0.0
    %1760 = vmatpush1.msra.mxu0 0.0
    %1761 = vmatprep.subr.mxu0 0.0
    %1762 = vmatpush1.msra.mxu0 0.0
    %1763 = vmatprep.subr.mxu0 0.0
    %1764 = vmatpush1.msra.mxu0 0.0
    %1765 = vmatprep.subr.mxu0 0.0
    %1766 = vmatpush1.msra.mxu0 0.0
    %1767 = vmatprep.subr.mxu0 0.0
    %1768 = vmatpush1.msra.mxu0 0.0
    %1769 = vmatprep.subr.mxu0 0.0
    %1770 = vmatpush1.msra.mxu0 0.0
    %1771 = vmatprep.subr.mxu0 0.0
    %1772 = vmatpush1.msra.mxu0 0.0
    %1773 = vmatprep.subr.mxu0 0.0
    %1774 = vmatpush1.msra.mxu0 0.0
    %1775 = vmatprep.subr.mxu0 0.0
    %1776 = vmatpush1.msra.mxu0 0.0
    %1777 = vmatprep.subr.mxu0 0.0
    %1778 = vmatpush1.msra.mxu0 0.0
    %1779 = vmatprep.subr.mxu0 0.0
    %1780 = vmatpush1.msra.mxu0 0.0
    %1781 = vmatprep.subr.mxu0 0.0
    %1782 = vmatpush1.msra.mxu0 0.0
    %1783 = vmatprep.mubr.f32.mxu0 0.0
    %1784 = vmatmul.mubr.f32.gmra.mrb[0].mxu0 %v1717
    %v1785 = vpop.f32.mrb[0].mxu0
    %v1786 = vadd.f32 0.0, %v1785
    %v1787 = vpop.f32.mrb[0].mxu0
    %1788 = vdwg.mxu0
    %1789 = vrot.lane.b32.xlu0 %v522, 32
    %v1790 = vpop.permute.xlu0 %1789
    %1791 = vrot.lane.b32.xlu0 %v524, 32
    %v1792 = vpop.permute.xlu0 %1791
    %v1793 = vsel %vm601, %v1790, 0
    %v1795 = vsel %vm601, %v1792, 0
    %1797 = vmatprep.subr.mxu0 0.0
    %1798 = vmatpush1.xpose.msra.mxu0 %v1795
    %1799 = vmatprep.subr.mxu0 0.0
    %1800 = vmatpush1.xpose.msra.mxu0 0.0
    %1801 = vmatprep.subr.mxu0 0.0
    %1802 = vmatpush1.xpose.msra.mxu0 0.0
    %1803 = vmatprep.subr.mxu0 0.0
    %1804 = vmatpush1.xpose.msra.mxu0 0.0
    %1805 = vmatprep.subr.mxu0 0.0
    %1806 = vmatpush1.xpose.msra.mxu0 0.0
    %1807 = vmatprep.subr.mxu0 0.0
    %1808 = vmatpush1.xpose.msra.mxu0 0.0
    %1809 = vmatprep.subr.mxu0 0.0
    %1810 = vmatpush1.xpose.msra.mxu0 0.0
    %1811 = vmatprep.subr.mxu0 0.0
    %1812 = vmatpush1.xpose.msra.mxu0 0.0
    %1813 = vmatprep.subr.mxu0 0.0
    %1814 = vmatpush1.xpose.msra.mxu0 0.0
    %1815 = vmatprep.subr.mxu0 0.0
    %1816 = vmatpush1.xpose.msra.mxu0 0.0
    %1817 = vmatprep.subr.mxu0 0.0
    %1818 = vmatpush1.xpose.msra.mxu0 0.0
    %1819 = vmatprep.subr.mxu0 0.0
    %1820 = vmatpush1.xpose.msra.mxu0 0.0
    %1821 = vmatprep.subr.mxu0 0.0
    %1822 = vmatpush1.xpose.msra.mxu0 0.0
    %1823 = vmatprep.subr.mxu0 0.0
    %1824 = vmatpush1.xpose.msra.mxu0 0.0
    %1825 = vmatprep.subr.mxu0 0.0
    %1826 = vmatpush1.xpose.msra.mxu0 0.0
    %1827 = vmatprep.subr.mxu0 0.0
    %1828 = vmatpush1.xpose.msra.mxu0 0.0
    %1829 = vmatprep.subr.mxu0 0.0
    %1830 = vmatpush1.xpose.msra.mxu0 0.0
    %1831 = vmatprep.subr.mxu0 0.0
    %1832 = vmatpush1.xpose.msra.mxu0 0.0
    %1833 = vmatprep.subr.mxu0 0.0
    %1834 = vmatpush1.xpose.msra.mxu0 0.0
    %1835 = vmatprep.subr.mxu0 0.0
    %1836 = vmatpush1.xpose.msra.mxu0 0.0
    %1837 = vmatprep.subr.mxu0 0.0
    %1838 = vmatpush1.xpose.msra.mxu0 0.0
    %1839 = vmatprep.subr.mxu0 0.0
    %1840 = vmatpush1.xpose.msra.mxu0 0.0
    %1841 = vmatprep.subr.mxu0 0.0
    %1842 = vmatpush1.xpose.msra.mxu0 0.0
    %1843 = vmatprep.subr.mxu0 0.0
    %1844 = vmatpush1.xpose.msra.mxu0 0.0
    %1845 = vmatprep.subr.mxu0 0.0
    %1846 = vmatpush1.xpose.msra.mxu0 0.0
    %1847 = vmatprep.subr.mxu0 0.0
    %1848 = vmatpush1.xpose.msra.mxu0 0.0
    %1849 = vmatprep.subr.mxu0 0.0
    %1850 = vmatpush1.xpose.msra.mxu0 0.0
    %1851 = vmatprep.subr.mxu0 0.0
    %1852 = vmatpush1.xpose.msra.mxu0 0.0
    %1853 = vmatprep.subr.mxu0 0.0
    %1854 = vmatpush1.xpose.msra.mxu0 0.0
    %1855 = vmatprep.subr.mxu0 0.0
    %1856 = vmatpush1.xpose.msra.mxu0 0.0
    %1857 = vmatprep.subr.mxu0 0.0
    %1858 = vmatpush1.xpose.msra.mxu0 0.0
    %1859 = vmatprep.subr.mxu0 0.0
    %1860 = vmatpush1.xpose.msra.mxu0 0.0
    %1861 = vmatprep.mubr.f32.mxu0 0.0
    %1862 = vmatmul.mubr.f32.gmra.mrb[0].mxu0 %v1793
    %v1863 = vpop.f32.mrb[0].mxu0
    %v1864 = vadd.f32 0.0, %v1863
    %v1865 = vpop.f32.mrb[0].mxu0
    %1866 = vdwg.mxu0
    %v1867 = vmul.f32 %v1864, 0.17677669
    %v1868 = vadd.f32 %v1867, %v1368
    %v1869 = vsel %vm684, %v1868, -inf
    %1870 = vmax.xlane.f32.xlu0 %v1869
    %v1871 = vpop.xlane.xlu0 %1870
    %v1872 = vsub.f32 %v1868, %v1871
    %v1873 = vmul.f32 %v1872, 1.442695
    %v1874 = vpow.pop %v1873
    %v1875 = vsel %vm684, %v1874, 0.0
    %1876 = vadd.xlane.f32.xlu0 %v1875
    %v1877 = vpop.xlane.xlu0 %1876
    %v1878 = vrcp.pop %v1877
    %v1879 = vmul.f32 %v1874, %v1878
    %1880 = vrot.lane.b32.xlu0 %v598, 32
    %v1881 = vpop.permute.xlu0 %1880
    %v1884 = vsel %vm684, %v1879, 0
    %1886 = vmatprep.subr.mxu0 0.0
    %1887 = vmatpush1.msra.mxu0 %v1881
    %1888 = vmatprep.subr.mxu0 0.0
    %1889 = vmatpush1.msra.mxu0 0.0
    %1890 = vmatprep.subr.mxu0 0.0
    %1891 = vmatpush1.msra.mxu0 0.0
    %1892 = vmatprep.subr.mxu0 0.0
    %1893 = vmatpush1.msra.mxu0 0.0
    %1894 = vmatprep.subr.mxu0 0.0
    %1895 = vmatpush1.msra.mxu0 0.0
    %1896 = vmatprep.subr.mxu0 0.0
    %1897 = vmatpush1.msra.mxu0 0.0
    %1898 = vmatprep.subr.mxu0 0.0
    %1899 = vmatpush1.msra.mxu0 0.0
    %1900 = vmatprep.subr.mxu0 0.0
    %1901 = vmatpush1.msra.mxu0 0.0
    %1902 = vmatprep.subr.mxu0 0.0
    %1903 = vmatpush1.msra.mxu0 0.0
    %1904 = vmatprep.subr.mxu0 0.0
    %1905 = vmatpush1.msra.mxu0 0.0
    %1906 = vmatprep.subr.mxu0 0.0
    %1907 = vmatpush1.msra.mxu0 0.0
    %1908 = vmatprep.subr.mxu0 0.0
    %1909 = vmatpush1.msra.mxu0 0.0
    %1910 = vmatprep.subr.mxu0 0.0
    %1911 = vmatpush1.msra.mxu0 0.0
    %1912 = vmatprep.subr.mxu0 0.0
    %1913 = vmatpush1.msra.mxu0 0.0
    %1914 = vmatprep.subr.mxu0 0.0
    %1915 = vmatpush1.msra.mxu0 0.0
    %1916 = vmatprep.subr.mxu0 0.0
    %1917 = vmatpush1.msra.mxu0 0.0
    %1918 = vmatprep.subr.mxu0 0.0
    %1919 = vmatpush1.msra.mxu0 0.0
    %1920 = vmatprep.subr.mxu0 0.0
    %1921 = vmatpush1.msra.mxu0 0.0
    %1922 = vmatprep.subr.mxu0 0.0
    %1923 = vmatpush1.msra.mxu0 0.0
    %1924 = vmatprep.subr.mxu0 0.0
    %1925 = vmatpush1.msra.mxu0 0.0
    %1926 = vmatprep.subr.mxu0 0.0
    %1927 = vmatpush1.msra.mxu0 0.0
    %1928 = vmatprep.subr.mxu0 0.0
    %1929 = vmatpush1.msra.mxu0 0.0
    %1930 = vmatprep.subr.mxu0 0.0
    %1931 = vmatpush1.msra.mxu0 0.0
    %1932 = vmatprep.subr.mxu0 0.0
    %1933 = vmatpush1.msra.mxu0 0.0
    %1934 = vmatprep.subr.mxu0 0.0
    %1935 = vmatpush1.msra.mxu0 0.0
    %1936 = vmatprep.subr.mxu0 0.0
    %1937 = vmatpush1.msra.mxu0 0.0
    %1938 = vmatprep.subr.mxu0 0.0
    %1939 = vmatpush1.msra.mxu0 0.0
    %1940 = vmatprep.subr.mxu0 0.0
    %1941 = vmatpush1.msra.mxu0 0.0
    %1942 = vmatprep.subr.mxu0 0.0
    %1943 = vmatpush1.msra.mxu0 0.0
    %1944 = vmatprep.subr.mxu0 0.0
    %1945 = vmatpush1.msra.mxu0 0.0
    %1946 = vmatprep.subr.mxu0 0.0
    %1947 = vmatpush1.msra.mxu0 0.0
    %1948 = vmatprep.subr.mxu0 0.0
    %1949 = vmatpush1.msra.mxu0 0.0
    %1950 = vmatprep.mubr.f32.mxu0 0.0
    %1951 = vmatmul.mubr.f32.gmra.mrb[0].mxu0 %v1884
    %v1952 = vpop.f32.mrb[0].mxu0
    %v1953 = vadd.f32 0.0, %v1952
    %v1954 = vpop.f32.mrb[0].mxu0
    %1955 = vdwg.mxu0
    %1957 = vrot.lane.b32.xlu0 %v1619, 32
    %v1958 = vpop.permute.xlu0 %1957
    %1961 = vrot.lane.b32.xlu0 %v1786, 64
    %v1962 = vpop.permute.xlu0 %1961
    %1965 = vrot.lane.b32.xlu0 %v1953, 96
    %v1966 = vpop.permute.xlu0 %1965
    %v1968 = vsel %vm601, %v1451, %v1958
    %v1969 = vsel %vm1284, %v1968, %v1962
    %v1970 = vsel %vm1286, %v1969, %v1966
    %v1971 = vld [vmem:[#allocation7] sm:$0xff]
    %v1972 = vld [vmem:[#allocation7 + $0x8] sm:$0xff]
    %v1973 = vld [vmem:[#allocation7 + $0x10] sm:$0xff]
    %v1974 = vld [vmem:[#allocation7 + $0x18] sm:$0xff]
    %v1975 = vld [vmem:[#allocation7 + $0x20] sm:$0xff]
    %v1976 = vld [vmem:[#allocation7 + $0x28] sm:$0xff]
    %v1977 = vld [vmem:[#allocation7 + $0x30] sm:$0xff]
    %v1978 = vld [vmem:[#allocation7 + $0x38] sm:$0xff]
    %v1979 = vld [vmem:[#allocation7 + $0x40] sm:$0xff]
    %v1980 = vld [vmem:[#allocation7 + $0x48] sm:$0xff]
    %v1981 = vld [vmem:[#allocation7 + $0x50] sm:$0xff]
    %v1982 = vld [vmem:[#allocation7 + $0x58] sm:$0xff]
    %v1983 = vld [vmem:[#allocation7 + $0x60] sm:$0xff]
    %v1984 = vld [vmem:[#allocation7 + $0x68] sm:$0xff]
    %v1985 = vld [vmem:[#allocation7 + $0x70] sm:$0xff]
    %v1986 = vld [vmem:[#allocation7 + $0x78] sm:$0xff]
    %v1987 = vld [vmem:[%s9] sm:$0x1]
    %v1989 = vlaneseq
    %v1990 = vshrl.u32 %v1989, 7
    %v1991 = vsub.s32 0, %v1990
    %v1992 = vrot.slane %v1987, %v1991
    %1994 = vmatprep.subr.mxu0 0.0
    %1995 = vmatpush1.msra.mxu0 %v1971
    %1996 = vmatprep.subr.mxu0 0.0
    %1997 = vmatpush1.msra.mxu0 %v1972
    %1998 = vmatprep.subr.mxu0 0.0
    %1999 = vmatpush1.msra.mxu0 %v1973
    %2000 = vmatprep.subr.mxu0 0.0
    %2001 = vmatpush1.msra.mxu0 %v1974
    %2002 = vmatprep.subr.mxu0 0.0
    %2003 = vmatpush1.msra.mxu0 %v1975
    %2004 = vmatprep.subr.mxu0 0.0
    %2005 = vmatpush1.msra.mxu0 %v1976
    %2006 = vmatprep.subr.mxu0 0.0
    %2007 = vmatpush1.msra.mxu0 %v1977
    %2008 = vmatprep.subr.mxu0 0.0
    %2009 = vmatpush1.msra.mxu0 %v1978
    %2010 = vmatprep.subr.mxu0 0.0
    %2011 = vmatpush1.msra.mxu0 %v1979
    %2012 = vmatprep.subr.mxu0 0.0
    %2013 = vmatpush1.msra.mxu0 %v1980
    %2014 = vmatprep.subr.mxu0 0.0
    %2015 = vmatpush1.msra.mxu0 %v1981
    %2016 = vmatprep.subr.mxu0 0.0
    %2017 = vmatpush1.msra.mxu0 %v1982
    %2018 = vmatprep.subr.mxu0 0.0
    %2019 = vmatpush1.msra.mxu0 %v1983
    %2020 = vmatprep.subr.mxu0 0.0
    %2021 = vmatpush1.msra.mxu0 %v1984
    %2022 = vmatprep.subr.mxu0 0.0
    %2023 = vmatpush1.msra.mxu0 %v1985
    %2024 = vmatprep.subr.mxu0 0.0
    %2025 = vmatpush1.msra.mxu0 %v1986
    %2026 = vmatprep.subr.mxu0 0.0
    %2027 = vmatpush1.msra.mxu0 0.0
    %2028 = vmatprep.subr.mxu0 0.0
    %2029 = vmatpush1.msra.mxu0 0.0
    %2030 = vmatprep.subr.mxu0 0.0
    %2031 = vmatpush1.msra.mxu0 0.0
    %2032 = vmatprep.subr.mxu0 0.0
    %2033 = vmatpush1.msra.mxu0 0.0
    %2034 = vmatprep.subr.mxu0 0.0
    %2035 = vmatpush1.msra.mxu0 0.0
    %2036 = vmatprep.subr.mxu0 0.0
    %2037 = vmatpush1.msra.mxu0 0.0
    %2038 = vmatprep.subr.mxu0 0.0
    %2039 = vmatpush1.msra.mxu0 0.0
    %2040 = vmatprep.subr.mxu0 0.0
    %2041 = vmatpush1.msra.mxu0 0.0
    %2042 = vmatprep.subr.mxu0 0.0
    %2043 = vmatpush1.msra.mxu0 0.0
    %2044 = vmatprep.subr.mxu0 0.0
    %2045 = vmatpush1.msra.mxu0 0.0
    %2046 = vmatprep.subr.mxu0 0.0
    %2047 = vmatpush1.msra.mxu0 0.0
    %2048 = vmatprep.subr.mxu0 0.0
    %2049 = vmatpush1.msra.mxu0 0.0
    %2050 = vmatprep.subr.mxu0 0.0
    %2051 = vmatpush1.msra.mxu0 0.0
    %2052 = vmatprep.subr.mxu0 0.0
    %2053 = vmatpush1.msra.mxu0 0.0
    %2054 = vmatprep.subr.mxu0 0.0
    %2055 = vmatpush1.msra.mxu0 0.0
    %2056 = vmatprep.subr.mxu0 0.0
    %2057 = vmatpush1.msra.mxu0 0.0
    %2058 = vmatprep.mubr.f32.mxu0 0.0
    %2059 = vmatmul.mubr.f32.gmra.mrb[0].mxu0 %v1287
    %v2060 = vpop.f32.mrb[0].mxu0
    %v2061 = vadd.f32 %v1992, %v2060
    %v2062 = vpop.f32.mrb[0].mxu0
    %2063 = vmatprep.mubr.f32.mxu0 0.0
    %2064 = vmatmul.mubr.f32.gmra.mrb[0].mxu0 %v1970
    %v2065 = vpop.f32.mrb[0].mxu0
    %v2066 = vadd.f32 %v1992, %v2065
    %v2067 = vpop.f32.mrb[0].mxu0
    %2068 = vdwg.mxu0
    %v2069 = vadd.f32 %v378, %v2061
    %v2070 = vadd.f32 %v379, %v2066
    %v2071 = vld [vmem:[%s10] sm:$0x1]
    %v2072 = vld [vmem:[%s11] sm:$0x1]
    %2073 = vadd.xlane.f32.xlu0 %v2069
    %v2074 = vpop.xlane.xlu0 %2073
    %2075 = vadd.xlane.f32.xlu0 %v2070
    %v2076 = vpop.xlane.xlu0 %2075
    %v2077 = vmul.f32 %v2074, %v345
    %v2078 = vmul.f32 %v2076, %v345
    %v2079 = vsub.f32 %v2069, %v2077
    %v2080 = vsub.f32 %v2070, %v2078
    %v2081 = vmul.f32 %v2079, %v2079
    %v2082 = vmul.f32 %v2080, %v2080
    %2083 = vadd.xlane.f32.xlu0 %v2081
    %v2084 = vpop.xlane.xlu0 %2083
    %2085 = vadd.xlane.f32.xlu0 %v2082
    %v2086 = vpop.xlane.xlu0 %2085
    %v2087 = vmul.f32 %v2084, %v345
    %v2088 = vmul.f32 %v2086, %v345
    %v2089 = vadd.f32 %v2087, 1e-12
    %v2090 = vadd.f32 %v2088, 1e-12
    %v2091 = vrsqrt.pop %v2089
    %v2092 = vrsqrt.pop %v2090
    %v2093 = vmul.f32 %v2079, %v2091
    %v2094 = vmul.f32 %v2080, %v2092
    %v2096 = vlaneseq
    %v2097 = vshrl.u32 %v2096, 7
    %v2098 = vsub.s32 0, %v2097
    %v2099 = vrot.slane %v2071, %v2098
    %v2101 = vmul.f32 %v2093, %v2099
    %v2102 = vmul.f32 %v2094, %v2099
    %v2104 = vlaneseq
    %v2105 = vshrl.u32 %v2104, 7
    %v2106 = vsub.s32 0, %v2105
    %v2107 = vrot.slane %v2072, %v2106
    %v2109 = vadd.f32 %v2101, %v2107
    %v2110 = vadd.f32 %v2102, %v2107
    %v2111 = vld [vmem:[#allocation8] sm:$0xff]
    %v2112 = vld [vmem:[#allocation8 + $0x8] sm:$0xff]
    %v2113 = vld [vmem:[#allocation8 + $0x10] sm:$0xff]
    %v2114 = vld [vmem:[#allocation8 + $0x18] sm:$0xff]
    %v2115 = vld [vmem:[#allocation8 + $0x20] sm:$0xff]
    %v2116 = vld [vmem:[#allocation8 + $0x28] sm:$0xff]
    %v2117 = vld [vmem:[#allocation8 + $0x30] sm:$0xff]
    %v2118 = vld [vmem:[#allocation8 + $0x38] sm:$0xff]
    %v2119 = vld [vmem:[#allocation8 + $0x40] sm:$0xff]
    %v2120 = vld [vmem:[#allocation8 + $0x48] sm:$0xff]
    %v2121 = vld [vmem:[#allocation8 + $0x50] sm:$0xff]
    %v2122 = vld [vmem:[#allocation8 + $0x58] sm:$0xff]
    %v2123 = vld [vmem:[#allocation8 + $0x60] sm:$0xff]
    %v2124 = vld [vmem:[#allocation8 + $0x68] sm:$0xff]
    %v2125 = vld [vmem:[#allocation8 + $0x70] sm:$0xff]
    %v2126 = vld [vmem:[#allocation8 + $0x78] sm:$0xff]
    %v2127 = vld [vmem:[#allocation8 + $0x80] sm:$0xff]
    %v2128 = vld [vmem:[#allocation8 + $0x88] sm:$0xff]
    %v2129 = vld [vmem:[#allocation8 + $0x90] sm:$0xff]
    %v2130 = vld [vmem:[#allocation8 + $0x98] sm:$0xff]
    %v2131 = vld [vmem:[#allocation8 + $0xa0] sm:$0xff]
    %v2132 = vld [vmem:[#allocation8 + $0xa8] sm:$0xff]
    %v2133 = vld [vmem:[#allocation8 + $0xb0] sm:$0xff]
    %v2134 = vld [vmem:[#allocation8 + $0xb8] sm:$0xff]
    %v2135 = vld [vmem:[#allocation8 + $0xc0] sm:$0xff]
    %v2136 = vld [vmem:[#allocation8 + $0xc8] sm:$0xff]
    %v2137 = vld [vmem:[#allocation8 + $0xd0] sm:$0xff]
    %v2138 = vld [vmem:[#allocation8 + $0xd8] sm:$0xff]
    %v2139 = vld [vmem:[#allocation8 + $0xe0] sm:$0xff]
    %v2140 = vld [vmem:[#allocation8 + $0xe8] sm:$0xff]
    %v2141 = vld [vmem:[#allocation8 + $0xf0] sm:$0xff]
    %v2142 = vld [vmem:[#allocation8 + $0xf8] sm:$0xff]
    %v2143 = vld [vmem:[%s13] sm:$0x3]
    %v2145 = vlaneseq
    %v2146 = vshrl.u32 %v2145, 7
    %v2147 = vsub.s32 0, %v2146
    %v2148 = vrot.slane %v2143, %v2147
    %v2149 = vlaneseq
    %v2150 = vshrl.u32 %v2149, 7
    %v2151 = vsub.s32 1, %v2150
    %v2152 = vrot.slane %v2143, %v2151
    %2155 = vmatprep.subr.mxu0 %v2112
    %2156 = vmatpush1.msra.mxu0 %v2111
    %2157 = vmatprep.subr.mxu0 %v2114
    %2158 = vmatpush1.msra.mxu0 %v2113
    %2159 = vmatprep.subr.mxu0 %v2116
    %2160 = vmatpush1.msra.mxu0 %v2115
    %2161 = vmatprep.subr.mxu0 %v2118
    %2162 = vmatpush1.msra.mxu0 %v2117
    %2163 = vmatprep.subr.mxu0 %v2120
    %2164 = vmatpush1.msra.mxu0 %v2119
    %2165 = vmatprep.subr.mxu0 %v2122
    %2166 = vmatpush1.msra.mxu0 %v2121
    %2167 = vmatprep.subr.mxu0 %v2124
    %2168 = vmatpush1.msra.mxu0 %v2123
    %2169 = vmatprep.subr.mxu0 %v2126
    %2170 = vmatpush1.msra.mxu0 %v2125
    %2171 = vmatprep.subr.mxu0 %v2128
    %2172 = vmatpush1.msra.mxu0 %v2127
    %2173 = vmatprep.subr.mxu0 %v2130
    %2174 = vmatpush1.msra.mxu0 %v2129
    %2175 = vmatprep.subr.mxu0 %v2132
    %2176 = vmatpush1.msra.mxu0 %v2131
    %2177 = vmatprep.subr.mxu0 %v2134
    %2178 = vmatpush1.msra.mxu0 %v2133
    %2179 = vmatprep.subr.mxu0 %v2136
    %2180 = vmatpush1.msra.mxu0 %v2135
    %2181 = vmatprep.subr.mxu0 %v2138
    %2182 = vmatpush1.msra.mxu0 %v2137
    %2183 = vmatprep.subr.mxu0 %v2140
    %2184 = vmatpush1.msra.mxu0 %v2139
    %2185 = vmatprep.subr.mxu0 %v2142
    %2186 = vmatpush1.msra.mxu0 %v2141
    %2187 = vmatprep.subr.mxu0 0.0
    %2188 = vmatpush1.msra.mxu0 0.0
    %2189 = vmatprep.subr.mxu0 0.0
    %2190 = vmatpush1.msra.mxu0 0.0
    %2191 = vmatprep.subr.mxu0 0.0
    %2192 = vmatpush1.msra.mxu0 0.0
    %2193 = vmatprep.subr.mxu0 0.0
    %2194 = vmatpush1.msra.mxu0 0.0
    %2195 = vmatprep.subr.mxu0 0.0
    %2196 = vmatpush1.msra.mxu0 0.0
    %2197 = vmatprep.subr.mxu0 0.0
    %2198 = vmatpush1.msra.mxu0 0.0
    %2199 = vmatprep.subr.mxu0 0.0
    %2200 = vmatpush1.msra.mxu0 0.0
    %2201 = vmatprep.subr.mxu0 0.0
    %2202 = vmatpush1.msra.mxu0 0.0
    %2203 = vmatprep.subr.mxu0 0.0
    %2204 = vmatpush1.msra.mxu0 0.0
    %2205 = vmatprep.subr.mxu0 0.0
    %2206 = vmatpush1.msra.mxu0 0.0
    %2207 = vmatprep.subr.mxu0 0.0
    %2208 = vmatpush1.msra.mxu0 0.0
    %2209 = vmatprep.subr.mxu0 0.0
    %2210 = vmatpush1.msra.mxu0 0.0
    %2211 = vmatprep.subr.mxu0 0.0
    %2212 = vmatpush1.msra.mxu0 0.0
    %2213 = vmatprep.subr.mxu0 0.0
    %2214 = vmatpush1.msra.mxu0 0.0
    %2215 = vmatprep.subr.mxu0 0.0
    %2216 = vmatpush1.msra.mxu0 0.0
    %2217 = vmatprep.subr.mxu0 0.0
    %2218 = vmatpush1.msra.mxu0 0.0
    %2219 = vmatprep.mubr.f32.mxu0 0.0
    %2220 = vmatmul.mubr.f32.gmra.mrb[0].mxu0 %v2109
    %v2221 = vpop.f32.mrb[0].mxu0
    %v2222 = vadd.f32 %v2148, %v2221
    %v2223 = vpop.f32.mrb[0].mxu0
    %v2224 = vadd.f32 %v2152, %v2223
    %2225 = vmatprep.mubr.f32.mxu0 0.0
    %2226 = vmatmul.mubr.f32.gmra.mrb[0].mxu0 %v2110
    %v2227 = vpop.f32.mrb[0].mxu0
    %v2228 = vadd.f32 %v2148, %v2227
    %v2229 = vpop.f32.mrb[0].mxu0
    %v2230 = vadd.f32 %v2152, %v2229
    %2231 = vdwg.mxu0
    %v2232 = vmul.f32 %v2222, 0.5
    %v2233 = vmul.f32 %v2224, 0.5
    %v2234 = vmul.f32 %v2228, 0.5
    %v2235 = vmul.f32 %v2230, 0.5
    %v2236 = vmul.f32 %v2222, 0.044715
    %v2237 = vmul.f32 %v2224, 0.044715
    %v2238 = vmul.f32 %v2228, 0.044715
    %v2239 = vmul.f32 %v2230, 0.044715
    %v2240 = vmul.f32 %v2236, %v2222
    %v2241 = vmul.f32 %v2237, %v2224
    %v2242 = vmul.f32 %v2238, %v2228
    %v2243 = vmul.f32 %v2239, %v2230
    %v2244 = vmul.f32 %v2240, %v2222
    %v2245 = vmul.f32 %v2241, %v2224
    %v2246 = vmul.f32 %v2242, %v2228
    %v2247 = vmul.f32 %v2243, %v2230
    %v2248 = vadd.f32 %v2222, %v2244
    %v2249 = vadd.f32 %v2224, %v2245
    %v2250 = vadd.f32 %v2228, %v2246
    %v2251 = vadd.f32 %v2230, %v2247
    %v2252 = vmul.f32 %v2248, 0.7978846
    %v2253 = vmul.f32 %v2249, 0.7978846
    %v2254 = vmul.f32 %v2250, 0.7978846
    %v2255 = vmul.f32 %v2251, 0.7978846
    %v2256 = vtanh.pop %v2252
    %v2257 = vtanh.pop %v2253
    %v2258 = vtanh.pop %v2254
    %v2259 = vtanh.pop %v2255
    %v2260 = vadd.f32 %v2256, 1.0
    %v2261 = vadd.f32 %v2257, 1.0
    %v2262 = vadd.f32 %v2258, 1.0
    %v2263 = vadd.f32 %v2259, 1.0
    %v2264 = vmul.f32 %v2232, %v2260
    %v2265 = vmul.f32 %v2233, %v2261
    %v2266 = vmul.f32 %v2234, %v2262
    %v2267 = vmul.f32 %v2235, %v2263
    %v2268 = vld [vmem:[#allocation10] sm:$0xff]
    %v2269 = vld [vmem:[#allocation10 + $0x8] sm:$0xff]
    %v2270 = vld [vmem:[#allocation10 + $0x10] sm:$0xff]
    %v2271 = vld [vmem:[#allocation10 + $0x18] sm:$0xff]
    %v2272 = vld [vmem:[#allocation10 + $0x20] sm:$0xff]
    %v2273 = vld [vmem:[#allocation10 + $0x28] sm:$0xff]
    %v2274 = vld [vmem:[#allocation10 + $0x30] sm:$0xff]
    %v2275 = vld [vmem:[#allocation10 + $0x38] sm:$0xff]
    %v2276 = vld [vmem:[#allocation10 + $0x40] sm:$0xff]
    %v2277 = vld [vmem:[#allocation10 + $0x48] sm:$0xff]
    %v2278 = vld [vmem:[#allocation10 + $0x50] sm:$0xff]
    %v2279 = vld [vmem:[#allocation10 + $0x58] sm:$0xff]
    %v2280 = vld [vmem:[#allocation10 + $0x60] sm:$0xff]
    %v2281 = vld [vmem:[#allocation10 + $0x68] sm:$0xff]
    %v2282 = vld [vmem:[#allocation10 + $0x70] sm:$0xff]
    %v2283 = vld [vmem:[#allocation10 + $0x78] sm:$0xff]
    %v2284 = vld [vmem:[#allocation10 + $0x80] sm:$0xff]
    %v2285 = vld [vmem:[#allocation10 + $0x88] sm:$0xff]
    %v2286 = vld [vmem:[#allocation10 + $0x90] sm:$0xff]
    %v2287 = vld [vmem:[#allocation10 + $0x98] sm:$0xff]
    %v2288 = vld [vmem:[#allocation10 + $0xa0] sm:$0xff]
    %v2289 = vld [vmem:[#allocation10 + $0xa8] sm:$0xff]
    %v2290 = vld [vmem:[#allocation10 + $0xb0] sm:$0xff]
    %v2291 = vld [vmem:[#allocation10 + $0xb8] sm:$0xff]
    %v2292 = vld [vmem:[#allocation10 + $0xc0] sm:$0xff]
    %v2293 = vld [vmem:[#allocation10 + $0xc8] sm:$0xff]
    %v2294 = vld [vmem:[#allocation10 + $0xd0] sm:$0xff]
    %v2295 = vld [vmem:[#allocation10 + $0xd8] sm:$0xff]
    %v2296 = vld [vmem:[#allocation10 + $0xe0] sm:$0xff]
    %v2297 = vld [vmem:[#allocation10 + $0xe8] sm:$0xff]
    %v2298 = vld [vmem:[#allocation10 + $0xf0] sm:$0xff]
    %v2299 = vld [vmem:[#allocation10 + $0xf8] sm:$0xff]
    %v2300 = vld [vmem:[#allocation11] sm:$0x1]
    %v2302 = vlaneseq
    %v2303 = vshrl.u32 %v2302, 7
    %v2304 = vsub.s32 0, %v2303
    %v2305 = vrot.slane %v2300, %v2304
    %2307 = vmatprep.subr.mxu0 0.0
    %2308 = vmatpush1.msra.mxu0 %v2268
    %2309 = vmatprep.subr.mxu0 0.0
    %2310 = vmatpush1.msra.mxu0 %v2269
    %2311 = vmatprep.subr.mxu0 0.0
    %2312 = vmatpush1.msra.mxu0 %v2270
    %2313 = vmatprep.subr.mxu0 0.0
    %2314 = vmatpush1.msra.mxu0 %v2271
    %2315 = vmatprep.subr.mxu0 0.0
    %2316 = vmatpush1.msra.mxu0 %v2272
    %2317 = vmatprep.subr.mxu0 0.0
    %2318 = vmatpush1.msra.mxu0 %v2273
    %2319 = vmatprep.subr.mxu0 0.0
    %2320 = vmatpush1.msra.mxu0 %v2274
    %2321 = vmatprep.subr.mxu0 0.0
    %2322 = vmatpush1.msra.mxu0 %v2275
    %2323 = vmatprep.subr.mxu0 0.0
    %2324 = vmatpush1.msra.mxu0 %v2276
    %2325 = vmatprep.subr.mxu0 0.0
    %2326 = vmatpush1.msra.mxu0 %v2277
    %2327 = vmatprep.subr.mxu0 0.0
    %2328 = vmatpush1.msra.mxu0 %v2278
    %2329 = vmatprep.subr.mxu0 0.0
    %2330 = vmatpush1.msra.mxu0 %v2279
    %2331 = vmatprep.subr.mxu0 0.0
    %2332 = vmatpush1.msra.mxu0 %v2280
    %2333 = vmatprep.subr.mxu0 0.0
    %2334 = vmatpush1.msra.mxu0 %v2281
    %2335 = vmatprep.subr.mxu0 0.0
    %2336 = vmatpush1.msra.mxu0 %v2282
    %2337 = vmatprep.subr.mxu0 0.0
    %2338 = vmatpush1.msra.mxu0 %v2283
    %2339 = vmatprep.subr.mxu0 0.0
    %2340 = vmatpush1.msra.mxu0 %v2284
    %2341 = vmatprep.subr.mxu0 0.0
    %2342 = vmatpush1.msra.mxu0 %v2285
    %2343 = vmatprep.subr.mxu0 0.0
    %2344 = vmatpush1.msra.mxu0 %v2286
    %2345 = vmatprep.subr.mxu0 0.0
    %2346 = vmatpush1.msra.mxu0 %v2287
    %2347 = vmatprep.subr.mxu0 0.0
    %2348 = vmatpush1.msra.mxu0 %v2288
    %2349 = vmatprep.subr.mxu0 0.0
    %2350 = vmatpush1.msra.mxu0 %v2289
    %2351 = vmatprep.subr.mxu0 0.0
    %2352 = vmatpush1.msra.mxu0 %v2290
    %2353 = vmatprep.subr.mxu0 0.0
    %2354 = vmatpush1.msra.mxu0 %v2291
    %2355 = vmatprep.subr.mxu0 0.0
    %2356 = vmatpush1.msra.mxu0 %v2292
    %2357 = vmatprep.subr.mxu0 0.0
    %2358 = vmatpush1.msra.mxu0 %v2293
    %2359 = vmatprep.subr.mxu0 0.0
    %2360 = vmatpush1.msra.mxu0 %v2294
    %2361 = vmatprep.subr.mxu0 0.0
    %2362 = vmatpush1.msra.mxu0 %v2295
    %2363 = vmatprep.subr.mxu0 0.0
    %2364 = vmatpush1.msra.mxu0 %v2296
    %2365 = vmatprep.subr.mxu0 0.0
    %2366 = vmatpush1.msra.mxu0 %v2297
    %2367 = vmatprep.subr.mxu0 0.0
    %2368 = vmatpush1.msra.mxu0 %v2298
    %2369 = vmatprep.subr.mxu0 0.0
    %2370 = vmatpush1.msra.mxu0 %v2299
    %2371 = vmatprep.mubr.f32.mxu0 %v2265
    %2372 = vmatmul.mubr.f32.gmra.mrb[0].mxu0 %v2264
    %v2373 = vpop.f32.mrb[0].mxu0
    %v2374 = vadd.f32 %v2305, %v2373
    %v2375 = vpop.f32.mrb[0].mxu0
    %2376 = vmatprep.mubr.f32.mxu0 %v2267
    %2377 = vmatmul.mubr.f32.gmra.mrb[0].mxu0 %v2266
    %v2378 = vpop.f32.mrb[0].mxu0
    %v2379 = vadd.f32 %v2305, %v2378
    %v2380 = vpop.f32.mrb[0].mxu0
    %2381 = vdwg.mxu0
    %v2382 = vadd.f32 %v2109, %v2374
    %v2383 = vadd.f32 %v2110, %v2379
    %v2384 = vld [vmem:[%s16] sm:$0x1]
    %v2385 = vld [vmem:[%s17] sm:$0x1]
    %2386 = vadd.xlane.f32.xlu0 %v2382
    %v2387 = vpop.xlane.xlu0 %2386
    %2388 = vadd.xlane.f32.xlu0 %v2383
    %v2389 = vpop.xlane.xlu0 %2388
    %v2390 = vmul.f32 %v2387, %v345
    %v2391 = vmul.f32 %v2389, %v345
    %v2392 = vsub.f32 %v2382, %v2390
    %v2393 = vsub.f32 %v2383, %v2391
    %v2394 = vmul.f32 %v2392, %v2392
    %v2395 = vmul.f32 %v2393, %v2393
    %2396 = vadd.xlane.f32.xlu0 %v2394
    %v2397 = vpop.xlane.xlu0 %2396
    %2398 = vadd.xlane.f32.xlu0 %v2395
    %v2399 = vpop.xlane.xlu0 %2398
    %v2400 = vmul.f32 %v2397, %v345
    %v2401 = vmul.f32 %v2399, %v345
    %v2402 = vadd.f32 %v2400, 1e-12
    %v2403 = vadd.f32 %v2401, 1e-12
    %v2404 = vrsqrt.pop %v2402
    %v2405 = vrsqrt.pop %v2403
    %v2406 = vmul.f32 %v2392, %v2404
    %v2407 = vmul.f32 %v2393, %v2405
    %v2409 = vlaneseq
    %v2410 = vshrl.u32 %v2409, 7
    %v2411 = vsub.s32 0, %v2410
    %v2412 = vrot.slane %v2384, %v2411
    %v2414 = vmul.f32 %v2406, %v2412
    %v2415 = vmul.f32 %v2407, %v2412
    %v2417 = vlaneseq
    %v2418 = vshrl.u32 %v2417, 7
    %v2419 = vsub.s32 0, %v2418
    %v2420 = vrot.slane %v2385, %v2419
    %v2422 = vadd.f32 %v2414, %v2420
    %v2423 = vadd.f32 %v2415, %v2420
    %s2424 = scalar_lea.vmem [#allocation5], 384
    %v2425 = vld [vmem:[%s2424] sm:$0xff]
    %v2426 = vld [vmem:[%s2424 + $0x8] sm:$0xff]
    %v2427 = vld [vmem:[%s2424 + $0x10] sm:$0xff]
    %v2428 = vld [vmem:[%s2424 + $0x18] sm:$0xff]
    %v2429 = vld [vmem:[%s2424 + $0x20] sm:$0xff]
    %v2430 = vld [vmem:[%s2424 + $0x28] sm:$0xff]
    %v2431 = vld [vmem:[%s2424 + $0x30] sm:$0xff]
    %v2432 = vld [vmem:[%s2424 + $0x38] sm:$0xff]
    %v2433 = vld [vmem:[%s2424 + $0x40] sm:$0xff]
    %v2434 = vld [vmem:[%s2424 + $0x48] sm:$0xff]
    %v2435 = vld [vmem:[%s2424 + $0x50] sm:$0xff]
    %v2436 = vld [vmem:[%s2424 + $0x58] sm:$0xff]
    %v2437 = vld [vmem:[%s2424 + $0x60] sm:$0xff]
    %v2438 = vld [vmem:[%s2424 + $0x68] sm:$0xff]
    %v2439 = vld [vmem:[%s2424 + $0x70] sm:$0xff]
    %v2440 = vld [vmem:[%s2424 + $0x78] sm:$0xff]
    %v2441 = vld [vmem:[%s2424 + $0x80] sm:$0xff]
    %v2442 = vld [vmem:[%s2424 + $0x88] sm:$0xff]
    %v2443 = vld [vmem:[%s2424 + $0x90] sm:$0xff]
    %v2444 = vld [vmem:[%s2424 + $0x98] sm:$0xff]
    %v2445 = vld [vmem:[%s2424 + $0xa0] sm:$0xff]
    %v2446 = vld [vmem:[%s2424 + $0xa8] sm:$0xff]
    %v2447 = vld [vmem:[%s2424 + $0xb0] sm:$0xff]
    %v2448 = vld [vmem:[%s2424 + $0xb8] sm:$0xff]
    %v2449 = vld [vmem:[%s2424 + $0xc0] sm:$0xff]
    %v2450 = vld [vmem:[%s2424 + $0xc8] sm:$0xff]
    %v2451 = vld [vmem:[%s2424 + $0xd0] sm:$0xff]
    %v2452 = vld [vmem:[%s2424 + $0xd8] sm:$0xff]
    %v2453 = vld [vmem:[%s2424 + $0xe0] sm:$0xff]
    %v2454 = vld [vmem:[%s2424 + $0xe8] sm:$0xff]
    %v2455 = vld [vmem:[%s2424 + $0xf0] sm:$0xff]
    %v2456 = vld [vmem:[%s2424 + $0xf8] sm:$0xff]
    %v2457 = vld [vmem:[%s2424 + $0x100] sm:$0xff]
    %v2458 = vld [vmem:[%s2424 + $0x108] sm:$0xff]
    %v2459 = vld [vmem:[%s2424 + $0x110] sm:$0xff]
    %v2460 = vld [vmem:[%s2424 + $0x118] sm:$0xff]
    %v2461 = vld [vmem:[%s2424 + $0x120] sm:$0xff]
    %v2462 = vld [vmem:[%s2424 + $0x128] sm:$0xff]
    %v2463 = vld [vmem:[%s2424 + $0x130] sm:$0xff]
    %v2464 = vld [vmem:[%s2424 + $0x138] sm:$0xff]
    %v2465 = vld [vmem:[%s2424 + $0x140] sm:$0xff]
    %v2466 = vld [vmem:[%s2424 + $0x148] sm:$0xff]
    %v2467 = vld [vmem:[%s2424 + $0x150] sm:$0xff]
    %v2468 = vld [vmem:[%s2424 + $0x158] sm:$0xff]
    %v2469 = vld [vmem:[%s2424 + $0x160] sm:$0xff]
    %v2470 = vld [vmem:[%s2424 + $0x168] sm:$0xff]
    %v2471 = vld [vmem:[%s2424 + $0x170] sm:$0xff]
    %v2472 = vld [vmem:[%s2424 + $0x178] sm:$0xff]
    %s2473 = scalar_lea.vmem %s7, 3
    %v2474 = vld [vmem:[%s2473] sm:$0x7]
    %v2476 = vlaneseq
    %v2477 = vshrl.u32 %v2476, 7
    %v2478 = vsub.s32 0, %v2477
    %v2479 = vrot.slane %v2474, %v2478
    %v2480 = vlaneseq
    %v2481 = vshrl.u32 %v2480, 7
    %v2482 = vsub.s32 1, %v2481
    %v2483 = vrot.slane %v2474, %v2482
    %v2484 = vlaneseq
    %v2485 = vshrl.u32 %v2484, 7
    %v2486 = vsub.s32 2, %v2485
    %v2487 = vrot.slane %v2474, %v2486
    %2491 = vmatprep.subr.mxu0 %v2426
    %2492 = vmatpush1.msra.mxu0 %v2425
    %2493 = vmatprep.subr.mxu0 %v2429
    %2494 = vmatpush1.msra.mxu0 %v2428
    %2495 = vmatprep.subr.mxu0 %v2432
    %2496 = vmatpush1.msra.mxu0 %v2431
    %2497 = vmatprep.subr.mxu0 %v2435
    %2498 = vmatpush1.msra.mxu0 %v2434
    %2499 = vmatprep.subr.mxu0 %v2438
    %2500 = vmatpush1.msra.mxu0 %v2437
    %2501 = vmatprep.subr.mxu0 %v2441
    %2502 = vmatpush1.msra.mxu0 %v2440
    %2503 = vmatprep.subr.mxu0 %v2444
    %2504 = vmatpush1.msra.mxu0 %v2443
    %2505 = vmatprep.subr.mxu0 %v2447
    %2506 = vmatpush1.msra.mxu0 %v2446
    %2507 = vmatprep.subr.mxu0 %v2450
    %2508 = vmatpush1.msra.mxu0 %v2449
    %2509 = vmatprep.subr.mxu0 %v2453
    %2510 = vmatpush1.msra.mxu0 %v2452
    %2511 = vmatprep.subr.mxu0 %v2456
    %2512 = vmatpush1.msra.mxu0 %v2455
    %2513 = vmatprep.subr.mxu0 %v2459
    %2514 = vmatpush1.msra.mxu0 %v2458
    %2515 = vmatprep.subr.mxu0 %v2462
    %2516 = vmatpush1.msra.mxu0 %v2461
    %2517 = vmatprep.subr.mxu0 %v2465
    %2518 = vmatpush1.msra.mxu0 %v2464
    %2519 = vmatprep.subr.mxu0 %v2468
    %2520 = vmatpush1.msra.mxu0 %v2467
    %2521 = vmatprep.subr.mxu0 %v2471
    %2522 = vmatpush1.msra.mxu0 %v2470
    %2523 = vmatprep.subr.mxu0 0.0
    %2524 = vmatpush1.msra.mxu0 0.0
    %2525 = vmatprep.subr.mxu0 0.0
    %2526 = vmatpush1.msra.mxu0 0.0
    %2527 = vmatprep.subr.mxu0 0.0
    %2528 = vmatpush1.msra.mxu0 0.0
    %2529 = vmatprep.subr.mxu0 0.0
    %2530 = vmatpush1.msra.mxu0 0.0
    %2531 = vmatprep.subr.mxu0 0.0
    %2532 = vmatpush1.msra.mxu0 0.0
    %2533 = vmatprep.subr.mxu0 0.0
    %2534 = vmatpush1.msra.mxu0 0.0
    %2535 = vmatprep.subr.mxu0 0.0
    %2536 = vmatpush1.msra.mxu0 0.0
    %2537 = vmatprep.subr.mxu0 0.0
    %2538 = vmatpush1.msra.mxu0 0.0
    %2539 = vmatprep.subr.mxu0 0.0
    %2540 = vmatpush1.msra.mxu0 0.0
    %2541 = vmatprep.subr.mxu0 0.0
    %2542 = vmatpush1.msra.mxu0 0.0
    %2543 = vmatprep.subr.mxu0 0.0
    %2544 = vmatpush1.msra.mxu0 0.0
    %2545 = vmatprep.subr.mxu0 0.0
    %2546 = vmatpush1.msra.mxu0 0.0
    %2547 = vmatprep.subr.mxu0 0.0
    %2548 = vmatpush1.msra.mxu0 0.0
    %2549 = vmatprep.subr.mxu0 0.0
    %2550 = vmatpush1.msra.mxu0 0.0
    %2551 = vmatprep.subr.mxu0 0.0
    %2552 = vmatpush1.msra.mxu0 0.0
    %2553 = vmatprep.subr.mxu0 0.0
    %2554 = vmatpush1.msra.mxu0 0.0
    %2555 = vmatprep.mubr.f32.mxu0 0.0
    %2556 = vmatmul.mubr.f32.gmra.mrb[0].mxu0 %v2422
    %v2557 = vpop.f32.mrb[0].mxu0
    %v2558 = vadd.f32 %v2479, %v2557
    %v2559 = vpop.f32.mrb[0].mxu0
    %v2560 = vadd.f32 %v2483, %v2559
    %2561 = vmatprep.mubr.f32.mxu0 0.0
    %2562 = vmatmul.mubr.f32.gmra.mrb[0].mxu0 %v2423
    %v2563 = vpop.f32.mrb[0].mxu0
    %v2564 = vadd.f32 %v2479, %v2563
    %v2565 = vpop.f32.mrb[0].mxu0
    %v2566 = vadd.f32 %v2483, %v2565
    %2567 = vdwg.mxu0
    %2568 = vmatprep.subr.mxu0 0.0
    %2569 = vmatpush1.msra.mxu0 %v2427
    %2570 = vmatprep.subr.mxu0 0.0
    %2571 = vmatpush1.msra.mxu0 %v2430
    %2572 = vmatprep.subr.mxu0 0.0
    %2573 = vmatpush1.msra.mxu0 %v2433
    %2574 = vmatprep.subr.mxu0 0.0
    %2575 = vmatpush1.msra.mxu0 %v2436
    %2576 = vmatprep.subr.mxu0 0.0
    %2577 = vmatpush1.msra.mxu0 %v2439
    %2578 = vmatprep.subr.mxu0 0.0
    %2579 = vmatpush1.msra.mxu0 %v2442
    %2580 = vmatprep.subr.mxu0 0.0
    %2581 = vmatpush1.msra.mxu0 %v2445
    %2582 = vmatprep.subr.mxu0 0.0
    %2583 = vmatpush1.msra.mxu0 %v2448
    %2584 = vmatprep.subr.mxu0 0.0
    %2585 = vmatpush1.msra.mxu0 %v2451
    %2586 = vmatprep.subr.mxu0 0.0
    %2587 = vmatpush1.msra.mxu0 %v2454
    %2588 = vmatprep.subr.mxu0 0.0
    %2589 = vmatpush1.msra.mxu0 %v2457
    %2590 = vmatprep.subr.mxu0 0.0
    %2591 = vmatpush1.msra.mxu0 %v2460
    %2592 = vmatprep.subr.mxu0 0.0
    %2593 = vmatpush1.msra.mxu0 %v2463
    %2594 = vmatprep.subr.mxu0 0.0
    %2595 = vmatpush1.msra.mxu0 %v2466
    %2596 = vmatprep.subr.mxu0 0.0
    %2597 = vmatpush1.msra.mxu0 %v2469
    %2598 = vmatprep.subr.mxu0 0.0
    %2599 = vmatpush1.msra.mxu0 %v2472
    %2600 = vmatprep.subr.mxu0 0.0
    %2601 = vmatpush1.msra.mxu0 0.0
    %2602 = vmatprep.subr.mxu0 0.0
    %2603 = vmatpush1.msra.mxu0 0.0
    %2604 = vmatprep.subr.mxu0 0.0
    %2605 = vmatpush1.msra.mxu0 0.0
    %2606 = vmatprep.subr.mxu0 0.0
    %2607 = vmatpush1.msra.mxu0 0.0
    %2608 = vmatprep.subr.mxu0 0.0
    %2609 = vmatpush1.msra.mxu0 0.0
    %2610 = vmatprep.subr.mxu0 0.0
    %2611 = vmatpush1.msra.mxu0 0.0
    %2612 = vmatprep.subr.mxu0 0.0
    %2613 = vmatpush1.msra.mxu0 0.0
    %2614 = vmatprep.subr.mxu0 0.0
    %2615 = vmatpush1.msra.mxu0 0.0
    %2616 = vmatprep.subr.mxu0 0.0
    %2617 = vmatpush1.msra.mxu0 0.0
    %2618 = vmatprep.subr.mxu0 0.0
    %2619 = vmatpush1.msra.mxu0 0.0
    %2620 = vmatprep.subr.mxu0 0.0
    %2621 = vmatpush1.msra.mxu0 0.0
    %2622 = vmatprep.subr.mxu0 0.0
    %2623 = vmatpush1.msra.mxu0 0.0
    %2624 = vmatprep.subr.mxu0 0.0
    %2625 = vmatpush1.msra.mxu0 0.0
    %2626 = vmatprep.subr.mxu0 0.0
    %2627 = vmatpush1.msra.mxu0 0.0
    %2628 = vmatprep.subr.mxu0 0.0
    %2629 = vmatpush1.msra.mxu0 0.0
    %2630 = vmatprep.subr.mxu0 0.0
    %2631 = vmatpush1.msra.mxu0 0.0
    %2632 = vmatprep.mubr.f32.mxu0 0.0
    %2633 = vmatmul.mubr.f32.gmra.mrb[0].mxu0 %v2422
    %v2634 = vpop.f32.mrb[0].mxu0
    %v2635 = vadd.f32 %v2487, %v2634
    %v2636 = vpop.f32.mrb[0].mxu0
    %2637 = vmatprep.mubr.f32.mxu0 0.0
    %2638 = vmatmul.mubr.f32.gmra.mrb[0].mxu0 %v2423
    %v2639 = vpop.f32.mrb[0].mxu0
    %v2640 = vadd.f32 %v2487, %v2639
    %v2641 = vpop.f32.mrb[0].mxu0
    %2642 = vdwg.mxu0
    %v2644 = vsel %vm601, %v2558, 0
    %v2647 = vsel %vm601, %v2560, 0
    %2649 = vmatprep.subr.mxu0 0.0
    %2650 = vmatpush1.xpose.msra.mxu0 %v2647
    %2651 = vmatprep.subr.mxu0 0.0
    %2652 = vmatpush1.xpose.msra.mxu0 0.0
    %2653 = vmatprep.subr.mxu0 0.0
    %2654 = vmatpush1.xpose.msra.mxu0 0.0
    %2655 = vmatprep.subr.mxu0 0.0
    %2656 = vmatpush1.xpose.msra.mxu0 0.0
    %2657 = vmatprep.subr.mxu0 0.0
    %2658 = vmatpush1.xpose.msra.mxu0 0.0
    %2659 = vmatprep.subr.mxu0 0.0
    %2660 = vmatpush1.xpose.msra.mxu0 0.0
    %2661 = vmatprep.subr.mxu0 0.0
    %2662 = vmatpush1.xpose.msra.mxu0 0.0
    %2663 = vmatprep.subr.mxu0 0.0
    %2664 = vmatpush1.xpose.msra.mxu0 0.0
    %2665 = vmatprep.subr.mxu0 0.0
    %2666 = vmatpush1.xpose.msra.mxu0 0.0
    %2667 = vmatprep.subr.mxu0 0.0
    %2668 = vmatpush1.xpose.msra.mxu0 0.0
    %2669 = vmatprep.subr.mxu0 0.0
    %2670 = vmatpush1.xpose.msra.mxu0 0.0
    %2671 = vmatprep.subr.mxu0 0.0
    %2672 = vmatpush1.xpose.msra.mxu0 0.0
    %2673 = vmatprep.subr.mxu0 0.0
    %2674 = vmatpush1.xpose.msra.mxu0 0.0
    %2675 = vmatprep.subr.mxu0 0.0
    %2676 = vmatpush1.xpose.msra.mxu0 0.0
    %2677 = vmatprep.subr.mxu0 0.0
    %2678 = vmatpush1.xpose.msra.mxu0 0.0
    %2679 = vmatprep.subr.mxu0 0.0
    %2680 = vmatpush1.xpose.msra.mxu0 0.0
    %2681 = vmatprep.subr.mxu0 0.0
    %2682 = vmatpush1.xpose.msra.mxu0 0.0
    %2683 = vmatprep.subr.mxu0 0.0
    %2684 = vmatpush1.xpose.msra.mxu0 0.0
    %2685 = vmatprep.subr.mxu0 0.0
    %2686 = vmatpush1.xpose.msra.mxu0 0.0
    %2687 = vmatprep.subr.mxu0 0.0
    %2688 = vmatpush1.xpose.msra.mxu0 0.0
    %2689 = vmatprep.subr.mxu0 0.0
    %2690 = vmatpush1.xpose.msra.mxu0 0.0
    %2691 = vmatprep.subr.mxu0 0.0
    %2692 = vmatpush1.xpose.msra.mxu0 0.0
    %2693 = vmatprep.subr.mxu0 0.0
    %2694 = vmatpush1.xpose.msra.mxu0 0.0
    %2695 = vmatprep.subr.mxu0 0.0
    %2696 = vmatpush1.xpose.msra.mxu0 0.0
    %2697 = vmatprep.subr.mxu0 0.0
    %2698 = vmatpush1.xpose.msra.mxu0 0.0
    %2699 = vmatprep.subr.mxu0 0.0
    %2700 = vmatpush1.xpose.msra.mxu0 0.0
    %2701 = vmatprep.subr.mxu0 0.0
    %2702 = vmatpush1.xpose.msra.mxu0 0.0
    %2703 = vmatprep.subr.mxu0 0.0
    %2704 = vmatpush1.xpose.msra.mxu0 0.0
    %2705 = vmatprep.subr.mxu0 0.0
    %2706 = vmatpush1.xpose.msra.mxu0 0.0
    %2707 = vmatprep.subr.mxu0 0.0
    %2708 = vmatpush1.xpose.msra.mxu0 0.0
    %2709 = vmatprep.subr.mxu0 0.0
    %2710 = vmatpush1.xpose.msra.mxu0 0.0
    %2711 = vmatprep.subr.mxu0 0.0
    %2712 = vmatpush1.xpose.msra.mxu0 0.0
    %2713 = vmatprep.mubr.f32.mxu0 0.0
    %2714 = vmatmul.mubr.f32.gmra.mrb[0].mxu0 %v2644
    %v2715 = vpop.f32.mrb[0].mxu0
    %v2716 = vadd.f32 0.0, %v2715
    %v2717 = vpop.f32.mrb[0].mxu0
    %2718 = vdwg.mxu0
    %v2719 = vmul.f32 %v2716, 0.17677669
    %v2720 = vadd.f32 %v2719, %v682
    %v2721 = vsel %vm684, %v2720, -inf
    %2722 = vmax.xlane.f32.xlu0 %v2721
    %v2723 = vpop.xlane.xlu0 %2722
    %v2724 = vsub.f32 %v2720, %v2723
    %v2725 = vmul.f32 %v2724, 1.442695
    %v2726 = vpow.pop %v2725
    %v2727 = vsel %vm684, %v2726, 0.0
    %2728 = vadd.xlane.f32.xlu0 %v2727
    %v2729 = vpop.xlane.xlu0 %2728
    %v2730 = vrcp.pop %v2729
    %v2731 = vmul.f32 %v2726, %v2730
    %v2733 = vsel %vm684, %v2731, 0
    %2735 = vmatprep.subr.mxu0 0.0
    %2736 = vmatpush1.msra.mxu0 %v2635
    %2737 = vmatprep.subr.mxu0 0.0
    %2738 = vmatpush1.msra.mxu0 0.0
    %2739 = vmatprep.subr.mxu0 0.0
    %2740 = vmatpush1.msra.mxu0 0.0
    %2741 = vmatprep.subr.mxu0 0.0
    %2742 = vmatpush1.msra.mxu0 0.0
    %2743 = vmatprep.subr.mxu0 0.0
    %2744 = vmatpush1.msra.mxu0 0.0
    %2745 = vmatprep.subr.mxu0 0.0
    %2746 = vmatpush1.msra.mxu0 0.0
    %2747 = vmatprep.subr.mxu0 0.0
    %2748 = vmatpush1.msra.mxu0 0.0
    %2749 = vmatprep.subr.mxu0 0.0
    %2750 = vmatpush1.msra.mxu0 0.0
    %2751 = vmatprep.subr.mxu0 0.0
    %2752 = vmatpush1.msra.mxu0 0.0
    %2753 = vmatprep.subr.mxu0 0.0
    %2754 = vmatpush1.msra.mxu0 0.0
    %2755 = vmatprep.subr.mxu0 0.0
    %2756 = vmatpush1.msra.mxu0 0.0
    %2757 = vmatprep.subr.mxu0 0.0
    %2758 = vmatpush1.msra.mxu0 0.0
    %2759 = vmatprep.subr.mxu0 0.0
    %2760 = vmatpush1.msra.mxu0 0.0
    %2761 = vmatprep.subr.mxu0 0.0
    %2762 = vmatpush1.msra.mxu0 0.0
    %2763 = vmatprep.subr.mxu0 0.0
    %2764 = vmatpush1.msra.mxu0 0.0
    %2765 = vmatprep.subr.mxu0 0.0
    %2766 = vmatpush1.msra.mxu0 0.0
    %2767 = vmatprep.subr.mxu0 0.0
    %2768 = vmatpush1.msra.mxu0 0.0
    %2769 = vmatprep.subr.mxu0 0.0
    %2770 = vmatpush1.msra.mxu0 0.0
    %2771 = vmatprep.subr.mxu0 0.0
    %2772 = vmatpush1.msra.mxu0 0.0
    %2773 = vmatprep.subr.mxu0 0.0
    %2774 = vmatpush1.msra.mxu0 0.0
    %2775 = vmatprep.subr.mxu0 0.0
    %2776 = vmatpush1.msra.mxu0 0.0
    %2777 = vmatprep.subr.mxu0 0.0
    %2778 = vmatpush1.msra.mxu0 0.0
    %2779 = vmatprep.subr.mxu0 0.0
    %2780 = vmatpush1.msra.mxu0 0.0
    %2781 = vmatprep.subr.mxu0 0.0
    %2782 = vmatpush1.msra.mxu0 0.0
    %2783 = vmatprep.subr.mxu0 0.0
    %2784 = vmatpush1.msra.mxu0 0.0
    %2785 = vmatprep.subr.mxu0 0.0
    %2786 = vmatpush1.msra.mxu0 0.0
    %2787 = vmatprep.subr.mxu0 0.0
    %2788 = vmatpush1.msra.mxu0 0.0
    %2789 = vmatprep.subr.mxu0 0.0
    %2790 = vmatpush1.msra.mxu0 0.0
    %2791 = vmatprep.subr.mxu0 0.0
    %2792 = vmatpush1.msra.mxu0 0.0
    %2793 = vmatprep.subr.mxu0 0.0
    %2794 = vmatpush1.msra.mxu0 0.0
    %2795 = vmatprep.subr.mxu0 0.0
    %2796 = vmatpush1.msra.mxu0 0.0
    %2797 = vmatprep.subr.mxu0 0.0
    %2798 = vmatpush1.msra.mxu0 0.0
    %2799 = vmatprep.mubr.f32.mxu0 0.0
    %2800 = vmatmul.mubr.f32.gmra.mrb[0].mxu0 %v2733
    %v2801 = vpop.f32.mrb[0].mxu0
    %v2802 = vadd.f32 0.0, %v2801
    %v2803 = vpop.f32.mrb[0].mxu0
    %2804 = vdwg.mxu0
    %2805 = vrot.lane.b32.xlu0 %v2558, 96
    %v2806 = vpop.permute.xlu0 %2805
    %2807 = vrot.lane.b32.xlu0 %v2560, 96
    %v2808 = vpop.permute.xlu0 %2807
    %v2809 = vsel %vm601, %v2806, 0
    %v2811 = vsel %vm601, %v2808, 0
    %2813 = vmatprep.subr.mxu0 0.0
    %2814 = vmatpush1.xpose.msra.mxu0 %v2811
    %2815 = vmatprep.subr.mxu0 0.0
    %2816 = vmatpush1.xpose.msra.mxu0 0.0
    %2817 = vmatprep.subr.mxu0 0.0
    %2818 = vmatpush1.xpose.msra.mxu0 0.0
    %2819 = vmatprep.subr.mxu0 0.0
    %2820 = vmatpush1.xpose.msra.mxu0 0.0
    %2821 = vmatprep.subr.mxu0 0.0
    %2822 = vmatpush1.xpose.msra.mxu0 0.0
    %2823 = vmatprep.subr.mxu0 0.0
    %2824 = vmatpush1.xpose.msra.mxu0 0.0
    %2825 = vmatprep.subr.mxu0 0.0
    %2826 = vmatpush1.xpose.msra.mxu0 0.0
    %2827 = vmatprep.subr.mxu0 0.0
    %2828 = vmatpush1.xpose.msra.mxu0 0.0
    %2829 = vmatprep.subr.mxu0 0.0
    %2830 = vmatpush1.xpose.msra.mxu0 0.0
    %2831 = vmatprep.subr.mxu0 0.0
    %2832 = vmatpush1.xpose.msra.mxu0 0.0
    %2833 = vmatprep.subr.mxu0 0.0
    %2834 = vmatpush1.xpose.msra.mxu0 0.0
    %2835 = vmatprep.subr.mxu0 0.0
    %2836 = vmatpush1.xpose.msra.mxu0 0.0
    %2837 = vmatprep.subr.mxu0 0.0
    %2838 = vmatpush1.xpose.msra.mxu0 0.0
    %2839 = vmatprep.subr.mxu0 0.0
    %2840 = vmatpush1.xpose.msra.mxu0 0.0
    %2841 = vmatprep.subr.mxu0 0.0
    %2842 = vmatpush1.xpose.msra.mxu0 0.0
    %2843 = vmatprep.subr.mxu0 0.0
    %2844 = vmatpush1.xpose.msra.mxu0 0.0
    %2845 = vmatprep.subr.mxu0 0.0
    %2846 = vmatpush1.xpose.msra.mxu0 0.0
    %2847 = vmatprep.subr.mxu0 0.0
    %2848 = vmatpush1.xpose.msra.mxu0 0.0
    %2849 = vmatprep.subr.mxu0 0.0
    %2850 = vmatpush1.xpose.msra.mxu0 0.0
    %2851 = vmatprep.subr.mxu0 0.0
    %2852 = vmatpush1.xpose.msra.mxu0 0.0
    %2853 = vmatprep.subr.mxu0 0.0
    %2854 = vmatpush1.xpose.msra.mxu0 0.0
    %2855 = vmatprep.subr.mxu0 0.0
    %2856 = vmatpush1.xpose.msra.mxu0 0.0
    %2857 = vmatprep.subr.mxu0 0.0
    %2858 = vmatpush1.xpose.msra.mxu0 0.0
    %2859 = vmatprep.subr.mxu0 0.0
    %2860 = vmatpush1.xpose.msra.mxu0 0.0
    %2861 = vmatprep.subr.mxu0 0.0
    %2862 = vmatpush1.xpose.msra.mxu0 0.0
    %2863 = vmatprep.subr.mxu0 0.0
    %2864 = vmatpush1.xpose.msra.mxu0 0.0
    %2865 = vmatprep.subr.mxu0 0.0
    %2866 = vmatpush1.xpose.msra.mxu0 0.0
    %2867 = vmatprep.subr.mxu0 0.0
    %2868 = vmatpush1.xpose.msra.mxu0 0.0
    %2869 = vmatprep.subr.mxu0 0.0
    %2870 = vmatpush1.xpose.msra.mxu0 0.0
    %2871 = vmatprep.subr.mxu0 0.0
    %2872 = vmatpush1.xpose.msra.mxu0 0.0
    %2873 = vmatprep.subr.mxu0 0.0
    %2874 = vmatpush1.xpose.msra.mxu0 0.0
    %2875 = vmatprep.subr.mxu0 0.0
    %2876 = vmatpush1.xpose.msra.mxu0 0.0
    %2877 = vmatprep.mubr.f32.mxu0 0.0
    %2878 = vmatmul.mubr.f32.gmra.mrb[0].mxu0 %v2809
    %v2879 = vpop.f32.mrb[0].mxu0
    %v2880 = vadd.f32 0.0, %v2879
    %v2881 = vpop.f32.mrb[0].mxu0
    %2882 = vdwg.mxu0
    %v2883 = vmul.f32 %v2880, 0.17677669
    %v2884 = vadd.f32 %v2883, %v682
    %v2885 = vsel %vm684, %v2884, -inf
    %2886 = vmax.xlane.f32.xlu0 %v2885
    %v2887 = vpop.xlane.xlu0 %2886
    %v2888 = vsub.f32 %v2884, %v2887
    %v2889 = vmul.f32 %v2888, 1.442695
    %v2890 = vpow.pop %v2889
    %v2891 = vsel %vm684, %v2890, 0.0
    %2892 = vadd.xlane.f32.xlu0 %v2891
    %v2893 = vpop.xlane.xlu0 %2892
    %v2894 = vrcp.pop %v2893
    %v2895 = vmul.f32 %v2890, %v2894
    %2897 = vrot.lane.b32.xlu0 %v2635, 96
    %v2898 = vpop.permute.xlu0 %2897
    %v2901 = vsel %vm684, %v2895, 0
    %2903 = vmatprep.subr.mxu0 0.0
    %2904 = vmatpush1.msra.mxu0 %v2898
    %2905 = vmatprep.subr.mxu0 0.0
    %2906 = vmatpush1.msra.mxu0 0.0
    %2907 = vmatprep.subr.mxu0 0.0
    %2908 = vmatpush1.msra.mxu0 0.0
    %2909 = vmatprep.subr.mxu0 0.0
    %2910 = vmatpush1.msra.mxu0 0.0
    %2911 = vmatprep.subr.mxu0 0.0
    %2912 = vmatpush1.msra.mxu0 0.0
    %2913 = vmatprep.subr.mxu0 0.0
    %2914 = vmatpush1.msra.mxu0 0.0
    %2915 = vmatprep.subr.mxu0 0.0
    %2916 = vmatpush1.msra.mxu0 0.0
    %2917 = vmatprep.subr.mxu0 0.0
    %2918 = vmatpush1.msra.mxu0 0.0
    %2919 = vmatprep.subr.mxu0 0.0
    %2920 = vmatpush1.msra.mxu0 0.0
    %2921 = vmatprep.subr.mxu0 0.0
    %2922 = vmatpush1.msra.mxu0 0.0
    %2923 = vmatprep.subr.mxu0 0.0
    %2924 = vmatpush1.msra.mxu0 0.0
    %2925 = vmatprep.subr.mxu0 0.0
    %2926 = vmatpush1.msra.mxu0 0.0
    %2927 = vmatprep.subr.mxu0 0.0
    %2928 = vmatpush1.msra.mxu0 0.0
    %2929 = vmatprep.subr.mxu0 0.0
    %2930 = vmatpush1.msra.mxu0 0.0
    %2931 = vmatprep.subr.mxu0 0.0
    %2932 = vmatpush1.msra.mxu0 0.0
    %2933 = vmatprep.subr.mxu0 0.0
    %2934 = vmatpush1.msra.mxu0 0.0
    %2935 = vmatprep.subr.mxu0 0.0
    %2936 = vmatpush1.msra.mxu0 0.0
    %2937 = vmatprep.subr.mxu0 0.0
    %2938 = vmatpush1.msra.mxu0 0.0
    %2939 = vmatprep.subr.mxu0 0.0
    %2940 = vmatpush1.msra.mxu0 0.0
    %2941 = vmatprep.subr.mxu0 0.0
    %2942 = vmatpush1.msra.mxu0 0.0
    %2943 = vmatprep.subr.mxu0 0.0
    %2944 = vmatpush1.msra.mxu0 0.0
    %2945 = vmatprep.subr.mxu0 0.0
    %2946 = vmatpush1.msra.mxu0 0.0
    %2947 = vmatprep.subr.mxu0 0.0
    %2948 = vmatpush1.msra.mxu0 0.0
    %2949 = vmatprep.subr.mxu0 0.0
    %2950 = vmatpush1.msra.mxu0 0.0
    %2951 = vmatprep.subr.mxu0 0.0
    %2952 = vmatpush1.msra.mxu0 0.0
    %2953 = vmatprep.subr.mxu0 0.0
    %2954 = vmatpush1.msra.mxu0 0.0
    %2955 = vmatprep.subr.mxu0 0.0
    %2956 = vmatpush1.msra.mxu0 0.0
    %2957 = vmatprep.subr.mxu0 0.0
    %2958 = vmatpush1.msra.mxu0 0.0
    %2959 = vmatprep.subr.mxu0 0.0
    %2960 = vmatpush1.msra.mxu0 0.0
    %2961 = vmatprep.subr.mxu0 0.0
    %2962 = vmatpush1.msra.mxu0 0.0
    %2963 = vmatprep.subr.mxu0 0.0
    %2964 = vmatpush1.msra.mxu0 0.0
    %2965 = vmatprep.subr.mxu0 0.0
    %2966 = vmatpush1.msra.mxu0 0.0
    %2967 = vmatprep.mubr.f32.mxu0 0.0
    %2968 = vmatmul.mubr.f32.gmra.mrb[0].mxu0 %v2901
    %v2969 = vpop.f32.mrb[0].mxu0
    %v2970 = vadd.f32 0.0, %v2969
    %v2971 = vpop.f32.mrb[0].mxu0
    %2972 = vdwg.mxu0
    %2973 = vrot.lane.b32.xlu0 %v2558, 64
    %v2974 = vpop.permute.xlu0 %2973
    %2975 = vrot.lane.b32.xlu0 %v2560, 64
    %v2976 = vpop.permute.xlu0 %2975
    %v2977 = vsel %vm601, %v2974, 0
    %v2979 = vsel %vm601, %v2976, 0
    %2981 = vmatprep.subr.mxu0 0.0
    %2982 = vmatpush1.xpose.msra.mxu0 %v2979
    %2983 = vmatprep.subr.mxu0 0.0
    %2984 = vmatpush1.xpose.msra.mxu0 0.0
    %2985 = vmatprep.subr.mxu0 0.0
    %2986 = vmatpush1.xpose.msra.mxu0 0.0
    %2987 = vmatprep.subr.mxu0 0.0
    %2988 = vmatpush1.xpose.msra.mxu0 0.0
    %2989 = vmatprep.subr.mxu0 0.0
    %2990 = vmatpush1.xpose.msra.mxu0 0.0
    %2991 = vmatprep.subr.mxu0 0.0
    %2992 = vmatpush1.xpose.msra.mxu0 0.0
    %2993 = vmatprep.subr.mxu0 0.0
    %2994 = vmatpush1.xpose.msra.mxu0 0.0
    %2995 = vmatprep.subr.mxu0 0.0
    %2996 = vmatpush1.xpose.msra.mxu0 0.0
    %2997 = vmatprep.subr.mxu0 0.0
    %2998 = vmatpush1.xpose.msra.mxu0 0.0
    %2999 = vmatprep.subr.mxu0 0.0
    %3000 = vmatpush1.xpose.msra.mxu0 0.0
    %3001 = vmatprep.subr.mxu0 0.0
    %3002 = vmatpush1.xpose.msra.mxu0 0.0
    %3003 = vmatprep.subr.mxu0 0.0
    %3004 = vmatpush1.xpose.msra.mxu0 0.0
    %3005 = vmatprep.subr.mxu0 0.0
    %3006 = vmatpush1.xpose.msra.mxu0 0.0
    %3007 = vmatprep.subr.mxu0 0.0
    %3008 = vmatpush1.xpose.msra.mxu0 0.0
    %3009 = vmatprep.subr.mxu0 0.0
    %3010 = vmatpush1.xpose.msra.mxu0 0.0
    %3011 = vmatprep.subr.mxu0 0.0
    %3012 = vmatpush1.xpose.msra.mxu0 0.0
    %3013 = vmatprep.subr.mxu0 0.0
    %3014 = vmatpush1.xpose.msra.mxu0 0.0
    %3015 = vmatprep.subr.mxu0 0.0
    %3016 = vmatpush1.xpose.msra.mxu0 0.0
    %3017 = vmatprep.subr.mxu0 0.0
    %3018 = vmatpush1.xpose.msra.mxu0 0.0
    %3019 = vmatprep.subr.mxu0 0.0
    %3020 = vmatpush1.xpose.msra.mxu0 0.0
    %3021 = vmatprep.subr.mxu0 0.0
    %3022 = vmatpush1.xpose.msra.mxu0 0.0
    %3023 = vmatprep.subr.mxu0 0.0
    %3024 = vmatpush1.xpose.msra.mxu0 0.0
    %3025 = vmatprep.subr.mxu0 0.0
    %3026 = vmatpush1.xpose.msra.mxu0 0.0
    %3027 = vmatprep.subr.mxu0 0.0
    %3028 = vmatpush1.xpose.msra.mxu0 0.0
    %3029 = vmatprep.subr.mxu0 0.0
    %3030 = vmatpush1.xpose.msra.mxu0 0.0
    %3031 = vmatprep.subr.mxu0 0.0
    %3032 = vmatpush1.xpose.msra.mxu0 0.0
    %3033 = vmatprep.subr.mxu0 0.0
    %3034 = vmatpush1.xpose.msra.mxu0 0.0
    %3035 = vmatprep.subr.mxu0 0.0
    %3036 = vmatpush1.xpose.msra.mxu0 0.0
    %3037 = vmatprep.subr.mxu0 0.0
    %3038 = vmatpush1.xpose.msra.mxu0 0.0
    %3039 = vmatprep.subr.mxu0 0.0
    %3040 = vmatpush1.xpose.msra.mxu0 0.0
    %3041 = vmatprep.subr.mxu0 0.0
    %3042 = vmatpush1.xpose.msra.mxu0 0.0
    %3043 = vmatprep.subr.mxu0 0.0
    %3044 = vmatpush1.xpose.msra.mxu0 0.0
    %3045 = vmatprep.mubr.f32.mxu0 0.0
    %3046 = vmatmul.mubr.f32.gmra.mrb[0].mxu0 %v2977
    %v3047 = vpop.f32.mrb[0].mxu0
    %v3048 = vadd.f32 0.0, %v3047
    %v3049 = vpop.f32.mrb[0].mxu0
    %3050 = vdwg.mxu0
    %v3051 = vmul.f32 %v3048, 0.17677669
    %v3052 = vadd.f32 %v3051, %v682
    %v3053 = vsel %vm684, %v3052, -inf
    %3054 = vmax.xlane.f32.xlu0 %v3053
    %v3055 = vpop.xlane.xlu0 %3054
    %v3056 = vsub.f32 %v3052, %v3055
    %v3057 = vmul.f32 %v3056, 1.442695
    %v3058 = vpow.pop %v3057
    %v3059 = vsel %vm684, %v3058, 0.0
    %3060 = vadd.xlane.f32.xlu0 %v3059
    %v3061 = vpop.xlane.xlu0 %3060
    %v3062 = vrcp.pop %v3061
    %v3063 = vmul.f32 %v3058, %v3062
    %3064 = vrot.lane.b32.xlu0 %v2635, 64
    %v3065 = vpop.permute.xlu0 %3064
    %v3068 = vsel %vm684, %v3063, 0
    %3070 = vmatprep.subr.mxu0 0.0
    %3071 = vmatpush1.msra.mxu0 %v3065
    %3072 = vmatprep.subr.mxu0 0.0
    %3073 = vmatpush1.msra.mxu0 0.0
    %3074 = vmatprep.subr.mxu0 0.0
    %3075 = vmatpush1.msra.mxu0 0.0
    %3076 = vmatprep.subr.mxu0 0.0
    %3077 = vmatpush1.msra.mxu0 0.0
    %3078 = vmatprep.subr.mxu0 0.0
    %3079 = vmatpush1.msra.mxu0 0.0
    %3080 = vmatprep.subr.mxu0 0.0
    %3081 = vmatpush1.msra.mxu0 0.0
    %3082 = vmatprep.subr.mxu0 0.0
    %3083 = vmatpush1.msra.mxu0 0.0
    %3084 = vmatprep.subr.mxu0 0.0
    %3085 = vmatpush1.msra.mxu0 0.0
    %3086 = vmatprep.subr.mxu0 0.0
    %3087 = vmatpush1.msra.mxu0 0.0
    %3088 = vmatprep.subr.mxu0 0.0
    %3089 = vmatpush1.msra.mxu0 0.0
    %3090 = vmatprep.subr.mxu0 0.0
    %3091 = vmatpush1.msra.mxu0 0.0
    %3092 = vmatprep.subr.mxu0 0.0
    %3093 = vmatpush1.msra.mxu0 0.0
    %3094 = vmatprep.subr.mxu0 0.0
    %3095 = vmatpush1.msra.mxu0 0.0
    %3096 = vmatprep.subr.mxu0 0.0
    %3097 = vmatpush1.msra.mxu0 0.0
    %3098 = vmatprep.subr.mxu0 0.0
    %3099 = vmatpush1.msra.mxu0 0.0
    %3100 = vmatprep.subr.mxu0 0.0
    %3101 = vmatpush1.msra.mxu0 0.0
    %3102 = vmatprep.subr.mxu0 0.0
    %3103 = vmatpush1.msra.mxu0 0.0
    %3104 = vmatprep.subr.mxu0 0.0
    %3105 = vmatpush1.msra.mxu0 0.0
    %3106 = vmatprep.subr.mxu0 0.0
    %3107 = vmatpush1.msra.mxu0 0.0
    %3108 = vmatprep.subr.mxu0 0.0
    %3109 = vmatpush1.msra.mxu0 0.0
    %3110 = vmatprep.subr.mxu0 0.0
    %3111 = vmatpush1.msra.mxu0 0.0
    %3112 = vmatprep.subr.mxu0 0.0
    %3113 = vmatpush1.msra.mxu0 0.0
    %3114 = vmatprep.subr.mxu0 0.0
    %3115 = vmatpush1.msra.mxu0 0.0
    %3116 = vmatprep.subr.mxu0 0.0
    %3117 = vmatpush1.msra.mxu0 0.0
    %3118 = vmatprep.subr.mxu0 0.0
    %3119 = vmatpush1.msra.mxu0 0.0
    %3120 = vmatprep.subr.mxu0 0.0
    %3121 = vmatpush1.msra.mxu0 0.0
    %3122 = vmatprep.subr.mxu0 0.0
    %3123 = vmatpush1.msra.mxu0 0.0
    %3124 = vmatprep.subr.mxu0 0.0
    %3125 = vmatpush1.msra.mxu0 0.0
    %3126 = vmatprep.subr.mxu0 0.0
    %3127 = vmatpush1.msra.mxu0 0.0
    %3128 = vmatprep.subr.mxu0 0.0
    %3129 = vmatpush1.msra.mxu0 0.0
    %3130 = vmatprep.subr.mxu0 0.0
    %3131 = vmatpush1.msra.mxu0 0.0
    %3132 = vmatprep.subr.mxu0 0.0
    %3133 = vmatpush1.msra.mxu0 0.0
    %3134 = vmatprep.mubr.f32.mxu0 0.0
    %3135 = vmatmul.mubr.f32.gmra.mrb[0].mxu0 %v3068
    %v3136 = vpop.f32.mrb[0].mxu0
    %v3137 = vadd.f32 0.0, %v3136
    %v3138 = vpop.f32.mrb[0].mxu0
    %3139 = vdwg.mxu0
    %3140 = vrot.lane.b32.xlu0 %v2558, 32
    %v3141 = vpop.permute.xlu0 %3140
    %3142 = vrot.lane.b32.xlu0 %v2560, 32
    %v3143 = vpop.permute.xlu0 %3142
    %v3144 = vsel %vm601, %v3141, 0
    %v3146 = vsel %vm601, %v3143, 0
    %3148 = vmatprep.subr.mxu0 0.0
    %3149 = vmatpush1.xpose.msra.mxu0 %v3146
    %3150 = vmatprep.subr.mxu0 0.0
    %3151 = vmatpush1.xpose.msra.mxu0 0.0
    %3152 = vmatprep.subr.mxu0 0.0
    %3153 = vmatpush1.xpose.msra.mxu0 0.0
    %3154 = vmatprep.subr.mxu0 0.0
    %3155 = vmatpush1.xpose.msra.mxu0 0.0
    %3156 = vmatprep.subr.mxu0 0.0
    %3157 = vmatpush1.xpose.msra.mxu0 0.0
    %3158 = vmatprep.subr.mxu0 0.0
    %3159 = vmatpush1.xpose.msra.mxu0 0.0
    %3160 = vmatprep.subr.mxu0 0.0
    %3161 = vmatpush1.xpose.msra.mxu0 0.0
    %3162 = vmatprep.subr.mxu0 0.0
    %3163 = vmatpush1.xpose.msra.mxu0 0.0
    %3164 = vmatprep.subr.mxu0 0.0
    %3165 = vmatpush1.xpose.msra.mxu0 0.0
    %3166 = vmatprep.subr.mxu0 0.0
    %3167 = vmatpush1.xpose.msra.mxu0 0.0
    %3168 = vmatprep.subr.mxu0 0.0
    %3169 = vmatpush1.xpose.msra.mxu0 0.0
    %3170 = vmatprep.subr.mxu0 0.0
    %3171 = vmatpush1.xpose.msra.mxu0 0.0
    %3172 = vmatprep.subr.mxu0 0.0
    %3173 = vmatpush1.xpose.msra.mxu0 0.0
    %3174 = vmatprep.subr.mxu0 0.0
    %3175 = vmatpush1.xpose.msra.mxu0 0.0
    %3176 = vmatprep.subr.mxu0 0.0
    %3177 = vmatpush1.xpose.msra.mxu0 0.0
    %3178 = vmatprep.subr.mxu0 0.0
    %3179 = vmatpush1.xpose.msra.mxu0 0.0
    %3180 = vmatprep.subr.mxu0 0.0
    %3181 = vmatpush1.xpose.msra.mxu0 0.0
    %3182 = vmatprep.subr.mxu0 0.0
    %3183 = vmatpush1.xpose.msra.mxu0 0.0
    %3184 = vmatprep.subr.mxu0 0.0
    %3185 = vmatpush1.xpose.msra.mxu0 0.0
    %3186 = vmatprep.subr.mxu0 0.0
    %3187 = vmatpush1.xpose.msra.mxu0 0.0
    %3188 = vmatprep.subr.mxu0 0.0
    %3189 = vmatpush1.xpose.msra.mxu0 0.0
    %3190 = vmatprep.subr.mxu0 0.0
    %3191 = vmatpush1.xpose.msra.mxu0 0.0
    %3192 = vmatprep.subr.mxu0 0.0
    %3193 = vmatpush1.xpose.msra.mxu0 0.0
    %3194 = vmatprep.subr.mxu0 0.0
    %3195 = vmatpush1.xpose.msra.mxu0 0.0
    %3196 = vmatprep.subr.mxu0 0.0
    %3197 = vmatpush1.xpose.msra.mxu0 0.0
    %3198 = vmatprep.subr.mxu0 0.0
    %3199 = vmatpush1.xpose.msra.mxu0 0.0
    %3200 = vmatprep.subr.mxu0 0.0
    %3201 = vmatpush1.xpose.msra.mxu0 0.0
    %3202 = vmatprep.subr.mxu0 0.0
    %3203 = vmatpush1.xpose.msra.mxu0 0.0
    %3204 = vmatprep.subr.mxu0 0.0
    %3205 = vmatpush1.xpose.msra.mxu0 0.0
    %3206 = vmatprep.subr.mxu0 0.0
    %3207 = vmatpush1.xpose.msra.mxu0 0.0
    %3208 = vmatprep.subr.mxu0 0.0
    %3209 = vmatpush1.xpose.msra.mxu0 0.0
    %3210 = vmatprep.subr.mxu0 0.0
    %3211 = vmatpush1.xpose.msra.mxu0 0.0
    %3212 = vmatprep.mubr.f32.mxu0 0.0
    %3213 = vmatmul.mubr.f32.gmra.mrb[0].mxu0 %v3144
    %v3214 = vpop.f32.mrb[0].mxu0
    %v3215 = vadd.f32 0.0, %v3214
    %v3216 = vpop.f32.mrb[0].mxu0
    %3217 = vdwg.mxu0
    %v3218 = vmul.f32 %v3215, 0.17677669
    %v3219 = vadd.f32 %v3218, %v682
    %v3220 = vsel %vm684, %v3219, -inf
    %3221 = vmax.xlane.f32.xlu0 %v3220
    %v3222 = vpop.xlane.xlu0 %3221
    %v3223 = vsub.f32 %v3219, %v3222
    %v3224 = vmul.f32 %v3223, 1.442695
    %v3225 = vpow.pop %v3224
    %v3226 = vsel %vm684, %v3225, 0.0
    %3227 = vadd.xlane.f32.xlu0 %v3226
    %v3228 = vpop.xlane.xlu0 %3227
    %v3229 = vrcp.pop %v3228
    %v3230 = vmul.f32 %v3225, %v3229
    %3231 = vrot.lane.b32.xlu0 %v2635, 32
    %v3232 = vpop.permute.xlu0 %3231
    %v3235 = vsel %vm684, %v3230, 0
    %3237 = vmatprep.subr.mxu0 0.0
    %3238 = vmatpush1.msra.mxu0 %v3232
    %3239 = vmatprep.subr.mxu0 0.0
    %3240 = vmatpush1.msra.mxu0 0.0
    %3241 = vmatprep.subr.mxu0 0.0
    %3242 = vmatpush1.msra.mxu0 0.0
    %3243 = vmatprep.subr.mxu0 0.0
    %3244 = vmatpush1.msra.mxu0 0.0
    %3245 = vmatprep.subr.mxu0 0.0
    %3246 = vmatpush1.msra.mxu0 0.0
    %3247 = vmatprep.subr.mxu0 0.0
    %3248 = vmatpush1.msra.mxu0 0.0
    %3249 = vmatprep.subr.mxu0 0.0
    %3250 = vmatpush1.msra.mxu0 0.0
    %3251 = vmatprep.subr.mxu0 0.0
    %3252 = vmatpush1.msra.mxu0 0.0
    %3253 = vmatprep.subr.mxu0 0.0
    %3254 = vmatpush1.msra.mxu0 0.0
    %3255 = vmatprep.subr.mxu0 0.0
    %3256 = vmatpush1.msra.mxu0 0.0
    %3257 = vmatprep.subr.mxu0 0.0
    %3258 = vmatpush1.msra.mxu0 0.0
    %3259 = vmatprep.subr.mxu0 0.0
    %3260 = vmatpush1.msra.mxu0 0.0
    %3261 = vmatprep.subr.mxu0 0.0
    %3262 = vmatpush1.msra.mxu0 0.0
    %3263 = vmatprep.subr.mxu0 0.0
    %3264 = vmatpush1.msra.mxu0 0.0
    %3265 = vmatprep.subr.mxu0 0.0
    %3266 = vmatpush1.msra.mxu0 0.0
    %3267 = vmatprep.subr.mxu0 0.0
    %3268 = vmatpush1.msra.mxu0 0.0
    %3269 = vmatprep.subr.mxu0 0.0
    %3270 = vmatpush1.msra.mxu0 0.0
    %3271 = vmatprep.subr.mxu0 0.0
    %3272 = vmatpush1.msra.mxu0 0.0
    %3273 = vmatprep.subr.mxu0 0.0
    %3274 = vmatpush1.msra.mxu0 0.0
    %3275 = vmatprep.subr.mxu0 0.0
    %3276 = vmatpush1.msra.mxu0 0.0
    %3277 = vmatprep.subr.mxu0 0.0
    %3278 = vmatpush1.msra.mxu0 0.0
    %3279 = vmatprep.subr.mxu0 0.0
    %3280 = vmatpush1.msra.mxu0 0.0
    %3281 = vmatprep.subr.mxu0 0.0
    %3282 = vmatpush1.msra.mxu0 0.0
    %3283 = vmatprep.subr.mxu0 0.0
    %3284 = vmatpush1.msra.mxu0 0.0
    %3285 = vmatprep.subr.mxu0 0.0
    %3286 = vmatpush1.msra.mxu0 0.0
    %3287 = vmatprep.subr.mxu0 0.0
    %3288 = vmatpush1.msra.mxu0 0.0
    %3289 = vmatprep.subr.mxu0 0.0
    %3290 = vmatpush1.msra.mxu0 0.0
    %3291 = vmatprep.subr.mxu0 0.0
    %3292 = vmatpush1.msra.mxu0 0.0
    %3293 = vmatprep.subr.mxu0 0.0
    %3294 = vmatpush1.msra.mxu0 0.0
    %3295 = vmatprep.subr.mxu0 0.0
    %3296 = vmatpush1.msra.mxu0 0.0
    %3297 = vmatprep.subr.mxu0 0.0
    %3298 = vmatpush1.msra.mxu0 0.0
    %3299 = vmatprep.subr.mxu0 0.0
    %3300 = vmatpush1.msra.mxu0 0.0
    %3301 = vmatprep.mubr.f32.mxu0 0.0
    %3302 = vmatmul.mubr.f32.gmra.mrb[0].mxu0 %v3235
    %v3303 = vpop.f32.mrb[0].mxu0
    %v3304 = vadd.f32 0.0, %v3303
    %v3305 = vpop.f32.mrb[0].mxu0
    %3306 = vdwg.mxu0
    %3308 = vrot.lane.b32.xlu0 %v2970, 32
    %v3309 = vpop.permute.xlu0 %3308
    %3312 = vrot.lane.b32.xlu0 %v3137, 64
    %v3313 = vpop.permute.xlu0 %3312
    %3316 = vrot.lane.b32.xlu0 %v3304, 96
    %v3317 = vpop.permute.xlu0 %3316
    %v3319 = vsel %vm601, %v2802, %v3309
    %v3320 = vsel %vm1284, %v3319, %v3313
    %v3321 = vsel %vm1286, %v3320, %v3317
    %v3323 = vsel %vm601, %v2564, 0
    %v3326 = vsel %vm601, %v2566, 0
    %3328 = vmatprep.subr.mxu0 0.0
    %3329 = vmatpush1.xpose.msra.mxu0 %v3326
    %3330 = vmatprep.subr.mxu0 0.0
    %3331 = vmatpush1.xpose.msra.mxu0 0.0
    %3332 = vmatprep.subr.mxu0 0.0
    %3333 = vmatpush1.xpose.msra.mxu0 0.0
    %3334 = vmatprep.subr.mxu0 0.0
    %3335 = vmatpush1.xpose.msra.mxu0 0.0
    %3336 = vmatprep.subr.mxu0 0.0
    %3337 = vmatpush1.xpose.msra.mxu0 0.0
    %3338 = vmatprep.subr.mxu0 0.0
    %3339 = vmatpush1.xpose.msra.mxu0 0.0
    %3340 = vmatprep.subr.mxu0 0.0
    %3341 = vmatpush1.xpose.msra.mxu0 0.0
    %3342 = vmatprep.subr.mxu0 0.0
    %3343 = vmatpush1.xpose.msra.mxu0 0.0
    %3344 = vmatprep.subr.mxu0 0.0
    %3345 = vmatpush1.xpose.msra.mxu0 0.0
    %3346 = vmatprep.subr.mxu0 0.0
    %3347 = vmatpush1.xpose.msra.mxu0 0.0
    %3348 = vmatprep.subr.mxu0 0.0
    %3349 = vmatpush1.xpose.msra.mxu0 0.0
    %3350 = vmatprep.subr.mxu0 0.0
    %3351 = vmatpush1.xpose.msra.mxu0 0.0
    %3352 = vmatprep.subr.mxu0 0.0
    %3353 = vmatpush1.xpose.msra.mxu0 0.0
    %3354 = vmatprep.subr.mxu0 0.0
    %3355 = vmatpush1.xpose.msra.mxu0 0.0
    %3356 = vmatprep.subr.mxu0 0.0
    %3357 = vmatpush1.xpose.msra.mxu0 0.0
    %3358 = vmatprep.subr.mxu0 0.0
    %3359 = vmatpush1.xpose.msra.mxu0 0.0
    %3360 = vmatprep.subr.mxu0 0.0
    %3361 = vmatpush1.xpose.msra.mxu0 0.0
    %3362 = vmatprep.subr.mxu0 0.0
    %3363 = vmatpush1.xpose.msra.mxu0 0.0
    %3364 = vmatprep.subr.mxu0 0.0
    %3365 = vmatpush1.xpose.msra.mxu0 0.0
    %3366 = vmatprep.subr.mxu0 0.0
    %3367 = vmatpush1.xpose.msra.mxu0 0.0
    %3368 = vmatprep.subr.mxu0 0.0
    %3369 = vmatpush1.xpose.msra.mxu0 0.0
    %3370 = vmatprep.subr.mxu0 0.0
    %3371 = vmatpush1.xpose.msra.mxu0 0.0
    %3372 = vmatprep.subr.mxu0 0.0
    %3373 = vmatpush1.xpose.msra.mxu0 0.0
    %3374 = vmatprep.subr.mxu0 0.0
    %3375 = vmatpush1.xpose.msra.mxu0 0.0
    %3376 = vmatprep.subr.mxu0 0.0
    %3377 = vmatpush1.xpose.msra.mxu0 0.0
    %3378 = vmatprep.subr.mxu0 0.0
    %3379 = vmatpush1.xpose.msra.mxu0 0.0
    %3380 = vmatprep.subr.mxu0 0.0
    %3381 = vmatpush1.xpose.msra.mxu0 0.0
    %3382 = vmatprep.subr.mxu0 0.0
    %3383 = vmatpush1.xpose.msra.mxu0 0.0
    %3384 = vmatprep.subr.mxu0 0.0
    %3385 = vmatpush1.xpose.msra.mxu0 0.0
    %3386 = vmatprep.subr.mxu0 0.0
    %3387 = vmatpush1.xpose.msra.mxu0 0.0
    %3388 = vmatprep.subr.mxu0 0.0
    %3389 = vmatpush1.xpose.msra.mxu0 0.0
    %3390 = vmatprep.subr.mxu0 0.0
    %3391 = vmatpush1.xpose.msra.mxu0 0.0
    %3392 = vmatprep.mubr.f32.mxu0 0.0
    %3393 = vmatmul.mubr.f32.gmra.mrb[0].mxu0 %v3323
    %v3394 = vpop.f32.mrb[0].mxu0
    %v3395 = vadd.f32 0.0, %v3394
    %v3396 = vpop.f32.mrb[0].mxu0
    %3397 = vdwg.mxu0
    %v3398 = vmul.f32 %v3395, 0.17677669
    %v3399 = vadd.f32 %v3398, %v1368
    %v3400 = vsel %vm684, %v3399, -inf
    %3401 = vmax.xlane.f32.xlu0 %v3400
    %v3402 = vpop.xlane.xlu0 %3401
    %v3403 = vsub.f32 %v3399, %v3402
    %v3404 = vmul.f32 %v3403, 1.442695
    %v3405 = vpow.pop %v3404
    %v3406 = vsel %vm684, %v3405, 0.0
    %3407 = vadd.xlane.f32.xlu0 %v3406
    %v3408 = vpop.xlane.xlu0 %3407
    %v3409 = vrcp.pop %v3408
    %v3410 = vmul.f32 %v3405, %v3409
    %v3412 = vsel %vm684, %v3410, 0
    %3414 = vmatprep.subr.mxu0 0.0
    %3415 = vmatpush1.msra.mxu0 %v2640
    %3416 = vmatprep.subr.mxu0 0.0
    %3417 = vmatpush1.msra.mxu0 0.0
    %3418 = vmatprep.subr.mxu0 0.0
    %3419 = vmatpush1.msra.mxu0 0.0
    %3420 = vmatprep.subr.mxu0 0.0
    %3421 = vmatpush1.msra.mxu0 0.0
    %3422 = vmatprep.subr.mxu0 0.0
    %3423 = vmatpush1.msra.mxu0 0.0
    %3424 = vmatprep.subr.mxu0 0.0
    %3425 = vmatpush1.msra.mxu0 0.0
    %3426 = vmatprep.subr.mxu0 0.0
    %3427 = vmatpush1.msra.mxu0 0.0
    %3428 = vmatprep.subr.mxu0 0.0
    %3429 = vmatpush1.msra.mxu0 0.0
    %3430 = vmatprep.subr.mxu0 0.0
    %3431 = vmatpush1.msra.mxu0 0.0
    %3432 = vmatprep.subr.mxu0 0.0
    %3433 = vmatpush1.msra.mxu0 0.0
    %3434 = vmatprep.subr.mxu0 0.0
    %3435 = vmatpush1.msra.mxu0 0.0
    %3436 = vmatprep.subr.mxu0 0.0
    %3437 = vmatpush1.msra.mxu0 0.0
    %3438 = vmatprep.subr.mxu0 0.0
    %3439 = vmatpush1.msra.mxu0 0.0
    %3440 = vmatprep.subr.mxu0 0.0
    %3441 = vmatpush1.msra.mxu0 0.0
    %3442 = vmatprep.subr.mxu0 0.0
    %3443 = vmatpush1.msra.mxu0 0.0
    %3444 = vmatprep.subr.mxu0 0.0
    %3445 = vmatpush1.msra.mxu0 0.0
    %3446 = vmatprep.subr.mxu0 0.0
    %3447 = vmatpush1.msra.mxu0 0.0
    %3448 = vmatprep.subr.mxu0 0.0
    %3449 = vmatpush1.msra.mxu0 0.0
    %3450 = vmatprep.subr.mxu0 0.0
    %3451 = vmatpush1.msra.mxu0 0.0
    %3452 = vmatprep.subr.mxu0 0.0
    %3453 = vmatpush1.msra.mxu0 0.0
    %3454 = vmatprep.subr.mxu0 0.0
    %3455 = vmatpush1.msra.mxu0 0.0
    %3456 = vmatprep.subr.mxu0 0.0
    %3457 = vmatpush1.msra.mxu0 0.0
    %3458 = vmatprep.subr.mxu0 0.0
    %3459 = vmatpush1.msra.mxu0 0.0
    %3460 = vmatprep.subr.mxu0 0.0
    %3461 = vmatpush1.msra.mxu0 0.0
    %3462 = vmatprep.subr.mxu0 0.0
    %3463 = vmatpush1.msra.mxu0 0.0
    %3464 = vmatprep.subr.mxu0 0.0
    %3465 = vmatpush1.msra.mxu0 0.0
    %3466 = vmatprep.subr.mxu0 0.0
    %3467 = vmatpush1.msra.mxu0 0.0
    %3468 = vmatprep.subr.mxu0 0.0
    %3469 = vmatpush1.msra.mxu0 0.0
    %3470 = vmatprep.subr.mxu0 0.0
    %3471 = vmatpush1.msra.mxu0 0.0
    %3472 = vmatprep.subr.mxu0 0.0
    %3473 = vmatpush1.msra.mxu0 0.0
    %3474 = vmatprep.subr.mxu0 0.0
    %3475 = vmatpush1.msra.mxu0 0.0
    %3476 = vmatprep.subr.mxu0 0.0
    %3477 = vmatpush1.msra.mxu0 0.0
    %3478 = vmatprep.mubr.f32.mxu0 0.0
    %3479 = vmatmul.mubr.f32.gmra.mrb[0].mxu0 %v3412
    %v3480 = vpop.f32.mrb[0].mxu0
    %v3481 = vadd.f32 0.0, %v3480
    %v3482 = vpop.f32.mrb[0].mxu0
    %3483 = vdwg.mxu0
    %3484 = vrot.lane.b32.xlu0 %v2564, 96
    %v3485 = vpop.permute.xlu0 %3484
    %3486 = vrot.lane.b32.xlu0 %v2566, 96
    %v3487 = vpop.permute.xlu0 %3486
    %v3488 = vsel %vm601, %v3485, 0
    %v3490 = vsel %vm601, %v3487, 0
    %3492 = vmatprep.subr.mxu0 0.0
    %3493 = vmatpush1.xpose.msra.mxu0 %v3490
    %3494 = vmatprep.subr.mxu0 0.0
    %3495 = vmatpush1.xpose.msra.mxu0 0.0
    %3496 = vmatprep.subr.mxu0 0.0
    %3497 = vmatpush1.xpose.msra.mxu0 0.0
    %3498 = vmatprep.subr.mxu0 0.0
    %3499 = vmatpush1.xpose.msra.mxu0 0.0
    %3500 = vmatprep.subr.mxu0 0.0
    %3501 = vmatpush1.xpose.msra.mxu0 0.0
    %3502 = vmatprep.subr.mxu0 0.0
    %3503 = vmatpush1.xpose.msra.mxu0 0.0
    %3504 = vmatprep.subr.mxu0 0.0
    %3505 = vmatpush1.xpose.msra.mxu0 0.0
    %3506 = vmatprep.subr.mxu0 0.0
    %3507 = vmatpush1.xpose.msra.mxu0 0.0
    %3508 = vmatprep.subr.mxu0 0.0
    %3509 = vmatpush1.xpose.msra.mxu0 0.0
    %3510 = vmatprep.subr.mxu0 0.0
    %3511 = vmatpush1.xpose.msra.mxu0 0.0
    %3512 = vmatprep.subr.mxu0 0.0
    %3513 = vmatpush1.xpose.msra.mxu0 0.0
    %3514 = vmatprep.subr.mxu0 0.0
    %3515 = vmatpush1.xpose.msra.mxu0 0.0
    %3516 = vmatprep.subr.mxu0 0.0
    %3517 = vmatpush1.xpose.msra.mxu0 0.0
    %3518 = vmatprep.subr.mxu0 0.0
    %3519 = vmatpush1.xpose.msra.mxu0 0.0
    %3520 = vmatprep.subr.mxu0 0.0
    %3521 = vmatpush1.xpose.msra.mxu0 0.0
    %3522 = vmatprep.subr.mxu0 0.0
    %3523 = vmatpush1.xpose.msra.mxu0 0.0
    %3524 = vmatprep.subr.mxu0 0.0
    %3525 = vmatpush1.xpose.msra.mxu0 0.0
    %3526 = vmatprep.subr.mxu0 0.0
    %3527 = vmatpush1.xpose.msra.mxu0 0.0
    %3528 = vmatprep.subr.mxu0 0.0
    %3529 = vmatpush1.xpose.msra.mxu0 0.0
    %3530 = vmatprep.subr.mxu0 0.0
    %3531 = vmatpush1.xpose.msra.mxu0 0.0
    %3532 = vmatprep.subr.mxu0 0.0
    %3533 = vmatpush1.xpose.msra.mxu0 0.0
    %3534 = vmatprep.subr.mxu0 0.0
    %3535 = vmatpush1.xpose.msra.mxu0 0.0
    %3536 = vmatprep.subr.mxu0 0.0
    %3537 = vmatpush1.xpose.msra.mxu0 0.0
    %3538 = vmatprep.subr.mxu0 0.0
    %3539 = vmatpush1.xpose.msra.mxu0 0.0
    %3540 = vmatprep.subr.mxu0 0.0
    %3541 = vmatpush1.xpose.msra.mxu0 0.0
    %3542 = vmatprep.subr.mxu0 0.0
    %3543 = vmatpush1.xpose.msra.mxu0 0.0
    %3544 = vmatprep.subr.mxu0 0.0
    %3545 = vmatpush1.xpose.msra.mxu0 0.0
    %3546 = vmatprep.subr.mxu0 0.0
    %3547 = vmatpush1.xpose.msra.mxu0 0.0
    %3548 = vmatprep.subr.mxu0 0.0
    %3549 = vmatpush1.xpose.msra.mxu0 0.0
    %3550 = vmatprep.subr.mxu0 0.0
    %3551 = vmatpush1.xpose.msra.mxu0 0.0
    %3552 = vmatprep.subr.mxu0 0.0
    %3553 = vmatpush1.xpose.msra.mxu0 0.0
    %3554 = vmatprep.subr.mxu0 0.0
    %3555 = vmatpush1.xpose.msra.mxu0 0.0
    %3556 = vmatprep.mubr.f32.mxu0 0.0
    %3557 = vmatmul.mubr.f32.gmra.mrb[0].mxu0 %v3488
    %v3558 = vpop.f32.mrb[0].mxu0
    %v3559 = vadd.f32 0.0, %v3558
    %v3560 = vpop.f32.mrb[0].mxu0
    %3561 = vdwg.mxu0
    %v3562 = vmul.f32 %v3559, 0.17677669
    %v3563 = vadd.f32 %v3562, %v1368
    %v3564 = vsel %vm684, %v3563, -inf
    %3565 = vmax.xlane.f32.xlu0 %v3564
    %v3566 = vpop.xlane.xlu0 %3565
    %v3567 = vsub.f32 %v3563, %v3566
    %v3568 = vmul.f32 %v3567, 1.442695
    %v3569 = vpow.pop %v3568
    %v3570 = vsel %vm684, %v3569, 0.0
    %3571 = vadd.xlane.f32.xlu0 %v3570
    %v3572 = vpop.xlane.xlu0 %3571
    %v3573 = vrcp.pop %v3572
    %v3574 = vmul.f32 %v3569, %v3573
    %3576 = vrot.lane.b32.xlu0 %v2640, 96
    %v3577 = vpop.permute.xlu0 %3576
    %v3580 = vsel %vm684, %v3574, 0
    %3582 = vmatprep.subr.mxu0 0.0
    %3583 = vmatpush1.msra.mxu0 %v3577
    %3584 = vmatprep.subr.mxu0 0.0
    %3585 = vmatpush1.msra.mxu0 0.0
    %3586 = vmatprep.subr.mxu0 0.0
    %3587 = vmatpush1.msra.mxu0 0.0
    %3588 = vmatprep.subr.mxu0 0.0
    %3589 = vmatpush1.msra.mxu0 0.0
    %3590 = vmatprep.subr.mxu0 0.0
    %3591 = vmatpush1.msra.mxu0 0.0
    %3592 = vmatprep.subr.mxu0 0.0
    %3593 = vmatpush1.msra.mxu0 0.0
    %3594 = vmatprep.subr.mxu0 0.0
    %3595 = vmatpush1.msra.mxu0 0.0
    %3596 = vmatprep.subr.mxu0 0.0
    %3597 = vmatpush1.msra.mxu0 0.0
    %3598 = vmatprep.subr.mxu0 0.0
    %3599 = vmatpush1.msra.mxu0 0.0
    %3600 = vmatprep.subr.mxu0 0.0
    %3601 = vmatpush1.msra.mxu0 0.0
    %3602 = vmatprep.subr.mxu0 0.0
    %3603 = vmatpush1.msra.mxu0 0.0
    %3604 = vmatprep.subr.mxu0 0.0
    %3605 = vmatpush1.msra.mxu0 0.0
    %3606 = vmatprep.subr.mxu0 0.0
    %3607 = vmatpush1.msra.mxu0 0.0
    %3608 = vmatprep.subr.mxu0 0.0
    %3609 = vmatpush1.msra.mxu0 0.0
    %3610 = vmatprep.subr.mxu0 0.0
    %3611 = vmatpush1.msra.mxu0 0.0
    %3612 = vmatprep.subr.mxu0 0.0
    %3613 = vmatpush1.msra.mxu0 0.0
    %3614 = vmatprep.subr.mxu0 0.0
    %3615 = vmatpush1.msra.mxu0 0.0
    %3616 = vmatprep.subr.mxu0 0.0
    %3617 = vmatpush1.msra.mxu0 0.0
    %3618 = vmatprep.subr.mxu0 0.0
    %3619 = vmatpush1.msra.mxu0 0.0
    %3620 = vmatprep.subr.mxu0 0.0
    %3621 = vmatpush1.msra.mxu0 0.0
    %3622 = vmatprep.subr.mxu0 0.0
    %3623 = vmatpush1.msra.mxu0 0.0
    %3624 = vmatprep.subr.mxu0 0.0
    %3625 = vmatpush1.msra.mxu0 0.0
    %3626 = vmatprep.subr.mxu0 0.0
    %3627 = vmatpush1.msra.mxu0 0.0
    %3628 = vmatprep.subr.mxu0 0.0
    %3629 = vmatpush1.msra.mxu0 0.0
    %3630 = vmatprep.subr.mxu0 0.0
    %3631 = vmatpush1.msra.mxu0 0.0
    %3632 = vmatprep.subr.mxu0 0.0
    %3633 = vmatpush1.msra.mxu0 0.0
    %3634 = vmatprep.subr.mxu0 0.0
    %3635 = vmatpush1.msra.mxu0 0.0
    %3636 = vmatprep.subr.mxu0 0.0
    %3637 = vmatpush1.msra.mxu0 0.0
    %3638 = vmatprep.subr.mxu0 0.0
    %3639 = vmatpush1.msra.mxu0 0.0
    %3640 = vmatprep.subr.mxu0 0.0
    %3641 = vmatpush1.msra.mxu0 0.0
    %3642 = vmatprep.subr.mxu0 0.0
    %3643 = vmatpush1.msra.mxu0 0.0
    %3644 = vmatprep.subr.mxu0 0.0
    %3645 = vmatpush1.msra.mxu0 0.0
    %3646 = vmatprep.mubr.f32.mxu0 0.0
    %3647 = vmatmul.mubr.f32.gmra.mrb[0].mxu0 %v3580
    %v3648 = vpop.f32.mrb[0].mxu0
    %v3649 = vadd.f32 0.0, %v3648
    %v3650 = vpop.f32.mrb[0].mxu0
    %3651 = vdwg.mxu0
    %3652 = vrot.lane.b32.xlu0 %v2564, 64
    %v3653 = vpop.permute.xlu0 %3652
    %3654 = vrot.lane.b32.xlu0 %v2566, 64
    %v3655 = vpop.permute.xlu0 %3654
    %v3656 = vsel %vm601, %v3653, 0
    %v3658 = vsel %vm601, %v3655, 0
    %3660 = vmatprep.subr.mxu0 0.0
    %3661 = vmatpush1.xpose.msra.mxu0 %v3658
    %3662 = vmatprep.subr.mxu0 0.0
    %3663 = vmatpush1.xpose.msra.mxu0 0.0
    %3664 = vmatprep.subr.mxu0 0.0
    %3665 = vmatpush1.xpose.msra.mxu0 0.0
    %3666 = vmatprep.subr.mxu0 0.0
    %3667 = vmatpush1.xpose.msra.mxu0 0.0
    %3668 = vmatprep.subr.mxu0 0.0
    %3669 = vmatpush1.xpose.msra.mxu0 0.0
    %3670 = vmatprep.subr.mxu0 0.0
    %3671 = vmatpush1.xpose.msra.mxu0 0.0
    %3672 = vmatprep.subr.mxu0 0.0
    %3673 = vmatpush1.xpose.msra.mxu0 0.0
    %3674 = vmatprep.subr.mxu0 0.0
    %3675 = vmatpush1.xpose.msra.mxu0 0.0
    %3676 = vmatprep.subr.mxu0 0.0
    %3677 = vmatpush1.xpose.msra.mxu0 0.0
    %3678 = vmatprep.subr.mxu0 0.0
    %3679 = vmatpush1.xpose.msra.mxu0 0.0
    %3680 = vmatprep.subr.mxu0 0.0
    %3681 = vmatpush1.xpose.msra.mxu0 0.0
    %3682 = vmatprep.subr.mxu0 0.0
    %3683 = vmatpush1.xpose.msra.mxu0 0.0
    %3684 = vmatprep.subr.mxu0 0.0
    %3685 = vmatpush1.xpose.msra.mxu0 0.0
    %3686 = vmatprep.subr.mxu0 0.0
    %3687 = vmatpush1.xpose.msra.mxu0 0.0
    %3688 = vmatprep.subr.mxu0 0.0
    %3689 = vmatpush1.xpose.msra.mxu0 0.0
    %3690 = vmatprep.subr.mxu0 0.0
    %3691 = vmatpush1.xpose.msra.mxu0 0.0
    %3692 = vmatprep.subr.mxu0 0.0
    %3693 = vmatpush1.xpose.msra.mxu0 0.0
    %3694 = vmatprep.subr.mxu0 0.0
    %3695 = vmatpush1.xpose.msra.mxu0 0.0
    %3696 = vmatprep.subr.mxu0 0.0
    %3697 = vmatpush1.xpose.msra.mxu0 0.0
    %3698 = vmatprep.subr.mxu0 0.0
    %3699 = vmatpush1.xpose.msra.mxu0 0.0
    %3700 = vmatprep.subr.mxu0 0.0
    %3701 = vmatpush1.xpose.msra.mxu0 0.0
    %3702 = vmatprep.subr.mxu0 0.0
    %3703 = vmatpush1.xpose.msra.mxu0 0.0
    %3704 = vmatprep.subr.mxu0 0.0
    %3705 = vmatpush1.xpose.msra.mxu0 0.0
    %3706 = vmatprep.subr.mxu0 0.0
    %3707 = vmatpush1.xpose.msra.mxu0 0.0
    %3708 = vmatprep.subr.mxu0 0.0
    %3709 = vmatpush1.xpose.msra.mxu0 0.0
    %3710 = vmatprep.subr.mxu0 0.0
    %3711 = vmatpush1.xpose.msra.mxu0 0.0
    %3712 = vmatprep.subr.mxu0 0.0
    %3713 = vmatpush1.xpose.msra.mxu0 0.0
    %3714 = vmatprep.subr.mxu0 0.0
    %3715 = vmatpush1.xpose.msra.mxu0 0.0
    %3716 = vmatprep.subr.mxu0 0.0
    %3717 = vmatpush1.xpose.msra.mxu0 0.0
    %3718 = vmatprep.subr.mxu0 0.0
    %3719 = vmatpush1.xpose.msra.mxu0 0.0
    %3720 = vmatprep.subr.mxu0 0.0
    %3721 = vmatpush1.xpose.msra.mxu0 0.0
    %3722 = vmatprep.subr.mxu0 0.0
    %3723 = vmatpush1.xpose.msra.mxu0 0.0
    %3724 = vmatprep.mubr.f32.mxu0 0.0
    %3725 = vmatmul.mubr.f32.gmra.mrb[0].mxu0 %v3656
    %v3726 = vpop.f32.mrb[0].mxu0
    %v3727 = vadd.f32 0.0, %v3726
    %v3728 = vpop.f32.mrb[0].mxu0
    %3729 = vdwg.mxu0
    %v3730 = vmul.f32 %v3727, 0.17677669
    %v3731 = vadd.f32 %v3730, %v1368
    %v3732 = vsel %vm684, %v3731, -inf
    %3733 = vmax.xlane.f32.xlu0 %v3732
    %v3734 = vpop.xlane.xlu0 %3733
    %v3735 = vsub.f32 %v3731, %v3734
    %v3736 = vmul.f32 %v3735, 1.442695
    %v3737 = vpow.pop %v3736
    %v3738 = vsel %vm684, %v3737, 0.0
    %3739 = vadd.xlane.f32.xlu0 %v3738
    %v3740 = vpop.xlane.xlu0 %3739
    %v3741 = vrcp.pop %v3740
    %v3742 = vmul.f32 %v3737, %v3741
    %3743 = vrot.lane.b32.xlu0 %v2640, 64
    %v3744 = vpop.permute.xlu0 %3743
    %v3747 = vsel %vm684, %v3742, 0
    %3749 = vmatprep.subr.mxu0 0.0
    %3750 = vmatpush1.msra.mxu0 %v3744
    %3751 = vmatprep.subr.mxu0 0.0
    %3752 = vmatpush1.msra.mxu0 0.0
    %3753 = vmatprep.subr.mxu0 0.0
    %3754 = vmatpush1.msra.mxu0 0.0
    %3755 = vmatprep.subr.mxu0 0.0
    %3756 = vmatpush1.msra.mxu0 0.0
    %3757 = vmatprep.subr.mxu0 0.0
    %3758 = vmatpush1.msra.mxu0 0.0
    %3759 = vmatprep.subr.mxu0 0.0
    %3760 = vmatpush1.msra.mxu0 0.0
    %3761 = vmatprep.subr.mxu0 0.0
    %3762 = vmatpush1.msra.mxu0 0.0
    %3763 = vmatprep.subr.mxu0 0.0
    %3764 = vmatpush1.msra.mxu0 0.0
    %3765 = vmatprep.subr.mxu0 0.0
    %3766 = vmatpush1.msra.mxu0 0.0
    %3767 = vmatprep.subr.mxu0 0.0
    %3768 = vmatpush1.msra.mxu0 0.0
    %3769 = vmatprep.subr.mxu0 0.0
    %3770 = vmatpush1.msra.mxu0 0.0
    %3771 = vmatprep.subr.mxu0 0.0
    %3772 = vmatpush1.msra.mxu0 0.0
    %3773 = vmatprep.subr.mxu0 0.0
    %3774 = vmatpush1.msra.mxu0 0.0
    %3775 = vmatprep.subr.mxu0 0.0
    %3776 = vmatpush1.msra.mxu0 0.0
    %3777 = vmatprep.subr.mxu0 0.0
    %3778 = vmatpush1.msra.mxu0 0.0
    %3779 = vmatprep.subr.mxu0 0.0
    %3780 = vmatpush1.msra.mxu0 0.0
    %3781 = vmatprep.subr.mxu0 0.0
    %3782 = vmatpush1.msra.mxu0 0.0
    %3783 = vmatprep.subr.mxu0 0.0
    %3784 = vmatpush1.msra.mxu0 0.0
    %3785 = vmatprep.subr.mxu0 0.0
    %3786 = vmatpush1.msra.mxu0 0.0
    %3787 = vmatprep.subr.mxu0 0.0
    %3788 = vmatpush1.msra.mxu0 0.0
    %3789 = vmatprep.subr.mxu0 0.0
    %3790 = vmatpush1.msra.mxu0 0.0
    %3791 = vmatprep.subr.mxu0 0.0
    %3792 = vmatpush1.msra.mxu0 0.0
    %3793 = vmatprep.subr.mxu0 0.0
    %3794 = vmatpush1.msra.mxu0 0.0
    %3795 = vmatprep.subr.mxu0 0.0
    %3796 = vmatpush1.msra.mxu0 0.0
    %3797 = vmatprep.subr.mxu0 0.0
    %3798 = vmatpush1.msra.mxu0 0.0
    %3799 = vmatprep.subr.mxu0 0.0
    %3800 = vmatpush1.msra.mxu0 0.0
    %3801 = vmatprep.subr.mxu0 0.0
    %3802 = vmatpush1.msra.mxu0 0.0
    %3803 = vmatprep.subr.mxu0 0.0
    %3804 = vmatpush1.msra.mxu0 0.0
    %3805 = vmatprep.subr.mxu0 0.0
    %3806 = vmatpush1.msra.mxu0 0.0
    %3807 = vmatprep.subr.mxu0 0.0
    %3808 = vmatpush1.msra.mxu0 0.0
    %3809 = vmatprep.subr.mxu0 0.0
    %3810 = vmatpush1.msra.mxu0 0.0
    %3811 = vmatprep.subr.mxu0 0.0
    %3812 = vmatpush1.msra.mxu0 0.0
    %3813 = vmatprep.mubr.f32.mxu0 0.0
    %3814 = vmatmul.mubr.f32.gmra.mrb[0].mxu0 %v3747
    %v3815 = vpop.f32.mrb[0].mxu0
    %v3816 = vadd.f32 0.0, %v3815
    %v3817 = vpop.f32.mrb[0].mxu0
    %3818 = vdwg.mxu0
    %3819 = vrot.lane.b32.xlu0 %v2564, 32
    %v3820 = vpop.permute.xlu0 %3819
    %3821 = vrot.lane.b32.xlu0 %v2566, 32
    %v3822 = vpop.permute.xlu0 %3821
    %v3823 = vsel %vm601, %v3820, 0
    %v3825 = vsel %vm601, %v3822, 0
    %3827 = vmatprep.subr.mxu0 0.0
    %3828 = vmatpush1.xpose.msra.mxu0 %v3825
    %3829 = vmatprep.subr.mxu0 0.0
    %3830 = vmatpush1.xpose.msra.mxu0 0.0
    %3831 = vmatprep.subr.mxu0 0.0
    %3832 = vmatpush1.xpose.msra.mxu0 0.0
    %3833 = vmatprep.subr.mxu0 0.0
    %3834 = vmatpush1.xpose.msra.mxu0 0.0
    %3835 = vmatprep.subr.mxu0 0.0
    %3836 = vmatpush1.xpose.msra.mxu0 0.0
    %3837 = vmatprep.subr.mxu0 0.0
    %3838 = vmatpush1.xpose.msra.mxu0 0.0
    %3839 = vmatprep.subr.mxu0 0.0
    %3840 = vmatpush1.xpose.msra.mxu0 0.0
    %3841 = vmatprep.subr.mxu0 0.0
    %3842 = vmatpush1.xpose.msra.mxu0 0.0
    %3843 = vmatprep.subr.mxu0 0.0
    %3844 = vmatpush1.xpose.msra.mxu0 0.0
    %3845 = vmatprep.subr.mxu0 0.0
    %3846 = vmatpush1.xpose.msra.mxu0 0.0
    %3847 = vmatprep.subr.mxu0 0.0
    %3848 = vmatpush1.xpose.msra.mxu0 0.0
    %3849 = vmatprep.subr.mxu0 0.0
    %3850 = vmatpush1.xpose.msra.mxu0 0.0
    %3851 = vmatprep.subr.mxu0 0.0
    %3852 = vmatpush1.xpose.msra.mxu0 0.0
    %3853 = vmatprep.subr.mxu0 0.0
    %3854 = vmatpush1.xpose.msra.mxu0 0.0
    %3855 = vmatprep.subr.mxu0 0.0
    %3856 = vmatpush1.xpose.msra.mxu0 0.0
    %3857 = vmatprep.subr.mxu0 0.0
    %3858 = vmatpush1.xpose.msra.mxu0 0.0
    %3859 = vmatprep.subr.mxu0 0.0
    %3860 = vmatpush1.xpose.msra.mxu0 0.0
    %3861 = vmatprep.subr.mxu0 0.0
    %3862 = vmatpush1.xpose.msra.mxu0 0.0
    %3863 = vmatprep.subr.mxu0 0.0
    %3864 = vmatpush1.xpose.msra.mxu0 0.0
    %3865 = vmatprep.subr.mxu0 0.0
    %3866 = vmatpush1.xpose.msra.mxu0 0.0
    %3867 = vmatprep.subr.mxu0 0.0
    %3868 = vmatpush1.xpose.msra.mxu0 0.0
    %3869 = vmatprep.subr.mxu0 0.0
    %3870 = vmatpush1.xpose.msra.mxu0 0.0
    %3871 = vmatprep.subr.mxu0 0.0
    %3872 = vmatpush1.xpose.msra.mxu0 0.0
    %3873 = vmatprep.subr.mxu0 0.0
    %3874 = vmatpush1.xpose.msra.mxu0 0.0
    %3875 = vmatprep.subr.mxu0 0.0
    %3876 = vmatpush1.xpose.msra.mxu0 0.0
    %3877 = vmatprep.subr.mxu0 0.0
    %3878 = vmatpush1.xpose.msra.mxu0 0.0
    %3879 = vmatprep.subr.mxu0 0.0
    %3880 = vmatpush1.xpose.msra.mxu0 0.0
    %3881 = vmatprep.subr.mxu0 0.0
    %3882 = vmatpush1.xpose.msra.mxu0 0.0
    %3883 = vmatprep.subr.mxu0 0.0
    %3884 = vmatpush1.xpose.msra.mxu0 0.0
    %3885 = vmatprep.subr.mxu0 0.0
    %3886 = vmatpush1.xpose.msra.mxu0 0.0
    %3887 = vmatprep.subr.mxu0 0.0
    %3888 = vmatpush1.xpose.msra.mxu0 0.0
    %3889 = vmatprep.subr.mxu0 0.0
    %3890 = vmatpush1.xpose.msra.mxu0 0.0
    %3891 = vmatprep.mubr.f32.mxu0 0.0
    %3892 = vmatmul.mubr.f32.gmra.mrb[0].mxu0 %v3823
    %v3893 = vpop.f32.mrb[0].mxu0
    %v3894 = vadd.f32 0.0, %v3893
    %v3895 = vpop.f32.mrb[0].mxu0
    %3896 = vdwg.mxu0
    %v3897 = vmul.f32 %v3894, 0.17677669
    %v3898 = vadd.f32 %v3897, %v1368
    %v3899 = vsel %vm684, %v3898, -inf
    %3900 = vmax.xlane.f32.xlu0 %v3899
    %v3901 = vpop.xlane.xlu0 %3900
    %v3902 = vsub.f32 %v3898, %v3901
    %v3903 = vmul.f32 %v3902, 1.442695
    %v3904 = vpow.pop %v3903
    %v3905 = vsel %vm684, %v3904, 0.0
    %3906 = vadd.xlane.f32.xlu0 %v3905
    %v3907 = vpop.xlane.xlu0 %3906
    %v3908 = vrcp.pop %v3907
    %v3909 = vmul.f32 %v3904, %v3908
    %3910 = vrot.lane.b32.xlu0 %v2640, 32
    %v3911 = vpop.permute.xlu0 %3910
    %v3914 = vsel %vm684, %v3909, 0
    %3916 = vmatprep.subr.mxu0 0.0
    %3917 = vmatpush1.msra.mxu0 %v3911
    %3918 = vmatprep.subr.mxu0 0.0
    %3919 = vmatpush1.msra.mxu0 0.0
    %3920 = vmatprep.subr.mxu0 0.0
    %3921 = vmatpush1.msra.mxu0 0.0
    %3922 = vmatprep.subr.mxu0 0.0
    %3923 = vmatpush1.msra.mxu0 0.0
    %3924 = vmatprep.subr.mxu0 0.0
    %3925 = vmatpush1.msra.mxu0 0.0
    %3926 = vmatprep.subr.mxu0 0.0
    %3927 = vmatpush1.msra.mxu0 0.0
    %3928 = vmatprep.subr.mxu0 0.0
    %3929 = vmatpush1.msra.mxu0 0.0
    %3930 = vmatprep.subr.mxu0 0.0
    %3931 = vmatpush1.msra.mxu0 0.0
    %3932 = vmatprep.subr.mxu0 0.0
    %3933 = vmatpush1.msra.mxu0 0.0
    %3934 = vmatprep.subr.mxu0 0.0
    %3935 = vmatpush1.msra.mxu0 0.0
    %3936 = vmatprep.subr.mxu0 0.0
    %3937 = vmatpush1.msra.mxu0 0.0
    %3938 = vmatprep.subr.mxu0 0.0
    %3939 = vmatpush1.msra.mxu0 0.0
    %3940 = vmatprep.subr.mxu0 0.0
    %3941 = vmatpush1.msra.mxu0 0.0
    %3942 = vmatprep.subr.mxu0 0.0
    %3943 = vmatpush1.msra.mxu0 0.0
    %3944 = vmatprep.subr.mxu0 0.0
    %3945 = vmatpush1.msra.mxu0 0.0
    %3946 = vmatprep.subr.mxu0 0.0
    %3947 = vmatpush1.msra.mxu0 0.0
    %3948 = vmatprep.subr.mxu0 0.0
    %3949 = vmatpush1.msra.mxu0 0.0
    %3950 = vmatprep.subr.mxu0 0.0
    %3951 = vmatpush1.msra.mxu0 0.0
    %3952 = vmatprep.subr.mxu0 0.0
    %3953 = vmatpush1.msra.mxu0 0.0
    %3954 = vmatprep.subr.mxu0 0.0
    %3955 = vmatpush1.msra.mxu0 0.0
    %3956 = vmatprep.subr.mxu0 0.0
    %3957 = vmatpush1.msra.mxu0 0.0
    %3958 = vmatprep.subr.mxu0 0.0
    %3959 = vmatpush1.msra.mxu0 0.0
    %3960 = vmatprep.subr.mxu0 0.0
    %3961 = vmatpush1.msra.mxu0 0.0
    %3962 = vmatprep.subr.mxu0 0.0
    %3963 = vmatpush1.msra.mxu0 0.0
    %3964 = vmatprep.subr.mxu0 0.0
    %3965 = vmatpush1.msra.mxu0 0.0
    %3966 = vmatprep.subr.mxu0 0.0
    %3967 = vmatpush1.msra.mxu0 0.0
    %3968 = vmatprep.subr.mxu0 0.0
    %3969 = vmatpush1.msra.mxu0 0.0
    %3970 = vmatprep.subr.mxu0 0.0
    %3971 = vmatpush1.msra.mxu0 0.0
    %3972 = vmatprep.subr.mxu0 0.0
    %3973 = vmatpush1.msra.mxu0 0.0
    %3974 = vmatprep.subr.mxu0 0.0
    %3975 = vmatpush1.msra.mxu0 0.0
    %3976 = vmatprep.subr.mxu0 0.0
    %3977 = vmatpush1.msra.mxu0 0.0
    %3978 = vmatprep.subr.mxu0 0.0
    %3979 = vmatpush1.msra.mxu0 0.0
    %3980 = vmatprep.mubr.f32.mxu0 0.0
    %3981 = vmatmul.mubr.f32.gmra.mrb[0].mxu0 %v3914
    %v3982 = vpop.f32.mrb[0].mxu0
    %v3983 = vadd.f32 0.0, %v3982
    %v3984 = vpop.f32.mrb[0].mxu0
    %3985 = vdwg.mxu0
    %3987 = vrot.lane.b32.xlu0 %v3649, 32
    %v3988 = vpop.permute.xlu0 %3987
    %3991 = vrot.lane.b32.xlu0 %v3816, 64
    %v3992 = vpop.permute.xlu0 %3991
    %3995 = vrot.lane.b32.xlu0 %v3983, 96
    %v3996 = vpop.permute.xlu0 %3995
    %v3998 = vsel %vm601, %v3481, %v3988
    %v3999 = vsel %vm1284, %v3998, %v3992
    %v4000 = vsel %vm1286, %v3999, %v3996
    %s4001 = scalar_lea.vmem [#allocation7], 128
    %v4002 = vld [vmem:[%s4001] sm:$0xff]
    %v4003 = vld [vmem:[%s4001 + $0x8] sm:$0xff]
    %v4004 = vld [vmem:[%s4001 + $0x10] sm:$0xff]
    %v4005 = vld [vmem:[%s4001 + $0x18] sm:$0xff]
    %v4006 = vld [vmem:[%s4001 + $0x20] sm:$0xff]
    %v4007 = vld [vmem:[%s4001 + $0x28] sm:$0xff]
    %v4008 = vld [vmem:[%s4001 + $0x30] sm:$0xff]
    %v4009 = vld [vmem:[%s4001 + $0x38] sm:$0xff]
    %v4010 = vld [vmem:[%s4001 + $0x40] sm:$0xff]
    %v4011 = vld [vmem:[%s4001 + $0x48] sm:$0xff]
    %v4012 = vld [vmem:[%s4001 + $0x50] sm:$0xff]
    %v4013 = vld [vmem:[%s4001 + $0x58] sm:$0xff]
    %v4014 = vld [vmem:[%s4001 + $0x60] sm:$0xff]
    %v4015 = vld [vmem:[%s4001 + $0x68] sm:$0xff]
    %v4016 = vld [vmem:[%s4001 + $0x70] sm:$0xff]
    %v4017 = vld [vmem:[%s4001 + $0x78] sm:$0xff]
    %s4018 = scalar_lea.vmem %s9, 1
    %v4019 = vld [vmem:[%s4018] sm:$0x1]
    %v4021 = vlaneseq
    %v4022 = vshrl.u32 %v4021, 7
    %v4023 = vsub.s32 0, %v4022
    %v4024 = vrot.slane %v4019, %v4023
    %4026 = vmatprep.subr.mxu0 0.0
    %4027 = vmatpush1.msra.mxu0 %v4002
    %4028 = vmatprep.subr.mxu0 0.0
    %4029 = vmatpush1.msra.mxu0 %v4003
    %4030 = vmatprep.subr.mxu0 0.0
    %4031 = vmatpush1.msra.mxu0 %v4004
    %4032 = vmatprep.subr.mxu0 0.0
    %4033 = vmatpush1.msra.mxu0 %v4005
    %4034 = vmatprep.subr.mxu0 0.0
    %4035 = vmatpush1.msra.mxu0 %v4006
    %4036 = vmatprep.subr.mxu0 0.0
    %4037 = vmatpush1.msra.mxu0 %v4007
    %4038 = vmatprep.subr.mxu0 0.0
    %4039 = vmatpush1.msra.mxu0 %v4008
    %4040 = vmatprep.subr.mxu0 0.0
    %4041 = vmatpush1.msra.mxu0 %v4009
    %4042 = vmatprep.subr.mxu0 0.0
    %4043 = vmatpush1.msra.mxu0 %v4010
    %4044 = vmatprep.subr.mxu0 0.0
    %4045 = vmatpush1.msra.mxu0 %v4011
    %4046 = vmatprep.subr.mxu0 0.0
    %4047 = vmatpush1.msra.mxu0 %v4012
    %4048 = vmatprep.subr.mxu0 0.0
    %4049 = vmatpush1.msra.mxu0 %v4013
    %4050 = vmatprep.subr.mxu0 0.0
    %4051 = vmatpush1.msra.mxu0 %v4014
    %4052 = vmatprep.subr.mxu0 0.0
    %4053 = vmatpush1.msra.mxu0 %v4015
    %4054 = vmatprep.subr.mxu0 0.0
    %4055 = vmatpush1.msra.mxu0 %v4016
    %4056 = vmatprep.subr.mxu0 0.0
    %4057 = vmatpush1.msra.mxu0 %v4017
    %4058 = vmatprep.subr.mxu0 0.0
    %4059 = vmatpush1.msra.mxu0 0.0
    %4060 = vmatprep.subr.mxu0 0.0
    %4061 = vmatpush1.msra.mxu0 0.0
    %4062 = vmatprep.subr.mxu0 0.0
    %4063 = vmatpush1.msra.mxu0 0.0
    %4064 = vmatprep.subr.mxu0 0.0
    %4065 = vmatpush1.msra.mxu0 0.0
    %4066 = vmatprep.subr.mxu0 0.0
    %4067 = vmatpush1.msra.mxu0 0.0
    %4068 = vmatprep.subr.mxu0 0.0
    %4069 = vmatpush1.msra.mxu0 0.0
    %4070 = vmatprep.subr.mxu0 0.0
    %4071 = vmatpush1.msra.mxu0 0.0
    %4072 = vmatprep.subr.mxu0 0.0
    %4073 = vmatpush1.msra.mxu0 0.0
    %4074 = vmatprep.subr.mxu0 0.0
    %4075 = vmatpush1.msra.mxu0 0.0
    %4076 = vmatprep.subr.mxu0 0.0
    %4077 = vmatpush1.msra.mxu0 0.0
    %4078 = vmatprep.subr.mxu0 0.0
    %4079 = vmatpush1.msra.mxu0 0.0
    %4080 = vmatprep.subr.mxu0 0.0
    %4081 = vmatpush1.msra.mxu0 0.0
    %4082 = vmatprep.subr.mxu0 0.0
    %4083 = vmatpush1.msra.mxu0 0.0
    %4084 = vmatprep.subr.mxu0 0.0
    %4085 = vmatpush1.msra.mxu0 0.0
    %4086 = vmatprep.subr.mxu0 0.0
    %4087 = vmatpush1.msra.mxu0 0.0
    %4088 = vmatprep.subr.mxu0 0.0
    %4089 = vmatpush1.msra.mxu0 0.0
    %4090 = vmatprep.mubr.f32.mxu0 0.0
    %4091 = vmatmul.mubr.f32.gmra.mrb[0].mxu0 %v3321
    %v4092 = vpop.f32.mrb[0].mxu0
    %v4093 = vadd.f32 %v4024, %v4092
    %v4094 = vpop.f32.mrb[0].mxu0
    %4095 = vmatprep.mubr.f32.mxu0 0.0
    %4096 = vmatmul.mubr.f32.gmra.mrb[0].mxu0 %v4000
    %v4097 = vpop.f32.mrb[0].mxu0
    %v4098 = vadd.f32 %v4024, %v4097
    %v4099 = vpop.f32.mrb[0].mxu0
    %4100 = vdwg.mxu0
    %v4101 = vadd.f32 %v2422, %v4093
    %v4102 = vadd.f32 %v2423, %v4098
    %s4103 = scalar_lea.vmem %s10, 1
    %v4104 = vld [vmem:[%s4103] sm:$0x1]
    %s4105 = scalar_lea.vmem %s11, 1
    %v4106 = vld [vmem:[%s4105] sm:$0x1]
    %4107 = vadd.xlane.f32.xlu0 %v4101
    %v4108 = vpop.xlane.xlu0 %4107
    %4109 = vadd.xlane.f32.xlu0 %v4102
    %v4110 = vpop.xlane.xlu0 %4109
    %v4111 = vmul.f32 %v4108, %v345
    %v4112 = vmul.f32 %v4110, %v345
    %v4113 = vsub.f32 %v4101, %v4111
    %v4114 = vsub.f32 %v4102, %v4112
    %v4115 = vmul.f32 %v4113, %v4113
    %v4116 = vmul.f32 %v4114, %v4114
    %4117 = vadd.xlane.f32.xlu0 %v4115
    %v4118 = vpop.xlane.xlu0 %4117
    %4119 = vadd.xlane.f32.xlu0 %v4116
    %v4120 = vpop.xlane.xlu0 %4119
    %v4121 = vmul.f32 %v4118, %v345
    %v4122 = vmul.f32 %v4120, %v345
    %v4123 = vadd.f32 %v4121, 1e-12
    %v4124 = vadd.f32 %v4122, 1e-12
    %v4125 = vrsqrt.pop %v4123
    %v4126 = vrsqrt.pop %v4124
    %v4127 = vmul.f32 %v4113, %v4125
    %v4128 = vmul.f32 %v4114, %v4126
    %v4130 = vlaneseq
    %v4131 = vshrl.u32 %v4130, 7
    %v4132 = vsub.s32 0, %v4131
    %v4133 = vrot.slane %v4104, %v4132
    %v4135 = vmul.f32 %v4127, %v4133
    %v4136 = vmul.f32 %v4128, %v4133
    %v4138 = vlaneseq
    %v4139 = vshrl.u32 %v4138, 7
    %v4140 = vsub.s32 0, %v4139
    %v4141 = vrot.slane %v4106, %v4140
    %v4143 = vadd.f32 %v4135, %v4141
    %v4144 = vadd.f32 %v4136, %v4141
    %s4145 = scalar_lea.vmem [#allocation8], 256
    %v4146 = vld [vmem:[%s4145] sm:$0xff]
    %v4147 = vld [vmem:[%s4145 + $0x8] sm:$0xff]
    %v4148 = vld [vmem:[%s4145 + $0x10] sm:$0xff]
    %v4149 = vld [vmem:[%s4145 + $0x18] sm:$0xff]
    %v4150 = vld [vmem:[%s4145 + $0x20] sm:$0xff]
    %v4151 = vld [vmem:[%s4145 + $0x28] sm:$0xff]
    %v4152 = vld [vmem:[%s4145 + $0x30] sm:$0xff]
    %v4153 = vld [vmem:[%s4145 + $0x38] sm:$0xff]
    %v4154 = vld [vmem:[%s4145 + $0x40] sm:$0xff]
    %v4155 = vld [vmem:[%s4145 + $0x48] sm:$0xff]
    %v4156 = vld [vmem:[%s4145 + $0x50] sm:$0xff]
    %v4157 = vld [vmem:[%s4145 + $0x58] sm:$0xff]
    %v4158 = vld [vmem:[%s4145 + $0x60] sm:$0xff]
    %v4159 = vld [vmem:[%s4145 + $0x68] sm:$0xff]
    %v4160 = vld [vmem:[%s4145 + $0x70] sm:$0xff]
    %v4161 = vld [vmem:[%s4145 + $0x78] sm:$0xff]
    %v4162 = vld [vmem:[%s4145 + $0x80] sm:$0xff]
    %v4163 = vld [vmem:[%s4145 + $0x88] sm:$0xff]
    %v4164 = vld [vmem:[%s4145 + $0x90] sm:$0xff]
    %v4165 = vld [vmem:[%s4145 + $0x98] sm:$0xff]
    %v4166 = vld [vmem:[%s4145 + $0xa0] sm:$0xff]
    %v4167 = vld [vmem:[%s4145 + $0xa8] sm:$0xff]
    %v4168 = vld [vmem:[%s4145 + $0xb0] sm:$0xff]
    %v4169 = vld [vmem:[%s4145 + $0xb8] sm:$0xff]
    %v4170 = vld [vmem:[%s4145 + $0xc0] sm:$0xff]
    %v4171 = vld [vmem:[%s4145 + $0xc8] sm:$0xff]
    %v4172 = vld [vmem:[%s4145 + $0xd0] sm:$0xff]
    %v4173 = vld [vmem:[%s4145 + $0xd8] sm:$0xff]
    %v4174 = vld [vmem:[%s4145 + $0xe0] sm:$0xff]
    %v4175 = vld [vmem:[%s4145 + $0xe8] sm:$0xff]
    %v4176 = vld [vmem:[%s4145 + $0xf0] sm:$0xff]
    %v4177 = vld [vmem:[%s4145 + $0xf8] sm:$0xff]
    %s4178 = scalar_lea.vmem %s13, 2
    %v4179 = vld [vmem:[%s4178] sm:$0x3]
    %v4181 = vlaneseq
    %v4182 = vshrl.u32 %v4181, 7
    %v4183 = vsub.s32 0, %v4182
    %v4184 = vrot.slane %v4179, %v4183
    %v4185 = vlaneseq
    %v4186 = vshrl.u32 %v4185, 7
    %v4187 = vsub.s32 1, %v4186
    %v4188 = vrot.slane %v4179, %v4187
    %4191 = vmatprep.subr.mxu0 %v4147
    %4192 = vmatpush1.msra.mxu0 %v4146
    %4193 = vmatprep.subr.mxu0 %v4149
    %4194 = vmatpush1.msra.mxu0 %v4148
    %4195 = vmatprep.subr.mxu0 %v4151
    %4196 = vmatpush1.msra.mxu0 %v4150
    %4197 = vmatprep.subr.mxu0 %v4153
    %4198 = vmatpush1.msra.mxu0 %v4152
    %4199 = vmatprep.subr.mxu0 %v4155
    %4200 = vmatpush1.msra.mxu0 %v4154
    %4201 = vmatprep.subr.mxu0 %v4157
    %4202 = vmatpush1.msra.mxu0 %v4156
    %4203 = vmatprep.subr.mxu0 %v4159
    %4204 = vmatpush1.msra.mxu0 %v4158
    %4205 = vmatprep.subr.mxu0 %v4161
    %4206 = vmatpush1.msra.mxu0 %v4160
    %4207 = vmatprep.subr.mxu0 %v4163
    %4208 = vmatpush1.msra.mxu0 %v4162
    %4209 = vmatprep.subr.mxu0 %v4165
    %4210 = vmatpush1.msra.mxu0 %v4164
    %4211 = vmatprep.subr.mxu0 %v4167
    %4212 = vmatpush1.msra.mxu0 %v4166
    %4213 = vmatprep.subr.mxu0 %v4169
    %4214 = vmatpush1.msra.mxu0 %v4168
    %4215 = vmatprep.subr.mxu0 %v4171
    %4216 = vmatpush1.msra.mxu0 %v4170
    %4217 = vmatprep.subr.mxu0 %v4173
    %4218 = vmatpush1.msra.mxu0 %v4172
    %4219 = vmatprep.subr.mxu0 %v4175
    %4220 = vmatpush1.msra.mxu0 %v4174
    %4221 = vmatprep.subr.mxu0 %v4177
    %4222 = vmatpush1.msra.mxu0 %v4176
    %4223 = vmatprep.subr.mxu0 0.0
    %4224 = vmatpush1.msra.mxu0 0.0
    %4225 = vmatprep.subr.mxu0 0.0
    %4226 = vmatpush1.msra.mxu0 0.0
    %4227 = vmatprep.subr.mxu0 0.0
    %4228 = vmatpush1.msra.mxu0 0.0
    %4229 = vmatprep.subr.mxu0 0.0
    %4230 = vmatpush1.msra.mxu0 0.0
    %4231 = vmatprep.subr.mxu0 0.0
    %4232 = vmatpush1.msra.mxu0 0.0
    %4233 = vmatprep.subr.mxu0 0.0
    %4234 = vmatpush1.msra.mxu0 0.0
    %4235 = vmatprep.subr.mxu0 0.0
    %4236 = vmatpush1.msra.mxu0 0.0
    %4237 = vmatprep.subr.mxu0 0.0
    %4238 = vmatpush1.msra.mxu0 0.0
    %4239 = vmatprep.subr.mxu0 0.0
    %4240 = vmatpush1.msra.mxu0 0.0
    %4241 = vmatprep.subr.mxu0 0.0
    %4242 = vmatpush1.msra.mxu0 0.0
    %4243 = vmatprep.subr.mxu0 0.0
    %4244 = vmatpush1.msra.mxu0 0.0
    %4245 = vmatprep.subr.mxu0 0.0
    %4246 = vmatpush1.msra.mxu0 0.0
    %4247 = vmatprep.subr.mxu0 0.0
    %4248 = vmatpush1.msra.mxu0 0.0
    %4249 = vmatprep.subr.mxu0 0.0
    %4250 = vmatpush1.msra.mxu0 0.0
    %4251 = vmatprep.subr.mxu0 0.0
    %4252 = vmatpush1.msra.mxu0 0.0
    %4253 = vmatprep.subr.mxu0 0.0
    %4254 = vmatpush1.msra.mxu0 0.0
    %4255 = vmatprep.mubr.f32.mxu0 0.0
    %4256 = vmatmul.mubr.f32.gmra.mrb[0].mxu0 %v4143
    %v4257 = vpop.f32.mrb[0].mxu0
    %v4258 = vadd.f32 %v4184, %v4257
    %v4259 = vpop.f32.mrb[0].mxu0
    %v4260 = vadd.f32 %v4188, %v4259
    %4261 = vmatprep.mubr.f32.mxu0 0.0
    %4262 = vmatmul.mubr.f32.gmra.mrb[0].mxu0 %v4144
    %v4263 = vpop.f32.mrb[0].mxu0
    %v4264 = vadd.f32 %v4184, %v4263
    %v4265 = vpop.f32.mrb[0].mxu0
    %v4266 = vadd.f32 %v4188, %v4265
    %4267 = vdwg.mxu0
    %v4268 = vmul.f32 %v4258, 0.5
    %v4269 = vmul.f32 %v4260, 0.5
    %v4270 = vmul.f32 %v4264, 0.5
    %v4271 = vmul.f32 %v4266, 0.5
    %v4272 = vmul.f32 %v4258, 0.044715
    %v4273 = vmul.f32 %v4260, 0.044715
    %v4274 = vmul.f32 %v4264, 0.044715
    %v4275 = vmul.f32 %v4266, 0.044715
    %v4276 = vmul.f32 %v4272, %v4258
    %v4277 = vmul.f32 %v4273, %v4260
    %v4278 = vmul.f32 %v4274, %v4264
    %v4279 = vmul.f32 %v4275, %v4266
    %v4280 = vmul.f32 %v4276, %v4258
    %v4281 = vmul.f32 %v4277, %v4260
    %v4282 = vmul.f32 %v4278, %v4264
    %v4283 = vmul.f32 %v4279, %v4266
    %v4284 = vadd.f32 %v4258, %v4280
    %v4285 = vadd.f32 %v4260, %v4281
    %v4286 = vadd.f32 %v4264, %v4282
    %v4287 = vadd.f32 %v4266, %v4283
    %v4288 = vmul.f32 %v4284, 0.7978846
    %v4289 = vmul.f32 %v4285, 0.7978846
    %v4290 = vmul.f32 %v4286, 0.7978846
    %v4291 = vmul.f32 %v4287, 0.7978846
    %v4292 = vtanh.pop %v4288
    %v4293 = vtanh.pop %v4289
    %v4294 = vtanh.pop %v4290
    %v4295 = vtanh.pop %v4291
    %v4296 = vadd.f32 %v4292, 1.0
    %v4297 = vadd.f32 %v4293, 1.0
    %v4298 = vadd.f32 %v4294, 1.0
    %v4299 = vadd.f32 %v4295, 1.0
    %v4300 = vmul.f32 %v4268, %v4296
    %v4301 = vmul.f32 %v4269, %v4297
    %v4302 = vmul.f32 %v4270, %v4298
    %v4303 = vmul.f32 %v4271, %v4299
    %s4304 = scalar_lea.vmem [#allocation10], 256
    %v4305 = vld [vmem:[%s4304] sm:$0xff]
    %v4306 = vld [vmem:[%s4304 + $0x8] sm:$0xff]
    %v4307 = vld [vmem:[%s4304 + $0x10] sm:$0xff]
    %v4308 = vld [vmem:[%s4304 + $0x18] sm:$0xff]
    %v4309 = vld [vmem:[%s4304 + $0x20] sm:$0xff]
    %v4310 = vld [vmem:[%s4304 + $0x28] sm:$0xff]
    %v4311 = vld [vmem:[%s4304 + $0x30] sm:$0xff]
    %v4312 = vld [vmem:[%s4304 + $0x38] sm:$0xff]
    %v4313 = vld [vmem:[%s4304 + $0x40] sm:$0xff]
    %v4314 = vld [vmem:[%s4304 + $0x48] sm:$0xff]
    %v4315 = vld [vmem:[%s4304 + $0x50] sm:$0xff]
    %v4316 = vld [vmem:[%s4304 + $0x58] sm:$0xff]
    %v4317 = vld [vmem:[%s4304 + $0x60] sm:$0xff]
    %v4318 = vld [vmem:[%s4304 + $0x68] sm:$0xff]
    %v4319 = vld [vmem:[%s4304 + $0x70] sm:$0xff]
    %v4320 = vld [vmem:[%s4304 + $0x78] sm:$0xff]
    %v4321 = vld [vmem:[%s4304 + $0x80] sm:$0xff]
    %v4322 = vld [vmem:[%s4304 + $0x88] sm:$0xff]
    %v4323 = vld [vmem:[%s4304 + $0x90] sm:$0xff]
    %v4324 = vld [vmem:[%s4304 + $0x98] sm:$0xff]
    %v4325 = vld [vmem:[%s4304 + $0xa0] sm:$0xff]
    %v4326 = vld [vmem:[%s4304 + $0xa8] sm:$0xff]
    %v4327 = vld [vmem:[%s4304 + $0xb0] sm:$0xff]
    %v4328 = vld [vmem:[%s4304 + $0xb8] sm:$0xff]
    %v4329 = vld [vmem:[%s4304 + $0xc0] sm:$0xff]
    %v4330 = vld [vmem:[%s4304 + $0xc8] sm:$0xff]
    %v4331 = vld [vmem:[%s4304 + $0xd0] sm:$0xff]
    %v4332 = vld [vmem:[%s4304 + $0xd8] sm:$0xff]
    %v4333 = vld [vmem:[%s4304 + $0xe0] sm:$0xff]
    %v4334 = vld [vmem:[%s4304 + $0xe8] sm:$0xff]
    %v4335 = vld [vmem:[%s4304 + $0xf0] sm:$0xff]
    %v4336 = vld [vmem:[%s4304 + $0xf8] sm:$0xff]
    %s4337 = scalar_lea.vmem [#allocation11], 1
    %v4338 = vld [vmem:[%s4337] sm:$0x1]
    %v4340 = vlaneseq
    %v4341 = vshrl.u32 %v4340, 7
    %v4342 = vsub.s32 0, %v4341
    %v4343 = vrot.slane %v4338, %v4342
    %4345 = vmatprep.subr.mxu0 0.0
    %4346 = vmatpush1.msra.mxu0 %v4305
    %4347 = vmatprep.subr.mxu0 0.0
    %4348 = vmatpush1.msra.mxu0 %v4306
    %4349 = vmatprep.subr.mxu0 0.0
    %4350 = vmatpush1.msra.mxu0 %v4307
    %4351 = vmatprep.subr.mxu0 0.0
    %4352 = vmatpush1.msra.mxu0 %v4308
    %4353 = vmatprep.subr.mxu0 0.0
    %4354 = vmatpush1.msra.mxu0 %v4309
    %4355 = vmatprep.subr.mxu0 0.0
    %4356 = vmatpush1.msra.mxu0 %v4310
    %4357 = vmatprep.subr.mxu0 0.0
    %4358 = vmatpush1.msra.mxu0 %v4311
    %4359 = vmatprep.subr.mxu0 0.0
    %4360 = vmatpush1.msra.mxu0 %v4312
    %4361 = vmatprep.subr.mxu0 0.0
    %4362 = vmatpush1.msra.mxu0 %v4313
    %4363 = vmatprep.subr.mxu0 0.0
    %4364 = vmatpush1.msra.mxu0 %v4314
    %4365 = vmatprep.subr.mxu0 0.0
    %4366 = vmatpush1.msra.mxu0 %v4315
    %4367 = vmatprep.subr.mxu0 0.0
    %4368 = vmatpush1.msra.mxu0 %v4316
    %4369 = vmatprep.subr.mxu0 0.0
    %4370 = vmatpush1.msra.mxu0 %v4317
    %4371 = vmatprep.subr.mxu0 0.0
    %4372 = vmatpush1.msra.mxu0 %v4318
    %4373 = vmatprep.subr.mxu0 0.0
    %4374 = vmatpush1.msra.mxu0 %v4319
    %4375 = vmatprep.subr.mxu0 0.0
    %4376 = vmatpush1.msra.mxu0 %v4320
    %4377 = vmatprep.subr.mxu0 0.0
    %4378 = vmatpush1.msra.mxu0 %v4321
    %4379 = vmatprep.subr.mxu0 0.0
    %4380 = vmatpush1.msra.mxu0 %v4322
    %4381 = vmatprep.subr.mxu0 0.0
    %4382 = vmatpush1.msra.mxu0 %v4323
    %4383 = vmatprep.subr.mxu0 0.0
    %4384 = vmatpush1.msra.mxu0 %v4324
    %4385 = vmatprep.subr.mxu0 0.0
    %4386 = vmatpush1.msra.mxu0 %v4325
    %4387 = vmatprep.subr.mxu0 0.0
    %4388 = vmatpush1.msra.mxu0 %v4326
    %4389 = vmatprep.subr.mxu0 0.0
    %4390 = vmatpush1.msra.mxu0 %v4327
    %4391 = vmatprep.subr.mxu0 0.0
    %4392 = vmatpush1.msra.mxu0 %v4328
    %4393 = vmatprep.subr.mxu0 0.0
    %4394 = vmatpush1.msra.mxu0 %v4329
    %4395 = vmatprep.subr.mxu0 0.0
    %4396 = vmatpush1.msra.mxu0 %v4330
    %4397 = vmatprep.subr.mxu0 0.0
    %4398 = vmatpush1.msra.mxu0 %v4331
    %4399 = vmatprep.subr.mxu0 0.0
    %4400 = vmatpush1.msra.mxu0 %v4332
    %4401 = vmatprep.subr.mxu0 0.0
    %4402 = vmatpush1.msra.mxu0 %v4333
    %4403 = vmatprep.subr.mxu0 0.0
    %4404 = vmatpush1.msra.mxu0 %v4334
    %4405 = vmatprep.subr.mxu0 0.0
    %4406 = vmatpush1.msra.mxu0 %v4335
    %4407 = vmatprep.subr.mxu0 0.0
    %4408 = vmatpush1.msra.mxu0 %v4336
    %4409 = vmatprep.mubr.f32.mxu0 %v4301
    %4410 = vmatmul.mubr.f32.gmra.mrb[0].mxu0 %v4300
    %v4411 = vpop.f32.mrb[0].mxu0
    %v4412 = vadd.f32 %v4343, %v4411
    %v4413 = vpop.f32.mrb[0].mxu0
    %4414 = vmatprep.mubr.f32.mxu0 %v4303
    %4415 = vmatmul.mubr.f32.gmra.mrb[0].mxu0 %v4302
    %v4416 = vpop.f32.mrb[0].mxu0
    %v4417 = vadd.f32 %v4343, %v4416
    %v4418 = vpop.f32.mrb[0].mxu0
    %4419 = vdwg.mxu0
    %v4420 = vadd.f32 %v4143, %v4412
    %v4421 = vadd.f32 %v4144, %v4417
    %s4422 = scalar_lea.vmem %s16, 1
    %v4423 = vld [vmem:[%s4422] sm:$0x1]
    %s4424 = scalar_lea.vmem %s17, 1
    %v4425 = vld [vmem:[%s4424] sm:$0x1]
    %4426 = vadd.xlane.f32.xlu0 %v4420
    %v4427 = vpop.xlane.xlu0 %4426
    %4428 = vadd.xlane.f32.xlu0 %v4421
    %v4429 = vpop.xlane.xlu0 %4428
    %v4430 = vmul.f32 %v4427, %v345
    %v4431 = vmul.f32 %v4429, %v345
    %v4432 = vsub.f32 %v4420, %v4430
    %v4433 = vsub.f32 %v4421, %v4431
    %v4434 = vmul.f32 %v4432, %v4432
    %v4435 = vmul.f32 %v4433, %v4433
    %4436 = vadd.xlane.f32.xlu0 %v4434
    %v4437 = vpop.xlane.xlu0 %4436
    %4438 = vadd.xlane.f32.xlu0 %v4435
    %v4439 = vpop.xlane.xlu0 %4438
    %v4440 = vmul.f32 %v4437, %v345
    %v4441 = vmul.f32 %v4439, %v345
    %v4442 = vadd.f32 %v4440, 1e-12
    %v4443 = vadd.f32 %v4441, 1e-12
    %v4444 = vrsqrt.pop %v4442
    %v4445 = vrsqrt.pop %v4443
    %v4446 = vmul.f32 %v4432, %v4444
    %v4447 = vmul.f32 %v4433, %v4445
    %v4449 = vlaneseq
    %v4450 = vshrl.u32 %v4449, 7
    %v4451 = vsub.s32 0, %v4450
    %v4452 = vrot.slane %v4423, %v4451
    %v4454 = vmul.f32 %v4446, %v4452
    %v4455 = vmul.f32 %v4447, %v4452
    %v4457 = vlaneseq
    %v4458 = vshrl.u32 %v4457, 7
    %v4459 = vsub.s32 0, %v4458
    %v4460 = vrot.slane %v4425, %v4459
    %v4462 = vadd.f32 %v4454, %v4460
    %v4463 = vadd.f32 %v4455, %v4460
    %v4465 = vrot.slane %v4463, 7
    %vm4467 = vcmask 1040384
    %v4468 = vsel %vm4467, %v4462, %v4465
    %v4469 = vld [vmem:[#allocation13] sm:$0xff]
    %v4470 = vld [vmem:[#allocation13 + $0x8] sm:$0xff]
    %v4471 = vld [vmem:[#allocation13 + $0x10] sm:$0xff]
    %v4472 = vld [vmem:[#allocation13 + $0x18] sm:$0xff]
    %v4473 = vld [vmem:[#allocation13 + $0x20] sm:$0xff]
    %v4474 = vld [vmem:[#allocation13 + $0x28] sm:$0xff]
    %v4475 = vld [vmem:[#allocation13 + $0x30] sm:$0xff]
    %v4476 = vld [vmem:[#allocation13 + $0x38] sm:$0xff]
    %v4477 = vld [vmem:[#allocation13 + $0x40] sm:$0xff]
    %v4478 = vld [vmem:[#allocation13 + $0x48] sm:$0xff]
    %v4479 = vld [vmem:[#allocation13 + $0x50] sm:$0xff]
    %v4480 = vld [vmem:[#allocation13 + $0x58] sm:$0xff]
    %v4481 = vld [vmem:[#allocation13 + $0x60] sm:$0xff]
    %v4482 = vld [vmem:[#allocation13 + $0x68] sm:$0xff]
    %v4483 = vld [vmem:[#allocation13 + $0x70] sm:$0xff]
    %v4484 = vld [vmem:[#allocation13 + $0x78] sm:$0xff]
    %v4485 = vld [vmem:[%s19] sm:$0x1]
    %v4487 = vlaneseq
    %v4488 = vshrl.u32 %v4487, 7
    %v4489 = vsub.s32 0, %v4488
    %v4490 = vrot.slane %v4485, %v4489
    %4492 = vmatprep.subr.mxu0 0.0
    %4493 = vmatpush1.msra.mxu0 %v4469
    %4494 = vmatprep.subr.mxu0 0.0
    %4495 = vmatpush1.msra.mxu0 %v4470
    %4496 = vmatprep.subr.mxu0 0.0
    %4497 = vmatpush1.msra.mxu0 %v4471
    %4498 = vmatprep.subr.mxu0 0.0
    %4499 = vmatpush1.msra.mxu0 %v4472
    %4500 = vmatprep.subr.mxu0 0.0
    %4501 = vmatpush1.msra.mxu0 %v4473
    %4502 = vmatprep.subr.mxu0 0.0
    %4503 = vmatpush1.msra.mxu0 %v4474
    %4504 = vmatprep.subr.mxu0 0.0
    %4505 = vmatpush1.msra.mxu0 %v4475
    %4506 = vmatprep.subr.mxu0 0.0
    %4507 = vmatpush1.msra.mxu0 %v4476
    %4508 = vmatprep.subr.mxu0 0.0
    %4509 = vmatpush1.msra.mxu0 %v4477
    %4510 = vmatprep.subr.mxu0 0.0
    %4511 = vmatpush1.msra.mxu0 %v4478
    %4512 = vmatprep.subr.mxu0 0.0
    %4513 = vmatpush1.msra.mxu0 %v4479
    %4514 = vmatprep.subr.mxu0 0.0
    %4515 = vmatpush1.msra.mxu0 %v4480
    %4516 = vmatprep.subr.mxu0 0.0
    %4517 = vmatpush1.msra.mxu0 %v4481
    %4518 = vmatprep.subr.mxu0 0.0
    %4519 = vmatpush1.msra.mxu0 %v4482
    %4520 = vmatprep.subr.mxu0 0.0
    %4521 = vmatpush1.msra.mxu0 %v4483
    %4522 = vmatprep.subr.mxu0 0.0
    %4523 = vmatpush1.msra.mxu0 %v4484
    %4524 = vmatprep.subr.mxu0 0.0
    %4525 = vmatpush1.msra.mxu0 0.0
    %4526 = vmatprep.subr.mxu0 0.0
    %4527 = vmatpush1.msra.mxu0 0.0
    %4528 = vmatprep.subr.mxu0 0.0
    %4529 = vmatpush1.msra.mxu0 0.0
    %4530 = vmatprep.subr.mxu0 0.0
    %4531 = vmatpush1.msra.mxu0 0.0
    %4532 = vmatprep.subr.mxu0 0.0
    %4533 = vmatpush1.msra.mxu0 0.0
    %4534 = vmatprep.subr.mxu0 0.0
    %4535 = vmatpush1.msra.mxu0 0.0
    %4536 = vmatprep.subr.mxu0 0.0
    %4537 = vmatpush1.msra.mxu0 0.0
    %4538 = vmatprep.subr.mxu0 0.0
    %4539 = vmatpush1.msra.mxu0 0.0
    %4540 = vmatprep.subr.mxu0 0.0
    %4541 = vmatpush1.msra.mxu0 0.0
    %4542 = vmatprep.subr.mxu0 0.0
    %4543 = vmatpush1.msra.mxu0 0.0
    %4544 = vmatprep.subr.mxu0 0.0
    %4545 = vmatpush1.msra.mxu0 0.0
    %4546 = vmatprep.subr.mxu0 0.0
    %4547 = vmatpush1.msra.mxu0 0.0
    %4548 = vmatprep.subr.mxu0 0.0
    %4549 = vmatpush1.msra.mxu0 0.0
    %4550 = vmatprep.subr.mxu0 0.0
    %4551 = vmatpush1.msra.mxu0 0.0
    %4552 = vmatprep.subr.mxu0 0.0
    %4553 = vmatpush1.msra.mxu0 0.0
    %4554 = vmatprep.subr.mxu0 0.0
    %4555 = vmatpush1.msra.mxu0 0.0
    %4556 = vmatprep.mubr.f32.mxu0 0.0
    %4557 = vmatmul.mubr.f32.gmra.mrb[0].mxu0 %v4468
    %v4558 = vpop.f32.mrb[0].mxu0
    %v4559 = vadd.f32 %v4490, %v4558
    %v4560 = vpop.f32.mrb[0].mxu0
    %4561 = vdwg.mxu0
    %v4562 = vtanh.pop %v4559
    %v4563 = vld [vmem:[#allocation14] sm:$0xff]
    %v4564 = vld [vmem:[#allocation14 + $0x8] sm:$0xff]
    %v4565 = vld [vmem:[#allocation14 + $0x10] sm:$0xff]
    %v4566 = vld [vmem:[#allocation14 + $0x18] sm:$0xff]
    %v4567 = vld [vmem:[#allocation14 + $0x20] sm:$0xff]
    %v4568 = vld [vmem:[#allocation14 + $0x28] sm:$0xff]
    %v4569 = vld [vmem:[#allocation14 + $0x30] sm:$0xff]
    %v4570 = vld [vmem:[#allocation14 + $0x38] sm:$0xff]
    %v4571 = vld [vmem:[#allocation14 + $0x40] sm:$0xff]
    %v4572 = vld [vmem:[#allocation14 + $0x48] sm:$0xff]
    %v4573 = vld [vmem:[#allocation14 + $0x50] sm:$0xff]
    %v4574 = vld [vmem:[#allocation14 + $0x58] sm:$0xff]
    %v4575 = vld [vmem:[#allocation14 + $0x60] sm:$0xff]
    %v4576 = vld [vmem:[#allocation14 + $0x68] sm:$0xff]
    %v4577 = vld [vmem:[#allocation14 + $0x70] sm:$0xff]
    %v4578 = vld [vmem:[#allocation14 + $0x78] sm:$0xff]
    %v4579 = vld [vmem:[#allocation16] sm:$0x1]
    %v4581 = vlaneseq
    %v4582 = vshrl.u32 %v4581, 7
    %v4583 = vsub.s32 0, %v4582
    %v4584 = vrot.slane %v4579, %v4583
    %4586 = vmatprep.subr.mxu0 0.0
    %4587 = vmatpush1.msra.mxu0 %v4563
    %4588 = vmatprep.subr.mxu0 0.0
    %4589 = vmatpush1.msra.mxu0 %v4564
    %4590 = vmatprep.subr.mxu0 0.0
    %4591 = vmatpush1.msra.mxu0 %v4565
    %4592 = vmatprep.subr.mxu0 0.0
    %4593 = vmatpush1.msra.mxu0 %v4566
    %4594 = vmatprep.subr.mxu0 0.0
    %4595 = vmatpush1.msra.mxu0 %v4567
    %4596 = vmatprep.subr.mxu0 0.0
    %4597 = vmatpush1.msra.mxu0 %v4568
    %4598 = vmatprep.subr.mxu0 0.0
    %4599 = vmatpush1.msra.mxu0 %v4569
    %4600 = vmatprep.subr.mxu0 0.0
    %4601 = vmatpush1.msra.mxu0 %v4570
    %4602 = vmatprep.subr.mxu0 0.0
    %4603 = vmatpush1.msra.mxu0 %v4571
    %4604 = vmatprep.subr.mxu0 0.0
    %4605 = vmatpush1.msra.mxu0 %v4572
    %4606 = vmatprep.subr.mxu0 0.0
    %4607 = vmatpush1.msra.mxu0 %v4573
    %4608 = vmatprep.subr.mxu0 0.0
    %4609 = vmatpush1.msra.mxu0 %v4574
    %4610 = vmatprep.subr.mxu0 0.0
    %4611 = vmatpush1.msra.mxu0 %v4575
    %4612 = vmatprep.subr.mxu0 0.0
    %4613 = vmatpush1.msra.mxu0 %v4576
    %4614 = vmatprep.subr.mxu0 0.0
    %4615 = vmatpush1.msra.mxu0 %v4577
    %4616 = vmatprep.subr.mxu0 0.0
    %4617 = vmatpush1.msra.mxu0 %v4578
    %4618 = vmatprep.subr.mxu0 0.0
    %4619 = vmatpush1.msra.mxu0 0.0
    %4620 = vmatprep.subr.mxu0 0.0
    %4621 = vmatpush1.msra.mxu0 0.0
    %4622 = vmatprep.subr.mxu0 0.0
    %4623 = vmatpush1.msra.mxu0 0.0
    %4624 = vmatprep.subr.mxu0 0.0
    %4625 = vmatpush1.msra.mxu0 0.0
    %4626 = vmatprep.subr.mxu0 0.0
    %4627 = vmatpush1.msra.mxu0 0.0
    %4628 = vmatprep.subr.mxu0 0.0
    %4629 = vmatpush1.msra.mxu0 0.0
    %4630 = vmatprep.subr.mxu0 0.0
    %4631 = vmatpush1.msra.mxu0 0.0
    %4632 = vmatprep.subr.mxu0 0.0
    %4633 = vmatpush1.msra.mxu0 0.0
    %4634 = vmatprep.subr.mxu0 0.0
    %4635 = vmatpush1.msra.mxu0 0.0
    %4636 = vmatprep.subr.mxu0 0.0
    %4637 = vmatpush1.msra.mxu0 0.0
    %4638 = vmatprep.subr.mxu0 0.0
    %4639 = vmatpush1.msra.mxu0 0.0
    %4640 = vmatprep.subr.mxu0 0.0
    %4641 = vmatpush1.msra.mxu0 0.0
    %4642 = vmatprep.subr.mxu0 0.0
    %4643 = vmatpush1.msra.mxu0 0.0
    %4644 = vmatprep.subr.mxu0 0.0
    %4645 = vmatpush1.msra.mxu0 0.0
    %4646 = vmatprep.subr.mxu0 0.0
    %4647 = vmatpush1.msra.mxu0 0.0
    %4648 = vmatprep.subr.mxu0 0.0
    %4649 = vmatpush1.msra.mxu0 0.0
    %4650 = vmatprep.mubr.f32.mxu0 0.0
    %4651 = vmatmul.mubr.f32.gmra.mrb[0].mxu0 %v4562
    %v4652 = vpop.f32.mrb[0].mxu0
    %v4653 = vadd.f32 %v4584, %v4652
    %v4654 = vpop.f32.mrb[0].mxu0
    %4655 = vdwg.mxu0
    %v4656 = vmax.f32 %v4653, 0.0
    %v4657 = vld [vmem:[#allocation17] sm:$0xff]
    %v4658 = vld [vmem:[#allocation17 + $0x8] sm:$0xff]
    %v4659 = vld [vmem:[#allocation17 + $0x10] sm:$0xff]
    %v4660 = vld [vmem:[#allocation17 + $0x18] sm:$0xff]
    %v4661 = vld [vmem:[#allocation17 + $0x20] sm:$0xff]
    %v4662 = vld [vmem:[#allocation17 + $0x28] sm:$0xff]
    %v4663 = vld [vmem:[#allocation17 + $0x30] sm:$0xff]
    %v4664 = vld [vmem:[#allocation17 + $0x38] sm:$0xff]
    %v4665 = vld [vmem:[#allocation17 + $0x40] sm:$0xff]
    %v4666 = vld [vmem:[#allocation17 + $0x48] sm:$0xff]
    %v4667 = vld [vmem:[#allocation17 + $0x50] sm:$0xff]
    %v4668 = vld [vmem:[#allocation17 + $0x58] sm:$0xff]
    %v4669 = vld [vmem:[#allocation17 + $0x60] sm:$0xff]
    %v4670 = vld [vmem:[#allocation17 + $0x68] sm:$0xff]
    %v4671 = vld [vmem:[#allocation17 + $0x70] sm:$0xff]
    %v4672 = vld [vmem:[#allocation17 + $0x78] sm:$0xff]
    %v4673 = vld [vmem:[%s23] sm:$0x1]
    %v4675 = vlaneseq
    %v4676 = vshrl.u32 %v4675, 7
    %v4677 = vsub.s32 0, %v4676
    %v4678 = vrot.slane %v4673, %v4677
    %4680 = vmatprep.subr.mxu0 0.0
    %4681 = vmatpush1.msra.mxu0 %v4657
    %4682 = vmatprep.subr.mxu0 0.0
    %4683 = vmatpush1.msra.mxu0 %v4658
    %4684 = vmatprep.subr.mxu0 0.0
    %4685 = vmatpush1.msra.mxu0 %v4659
    %4686 = vmatprep.subr.mxu0 0.0
    %4687 = vmatpush1.msra.mxu0 %v4660
    %4688 = vmatprep.subr.mxu0 0.0
    %4689 = vmatpush1.msra.mxu0 %v4661
    %4690 = vmatprep.subr.mxu0 0.0
    %4691 = vmatpush1.msra.mxu0 %v4662
    %4692 = vmatprep.subr.mxu0 0.0
    %4693 = vmatpush1.msra.mxu0 %v4663
    %4694 = vmatprep.subr.mxu0 0.0
    %4695 = vmatpush1.msra.mxu0 %v4664
    %4696 = vmatprep.subr.mxu0 0.0
    %4697 = vmatpush1.msra.mxu0 %v4665
    %4698 = vmatprep.subr.mxu0 0.0
    %4699 = vmatpush1.msra.mxu0 %v4666
    %4700 = vmatprep.subr.mxu0 0.0
    %4701 = vmatpush1.msra.mxu0 %v4667
    %4702 = vmatprep.subr.mxu0 0.0
    %4703 = vmatpush1.msra.mxu0 %v4668
    %4704 = vmatprep.subr.mxu0 0.0
    %4705 = vmatpush1.msra.mxu0 %v4669
    %4706 = vmatprep.subr.mxu0 0.0
    %4707 = vmatpush1.msra.mxu0 %v4670
    %4708 = vmatprep.subr.mxu0 0.0
    %4709 = vmatpush1.msra.mxu0 %v4671
    %4710 = vmatprep.subr.mxu0 0.0
    %4711 = vmatpush1.msra.mxu0 %v4672
    %4712 = vmatprep.subr.mxu0 0.0
    %4713 = vmatpush1.msra.mxu0 0.0
    %4714 = vmatprep.subr.mxu0 0.0
    %4715 = vmatpush1.msra.mxu0 0.0
    %4716 = vmatprep.subr.mxu0 0.0
    %4717 = vmatpush1.msra.mxu0 0.0
    %4718 = vmatprep.subr.mxu0 0.0
    %4719 = vmatpush1.msra.mxu0 0.0
    %4720 = vmatprep.subr.mxu0 0.0
    %4721 = vmatpush1.msra.mxu0 0.0
    %4722 = vmatprep.subr.mxu0 0.0
    %4723 = vmatpush1.msra.mxu0 0.0
    %4724 = vmatprep.subr.mxu0 0.0
    %4725 = vmatpush1.msra.mxu0 0.0
    %4726 = vmatprep.subr.mxu0 0.0
    %4727 = vmatpush1.msra.mxu0 0.0
    %4728 = vmatprep.subr.mxu0 0.0
    %4729 = vmatpush1.msra.mxu0 0.0
    %4730 = vmatprep.subr.mxu0 0.0
    %4731 = vmatpush1.msra.mxu0 0.0
    %4732 = vmatprep.subr.mxu0 0.0
    %4733 = vmatpush1.msra.mxu0 0.0
    %4734 = vmatprep.subr.mxu0 0.0
    %4735 = vmatpush1.msra.mxu0 0.0
    %4736 = vmatprep.subr.mxu0 0.0
    %4737 = vmatpush1.msra.mxu0 0.0
    %4738 = vmatprep.subr.mxu0 0.0
    %4739 = vmatpush1.msra.mxu0 0.0
    %4740 = vmatprep.subr.mxu0 0.0
    %4741 = vmatpush1.msra.mxu0 0.0
    %4742 = vmatprep.subr.mxu0 0.0
    %4743 = vmatpush1.msra.mxu0 0.0
    %4744 = vmatprep.mubr.f32.mxu0 0.0
    %4745 = vmatmul.mubr.f32.gmra.mrb[0].mxu0 %v4656
    %v4746 = vpop.f32.mrb[0].mxu0
    %v4747 = vadd.f32 %v4678, %v4746
    %v4748 = vpop.f32.mrb[0].mxu0
    %4749 = vdwg.mxu0
    %v4750 = vmax.f32 %v4747, 0.0
    %v4751 = vld [vmem:[#allocation19] sm:$0xff]
    %v4752 = vld [vmem:[#allocation19 + $0x8] sm:$0xff]
    %v4753 = vld [vmem:[#allocation19 + $0x10] sm:$0xff]
    %v4754 = vld [vmem:[#allocation19 + $0x18] sm:$0xff]
    %v4755 = vld [vmem:[#allocation19 + $0x20] sm:$0xff]
    %v4756 = vld [vmem:[#allocation19 + $0x28] sm:$0xff]
    %v4757 = vld [vmem:[#allocation19 + $0x30] sm:$0xff]
    %v4758 = vld [vmem:[#allocation19 + $0x38] sm:$0xff]
    %v4759 = vld [vmem:[#allocation19 + $0x40] sm:$0xff]
    %v4760 = vld [vmem:[#allocation19 + $0x48] sm:$0xff]
    %v4761 = vld [vmem:[#allocation19 + $0x50] sm:$0xff]
    %v4762 = vld [vmem:[#allocation19 + $0x58] sm:$0xff]
    %v4763 = vld [vmem:[#allocation19 + $0x60] sm:$0xff]
    %v4764 = vld [vmem:[#allocation19 + $0x68] sm:$0xff]
    %v4765 = vld [vmem:[#allocation19 + $0x70] sm:$0xff]
    %v4766 = vld [vmem:[#allocation19 + $0x78] sm:$0xff]
    %v4767 = vld [vmem:[%s25] sm:$0x1]
    %v4769 = vlaneseq
    %v4770 = vshrl.u32 %v4769, 7
    %v4771 = vsub.s32 0, %v4770
    %v4772 = vrot.slane %v4767, %v4771
    %4774 = vmatprep.subr.mxu0 0.0
    %4775 = vmatpush1.msra.mxu0 %v4751
    %4776 = vmatprep.subr.mxu0 0.0
    %4777 = vmatpush1.msra.mxu0 %v4752
    %4778 = vmatprep.subr.mxu0 0.0
    %4779 = vmatpush1.msra.mxu0 %v4753
    %4780 = vmatprep.subr.mxu0 0.0
    %4781 = vmatpush1.msra.mxu0 %v4754
    %4782 = vmatprep.subr.mxu0 0.0
    %4783 = vmatpush1.msra.mxu0 %v4755
    %4784 = vmatprep.subr.mxu0 0.0
    %4785 = vmatpush1.msra.mxu0 %v4756
    %4786 = vmatprep.subr.mxu0 0.0
    %4787 = vmatpush1.msra.mxu0 %v4757
    %4788 = vmatprep.subr.mxu0 0.0
    %4789 = vmatpush1.msra.mxu0 %v4758
    %4790 = vmatprep.subr.mxu0 0.0
    %4791 = vmatpush1.msra.mxu0 %v4759
    %4792 = vmatprep.subr.mxu0 0.0
    %4793 = vmatpush1.msra.mxu0 %v4760
    %4794 = vmatprep.subr.mxu0 0.0
    %4795 = vmatpush1.msra.mxu0 %v4761
    %4796 = vmatprep.subr.mxu0 0.0
    %4797 = vmatpush1.msra.mxu0 %v4762
    %4798 = vmatprep.subr.mxu0 0.0
    %4799 = vmatpush1.msra.mxu0 %v4763
    %4800 = vmatprep.subr.mxu0 0.0
    %4801 = vmatpush1.msra.mxu0 %v4764
    %4802 = vmatprep.subr.mxu0 0.0
    %4803 = vmatpush1.msra.mxu0 %v4765
    %4804 = vmatprep.subr.mxu0 0.0
    %4805 = vmatpush1.msra.mxu0 %v4766
    %4806 = vmatprep.subr.mxu0 0.0
    %4807 = vmatpush1.msra.mxu0 0.0
    %4808 = vmatprep.subr.mxu0 0.0
    %4809 = vmatpush1.msra.mxu0 0.0
    %4810 = vmatprep.subr.mxu0 0.0
    %4811 = vmatpush1.msra.mxu0 0.0
    %4812 = vmatprep.subr.mxu0 0.0
    %4813 = vmatpush1.msra.mxu0 0.0
    %4814 = vmatprep.subr.mxu0 0.0
    %4815 = vmatpush1.msra.mxu0 0.0
    %4816 = vmatprep.subr.mxu0 0.0
    %4817 = vmatpush1.msra.mxu0 0.0
    %4818 = vmatprep.subr.mxu0 0.0
    %4819 = vmatpush1.msra.mxu0 0.0
    %4820 = vmatprep.subr.mxu0 0.0
    %4821 = vmatpush1.msra.mxu0 0.0
    %4822 = vmatprep.subr.mxu0 0.0
    %4823 = vmatpush1.msra.mxu0 0.0
    %4824 = vmatprep.subr.mxu0 0.0
    %4825 = vmatpush1.msra.mxu0 0.0
    %4826 = vmatprep.subr.mxu0 0.0
    %4827 = vmatpush1.msra.mxu0 0.0
    %4828 = vmatprep.subr.mxu0 0.0
    %4829 = vmatpush1.msra.mxu0 0.0
    %4830 = vmatprep.subr.mxu0 0.0
    %4831 = vmatpush1.msra.mxu0 0.0
    %4832 = vmatprep.subr.mxu0 0.0
    %4833 = vmatpush1.msra.mxu0 0.0
    %4834 = vmatprep.subr.mxu0 0.0
    %4835 = vmatpush1.msra.mxu0 0.0
    %4836 = vmatprep.subr.mxu0 0.0
    %4837 = vmatpush1.msra.mxu0 0.0
    %4838 = vmatprep.mubr.f32.mxu0 0.0
    %4839 = vmatmul.mubr.f32.gmra.mrb[0].mxu0 %v4750
    %v4840 = vpop.f32.mrb[0].mxu0
    %v4841 = vadd.f32 %v4772, %v4840
    %v4842 = vpop.f32.mrb[0].mxu0
    %4843 = vdwg.mxu0
    %vm4844 = vcmask 25600
    %v4845 = vsel %vm4844, %v4841, -inf
    %4846 = vmax.xlane.f32.xlu0 %v4845
    %v4847 = vpop.xlane.xlu0 %4846
    %v4848 = vsub.f32 %v4841, %v4847
    %v4849 = vmul.f32 %v4848, 1.442695
    %v4850 = vpow.pop %v4849
    %v4851 = vsel %vm4844, %v4850, 0.0
    %4852 = vadd.xlane.f32.xlu0 %v4851
    %v4853 = vpop.xlane.xlu0 %4852
    %v4854 = vrcp.pop %v4853
    %v4855 = vmul.f32 %v4850, %v4854
    %4856 = vst.msk [vmem:[#allocation20] sm:$0x3] %vm4844, %v4855
    // Predicated region
    $region150: #{bert_net_forward.1} parent=1 // pred_check
      _
    $region151: #{bert_net_forward.1} parent=1 // pred_check_branch
      %4858 = sbr.rel (0) target = $region153
    $region152: #{bert_net_forward.1} parent=1 // pred_region
      %s4860 = ssub.s32 32, 32
      %4861 = vsyncadd [#allocation4], %s4860
      %s4863 = sshll.u32 [#allocation20], 4
      %s4864 = int_to_ptr.vmem [resolvable:$true] %s4863
      %4866 = dma.vmem_to_hbm [thread:$0]  %s4864, 32, %s26, [#allocation4]
    $region153: #{bert_net_forward.1} parent=1 // pred_fallthru
      _
    // Predicated region
    $region154: #{bert_net_forward.1} parent=1 // pred_check
      _
    $region155: #{bert_net_forward.1} parent=1 // pred_check_branch
      %4868 = sbr.rel (0) target = $region157
    $region156: #{bert_net_forward.1} parent=1 // pred_region
      %4869 = dma.done [#allocation4], 32
    $region157: #{bert_net_forward.1} parent=1 // pred_fallthru
      _
    %4870 = vsyncpa [#allocation3], 1
    %4871 = vsyncpa [#allocation6], 1
    %4872 = vsyncpa [#allocation9], 1
    %4873 = vsyncpa [#allocation12], 1
    %4874 = vsyncpa [#allocation15], 1
    %4875 = vsyncpa [#allocation18], 1
    %4876 = vsyncpa [#allocation4], 1

</llo_original>
